<compile_context>
chip_gen: v7x
topology: tpu7x:2x2x1
jax: 0.10.0
libtpu: 0.0.40
codegen_flags: <defaults>
</compile_context>

<pallas_src>
import jax
import jax.numpy as jnp
from jax.experimental import pallas as pl
from jax.experimental.pallas import tpu as pltpu


IN_CH = 4
BU_CH = [8, 16, 32]     # C3, C4, C5 channels
FPN_CH = 16


# ----------------------------------------------------------------------------
# In-kernel helpers (trace-time Python, all data stays in VMEM / vregs)
# ----------------------------------------------------------------------------
def _conv3x3_im2col(pad_ref, col_ref, x_val, w_ref, b_ref, *, stride, relu):
    """3x3 conv, padding=1, given stride, as a single im2col matmul.

    x_val  : (N, Hin, Win, Cin) f32 value
    pad_ref: VMEM scratch (N, Hin+2, Win+2, Cin)
    col_ref: VMEM scratch (N*Ho*Wo, 9*Cin)
    w_ref  : (9*Cin, Cout), b_ref: (1, Cout)
    returns (N*Ho*Wo, Cout) f32, rows in (n, i, j) row-major order.
    """
    n, hin, win, cin = x_val.shape
    ho, wo = hin // stride, win // stride
    m = n * ho * wo

    # zero padding done entirely in VMEM (no XLA pad op, no HBM traffic)
    pad_ref[...] = jnp.zeros(pad_ref.shape, pad_ref.dtype)
    pad_ref[:, 1:hin + 1, 1:win + 1, :] = x_val

    # im2col: each of the 9 taps is one window of the padded input, written into
    # its lane range of the column matrix.
    for kh in range(3):
        for kw in range(3):
            if stride == 1:
                patch = pad_ref[:, kh:kh + ho, kw:kw + wo, :]
            else:
                # stride-2: W via a stride-2 window read, H via a contiguous
                # 2*Ho row window + leading-dim reshape (layout no-op).
                blk = pad_ref[:, kh:kh + 2 * ho, pl.ds(kw, wo, 2), :]
                patch = blk.reshape(n, ho, 2, wo, cin)[:, :, 0, :, :]
            t = kh * 3 + kw
            col_ref[:, t * cin:(t + 1) * cin] = patch.reshape(m, cin)

    acc = jnp.dot(col_ref[...], w_ref[...], preferred_element_type=jnp.float32)
    acc = acc + b_ref[...]
    if relu:
        acc = jnp.maximum(acc, 0.0)
    return acc


def _conv1x1(x_val, w_ref, b_ref):
    """1x1 conv as a single matmul over M = N*H*W rows."""
    n, h, w, cin = x_val.shape
    y = jnp.dot(x_val.reshape(n * h * w, cin), w_ref[...],
                preferred_element_type=jnp.float32)
    return y + b_ref[...]


def _upsample2x(up_ref, m_val):
    """Nearest-neighbour 2x upsample, materialized in a VMEM scratch."""
    n, h, w, c = m_val.shape
    # H duplication: broadcast + merge of leading dims (layout no-op)
    mh = jnp.broadcast_to(m_val[:, :, None, :, :],
                          (n, h, 2, w, c)).reshape(n, 2 * h, w, c)
    # W duplication: write each coarse column twice (w <= 4 here, static stores)
    for j in range(w):
        col = mh[:, :, j:j + 1, :]
        up_ref[:, :, 2 * j:2 * j + 1, :] = col
        up_ref[:, :, 2 * j + 1:2 * j + 2, :] = col
    return up_ref[...]


# ----------------------------------------------------------------------------
# The fused FPN kernel: bottom_up(x) -> [C3,C4,C5]; top_down([C5,C4,C3]) -> [P5,P4,P3]
# ----------------------------------------------------------------------------
def _fpn_kernel(x_ref,
                bu0_w, bu0_b, bu1_w, bu1_b, bu2_w, bu2_b,
                lat0_w, lat0_b, lat1_w, lat1_b, lat2_w, lat2_b,
                out0_w, out0_b, out1_w, out1_b, out2_w, out2_b,
                p5_ref, p4_ref, p3_ref,
                pad_bu0, col_bu0, pad_bu1, col_bu1, pad_bu2, col_bu2,
                pad_o2, col_o2, pad_o1, col_o1, pad_o0, col_o0,
                up_p4, up_p3):
    n, h0, w0, _ = x_ref.shape
    h3, w3 = h0 // 2, w0 // 2
    h4, w4 = h0 // 4, w0 // 4
    h5, w5 = h0 // 8, w0 // 8

    # ---------------- bottom-up: 3x3 / stride-2 / ReLU ----------------
    c3 = _conv3x3_im2col(pad_bu0, col_bu0, x_ref[...], bu0_w, bu0_b,
                         stride=2, relu=True).reshape(n, h3, w3, bu0_w.shape[1])
    c4 = _conv3x3_im2col(pad_bu1, col_bu1, c3, bu1_w, bu1_b,
                         stride=2, relu=True).reshape(n, h4, w4, bu1_w.shape[1])
    c5 = _conv3x3_im2col(pad_bu2, col_bu2, c4, bu2_w, bu2_b,
                         stride=2, relu=True).reshape(n, h5, w5, bu2_w.shape[1])

    # ---------------- top-down: lateral 1x1, upsample+add, output 3x3 ----------------
    lat5 = _conv1x1(c5, lat2_w, lat2_b).reshape(n, h5, w5, FPN_CH)
    p5_ref[...] = _conv3x3_im2col(pad_o2, col_o2, lat5, out2_w, out2_b,
                                  stride=1, relu=False)

    m4 = _conv1x1(c4, lat1_w, lat1_b).reshape(n, h4, w4, FPN_CH) \
        + _upsample2x(up_p4, lat5)
    p4_ref[...] = _conv3x3_im2col(pad_o1, col_o1, m4, out1_w, out1_b,
                                  stride=1, relu=False)

    m3 = _conv1x1(c3, lat0_w, lat0_b).reshape(n, h3, w3, FPN_CH) \
        + _upsample2x(up_p3, m4)
    p3_ref[...] = _conv3x3_im2col(pad_o0, col_o0, m3, out0_w, out0_b,
                                  stride=1, relu=False)


# ----------------------------------------------------------------------------
# Parameters (same initialization / structure as the previous version)
# ----------------------------------------------------------------------------
def init_params(key):
    ks = jax.random.split(key, 16)
    p = {}
    cin = IN_CH
    for i, cout in enumerate(BU_CH):
        p[f"bu{i}_w"] = 0.1 * jax.random.normal(ks[i], (3, 3, cin, cout), jnp.float32)
        p[f"bu{i}_b"] = 0.01 * jnp.arange(cout, dtype=jnp.float32)
        cin = cout
    for i, c in enumerate(BU_CH):
        p[f"lat{i}_w"] = 0.1 * jax.random.normal(ks[4 + i], (1, 1, c, FPN_CH), jnp.float32)
        p[f"lat{i}_b"] = 0.01 * jnp.arange(FPN_CH, dtype=jnp.float32)
        p[f"out{i}_w"] = 0.1 * jax.random.normal(ks[8 + i], (3, 3, FPN_CH, FPN_CH), jnp.float32)
        p[f"out{i}_b"] = 0.01 * jnp.arange(FPN_CH, dtype=jnp.float32)
    return p


# ----------------------------------------------------------------------------
# Wrapper: one pallas_call for the whole forward pass
# ----------------------------------------------------------------------------
@jax.jit
def feature_pyramid_forward(params, x_nchw):
    f32 = jnp.float32
    x = jnp.transpose(x_nchw, (0, 2, 3, 1)).astype(f32)     # NCHW -> NHWC
    n, h0, w0, _ = x.shape
    h3, w3 = h0 // 2, w0 // 2
    h4, w4 = h0 // 4, w0 // 4
    h5, w5 = h0 // 8, w0 // 8

    flat3 = lambda w: w.reshape(-1, w.shape[-1]).astype(f32)            # (3,3,ci,co)->(9ci,co)
    flat1 = lambda w: w.reshape(w.shape[-2], w.shape[-1]).astype(f32)   # (1,1,ci,co)->(ci,co)
    row_b = lambda b: b.reshape(1, -1).astype(f32)

    inputs = [
        x,
        flat3(params["bu0_w"]), row_b(params["bu0_b"]),
        flat3(params["bu1_w"]), row_b(params["bu1_b"]),
        flat3(params["bu2_w"]), row_b(params["bu2_b"]),
        flat1(params["lat0_w"]), row_b(params["lat0_b"]),
        flat1(params["lat1_w"]), row_b(params["lat1_b"]),
        flat1(params["lat2_w"]), row_b(params["lat2_b"]),
        flat3(params["out0_w"]), row_b(params["out0_b"]),
        flat3(params["out1_w"]), row_b(params["out1_b"]),
        flat3(params["out2_w"]), row_b(params["out2_b"]),
    ]

    out_shape = (
        jax.ShapeDtypeStruct((n * h5 * w5, FPN_CH), f32),    # P5 rows (n, i, j)
        jax.ShapeDtypeStruct((n * h4 * w4, FPN_CH), f32),    # P4 rows
        jax.ShapeDtypeStruct((n * h3 * w3, FPN_CH), f32),    # P3 rows
    )

    scratch_shapes = [
        pltpu.VMEM((n, h0 + 2, w0 + 2, IN_CH), f32),         # pad, bottom-up conv 0
        pltpu.VMEM((n * h3 * w3, 9 * IN_CH), f32),           # im2col, bottom-up conv 0
        pltpu.VMEM((n, h3 + 2, w3 + 2, BU_CH[0]), f32),      # pad, bottom-up conv 1
        pltpu.VMEM((n * h4 * w4, 9 * BU_CH[0]), f32),        # im2col, bottom-up conv 1
        pltpu.VMEM((n, h4 + 2, w4 + 2, BU_CH[1]), f32),      # pad, bottom-up conv 2
        pltpu.VMEM((n * h5 * w5, 9 * BU_CH[1]), f32),        # im2col, bottom-up conv 2
        pltpu.VMEM((n, h5 + 2, w5 + 2, FPN_CH), f32),        # pad, P5 output conv
        pltpu.VMEM((n * h5 * w5, 9 * FPN_CH), f32),          # im2col, P5 output conv
        pltpu.VMEM((n, h4 + 2, w4 + 2, FPN_CH), f32),        # pad, P4 output conv
        pltpu.VMEM((n * h4 * w4, 9 * FPN_CH), f32),          # im2col, P4 output conv
        pltpu.VMEM((n, h3 + 2, w3 + 2, FPN_CH), f32),        # pad, P3 output conv
        pltpu.VMEM((n * h3 * w3, 9 * FPN_CH), f32),          # im2col, P3 output conv
        pltpu.VMEM((n, h4, w4, FPN_CH), f32),                # 2x upsample buffer (P4 level)
        pltpu.VMEM((n, h3, w3, FPN_CH), f32),                # 2x upsample buffer (P3 level)
    ]

    vmem_spec = pl.BlockSpec(memory_space=pltpu.MemorySpace.VMEM)
    p5, p4, p3 = pl.pallas_call(
        _fpn_kernel,
        out_shape=out_shape,
        in_specs=[vmem_spec] * len(inputs),
        out_specs=(vmem_spec, vmem_spec, vmem_spec),
        scratch_shapes=scratch_shapes,
    )(*inputs)

    return [p5.reshape(n, h5, w5, FPN_CH),       # P5
            p4.reshape(n, h4, w4, FPN_CH),       # P4
            p3.reshape(n, h3, w3, FPN_CH)]       # P3


# ----------------------------------------------------------------------------
# Pure-JAX/XLA reference of the same module (for a correctness self-check)
# ----------------------------------------------------------------------------
def _reference_forward(params, x_nchw):
    x = jnp.transpose(x_nchw, (0, 2, 3, 1)).astype(jnp.float32)

    def conv(x, w, b, stride, pad, relu):
        y = jax.lax.conv_general_dilated(
            x, w, window_strides=(stride, stride),
            padding=((pad, pad), (pad, pad)),
            dimension_numbers=("NHWC", "HWIO", "NHWC"),
            precision=jax.lax.Precision.HIGHEST)
        y = y + b.reshape(1, 1, 1, -1)
        return jnp.maximum(y, 0.0) if relu else y

    def up2(t):
        return jnp.repeat(jnp.repeat(t, 2, axis=1), 2, axis=2)

    feats = []
    f = x
    for i in range(len(BU_CH)):
        f = conv(f, params[f"bu{i}_w"], params[f"bu{i}_b"], 2, 1, True)
        feats.append(f)                                   # [C3, C4, C5]

    outs, m = [], None
    for lvl, c in enumerate(feats[::-1]):                 # C5, C4, C3
        idx = len(feats) - 1 - lvl
        lat = conv(c, params[f"lat{idx}_w"], params[f"lat{idx}_b"], 1, 0, False)
        m = lat if m is None else lat + up2(m)
        outs.append(conv(m, params[f"out{idx}_w"], params[f"out{idx}_b"], 1, 1, False))
    return outs                                           # [P5, P4, P3]


if __name__ == "__main__":
    key = jax.random.PRNGKey(0)
    k_x, k_p = jax.random.split(key)
    x = jax.random.normal(k_x, (2, 4, 16, 16), jnp.float32)   # NCHW like PyTorch
    params = init_params(k_p)

    outs = feature_pyramid_forward(params, x)
    outs = [jax.block_until_ready(o) for o in outs]

    # shapes: P5 (2,2,2,16), P4 (2,4,4,16), P3 (2,8,8,16) in NHWC
    assert outs[0].shape == (2, 2, 2, FPN_CH)
    assert outs[1].shape == (2, 4, 4, FPN_CH)
    assert outs[2].shape == (2, 8, 8, FPN_CH)
    assert all(bool(jnp.all(jnp.isfinite(o))) for o in outs)

    # numerical self-check against the pure-JAX reference of the same module
    refs = _reference_forward(params, x)
    for o, r in zip(outs, refs):
        assert o.shape == r.shape
        assert bool(jnp.allclose(o, r, atol=1e-3, rtol=1e-3)), \
            float(jnp.max(jnp.abs(o - r)))

    print("KERNEL_OK")
</pallas_src>

<mosaic_0001>
module attributes {stable_mosaic.version = 11 : i64} {
  func.func @_fpn_kernel(%arg0: memref<2x16x16x4xf32, #tpu.memory_space<vmem>>, %arg1: memref<36x8xf32, #tpu.memory_space<vmem>>, %arg2: memref<1x8xf32, #tpu.memory_space<vmem>>, %arg3: memref<72x16xf32, #tpu.memory_space<vmem>>, %arg4: memref<1x16xf32, #tpu.memory_space<vmem>>, %arg5: memref<144x32xf32, #tpu.memory_space<vmem>>, %arg6: memref<1x32xf32, #tpu.memory_space<vmem>>, %arg7: memref<8x16xf32, #tpu.memory_space<vmem>>, %arg8: memref<1x16xf32, #tpu.memory_space<vmem>>, %arg9: memref<16x16xf32, #tpu.memory_space<vmem>>, %arg10: memref<1x16xf32, #tpu.memory_space<vmem>>, %arg11: memref<32x16xf32, #tpu.memory_space<vmem>>, %arg12: memref<1x16xf32, #tpu.memory_space<vmem>>, %arg13: memref<144x16xf32, #tpu.memory_space<vmem>>, %arg14: memref<1x16xf32, #tpu.memory_space<vmem>>, %arg15: memref<144x16xf32, #tpu.memory_space<vmem>>, %arg16: memref<1x16xf32, #tpu.memory_space<vmem>>, %arg17: memref<144x16xf32, #tpu.memory_space<vmem>>, %arg18: memref<1x16xf32, #tpu.memory_space<vmem>>, %arg19: memref<8x16xf32, #tpu.memory_space<vmem>>, %arg20: memref<32x16xf32, #tpu.memory_space<vmem>>, %arg21: memref<128x16xf32, #tpu.memory_space<vmem>>, %arg22: memref<2x18x18x4xf32, #tpu.memory_space<vmem>>, %arg23: memref<128x36xf32, #tpu.memory_space<vmem>>, %arg24: memref<2x10x10x8xf32, #tpu.memory_space<vmem>>, %arg25: memref<32x72xf32, #tpu.memory_space<vmem>>, %arg26: memref<2x6x6x16xf32, #tpu.memory_space<vmem>>, %arg27: memref<8x144xf32, #tpu.memory_space<vmem>>, %arg28: memref<2x4x4x16xf32, #tpu.memory_space<vmem>>, %arg29: memref<8x144xf32, #tpu.memory_space<vmem>>, %arg30: memref<2x6x6x16xf32, #tpu.memory_space<vmem>>, %arg31: memref<32x144xf32, #tpu.memory_space<vmem>>, %arg32: memref<2x10x10x16xf32, #tpu.memory_space<vmem>>, %arg33: memref<128x144xf32, #tpu.memory_space<vmem>>, %arg34: memref<2x4x4x16xf32, #tpu.memory_space<vmem>>, %arg35: memref<2x8x8x16xf32, #tpu.memory_space<vmem>>) attributes {dimension_semantics = [], scalar_prefetch = 0 : i64, scratch_operands = 14 : i64, tpu.core_type = #tpu.core_type<tc>} {
    %c0 = arith.constant 0 : index
    %c0_0 = arith.constant 0 : index
    %c0_1 = arith.constant 0 : index
    %c0_2 = arith.constant 0 : index
    %0 = vector.load %arg0[%c0, %c0_0, %c0_1, %c0_2] : memref<2x16x16x4xf32, #tpu.memory_space<vmem>>, vector<2x16x16x4xf32>
    %cst = arith.constant 0.000000e+00 : f32
    %1 = vector.broadcast %cst : f32 to vector<2x18x18x4xf32>
    %c0_3 = arith.constant 0 : index
    %c0_4 = arith.constant 0 : index
    %c0_5 = arith.constant 0 : index
    %c0_6 = arith.constant 0 : index
    %2 = vector.load %arg22[%c0_3, %c0_4, %c0_5, %c0_6] : memref<2x18x18x4xf32, #tpu.memory_space<vmem>>, vector<2x18x18x4xf32>
    tpu.vector_store %arg22[%c0_3, %c0_4, %c0_5, %c0_6], %1 {strides = array<i32>} : memref<2x18x18x4xf32, #tpu.memory_space<vmem>>, vector<2x18x18x4xf32>,
    %c0_7 = arith.constant 0 : index
    %c1 = arith.constant 1 : index
    %c1_8 = arith.constant 1 : index
    %c0_9 = arith.constant 0 : index
    %3 = vector.load %arg22[%c0_7, %c1, %c1_8, %c0_9] : memref<2x18x18x4xf32, #tpu.memory_space<vmem>>, vector<2x16x16x4xf32>
    tpu.vector_store %arg22[%c0_7, %c1, %c1_8, %c0_9], %0 {strides = array<i32>} : memref<2x18x18x4xf32, #tpu.memory_space<vmem>>, vector<2x16x16x4xf32>,
    %c0_10 = arith.constant 0 : index
    %c0_11 = arith.constant 0 : index
    %c0_12 = arith.constant 0 : index
    %c0_13 = arith.constant 0 : index
    %4 = tpu.strided_load %arg22[%c0_10, %c0_11, %c0_12, %c0_13] {strides = array<i32: 1, 1, 2, 1>} : memref<2x18x18x4xf32, #tpu.memory_space<vmem>>, vector<2x16x8x4xf32>
    %5 = vector.shape_cast %4 : vector<2x16x8x4xf32> to vector<2x8x2x8x4xf32>
    %6 = vector.extract_strided_slice %5 {offsets = [0, 0, 0, 0, 0], sizes = [2, 8, 1, 8, 4], strides = [1, 1, 1, 1, 1]} : vector<2x8x2x8x4xf32> to vector<2x8x1x8x4xf32>
    %7 = vector.shape_cast %6 : vector<2x8x1x8x4xf32> to vector<2x8x8x4xf32>
    %8 = vector.shape_cast %7 : vector<2x8x8x4xf32> to vector<128x4xf32>
    %c0_14 = arith.constant 0 : index
    %c0_15 = arith.constant 0 : index
    %9 = vector.load %arg23[%c0_14, %c0_15] : memref<128x36xf32, #tpu.memory_space<vmem>>, vector<128x4xf32>
    tpu.vector_store %arg23[%c0_14, %c0_15], %8 {strides = array<i32>} : memref<128x36xf32, #tpu.memory_space<vmem>>, vector<128x4xf32>,
    %c0_16 = arith.constant 0 : index
    %c0_17 = arith.constant 0 : index
    %c1_18 = arith.constant 1 : index
    %c0_19 = arith.constant 0 : index
    %10 = tpu.strided_load %arg22[%c0_16, %c0_17, %c1_18, %c0_19] {strides = array<i32: 1, 1, 2, 1>} : memref<2x18x18x4xf32, #tpu.memory_space<vmem>>, vector<2x16x8x4xf32>
    %11 = vector.shape_cast %10 : vector<2x16x8x4xf32> to vector<2x8x2x8x4xf32>
    %12 = vector.extract_strided_slice %11 {offsets = [0, 0, 0, 0, 0], sizes = [2, 8, 1, 8, 4], strides = [1, 1, 1, 1, 1]} : vector<2x8x2x8x4xf32> to vector<2x8x1x8x4xf32>
    %13 = vector.shape_cast %12 : vector<2x8x1x8x4xf32> to vector<2x8x8x4xf32>
    %14 = vector.shape_cast %13 : vector<2x8x8x4xf32> to vector<128x4xf32>
    %c0_20 = arith.constant 0 : index
    %c4 = arith.constant 4 : index
    %15 = vector.load %arg23[%c0_20, %c4] : memref<128x36xf32, #tpu.memory_space<vmem>>, vector<128x4xf32>
    tpu.vector_store %arg23[%c0_20, %c4], %14 {strides = array<i32>} : memref<128x36xf32, #tpu.memory_space<vmem>>, vector<128x4xf32>,
    %c0_21 = arith.constant 0 : index
    %c0_22 = arith.constant 0 : index
    %c2 = arith.constant 2 : index
    %c0_23 = arith.constant 0 : index
    %16 = tpu.strided_load %arg22[%c0_21, %c0_22, %c2, %c0_23] {strides = array<i32: 1, 1, 2, 1>} : memref<2x18x18x4xf32, #tpu.memory_space<vmem>>, vector<2x16x8x4xf32>
    %17 = vector.shape_cast %16 : vector<2x16x8x4xf32> to vector<2x8x2x8x4xf32>
    %18 = vector.extract_strided_slice %17 {offsets = [0, 0, 0, 0, 0], sizes = [2, 8, 1, 8, 4], strides = [1, 1, 1, 1, 1]} : vector<2x8x2x8x4xf32> to vector<2x8x1x8x4xf32>
    %19 = vector.shape_cast %18 : vector<2x8x1x8x4xf32> to vector<2x8x8x4xf32>
    %20 = vector.shape_cast %19 : vector<2x8x8x4xf32> to vector<128x4xf32>
    %c0_24 = arith.constant 0 : index
    %c8 = arith.constant 8 : index
    %21 = vector.load %arg23[%c0_24, %c8] : memref<128x36xf32, #tpu.memory_space<vmem>>, vector<128x4xf32>
    tpu.vector_store %arg23[%c0_24, %c8], %20 {strides = array<i32>} : memref<128x36xf32, #tpu.memory_space<vmem>>, vector<128x4xf32>,
    %c0_25 = arith.constant 0 : index
    %c1_26 = arith.constant 1 : index
    %c0_27 = arith.constant 0 : index
    %c0_28 = arith.constant 0 : index
    %22 = tpu.strided_load %arg22[%c0_25, %c1_26, %c0_27, %c0_28] {strides = array<i32: 1, 1, 2, 1>} : memref<2x18x18x4xf32, #tpu.memory_space<vmem>>, vector<2x16x8x4xf32>
    %23 = vector.shape_cast %22 : vector<2x16x8x4xf32> to vector<2x8x2x8x4xf32>
    %24 = vector.extract_strided_slice %23 {offsets = [0, 0, 0, 0, 0], sizes = [2, 8, 1, 8, 4], strides = [1, 1, 1, 1, 1]} : vector<2x8x2x8x4xf32> to vector<2x8x1x8x4xf32>
    %25 = vector.shape_cast %24 : vector<2x8x1x8x4xf32> to vector<2x8x8x4xf32>
    %26 = vector.shape_cast %25 : vector<2x8x8x4xf32> to vector<128x4xf32>
    %c0_29 = arith.constant 0 : index
    %c12 = arith.constant 12 : index
    %27 = vector.load %arg23[%c0_29, %c12] : memref<128x36xf32, #tpu.memory_space<vmem>>, vector<128x4xf32>
    tpu.vector_store %arg23[%c0_29, %c12], %26 {strides = array<i32>} : memref<128x36xf32, #tpu.memory_space<vmem>>, vector<128x4xf32>,
    %c0_30 = arith.constant 0 : index
    %c1_31 = arith.constant 1 : index
    %c1_32 = arith.constant 1 : index
    %c0_33 = arith.constant 0 : index
    %28 = tpu.strided_load %arg22[%c0_30, %c1_31, %c1_32, %c0_33] {strides = array<i32: 1, 1, 2, 1>} : memref<2x18x18x4xf32, #tpu.memory_space<vmem>>, vector<2x16x8x4xf32>
    %29 = vector.shape_cast %28 : vector<2x16x8x4xf32> to vector<2x8x2x8x4xf32>
    %30 = vector.extract_strided_slice %29 {offsets = [0, 0, 0, 0, 0], sizes = [2, 8, 1, 8, 4], strides = [1, 1, 1, 1, 1]} : vector<2x8x2x8x4xf32> to vector<2x8x1x8x4xf32>
    %31 = vector.shape_cast %30 : vector<2x8x1x8x4xf32> to vector<2x8x8x4xf32>
    %32 = vector.shape_cast %31 : vector<2x8x8x4xf32> to vector<128x4xf32>
    %c0_34 = arith.constant 0 : index
    %c16 = arith.constant 16 : index
    %33 = vector.load %arg23[%c0_34, %c16] : memref<128x36xf32, #tpu.memory_space<vmem>>, vector<128x4xf32>
    tpu.vector_store %arg23[%c0_34, %c16], %32 {strides = array<i32>} : memref<128x36xf32, #tpu.memory_space<vmem>>, vector<128x4xf32>,
    %c0_35 = arith.constant 0 : index
    %c1_36 = arith.constant 1 : index
    %c2_37 = arith.constant 2 : index
    %c0_38 = arith.constant 0 : index
    %34 = tpu.strided_load %arg22[%c0_35, %c1_36, %c2_37, %c0_38] {strides = array<i32: 1, 1, 2, 1>} : memref<2x18x18x4xf32, #tpu.memory_space<vmem>>, vector<2x16x8x4xf32>
    %35 = vector.shape_cast %34 : vector<2x16x8x4xf32> to vector<2x8x2x8x4xf32>
    %36 = vector.extract_strided_slice %35 {offsets = [0, 0, 0, 0, 0], sizes = [2, 8, 1, 8, 4], strides = [1, 1, 1, 1, 1]} : vector<2x8x2x8x4xf32> to vector<2x8x1x8x4xf32>
    %37 = vector.shape_cast %36 : vector<2x8x1x8x4xf32> to vector<2x8x8x4xf32>
    %38 = vector.shape_cast %37 : vector<2x8x8x4xf32> to vector<128x4xf32>
    %c0_39 = arith.constant 0 : index
    %c20 = arith.constant 20 : index
    %39 = vector.load %arg23[%c0_39, %c20] : memref<128x36xf32, #tpu.memory_space<vmem>>, vector<128x4xf32>
    tpu.vector_store %arg23[%c0_39, %c20], %38 {strides = array<i32>} : memref<128x36xf32, #tpu.memory_space<vmem>>, vector<128x4xf32>,
    %c0_40 = arith.constant 0 : index
    %c2_41 = arith.constant 2 : index
    %c0_42 = arith.constant 0 : index
    %c0_43 = arith.constant 0 : index
    %40 = tpu.strided_load %arg22[%c0_40, %c2_41, %c0_42, %c0_43] {strides = array<i32: 1, 1, 2, 1>} : memref<2x18x18x4xf32, #tpu.memory_space<vmem>>, vector<2x16x8x4xf32>
    %41 = vector.shape_cast %40 : vector<2x16x8x4xf32> to vector<2x8x2x8x4xf32>
    %42 = vector.extract_strided_slice %41 {offsets = [0, 0, 0, 0, 0], sizes = [2, 8, 1, 8, 4], strides = [1, 1, 1, 1, 1]} : vector<2x8x2x8x4xf32> to vector<2x8x1x8x4xf32>
    %43 = vector.shape_cast %42 : vector<2x8x1x8x4xf32> to vector<2x8x8x4xf32>
    %44 = vector.shape_cast %43 : vector<2x8x8x4xf32> to vector<128x4xf32>
    %c0_44 = arith.constant 0 : index
    %c24 = arith.constant 24 : index
    %45 = vector.load %arg23[%c0_44, %c24] : memref<128x36xf32, #tpu.memory_space<vmem>>, vector<128x4xf32>
    tpu.vector_store %arg23[%c0_44, %c24], %44 {strides = array<i32>} : memref<128x36xf32, #tpu.memory_space<vmem>>, vector<128x4xf32>,
    %c0_45 = arith.constant 0 : index
    %c2_46 = arith.constant 2 : index
    %c1_47 = arith.constant 1 : index
    %c0_48 = arith.constant 0 : index
    %46 = tpu.strided_load %arg22[%c0_45, %c2_46, %c1_47, %c0_48] {strides = array<i32: 1, 1, 2, 1>} : memref<2x18x18x4xf32, #tpu.memory_space<vmem>>, vector<2x16x8x4xf32>
    %47 = vector.shape_cast %46 : vector<2x16x8x4xf32> to vector<2x8x2x8x4xf32>
    %48 = vector.extract_strided_slice %47 {offsets = [0, 0, 0, 0, 0], sizes = [2, 8, 1, 8, 4], strides = [1, 1, 1, 1, 1]} : vector<2x8x2x8x4xf32> to vector<2x8x1x8x4xf32>
    %49 = vector.shape_cast %48 : vector<2x8x1x8x4xf32> to vector<2x8x8x4xf32>
    %50 = vector.shape_cast %49 : vector<2x8x8x4xf32> to vector<128x4xf32>
    %c0_49 = arith.constant 0 : index
    %c28 = arith.constant 28 : index
    %51 = vector.load %arg23[%c0_49, %c28] : memref<128x36xf32, #tpu.memory_space<vmem>>, vector<128x4xf32>
    tpu.vector_store %arg23[%c0_49, %c28], %50 {strides = array<i32>} : memref<128x36xf32, #tpu.memory_space<vmem>>, vector<128x4xf32>,
    %c0_50 = arith.constant 0 : index
    %c2_51 = arith.constant 2 : index
    %c2_52 = arith.constant 2 : index
    %c0_53 = arith.constant 0 : index
    %52 = tpu.strided_load %arg22[%c0_50, %c2_51, %c2_52, %c0_53] {strides = array<i32: 1, 1, 2, 1>} : memref<2x18x18x4xf32, #tpu.memory_space<vmem>>, vector<2x16x8x4xf32>
    %53 = vector.shape_cast %52 : vector<2x16x8x4xf32> to vector<2x8x2x8x4xf32>
    %54 = vector.extract_strided_slice %53 {offsets = [0, 0, 0, 0, 0], sizes = [2, 8, 1, 8, 4], strides = [1, 1, 1, 1, 1]} : vector<2x8x2x8x4xf32> to vector<2x8x1x8x4xf32>
    %55 = vector.shape_cast %54 : vector<2x8x1x8x4xf32> to vector<2x8x8x4xf32>
    %56 = vector.shape_cast %55 : vector<2x8x8x4xf32> to vector<128x4xf32>
    %c0_54 = arith.constant 0 : index
    %c32 = arith.constant 32 : index
    %57 = vector.load %arg23[%c0_54, %c32] : memref<128x36xf32, #tpu.memory_space<vmem>>, vector<128x4xf32>
    tpu.vector_store %arg23[%c0_54, %c32], %56 {strides = array<i32>} : memref<128x36xf32, #tpu.memory_space<vmem>>, vector<128x4xf32>,
    %c0_55 = arith.constant 0 : index
    %c0_56 = arith.constant 0 : index
    %58 = vector.load %arg23[%c0_55, %c0_56] : memref<128x36xf32, #tpu.memory_space<vmem>>, vector<128x36xf32>
    %c0_57 = arith.constant 0 : index
    %c0_58 = arith.constant 0 : index
    %59 = vector.load %arg1[%c0_57, %c0_58] : memref<36x8xf32, #tpu.memory_space<vmem>>, vector<36x8xf32>
    %cst_59 = arith.constant dense<0.000000e+00> : vector<128x8xf32>
    %60 = tpu.matmul %58, %59, %cst_59 {dimension_numbers = #tpu.dot_dimension_numbers<[1], [0], [0], [1], [0, 0, 1, 1], [], []>} : vector<128x36xf32>, vector<36x8xf32>, vector<128x8xf32> -> vector<128x8xf32>
    %c0_60 = arith.constant 0 : index
    %c0_61 = arith.constant 0 : index
    %61 = vector.load %arg2[%c0_60, %c0_61] : memref<1x8xf32, #tpu.memory_space<vmem>>, vector<1x8xf32>
    %62 = vector.broadcast %61 : vector<1x8xf32> to vector<128x8xf32>
    %63 = arith.addf %60, %62 : vector<128x8xf32>
    %cst_62 = arith.constant 0.000000e+00 : f32
    %64 = vector.broadcast %cst_62 : f32 to vector<128x8xf32>
    %65 = arith.maximumf %63, %64 : vector<128x8xf32>
    %66 = vector.shape_cast %65 : vector<128x8xf32> to vector<2x8x8x8xf32>
    %cst_63 = arith.constant 0.000000e+00 : f32
    %67 = vector.broadcast %cst_63 : f32 to vector<2x10x10x8xf32>
    %c0_64 = arith.constant 0 : index
    %c0_65 = arith.constant 0 : index
    %c0_66 = arith.constant 0 : index
    %c0_67 = arith.constant 0 : index
    %68 = vector.load %arg24[%c0_64, %c0_65, %c0_66, %c0_67] : memref<2x10x10x8xf32, #tpu.memory_space<vmem>>, vector<2x10x10x8xf32>
    tpu.vector_store %arg24[%c0_64, %c0_65, %c0_66, %c0_67], %67 {strides = array<i32>} : memref<2x10x10x8xf32, #tpu.memory_space<vmem>>, vector<2x10x10x8xf32>,
    %c0_68 = arith.constant 0 : index
    %c1_69 = arith.constant 1 : index
    %c1_70 = arith.constant 1 : index
    %c0_71 = arith.constant 0 : index
    %69 = vector.load %arg24[%c0_68, %c1_69, %c1_70, %c0_71] : memref<2x10x10x8xf32, #tpu.memory_space<vmem>>, vector<2x8x8x8xf32>
    tpu.vector_store %arg24[%c0_68, %c1_69, %c1_70, %c0_71], %66 {strides = array<i32>} : memref<2x10x10x8xf32, #tpu.memory_space<vmem>>, vector<2x8x8x8xf32>,
    %c0_72 = arith.constant 0 : index
    %c0_73 = arith.constant 0 : index
    %c0_74 = arith.constant 0 : index
    %c0_75 = arith.constant 0 : index
    %70 = tpu.strided_load %arg24[%c0_72, %c0_73, %c0_74, %c0_75] {strides = array<i32: 1, 1, 2, 1>} : memref<2x10x10x8xf32, #tpu.memory_space<vmem>>, vector<2x8x4x8xf32>
    %71 = vector.shape_cast %70 : vector<2x8x4x8xf32> to vector<2x4x2x4x8xf32>
    %72 = vector.extract_strided_slice %71 {offsets = [0, 0, 0, 0, 0], sizes = [2, 4, 1, 4, 8], strides = [1, 1, 1, 1, 1]} : vector<2x4x2x4x8xf32> to vector<2x4x1x4x8xf32>
    %73 = vector.shape_cast %72 : vector<2x4x1x4x8xf32> to vector<2x4x4x8xf32>
    %74 = vector.shape_cast %73 : vector<2x4x4x8xf32> to vector<32x8xf32>
    %c0_76 = arith.constant 0 : index
    %c0_77 = arith.constant 0 : index
    %75 = vector.load %arg25[%c0_76, %c0_77] : memref<32x72xf32, #tpu.memory_space<vmem>>, vector<32x8xf32>
    tpu.vector_store %arg25[%c0_76, %c0_77], %74 {strides = array<i32>} : memref<32x72xf32, #tpu.memory_space<vmem>>, vector<32x8xf32>,
    %c0_78 = arith.constant 0 : index
    %c0_79 = arith.constant 0 : index
    %c1_80 = arith.constant 1 : index
    %c0_81 = arith.constant 0 : index
    %76 = tpu.strided_load %arg24[%c0_78, %c0_79, %c1_80, %c0_81] {strides = array<i32: 1, 1, 2, 1>} : memref<2x10x10x8xf32, #tpu.memory_space<vmem>>, vector<2x8x4x8xf32>
    %77 = vector.shape_cast %76 : vector<2x8x4x8xf32> to vector<2x4x2x4x8xf32>
    %78 = vector.extract_strided_slice %77 {offsets = [0, 0, 0, 0, 0], sizes = [2, 4, 1, 4, 8], strides = [1, 1, 1, 1, 1]} : vector<2x4x2x4x8xf32> to vector<2x4x1x4x8xf32>
    %79 = vector.shape_cast %78 : vector<2x4x1x4x8xf32> to vector<2x4x4x8xf32>
    %80 = vector.shape_cast %79 : vector<2x4x4x8xf32> to vector<32x8xf32>
    %c0_82 = arith.constant 0 : index
    %c8_83 = arith.constant 8 : index
    %81 = vector.load %arg25[%c0_82, %c8_83] : memref<32x72xf32, #tpu.memory_space<vmem>>, vector<32x8xf32>
    tpu.vector_store %arg25[%c0_82, %c8_83], %80 {strides = array<i32>} : memref<32x72xf32, #tpu.memory_space<vmem>>, vector<32x8xf32>,
    %c0_84 = arith.constant 0 : index
    %c0_85 = arith.constant 0 : index
    %c2_86 = arith.constant 2 : index
    %c0_87 = arith.constant 0 : index
    %82 = tpu.strided_load %arg24[%c0_84, %c0_85, %c2_86, %c0_87] {strides = array<i32: 1, 1, 2, 1>} : memref<2x10x10x8xf32, #tpu.memory_space<vmem>>, vector<2x8x4x8xf32>
    %83 = vector.shape_cast %82 : vector<2x8x4x8xf32> to vector<2x4x2x4x8xf32>
    %84 = vector.extract_strided_slice %83 {offsets = [0, 0, 0, 0, 0], sizes = [2, 4, 1, 4, 8], strides = [1, 1, 1, 1, 1]} : vector<2x4x2x4x8xf32> to vector<2x4x1x4x8xf32>
    %85 = vector.shape_cast %84 : vector<2x4x1x4x8xf32> to vector<2x4x4x8xf32>
    %86 = vector.shape_cast %85 : vector<2x4x4x8xf32> to vector<32x8xf32>
    %c0_88 = arith.constant 0 : index
    %c16_89 = arith.constant 16 : index
    %87 = vector.load %arg25[%c0_88, %c16_89] : memref<32x72xf32, #tpu.memory_space<vmem>>, vector<32x8xf32>
    tpu.vector_store %arg25[%c0_88, %c16_89], %86 {strides = array<i32>} : memref<32x72xf32, #tpu.memory_space<vmem>>, vector<32x8xf32>,
    %c0_90 = arith.constant 0 : index
    %c1_91 = arith.constant 1 : index
    %c0_92 = arith.constant 0 : index
    %c0_93 = arith.constant 0 : index
    %88 = tpu.strided_load %arg24[%c0_90, %c1_91, %c0_92, %c0_93] {strides = array<i32: 1, 1, 2, 1>} : memref<2x10x10x8xf32, #tpu.memory_space<vmem>>, vector<2x8x4x8xf32>
    %89 = vector.shape_cast %88 : vector<2x8x4x8xf32> to vector<2x4x2x4x8xf32>
    %90 = vector.extract_strided_slice %89 {offsets = [0, 0, 0, 0, 0], sizes = [2, 4, 1, 4, 8], strides = [1, 1, 1, 1, 1]} : vector<2x4x2x4x8xf32> to vector<2x4x1x4x8xf32>
    %91 = vector.shape_cast %90 : vector<2x4x1x4x8xf32> to vector<2x4x4x8xf32>
    %92 = vector.shape_cast %91 : vector<2x4x4x8xf32> to vector<32x8xf32>
    %c0_94 = arith.constant 0 : index
    %c24_95 = arith.constant 24 : index
    %93 = vector.load %arg25[%c0_94, %c24_95] : memref<32x72xf32, #tpu.memory_space<vmem>>, vector<32x8xf32>
    tpu.vector_store %arg25[%c0_94, %c24_95], %92 {strides = array<i32>} : memref<32x72xf32, #tpu.memory_space<vmem>>, vector<32x8xf32>,
    %c0_96 = arith.constant 0 : index
    %c1_97 = arith.constant 1 : index
    %c1_98 = arith.constant 1 : index
    %c0_99 = arith.constant 0 : index
    %94 = tpu.strided_load %arg24[%c0_96, %c1_97, %c1_98, %c0_99] {strides = array<i32: 1, 1, 2, 1>} : memref<2x10x10x8xf32, #tpu.memory_space<vmem>>, vector<2x8x4x8xf32>
    %95 = vector.shape_cast %94 : vector<2x8x4x8xf32> to vector<2x4x2x4x8xf32>
    %96 = vector.extract_strided_slice %95 {offsets = [0, 0, 0, 0, 0], sizes = [2, 4, 1, 4, 8], strides = [1, 1, 1, 1, 1]} : vector<2x4x2x4x8xf32> to vector<2x4x1x4x8xf32>
    %97 = vector.shape_cast %96 : vector<2x4x1x4x8xf32> to vector<2x4x4x8xf32>
    %98 = vector.shape_cast %97 : vector<2x4x4x8xf32> to vector<32x8xf32>
    %c0_100 = arith.constant 0 : index
    %c32_101 = arith.constant 32 : index
    %99 = vector.load %arg25[%c0_100, %c32_101] : memref<32x72xf32, #tpu.memory_space<vmem>>, vector<32x8xf32>
    tpu.vector_store %arg25[%c0_100, %c32_101], %98 {strides = array<i32>} : memref<32x72xf32, #tpu.memory_space<vmem>>, vector<32x8xf32>,
    %c0_102 = arith.constant 0 : index
    %c1_103 = arith.constant 1 : index
    %c2_104 = arith.constant 2 : index
    %c0_105 = arith.constant 0 : index
    %100 = tpu.strided_load %arg24[%c0_102, %c1_103, %c2_104, %c0_105] {strides = array<i32: 1, 1, 2, 1>} : memref<2x10x10x8xf32, #tpu.memory_space<vmem>>, vector<2x8x4x8xf32>
    %101 = vector.shape_cast %100 : vector<2x8x4x8xf32> to vector<2x4x2x4x8xf32>
    %102 = vector.extract_strided_slice %101 {offsets = [0, 0, 0, 0, 0], sizes = [2, 4, 1, 4, 8], strides = [1, 1, 1, 1, 1]} : vector<2x4x2x4x8xf32> to vector<2x4x1x4x8xf32>
    %103 = vector.shape_cast %102 : vector<2x4x1x4x8xf32> to vector<2x4x4x8xf32>
    %104 = vector.shape_cast %103 : vector<2x4x4x8xf32> to vector<32x8xf32>
    %c0_106 = arith.constant 0 : index
    %c40 = arith.constant 40 : index
    %105 = vector.load %arg25[%c0_106, %c40] : memref<32x72xf32, #tpu.memory_space<vmem>>, vector<32x8xf32>
    tpu.vector_store %arg25[%c0_106, %c40], %104 {strides = array<i32>} : memref<32x72xf32, #tpu.memory_space<vmem>>, vector<32x8xf32>,
    %c0_107 = arith.constant 0 : index
    %c2_108 = arith.constant 2 : index
    %c0_109 = arith.constant 0 : index
    %c0_110 = arith.constant 0 : index
    %106 = tpu.strided_load %arg24[%c0_107, %c2_108, %c0_109, %c0_110] {strides = array<i32: 1, 1, 2, 1>} : memref<2x10x10x8xf32, #tpu.memory_space<vmem>>, vector<2x8x4x8xf32>
    %107 = vector.shape_cast %106 : vector<2x8x4x8xf32> to vector<2x4x2x4x8xf32>
    %108 = vector.extract_strided_slice %107 {offsets = [0, 0, 0, 0, 0], sizes = [2, 4, 1, 4, 8], strides = [1, 1, 1, 1, 1]} : vector<2x4x2x4x8xf32> to vector<2x4x1x4x8xf32>
    %109 = vector.shape_cast %108 : vector<2x4x1x4x8xf32> to vector<2x4x4x8xf32>
    %110 = vector.shape_cast %109 : vector<2x4x4x8xf32> to vector<32x8xf32>
    %c0_111 = arith.constant 0 : index
    %c48 = arith.constant 48 : index
    %111 = vector.load %arg25[%c0_111, %c48] : memref<32x72xf32, #tpu.memory_space<vmem>>, vector<32x8xf32>
    tpu.vector_store %arg25[%c0_111, %c48], %110 {strides = array<i32>} : memref<32x72xf32, #tpu.memory_space<vmem>>, vector<32x8xf32>,
    %c0_112 = arith.constant 0 : index
    %c2_113 = arith.constant 2 : index
    %c1_114 = arith.constant 1 : index
    %c0_115 = arith.constant 0 : index
    %112 = tpu.strided_load %arg24[%c0_112, %c2_113, %c1_114, %c0_115] {strides = array<i32: 1, 1, 2, 1>} : memref<2x10x10x8xf32, #tpu.memory_space<vmem>>, vector<2x8x4x8xf32>
    %113 = vector.shape_cast %112 : vector<2x8x4x8xf32> to vector<2x4x2x4x8xf32>
    %114 = vector.extract_strided_slice %113 {offsets = [0, 0, 0, 0, 0], sizes = [2, 4, 1, 4, 8], strides = [1, 1, 1, 1, 1]} : vector<2x4x2x4x8xf32> to vector<2x4x1x4x8xf32>
    %115 = vector.shape_cast %114 : vector<2x4x1x4x8xf32> to vector<2x4x4x8xf32>
    %116 = vector.shape_cast %115 : vector<2x4x4x8xf32> to vector<32x8xf32>
    %c0_116 = arith.constant 0 : index
    %c56 = arith.constant 56 : index
    %117 = vector.load %arg25[%c0_116, %c56] : memref<32x72xf32, #tpu.memory_space<vmem>>, vector<32x8xf32>
    tpu.vector_store %arg25[%c0_116, %c56], %116 {strides = array<i32>} : memref<32x72xf32, #tpu.memory_space<vmem>>, vector<32x8xf32>,
    %c0_117 = arith.constant 0 : index
    %c2_118 = arith.constant 2 : index
    %c2_119 = arith.constant 2 : index
    %c0_120 = arith.constant 0 : index
    %118 = tpu.strided_load %arg24[%c0_117, %c2_118, %c2_119, %c0_120] {strides = array<i32: 1, 1, 2, 1>} : memref<2x10x10x8xf32, #tpu.memory_space<vmem>>, vector<2x8x4x8xf32>
    %119 = vector.shape_cast %118 : vector<2x8x4x8xf32> to vector<2x4x2x4x8xf32>
    %120 = vector.extract_strided_slice %119 {offsets = [0, 0, 0, 0, 0], sizes = [2, 4, 1, 4, 8], strides = [1, 1, 1, 1, 1]} : vector<2x4x2x4x8xf32> to vector<2x4x1x4x8xf32>
    %121 = vector.shape_cast %120 : vector<2x4x1x4x8xf32> to vector<2x4x4x8xf32>
    %122 = vector.shape_cast %121 : vector<2x4x4x8xf32> to vector<32x8xf32>
    %c0_121 = arith.constant 0 : index
    %c64 = arith.constant 64 : index
    %123 = vector.load %arg25[%c0_121, %c64] : memref<32x72xf32, #tpu.memory_space<vmem>>, vector<32x8xf32>
    tpu.vector_store %arg25[%c0_121, %c64], %122 {strides = array<i32>} : memref<32x72xf32, #tpu.memory_space<vmem>>, vector<32x8xf32>,
    %c0_122 = arith.constant 0 : index
    %c0_123 = arith.constant 0 : index
    %124 = vector.load %arg25[%c0_122, %c0_123] : memref<32x72xf32, #tpu.memory_space<vmem>>, vector<32x72xf32>
    %c0_124 = arith.constant 0 : index
    %c0_125 = arith.constant 0 : index
    %125 = vector.load %arg3[%c0_124, %c0_125] : memref<72x16xf32, #tpu.memory_space<vmem>>, vector<72x16xf32>
    %cst_126 = arith.constant dense<0.000000e+00> : vector<32x16xf32>
    %126 = tpu.matmul %124, %125, %cst_126 {dimension_numbers = #tpu.dot_dimension_numbers<[1], [0], [0], [1], [0, 0, 1, 1], [], []>} : vector<32x72xf32>, vector<72x16xf32>, vector<32x16xf32> -> vector<32x16xf32>
    %c0_127 = arith.constant 0 : index
    %c0_128 = arith.constant 0 : index
    %127 = vector.load %arg4[%c0_127, %c0_128] : memref<1x16xf32, #tpu.memory_space<vmem>>, vector<1x16xf32>
    %128 = vector.broadcast %127 : vector<1x16xf32> to vector<32x16xf32>
    %129 = arith.addf %126, %128 : vector<32x16xf32>
    %cst_129 = arith.constant 0.000000e+00 : f32
    %130 = vector.broadcast %cst_129 : f32 to vector<32x16xf32>
    %131 = arith.maximumf %129, %130 : vector<32x16xf32>
    %132 = vector.shape_cast %131 : vector<32x16xf32> to vector<2x4x4x16xf32>
    %cst_130 = arith.constant 0.000000e+00 : f32
    %133 = vector.broadcast %cst_130 : f32 to vector<2x6x6x16xf32>
    %c0_131 = arith.constant 0 : index
    %c0_132 = arith.constant 0 : index
    %c0_133 = arith.constant 0 : index
    %c0_134 = arith.constant 0 : index
    %134 = vector.load %arg26[%c0_131, %c0_132, %c0_133, %c0_134] : memref<2x6x6x16xf32, #tpu.memory_space<vmem>>, vector<2x6x6x16xf32>
    tpu.vector_store %arg26[%c0_131, %c0_132, %c0_133, %c0_134], %133 {strides = array<i32>} : memref<2x6x6x16xf32, #tpu.memory_space<vmem>>, vector<2x6x6x16xf32>,
    %c0_135 = arith.constant 0 : index
    %c1_136 = arith.constant 1 : index
    %c1_137 = arith.constant 1 : index
    %c0_138 = arith.constant 0 : index
    %135 = vector.load %arg26[%c0_135, %c1_136, %c1_137, %c0_138] : memref<2x6x6x16xf32, #tpu.memory_space<vmem>>, vector<2x4x4x16xf32>
    tpu.vector_store %arg26[%c0_135, %c1_136, %c1_137, %c0_138], %132 {strides = array<i32>} : memref<2x6x6x16xf32, #tpu.memory_space<vmem>>, vector<2x4x4x16xf32>,
    %c0_139 = arith.constant 0 : index
    %c0_140 = arith.constant 0 : index
    %c0_141 = arith.constant 0 : index
    %c0_142 = arith.constant 0 : index
    %136 = tpu.strided_load %arg26[%c0_139, %c0_140, %c0_141, %c0_142] {strides = array<i32: 1, 1, 2, 1>} : memref<2x6x6x16xf32, #tpu.memory_space<vmem>>, vector<2x4x2x16xf32>
    %137 = vector.shape_cast %136 : vector<2x4x2x16xf32> to vector<2x2x2x2x16xf32>
    %138 = vector.extract_strided_slice %137 {offsets = [0, 0, 0, 0, 0], sizes = [2, 2, 1, 2, 16], strides = [1, 1, 1, 1, 1]} : vector<2x2x2x2x16xf32> to vector<2x2x1x2x16xf32>
    %139 = vector.shape_cast %138 : vector<2x2x1x2x16xf32> to vector<2x2x2x16xf32>
    %140 = vector.shape_cast %139 : vector<2x2x2x16xf32> to vector<8x16xf32>
    %c0_143 = arith.constant 0 : index
    %c0_144 = arith.constant 0 : index
    %141 = vector.load %arg27[%c0_143, %c0_144] : memref<8x144xf32, #tpu.memory_space<vmem>>, vector<8x16xf32>
    tpu.vector_store %arg27[%c0_143, %c0_144], %140 {strides = array<i32>} : memref<8x144xf32, #tpu.memory_space<vmem>>, vector<8x16xf32>,
    %c0_145 = arith.constant 0 : index
    %c0_146 = arith.constant 0 : index
    %c1_147 = arith.constant 1 : index
    %c0_148 = arith.constant 0 : index
    %142 = tpu.strided_load %arg26[%c0_145, %c0_146, %c1_147, %c0_148] {strides = array<i32: 1, 1, 2, 1>} : memref<2x6x6x16xf32, #tpu.memory_space<vmem>>, vector<2x4x2x16xf32>
    %143 = vector.shape_cast %142 : vector<2x4x2x16xf32> to vector<2x2x2x2x16xf32>
    %144 = vector.extract_strided_slice %143 {offsets = [0, 0, 0, 0, 0], sizes = [2, 2, 1, 2, 16], strides = [1, 1, 1, 1, 1]} : vector<2x2x2x2x16xf32> to vector<2x2x1x2x16xf32>
    %145 = vector.shape_cast %144 : vector<2x2x1x2x16xf32> to vector<2x2x2x16xf32>
    %146 = vector.shape_cast %145 : vector<2x2x2x16xf32> to vector<8x16xf32>
    %c0_149 = arith.constant 0 : index
    %c16_150 = arith.constant 16 : index
    %147 = vector.load %arg27[%c0_149, %c16_150] : memref<8x144xf32, #tpu.memory_space<vmem>>, vector<8x16xf32>
    tpu.vector_store %arg27[%c0_149, %c16_150], %146 {strides = array<i32>} : memref<8x144xf32, #tpu.memory_space<vmem>>, vector<8x16xf32>,
    %c0_151 = arith.constant 0 : index
    %c0_152 = arith.constant 0 : index
    %c2_153 = arith.constant 2 : index
    %c0_154 = arith.constant 0 : index
    %148 = tpu.strided_load %arg26[%c0_151, %c0_152, %c2_153, %c0_154] {strides = array<i32: 1, 1, 2, 1>} : memref<2x6x6x16xf32, #tpu.memory_space<vmem>>, vector<2x4x2x16xf32>
    %149 = vector.shape_cast %148 : vector<2x4x2x16xf32> to vector<2x2x2x2x16xf32>
    %150 = vector.extract_strided_slice %149 {offsets = [0, 0, 0, 0, 0], sizes = [2, 2, 1, 2, 16], strides = [1, 1, 1, 1, 1]} : vector<2x2x2x2x16xf32> to vector<2x2x1x2x16xf32>
    %151 = vector.shape_cast %150 : vector<2x2x1x2x16xf32> to vector<2x2x2x16xf32>
    %152 = vector.shape_cast %151 : vector<2x2x2x16xf32> to vector<8x16xf32>
    %c0_155 = arith.constant 0 : index
    %c32_156 = arith.constant 32 : index
    %153 = vector.load %arg27[%c0_155, %c32_156] : memref<8x144xf32, #tpu.memory_space<vmem>>, vector<8x16xf32>
    tpu.vector_store %arg27[%c0_155, %c32_156], %152 {strides = array<i32>} : memref<8x144xf32, #tpu.memory_space<vmem>>, vector<8x16xf32>,
    %c0_157 = arith.constant 0 : index
    %c1_158 = arith.constant 1 : index
    %c0_159 = arith.constant 0 : index
    %c0_160 = arith.constant 0 : index
    %154 = tpu.strided_load %arg26[%c0_157, %c1_158, %c0_159, %c0_160] {strides = array<i32: 1, 1, 2, 1>} : memref<2x6x6x16xf32, #tpu.memory_space<vmem>>, vector<2x4x2x16xf32>
    %155 = vector.shape_cast %154 : vector<2x4x2x16xf32> to vector<2x2x2x2x16xf32>
    %156 = vector.extract_strided_slice %155 {offsets = [0, 0, 0, 0, 0], sizes = [2, 2, 1, 2, 16], strides = [1, 1, 1, 1, 1]} : vector<2x2x2x2x16xf32> to vector<2x2x1x2x16xf32>
    %157 = vector.shape_cast %156 : vector<2x2x1x2x16xf32> to vector<2x2x2x16xf32>
    %158 = vector.shape_cast %157 : vector<2x2x2x16xf32> to vector<8x16xf32>
    %c0_161 = arith.constant 0 : index
    %c48_162 = arith.constant 48 : index
    %159 = vector.load %arg27[%c0_161, %c48_162] : memref<8x144xf32, #tpu.memory_space<vmem>>, vector<8x16xf32>
    tpu.vector_store %arg27[%c0_161, %c48_162], %158 {strides = array<i32>} : memref<8x144xf32, #tpu.memory_space<vmem>>, vector<8x16xf32>,
    %c0_163 = arith.constant 0 : index
    %c1_164 = arith.constant 1 : index
    %c1_165 = arith.constant 1 : index
    %c0_166 = arith.constant 0 : index
    %160 = tpu.strided_load %arg26[%c0_163, %c1_164, %c1_165, %c0_166] {strides = array<i32: 1, 1, 2, 1>} : memref<2x6x6x16xf32, #tpu.memory_space<vmem>>, vector<2x4x2x16xf32>
    %161 = vector.shape_cast %160 : vector<2x4x2x16xf32> to vector<2x2x2x2x16xf32>
    %162 = vector.extract_strided_slice %161 {offsets = [0, 0, 0, 0, 0], sizes = [2, 2, 1, 2, 16], strides = [1, 1, 1, 1, 1]} : vector<2x2x2x2x16xf32> to vector<2x2x1x2x16xf32>
    %163 = vector.shape_cast %162 : vector<2x2x1x2x16xf32> to vector<2x2x2x16xf32>
    %164 = vector.shape_cast %163 : vector<2x2x2x16xf32> to vector<8x16xf32>
    %c0_167 = arith.constant 0 : index
    %c64_168 = arith.constant 64 : index
    %165 = vector.load %arg27[%c0_167, %c64_168] : memref<8x144xf32, #tpu.memory_space<vmem>>, vector<8x16xf32>
    tpu.vector_store %arg27[%c0_167, %c64_168], %164 {strides = array<i32>} : memref<8x144xf32, #tpu.memory_space<vmem>>, vector<8x16xf32>,
    %c0_169 = arith.constant 0 : index
    %c1_170 = arith.constant 1 : index
    %c2_171 = arith.constant 2 : index
    %c0_172 = arith.constant 0 : index
    %166 = tpu.strided_load %arg26[%c0_169, %c1_170, %c2_171, %c0_172] {strides = array<i32: 1, 1, 2, 1>} : memref<2x6x6x16xf32, #tpu.memory_space<vmem>>, vector<2x4x2x16xf32>
    %167 = vector.shape_cast %166 : vector<2x4x2x16xf32> to vector<2x2x2x2x16xf32>
    %168 = vector.extract_strided_slice %167 {offsets = [0, 0, 0, 0, 0], sizes = [2, 2, 1, 2, 16], strides = [1, 1, 1, 1, 1]} : vector<2x2x2x2x16xf32> to vector<2x2x1x2x16xf32>
    %169 = vector.shape_cast %168 : vector<2x2x1x2x16xf32> to vector<2x2x2x16xf32>
    %170 = vector.shape_cast %169 : vector<2x2x2x16xf32> to vector<8x16xf32>
    %c0_173 = arith.constant 0 : index
    %c80 = arith.constant 80 : index
    %171 = vector.load %arg27[%c0_173, %c80] : memref<8x144xf32, #tpu.memory_space<vmem>>, vector<8x16xf32>
    tpu.vector_store %arg27[%c0_173, %c80], %170 {strides = array<i32>} : memref<8x144xf32, #tpu.memory_space<vmem>>, vector<8x16xf32>,
    %c0_174 = arith.constant 0 : index
    %c2_175 = arith.constant 2 : index
    %c0_176 = arith.constant 0 : index
    %c0_177 = arith.constant 0 : index
    %172 = tpu.strided_load %arg26[%c0_174, %c2_175, %c0_176, %c0_177] {strides = array<i32: 1, 1, 2, 1>} : memref<2x6x6x16xf32, #tpu.memory_space<vmem>>, vector<2x4x2x16xf32>
    %173 = vector.shape_cast %172 : vector<2x4x2x16xf32> to vector<2x2x2x2x16xf32>
    %174 = vector.extract_strided_slice %173 {offsets = [0, 0, 0, 0, 0], sizes = [2, 2, 1, 2, 16], strides = [1, 1, 1, 1, 1]} : vector<2x2x2x2x16xf32> to vector<2x2x1x2x16xf32>
    %175 = vector.shape_cast %174 : vector<2x2x1x2x16xf32> to vector<2x2x2x16xf32>
    %176 = vector.shape_cast %175 : vector<2x2x2x16xf32> to vector<8x16xf32>
    %c0_178 = arith.constant 0 : index
    %c96 = arith.constant 96 : index
    %177 = vector.load %arg27[%c0_178, %c96] : memref<8x144xf32, #tpu.memory_space<vmem>>, vector<8x16xf32>
    tpu.vector_store %arg27[%c0_178, %c96], %176 {strides = array<i32>} : memref<8x144xf32, #tpu.memory_space<vmem>>, vector<8x16xf32>,
    %c0_179 = arith.constant 0 : index
    %c2_180 = arith.constant 2 : index
    %c1_181 = arith.constant 1 : index
    %c0_182 = arith.constant 0 : index
    %178 = tpu.strided_load %arg26[%c0_179, %c2_180, %c1_181, %c0_182] {strides = array<i32: 1, 1, 2, 1>} : memref<2x6x6x16xf32, #tpu.memory_space<vmem>>, vector<2x4x2x16xf32>
    %179 = vector.shape_cast %178 : vector<2x4x2x16xf32> to vector<2x2x2x2x16xf32>
    %180 = vector.extract_strided_slice %179 {offsets = [0, 0, 0, 0, 0], sizes = [2, 2, 1, 2, 16], strides = [1, 1, 1, 1, 1]} : vector<2x2x2x2x16xf32> to vector<2x2x1x2x16xf32>
    %181 = vector.shape_cast %180 : vector<2x2x1x2x16xf32> to vector<2x2x2x16xf32>
    %182 = vector.shape_cast %181 : vector<2x2x2x16xf32> to vector<8x16xf32>
    %c0_183 = arith.constant 0 : index
    %c112 = arith.constant 112 : index
    %183 = vector.load %arg27[%c0_183, %c112] : memref<8x144xf32, #tpu.memory_space<vmem>>, vector<8x16xf32>
    tpu.vector_store %arg27[%c0_183, %c112], %182 {strides = array<i32>} : memref<8x144xf32, #tpu.memory_space<vmem>>, vector<8x16xf32>,
    %c0_184 = arith.constant 0 : index
    %c2_185 = arith.constant 2 : index
    %c2_186 = arith.constant 2 : index
    %c0_187 = arith.constant 0 : index
    %184 = tpu.strided_load %arg26[%c0_184, %c2_185, %c2_186, %c0_187] {strides = array<i32: 1, 1, 2, 1>} : memref<2x6x6x16xf32, #tpu.memory_space<vmem>>, vector<2x4x2x16xf32>
    %185 = vector.shape_cast %184 : vector<2x4x2x16xf32> to vector<2x2x2x2x16xf32>
    %186 = vector.extract_strided_slice %185 {offsets = [0, 0, 0, 0, 0], sizes = [2, 2, 1, 2, 16], strides = [1, 1, 1, 1, 1]} : vector<2x2x2x2x16xf32> to vector<2x2x1x2x16xf32>
    %187 = vector.shape_cast %186 : vector<2x2x1x2x16xf32> to vector<2x2x2x16xf32>
    %188 = vector.shape_cast %187 : vector<2x2x2x16xf32> to vector<8x16xf32>
    %c0_188 = arith.constant 0 : index
    %c128 = arith.constant 128 : index
    %189 = vector.load %arg27[%c0_188, %c128] : memref<8x144xf32, #tpu.memory_space<vmem>>, vector<8x16xf32>
    tpu.vector_store %arg27[%c0_188, %c128], %188 {strides = array<i32>} : memref<8x144xf32, #tpu.memory_space<vmem>>, vector<8x16xf32>,
    %c0_189 = arith.constant 0 : index
    %c0_190 = arith.constant 0 : index
    %190 = vector.load %arg27[%c0_189, %c0_190] : memref<8x144xf32, #tpu.memory_space<vmem>>, vector<8x144xf32>
    %c0_191 = arith.constant 0 : index
    %c0_192 = arith.constant 0 : index
    %191 = vector.load %arg5[%c0_191, %c0_192] : memref<144x32xf32, #tpu.memory_space<vmem>>, vector<144x32xf32>
    %cst_193 = arith.constant dense<0.000000e+00> : vector<8x32xf32>
    %192 = tpu.matmul %190, %191, %cst_193 {dimension_numbers = #tpu.dot_dimension_numbers<[1], [0], [0], [1], [0, 0, 1, 1], [], []>} : vector<8x144xf32>, vector<144x32xf32>, vector<8x32xf32> -> vector<8x32xf32>
    %c0_194 = arith.constant 0 : index
    %c0_195 = arith.constant 0 : index
    %193 = vector.load %arg6[%c0_194, %c0_195] : memref<1x32xf32, #tpu.memory_space<vmem>>, vector<1x32xf32>
    %194 = vector.broadcast %193 : vector<1x32xf32> to vector<8x32xf32>
    %195 = arith.addf %192, %194 : vector<8x32xf32>
    %cst_196 = arith.constant 0.000000e+00 : f32
    %196 = vector.broadcast %cst_196 : f32 to vector<8x32xf32>
    %197 = arith.maximumf %195, %196 : vector<8x32xf32>
    %198 = vector.shape_cast %197 : vector<8x32xf32> to vector<2x2x2x32xf32>
    %199 = vector.shape_cast %198 : vector<2x2x2x32xf32> to vector<8x32xf32>
    %c0_197 = arith.constant 0 : index
    %c0_198 = arith.constant 0 : index
    %200 = vector.load %arg11[%c0_197, %c0_198] : memref<32x16xf32, #tpu.memory_space<vmem>>, vector<32x16xf32>
    %cst_199 = arith.constant dense<0.000000e+00> : vector<8x16xf32>
    %201 = tpu.matmul %199, %200, %cst_199 {dimension_numbers = #tpu.dot_dimension_numbers<[1], [0], [0], [1], [0, 0, 1, 1], [], []>} : vector<8x32xf32>, vector<32x16xf32>, vector<8x16xf32> -> vector<8x16xf32>
    %c0_200 = arith.constant 0 : index
    %c0_201 = arith.constant 0 : index
    %202 = vector.load %arg12[%c0_200, %c0_201] : memref<1x16xf32, #tpu.memory_space<vmem>>, vector<1x16xf32>
    %203 = vector.broadcast %202 : vector<1x16xf32> to vector<8x16xf32>
    %204 = arith.addf %201, %203 : vector<8x16xf32>
    %205 = vector.shape_cast %204 : vector<8x16xf32> to vector<2x2x2x16xf32>
    %cst_202 = arith.constant 0.000000e+00 : f32
    %206 = vector.broadcast %cst_202 : f32 to vector<2x4x4x16xf32>
    %c0_203 = arith.constant 0 : index
    %c0_204 = arith.constant 0 : index
    %c0_205 = arith.constant 0 : index
    %c0_206 = arith.constant 0 : index
    %207 = vector.load %arg28[%c0_203, %c0_204, %c0_205, %c0_206] : memref<2x4x4x16xf32, #tpu.memory_space<vmem>>, vector<2x4x4x16xf32>
    tpu.vector_store %arg28[%c0_203, %c0_204, %c0_205, %c0_206], %206 {strides = array<i32>} : memref<2x4x4x16xf32, #tpu.memory_space<vmem>>, vector<2x4x4x16xf32>,
    %c0_207 = arith.constant 0 : index
    %c1_208 = arith.constant 1 : index
    %c1_209 = arith.constant 1 : index
    %c0_210 = arith.constant 0 : index
    %208 = vector.load %arg28[%c0_207, %c1_208, %c1_209, %c0_210] : memref<2x4x4x16xf32, #tpu.memory_space<vmem>>, vector<2x2x2x16xf32>
    tpu.vector_store %arg28[%c0_207, %c1_208, %c1_209, %c0_210], %205 {strides = array<i32>} : memref<2x4x4x16xf32, #tpu.memory_space<vmem>>, vector<2x2x2x16xf32>,
    %c0_211 = arith.constant 0 : index
    %c0_212 = arith.constant 0 : index
    %c0_213 = arith.constant 0 : index
    %c0_214 = arith.constant 0 : index
    %209 = vector.load %arg28[%c0_211, %c0_212, %c0_213, %c0_214] : memref<2x4x4x16xf32, #tpu.memory_space<vmem>>, vector<2x2x2x16xf32>
    %210 = vector.shape_cast %209 : vector<2x2x2x16xf32> to vector<8x16xf32>
    %c0_215 = arith.constant 0 : index
    %c0_216 = arith.constant 0 : index
    %211 = vector.load %arg29[%c0_215, %c0_216] : memref<8x144xf32, #tpu.memory_space<vmem>>, vector<8x16xf32>
    tpu.vector_store %arg29[%c0_215, %c0_216], %210 {strides = array<i32>} : memref<8x144xf32, #tpu.memory_space<vmem>>, vector<8x16xf32>,
    %c0_217 = arith.constant 0 : index
    %c0_218 = arith.constant 0 : index
    %c1_219 = arith.constant 1 : index
    %c0_220 = arith.constant 0 : index
    %212 = vector.load %arg28[%c0_217, %c0_218, %c1_219, %c0_220] : memref<2x4x4x16xf32, #tpu.memory_space<vmem>>, vector<2x2x2x16xf32>
    %213 = vector.shape_cast %212 : vector<2x2x2x16xf32> to vector<8x16xf32>
    %c0_221 = arith.constant 0 : index
    %c16_222 = arith.constant 16 : index
    %214 = vector.load %arg29[%c0_221, %c16_222] : memref<8x144xf32, #tpu.memory_space<vmem>>, vector<8x16xf32>
    tpu.vector_store %arg29[%c0_221, %c16_222], %213 {strides = array<i32>} : memref<8x144xf32, #tpu.memory_space<vmem>>, vector<8x16xf32>,
    %c0_223 = arith.constant 0 : index
    %c0_224 = arith.constant 0 : index
    %c2_225 = arith.constant 2 : index
    %c0_226 = arith.constant 0 : index
    %215 = vector.load %arg28[%c0_223, %c0_224, %c2_225, %c0_226] : memref<2x4x4x16xf32, #tpu.memory_space<vmem>>, vector<2x2x2x16xf32>
    %216 = vector.shape_cast %215 : vector<2x2x2x16xf32> to vector<8x16xf32>
    %c0_227 = arith.constant 0 : index
    %c32_228 = arith.constant 32 : index
    %217 = vector.load %arg29[%c0_227, %c32_228] : memref<8x144xf32, #tpu.memory_space<vmem>>, vector<8x16xf32>
    tpu.vector_store %arg29[%c0_227, %c32_228], %216 {strides = array<i32>} : memref<8x144xf32, #tpu.memory_space<vmem>>, vector<8x16xf32>,
    %c0_229 = arith.constant 0 : index
    %c1_230 = arith.constant 1 : index
    %c0_231 = arith.constant 0 : index
    %c0_232 = arith.constant 0 : index
    %218 = vector.load %arg28[%c0_229, %c1_230, %c0_231, %c0_232] : memref<2x4x4x16xf32, #tpu.memory_space<vmem>>, vector<2x2x2x16xf32>
    %219 = vector.shape_cast %218 : vector<2x2x2x16xf32> to vector<8x16xf32>
    %c0_233 = arith.constant 0 : index
    %c48_234 = arith.constant 48 : index
    %220 = vector.load %arg29[%c0_233, %c48_234] : memref<8x144xf32, #tpu.memory_space<vmem>>, vector<8x16xf32>
    tpu.vector_store %arg29[%c0_233, %c48_234], %219 {strides = array<i32>} : memref<8x144xf32, #tpu.memory_space<vmem>>, vector<8x16xf32>,
    %c0_235 = arith.constant 0 : index
    %c1_236 = arith.constant 1 : index
    %c1_237 = arith.constant 1 : index
    %c0_238 = arith.constant 0 : index
    %221 = vector.load %arg28[%c0_235, %c1_236, %c1_237, %c0_238] : memref<2x4x4x16xf32, #tpu.memory_space<vmem>>, vector<2x2x2x16xf32>
    %222 = vector.shape_cast %221 : vector<2x2x2x16xf32> to vector<8x16xf32>
    %c0_239 = arith.constant 0 : index
    %c64_240 = arith.constant 64 : index
    %223 = vector.load %arg29[%c0_239, %c64_240] : memref<8x144xf32, #tpu.memory_space<vmem>>, vector<8x16xf32>
    tpu.vector_store %arg29[%c0_239, %c64_240], %222 {strides = array<i32>} : memref<8x144xf32, #tpu.memory_space<vmem>>, vector<8x16xf32>,
    %c0_241 = arith.constant 0 : index
    %c1_242 = arith.constant 1 : index
    %c2_243 = arith.constant 2 : index
    %c0_244 = arith.constant 0 : index
    %224 = vector.load %arg28[%c0_241, %c1_242, %c2_243, %c0_244] : memref<2x4x4x16xf32, #tpu.memory_space<vmem>>, vector<2x2x2x16xf32>
    %225 = vector.shape_cast %224 : vector<2x2x2x16xf32> to vector<8x16xf32>
    %c0_245 = arith.constant 0 : index
    %c80_246 = arith.constant 80 : index
    %226 = vector.load %arg29[%c0_245, %c80_246] : memref<8x144xf32, #tpu.memory_space<vmem>>, vector<8x16xf32>
    tpu.vector_store %arg29[%c0_245, %c80_246], %225 {strides = array<i32>} : memref<8x144xf32, #tpu.memory_space<vmem>>, vector<8x16xf32>,
    %c0_247 = arith.constant 0 : index
    %c2_248 = arith.constant 2 : index
    %c0_249 = arith.constant 0 : index
    %c0_250 = arith.constant 0 : index
    %227 = vector.load %arg28[%c0_247, %c2_248, %c0_249, %c0_250] : memref<2x4x4x16xf32, #tpu.memory_space<vmem>>, vector<2x2x2x16xf32>
    %228 = vector.shape_cast %227 : vector<2x2x2x16xf32> to vector<8x16xf32>
    %c0_251 = arith.constant 0 : index
    %c96_252 = arith.constant 96 : index
    %229 = vector.load %arg29[%c0_251, %c96_252] : memref<8x144xf32, #tpu.memory_space<vmem>>, vector<8x16xf32>
    tpu.vector_store %arg29[%c0_251, %c96_252], %228 {strides = array<i32>} : memref<8x144xf32, #tpu.memory_space<vmem>>, vector<8x16xf32>,
    %c0_253 = arith.constant 0 : index
    %c2_254 = arith.constant 2 : index
    %c1_255 = arith.constant 1 : index
    %c0_256 = arith.constant 0 : index
    %230 = vector.load %arg28[%c0_253, %c2_254, %c1_255, %c0_256] : memref<2x4x4x16xf32, #tpu.memory_space<vmem>>, vector<2x2x2x16xf32>
    %231 = vector.shape_cast %230 : vector<2x2x2x16xf32> to vector<8x16xf32>
    %c0_257 = arith.constant 0 : index
    %c112_258 = arith.constant 112 : index
    %232 = vector.load %arg29[%c0_257, %c112_258] : memref<8x144xf32, #tpu.memory_space<vmem>>, vector<8x16xf32>
    tpu.vector_store %arg29[%c0_257, %c112_258], %231 {strides = array<i32>} : memref<8x144xf32, #tpu.memory_space<vmem>>, vector<8x16xf32>,
    %c0_259 = arith.constant 0 : index
    %c2_260 = arith.constant 2 : index
    %c2_261 = arith.constant 2 : index
    %c0_262 = arith.constant 0 : index
    %233 = vector.load %arg28[%c0_259, %c2_260, %c2_261, %c0_262] : memref<2x4x4x16xf32, #tpu.memory_space<vmem>>, vector<2x2x2x16xf32>
    %234 = vector.shape_cast %233 : vector<2x2x2x16xf32> to vector<8x16xf32>
    %c0_263 = arith.constant 0 : index
    %c128_264 = arith.constant 128 : index
    %235 = vector.load %arg29[%c0_263, %c128_264] : memref<8x144xf32, #tpu.memory_space<vmem>>, vector<8x16xf32>
    tpu.vector_store %arg29[%c0_263, %c128_264], %234 {strides = array<i32>} : memref<8x144xf32, #tpu.memory_space<vmem>>, vector<8x16xf32>,
    %c0_265 = arith.constant 0 : index
    %c0_266 = arith.constant 0 : index
    %236 = vector.load %arg29[%c0_265, %c0_266] : memref<8x144xf32, #tpu.memory_space<vmem>>, vector<8x144xf32>
    %c0_267 = arith.constant 0 : index
    %c0_268 = arith.constant 0 : index
    %237 = vector.load %arg17[%c0_267, %c0_268] : memref<144x16xf32, #tpu.memory_space<vmem>>, vector<144x16xf32>
    %cst_269 = arith.constant dense<0.000000e+00> : vector<8x16xf32>
    %238 = tpu.matmul %236, %237, %cst_269 {dimension_numbers = #tpu.dot_dimension_numbers<[1], [0], [0], [1], [0, 0, 1, 1], [], []>} : vector<8x144xf32>, vector<144x16xf32>, vector<8x16xf32> -> vector<8x16xf32>
    %c0_270 = arith.constant 0 : index
    %c0_271 = arith.constant 0 : index
    %239 = vector.load %arg18[%c0_270, %c0_271] : memref<1x16xf32, #tpu.memory_space<vmem>>, vector<1x16xf32>
    %240 = vector.broadcast %239 : vector<1x16xf32> to vector<8x16xf32>
    %241 = arith.addf %238, %240 : vector<8x16xf32>
    %c0_272 = arith.constant 0 : index
    %c0_273 = arith.constant 0 : index
    %242 = vector.load %arg19[%c0_272, %c0_273] : memref<8x16xf32, #tpu.memory_space<vmem>>, vector<8x16xf32>
    tpu.vector_store %arg19[%c0_272, %c0_273], %241 {strides = array<i32>} : memref<8x16xf32, #tpu.memory_space<vmem>>, vector<8x16xf32>,
    %243 = vector.shape_cast %132 : vector<2x4x4x16xf32> to vector<32x16xf32>
    %c0_274 = arith.constant 0 : index
    %c0_275 = arith.constant 0 : index
    %244 = vector.load %arg9[%c0_274, %c0_275] : memref<16x16xf32, #tpu.memory_space<vmem>>, vector<16x16xf32>
    %cst_276 = arith.constant dense<0.000000e+00> : vector<32x16xf32>
    %245 = tpu.matmul %243, %244, %cst_276 {dimension_numbers = #tpu.dot_dimension_numbers<[1], [0], [0], [1], [0, 0, 1, 1], [], []>} : vector<32x16xf32>, vector<16x16xf32>, vector<32x16xf32> -> vector<32x16xf32>
    %c0_277 = arith.constant 0 : index
    %c0_278 = arith.constant 0 : index
    %246 = vector.load %arg10[%c0_277, %c0_278] : memref<1x16xf32, #tpu.memory_space<vmem>>, vector<1x16xf32>
    %247 = vector.broadcast %246 : vector<1x16xf32> to vector<32x16xf32>
    %248 = arith.addf %245, %247 : vector<32x16xf32>
    %249 = vector.shape_cast %248 : vector<32x16xf32> to vector<2x4x4x16xf32>
    %250 = vector.shape_cast %205 : vector<2x2x2x16xf32> to vector<2x2x1x2x16xf32>
    %251 = vector.shape_cast %250 : vector<2x2x1x2x16xf32> to vector<2x2x1x2x16xf32>
    %252 = vector.broadcast %251 : vector<2x2x1x2x16xf32> to vector<2x2x2x2x16xf32>
    %253 = vector.shape_cast %252 : vector<2x2x2x2x16xf32> to vector<2x4x2x16xf32>
    %254 = vector.extract_strided_slice %253 {offsets = [0, 0, 0, 0], sizes = [2, 4, 1, 16], strides = [1, 1, 1, 1]} : vector<2x4x2x16xf32> to vector<2x4x1x16xf32>
    %c0_279 = arith.constant 0 : index
    %c0_280 = arith.constant 0 : index
    %c0_281 = arith.constant 0 : index
    %c0_282 = arith.constant 0 : index
    %255 = vector.load %arg34[%c0_279, %c0_280, %c0_281, %c0_282] : memref<2x4x4x16xf32, #tpu.memory_space<vmem>>, vector<2x4x1x16xf32>
    tpu.vector_store %arg34[%c0_279, %c0_280, %c0_281, %c0_282], %254 {strides = array<i32>} : memref<2x4x4x16xf32, #tpu.memory_space<vmem>>, vector<2x4x1x16xf32>,
    %c0_283 = arith.constant 0 : index
    %c0_284 = arith.constant 0 : index
    %c1_285 = arith.constant 1 : index
    %c0_286 = arith.constant 0 : index
    %256 = vector.load %arg34[%c0_283, %c0_284, %c1_285, %c0_286] : memref<2x4x4x16xf32, #tpu.memory_space<vmem>>, vector<2x4x1x16xf32>
    tpu.vector_store %arg34[%c0_283, %c0_284, %c1_285, %c0_286], %254 {strides = array<i32>} : memref<2x4x4x16xf32, #tpu.memory_space<vmem>>, vector<2x4x1x16xf32>,
    %257 = vector.extract_strided_slice %253 {offsets = [0, 0, 1, 0], sizes = [2, 4, 1, 16], strides = [1, 1, 1, 1]} : vector<2x4x2x16xf32> to vector<2x4x1x16xf32>
    %c0_287 = arith.constant 0 : index
    %c0_288 = arith.constant 0 : index
    %c2_289 = arith.constant 2 : index
    %c0_290 = arith.constant 0 : index
    %258 = vector.load %arg34[%c0_287, %c0_288, %c2_289, %c0_290] : memref<2x4x4x16xf32, #tpu.memory_space<vmem>>, vector<2x4x1x16xf32>
    tpu.vector_store %arg34[%c0_287, %c0_288, %c2_289, %c0_290], %257 {strides = array<i32>} : memref<2x4x4x16xf32, #tpu.memory_space<vmem>>, vector<2x4x1x16xf32>,
    %c0_291 = arith.constant 0 : index
    %c0_292 = arith.constant 0 : index
    %c3 = arith.constant 3 : index
    %c0_293 = arith.constant 0 : index
    %259 = vector.load %arg34[%c0_291, %c0_292, %c3, %c0_293] : memref<2x4x4x16xf32, #tpu.memory_space<vmem>>, vector<2x4x1x16xf32>
    tpu.vector_store %arg34[%c0_291, %c0_292, %c3, %c0_293], %257 {strides = array<i32>} : memref<2x4x4x16xf32, #tpu.memory_space<vmem>>, vector<2x4x1x16xf32>,
    %c0_294 = arith.constant 0 : index
    %c0_295 = arith.constant 0 : index
    %c0_296 = arith.constant 0 : index
    %c0_297 = arith.constant 0 : index
    %260 = vector.load %arg34[%c0_294, %c0_295, %c0_296, %c0_297] : memref<2x4x4x16xf32, #tpu.memory_space<vmem>>, vector<2x4x4x16xf32>
    %261 = arith.addf %249, %260 : vector<2x4x4x16xf32>
    %cst_298 = arith.constant 0.000000e+00 : f32
    %262 = vector.broadcast %cst_298 : f32 to vector<2x6x6x16xf32>
    %c0_299 = arith.constant 0 : index
    %c0_300 = arith.constant 0 : index
    %c0_301 = arith.constant 0 : index
    %c0_302 = arith.constant 0 : index
    %263 = vector.load %arg30[%c0_299, %c0_300, %c0_301, %c0_302] : memref<2x6x6x16xf32, #tpu.memory_space<vmem>>, vector<2x6x6x16xf32>
    tpu.vector_store %arg30[%c0_299, %c0_300, %c0_301, %c0_302], %262 {strides = array<i32>} : memref<2x6x6x16xf32, #tpu.memory_space<vmem>>, vector<2x6x6x16xf32>,
    %c0_303 = arith.constant 0 : index
    %c1_304 = arith.constant 1 : index
    %c1_305 = arith.constant 1 : index
    %c0_306 = arith.constant 0 : index
    %264 = vector.load %arg30[%c0_303, %c1_304, %c1_305, %c0_306] : memref<2x6x6x16xf32, #tpu.memory_space<vmem>>, vector<2x4x4x16xf32>
    tpu.vector_store %arg30[%c0_303, %c1_304, %c1_305, %c0_306], %261 {strides = array<i32>} : memref<2x6x6x16xf32, #tpu.memory_space<vmem>>, vector<2x4x4x16xf32>,
    %c0_307 = arith.constant 0 : index
    %c0_308 = arith.constant 0 : index
    %c0_309 = arith.constant 0 : index
    %c0_310 = arith.constant 0 : index
    %265 = vector.load %arg30[%c0_307, %c0_308, %c0_309, %c0_310] : memref<2x6x6x16xf32, #tpu.memory_space<vmem>>, vector<2x4x4x16xf32>
    %266 = vector.shape_cast %265 : vector<2x4x4x16xf32> to vector<32x16xf32>
    %c0_311 = arith.constant 0 : index
    %c0_312 = arith.constant 0 : index
    %267 = vector.load %arg31[%c0_311, %c0_312] : memref<32x144xf32, #tpu.memory_space<vmem>>, vector<32x16xf32>
    tpu.vector_store %arg31[%c0_311, %c0_312], %266 {strides = array<i32>} : memref<32x144xf32, #tpu.memory_space<vmem>>, vector<32x16xf32>,
    %c0_313 = arith.constant 0 : index
    %c0_314 = arith.constant 0 : index
    %c1_315 = arith.constant 1 : index
    %c0_316 = arith.constant 0 : index
    %268 = vector.load %arg30[%c0_313, %c0_314, %c1_315, %c0_316] : memref<2x6x6x16xf32, #tpu.memory_space<vmem>>, vector<2x4x4x16xf32>
    %269 = vector.shape_cast %268 : vector<2x4x4x16xf32> to vector<32x16xf32>
    %c0_317 = arith.constant 0 : index
    %c16_318 = arith.constant 16 : index
    %270 = vector.load %arg31[%c0_317, %c16_318] : memref<32x144xf32, #tpu.memory_space<vmem>>, vector<32x16xf32>
    tpu.vector_store %arg31[%c0_317, %c16_318], %269 {strides = array<i32>} : memref<32x144xf32, #tpu.memory_space<vmem>>, vector<32x16xf32>,
    %c0_319 = arith.constant 0 : index
    %c0_320 = arith.constant 0 : index
    %c2_321 = arith.constant 2 : index
    %c0_322 = arith.constant 0 : index
    %271 = vector.load %arg30[%c0_319, %c0_320, %c2_321, %c0_322] : memref<2x6x6x16xf32, #tpu.memory_space<vmem>>, vector<2x4x4x16xf32>
    %272 = vector.shape_cast %271 : vector<2x4x4x16xf32> to vector<32x16xf32>
    %c0_323 = arith.constant 0 : index
    %c32_324 = arith.constant 32 : index
    %273 = vector.load %arg31[%c0_323, %c32_324] : memref<32x144xf32, #tpu.memory_space<vmem>>, vector<32x16xf32>
    tpu.vector_store %arg31[%c0_323, %c32_324], %272 {strides = array<i32>} : memref<32x144xf32, #tpu.memory_space<vmem>>, vector<32x16xf32>,
    %c0_325 = arith.constant 0 : index
    %c1_326 = arith.constant 1 : index
    %c0_327 = arith.constant 0 : index
    %c0_328 = arith.constant 0 : index
    %274 = vector.load %arg30[%c0_325, %c1_326, %c0_327, %c0_328] : memref<2x6x6x16xf32, #tpu.memory_space<vmem>>, vector<2x4x4x16xf32>
    %275 = vector.shape_cast %274 : vector<2x4x4x16xf32> to vector<32x16xf32>
    %c0_329 = arith.constant 0 : index
    %c48_330 = arith.constant 48 : index
    %276 = vector.load %arg31[%c0_329, %c48_330] : memref<32x144xf32, #tpu.memory_space<vmem>>, vector<32x16xf32>
    tpu.vector_store %arg31[%c0_329, %c48_330], %275 {strides = array<i32>} : memref<32x144xf32, #tpu.memory_space<vmem>>, vector<32x16xf32>,
    %c0_331 = arith.constant 0 : index
    %c1_332 = arith.constant 1 : index
    %c1_333 = arith.constant 1 : index
    %c0_334 = arith.constant 0 : index
    %277 = vector.load %arg30[%c0_331, %c1_332, %c1_333, %c0_334] : memref<2x6x6x16xf32, #tpu.memory_space<vmem>>, vector<2x4x4x16xf32>
    %278 = vector.shape_cast %277 : vector<2x4x4x16xf32> to vector<32x16xf32>
    %c0_335 = arith.constant 0 : index
    %c64_336 = arith.constant 64 : index
    %279 = vector.load %arg31[%c0_335, %c64_336] : memref<32x144xf32, #tpu.memory_space<vmem>>, vector<32x16xf32>
    tpu.vector_store %arg31[%c0_335, %c64_336], %278 {strides = array<i32>} : memref<32x144xf32, #tpu.memory_space<vmem>>, vector<32x16xf32>,
    %c0_337 = arith.constant 0 : index
    %c1_338 = arith.constant 1 : index
    %c2_339 = arith.constant 2 : index
    %c0_340 = arith.constant 0 : index
    %280 = vector.load %arg30[%c0_337, %c1_338, %c2_339, %c0_340] : memref<2x6x6x16xf32, #tpu.memory_space<vmem>>, vector<2x4x4x16xf32>
    %281 = vector.shape_cast %280 : vector<2x4x4x16xf32> to vector<32x16xf32>
    %c0_341 = arith.constant 0 : index
    %c80_342 = arith.constant 80 : index
    %282 = vector.load %arg31[%c0_341, %c80_342] : memref<32x144xf32, #tpu.memory_space<vmem>>, vector<32x16xf32>
    tpu.vector_store %arg31[%c0_341, %c80_342], %281 {strides = array<i32>} : memref<32x144xf32, #tpu.memory_space<vmem>>, vector<32x16xf32>,
    %c0_343 = arith.constant 0 : index
    %c2_344 = arith.constant 2 : index
    %c0_345 = arith.constant 0 : index
    %c0_346 = arith.constant 0 : index
    %283 = vector.load %arg30[%c0_343, %c2_344, %c0_345, %c0_346] : memref<2x6x6x16xf32, #tpu.memory_space<vmem>>, vector<2x4x4x16xf32>
    %284 = vector.shape_cast %283 : vector<2x4x4x16xf32> to vector<32x16xf32>
    %c0_347 = arith.constant 0 : index
    %c96_348 = arith.constant 96 : index
    %285 = vector.load %arg31[%c0_347, %c96_348] : memref<32x144xf32, #tpu.memory_space<vmem>>, vector<32x16xf32>
    tpu.vector_store %arg31[%c0_347, %c96_348], %284 {strides = array<i32>} : memref<32x144xf32, #tpu.memory_space<vmem>>, vector<32x16xf32>,
    %c0_349 = arith.constant 0 : index
    %c2_350 = arith.constant 2 : index
    %c1_351 = arith.constant 1 : index
    %c0_352 = arith.constant 0 : index
    %286 = vector.load %arg30[%c0_349, %c2_350, %c1_351, %c0_352] : memref<2x6x6x16xf32, #tpu.memory_space<vmem>>, vector<2x4x4x16xf32>
    %287 = vector.shape_cast %286 : vector<2x4x4x16xf32> to vector<32x16xf32>
    %c0_353 = arith.constant 0 : index
    %c112_354 = arith.constant 112 : index
    %288 = vector.load %arg31[%c0_353, %c112_354] : memref<32x144xf32, #tpu.memory_space<vmem>>, vector<32x16xf32>
    tpu.vector_store %arg31[%c0_353, %c112_354], %287 {strides = array<i32>} : memref<32x144xf32, #tpu.memory_space<vmem>>, vector<32x16xf32>,
    %c0_355 = arith.constant 0 : index
    %c2_356 = arith.constant 2 : index
    %c2_357 = arith.constant 2 : index
    %c0_358 = arith.constant 0 : index
    %289 = vector.load %arg30[%c0_355, %c2_356, %c2_357, %c0_358] : memref<2x6x6x16xf32, #tpu.memory_space<vmem>>, vector<2x4x4x16xf32>
    %290 = vector.shape_cast %289 : vector<2x4x4x16xf32> to vector<32x16xf32>
    %c0_359 = arith.constant 0 : index
    %c128_360 = arith.constant 128 : index
    %291 = vector.load %arg31[%c0_359, %c128_360] : memref<32x144xf32, #tpu.memory_space<vmem>>, vector<32x16xf32>
    tpu.vector_store %arg31[%c0_359, %c128_360], %290 {strides = array<i32>} : memref<32x144xf32, #tpu.memory_space<vmem>>, vector<32x16xf32>,
    %c0_361 = arith.constant 0 : index
    %c0_362 = arith.constant 0 : index
    %292 = vector.load %arg31[%c0_361, %c0_362] : memref<32x144xf32, #tpu.memory_space<vmem>>, vector<32x144xf32>
    %c0_363 = arith.constant 0 : index
    %c0_364 = arith.constant 0 : index
    %293 = vector.load %arg15[%c0_363, %c0_364] : memref<144x16xf32, #tpu.memory_space<vmem>>, vector<144x16xf32>
    %cst_365 = arith.constant dense<0.000000e+00> : vector<32x16xf32>
    %294 = tpu.matmul %292, %293, %cst_365 {dimension_numbers = #tpu.dot_dimension_numbers<[1], [0], [0], [1], [0, 0, 1, 1], [], []>} : vector<32x144xf32>, vector<144x16xf32>, vector<32x16xf32> -> vector<32x16xf32>
    %c0_366 = arith.constant 0 : index
    %c0_367 = arith.constant 0 : index
    %295 = vector.load %arg16[%c0_366, %c0_367] : memref<1x16xf32, #tpu.memory_space<vmem>>, vector<1x16xf32>
    %296 = vector.broadcast %295 : vector<1x16xf32> to vector<32x16xf32>
    %297 = arith.addf %294, %296 : vector<32x16xf32>
    %c0_368 = arith.constant 0 : index
    %c0_369 = arith.constant 0 : index
    %298 = vector.load %arg20[%c0_368, %c0_369] : memref<32x16xf32, #tpu.memory_space<vmem>>, vector<32x16xf32>
    tpu.vector_store %arg20[%c0_368, %c0_369], %297 {strides = array<i32>} : memref<32x16xf32, #tpu.memory_space<vmem>>, vector<32x16xf32>,
    %299 = vector.shape_cast %66 : vector<2x8x8x8xf32> to vector<128x8xf32>
    %c0_370 = arith.constant 0 : index
    %c0_371 = arith.constant 0 : index
    %300 = vector.load %arg7[%c0_370, %c0_371] : memref<8x16xf32, #tpu.memory_space<vmem>>, vector<8x16xf32>
    %cst_372 = arith.constant dense<0.000000e+00> : vector<128x16xf32>
    %301 = tpu.matmul %299, %300, %cst_372 {dimension_numbers = #tpu.dot_dimension_numbers<[1], [0], [0], [1], [0, 0, 1, 1], [], []>} : vector<128x8xf32>, vector<8x16xf32>, vector<128x16xf32> -> vector<128x16xf32>
    %c0_373 = arith.constant 0 : index
    %c0_374 = arith.constant 0 : index
    %302 = vector.load %arg8[%c0_373, %c0_374] : memref<1x16xf32, #tpu.memory_space<vmem>>, vector<1x16xf32>
    %303 = vector.broadcast %302 : vector<1x16xf32> to vector<128x16xf32>
    %304 = arith.addf %301, %303 : vector<128x16xf32>
    %305 = vector.shape_cast %304 : vector<128x16xf32> to vector<2x8x8x16xf32>
    %306 = vector.shape_cast %261 : vector<2x4x4x16xf32> to vector<2x4x1x4x16xf32>
    %307 = vector.shape_cast %306 : vector<2x4x1x4x16xf32> to vector<2x4x1x4x16xf32>
    %308 = vector.broadcast %307 : vector<2x4x1x4x16xf32> to vector<2x4x2x4x16xf32>
    %309 = vector.shape_cast %308 : vector<2x4x2x4x16xf32> to vector<2x8x4x16xf32>
    %310 = vector.extract_strided_slice %309 {offsets = [0, 0, 0, 0], sizes = [2, 8, 1, 16], strides = [1, 1, 1, 1]} : vector<2x8x4x16xf32> to vector<2x8x1x16xf32>
    %c0_375 = arith.constant 0 : index
    %c0_376 = arith.constant 0 : index
    %c0_377 = arith.constant 0 : index
    %c0_378 = arith.constant 0 : index
    %311 = vector.load %arg35[%c0_375, %c0_376, %c0_377, %c0_378] : memref<2x8x8x16xf32, #tpu.memory_space<vmem>>, vector<2x8x1x16xf32>
    tpu.vector_store %arg35[%c0_375, %c0_376, %c0_377, %c0_378], %310 {strides = array<i32>} : memref<2x8x8x16xf32, #tpu.memory_space<vmem>>, vector<2x8x1x16xf32>,
    %c0_379 = arith.constant 0 : index
    %c0_380 = arith.constant 0 : index
    %c1_381 = arith.constant 1 : index
    %c0_382 = arith.constant 0 : index
    %312 = vector.load %arg35[%c0_379, %c0_380, %c1_381, %c0_382] : memref<2x8x8x16xf32, #tpu.memory_space<vmem>>, vector<2x8x1x16xf32>
    tpu.vector_store %arg35[%c0_379, %c0_380, %c1_381, %c0_382], %310 {strides = array<i32>} : memref<2x8x8x16xf32, #tpu.memory_space<vmem>>, vector<2x8x1x16xf32>,
    %313 = vector.extract_strided_slice %309 {offsets = [0, 0, 1, 0], sizes = [2, 8, 1, 16], strides = [1, 1, 1, 1]} : vector<2x8x4x16xf32> to vector<2x8x1x16xf32>
    %c0_383 = arith.constant 0 : index
    %c0_384 = arith.constant 0 : index
    %c2_385 = arith.constant 2 : index
    %c0_386 = arith.constant 0 : index
    %314 = vector.load %arg35[%c0_383, %c0_384, %c2_385, %c0_386] : memref<2x8x8x16xf32, #tpu.memory_space<vmem>>, vector<2x8x1x16xf32>
    tpu.vector_store %arg35[%c0_383, %c0_384, %c2_385, %c0_386], %313 {strides = array<i32>} : memref<2x8x8x16xf32, #tpu.memory_space<vmem>>, vector<2x8x1x16xf32>,
    %c0_387 = arith.constant 0 : index
    %c0_388 = arith.constant 0 : index
    %c3_389 = arith.constant 3 : index
    %c0_390 = arith.constant 0 : index
    %315 = vector.load %arg35[%c0_387, %c0_388, %c3_389, %c0_390] : memref<2x8x8x16xf32, #tpu.memory_space<vmem>>, vector<2x8x1x16xf32>
    tpu.vector_store %arg35[%c0_387, %c0_388, %c3_389, %c0_390], %313 {strides = array<i32>} : memref<2x8x8x16xf32, #tpu.memory_space<vmem>>, vector<2x8x1x16xf32>,
    %316 = vector.extract_strided_slice %309 {offsets = [0, 0, 2, 0], sizes = [2, 8, 1, 16], strides = [1, 1, 1, 1]} : vector<2x8x4x16xf32> to vector<2x8x1x16xf32>
    %c0_391 = arith.constant 0 : index
    %c0_392 = arith.constant 0 : index
    %c4_393 = arith.constant 4 : index
    %c0_394 = arith.constant 0 : index
    %317 = vector.load %arg35[%c0_391, %c0_392, %c4_393, %c0_394] : memref<2x8x8x16xf32, #tpu.memory_space<vmem>>, vector<2x8x1x16xf32>
    tpu.vector_store %arg35[%c0_391, %c0_392, %c4_393, %c0_394], %316 {strides = array<i32>} : memref<2x8x8x16xf32, #tpu.memory_space<vmem>>, vector<2x8x1x16xf32>,
    %c0_395 = arith.constant 0 : index
    %c0_396 = arith.constant 0 : index
    %c5 = arith.constant 5 : index
    %c0_397 = arith.constant 0 : index
    %318 = vector.load %arg35[%c0_395, %c0_396, %c5, %c0_397] : memref<2x8x8x16xf32, #tpu.memory_space<vmem>>, vector<2x8x1x16xf32>
    tpu.vector_store %arg35[%c0_395, %c0_396, %c5, %c0_397], %316 {strides = array<i32>} : memref<2x8x8x16xf32, #tpu.memory_space<vmem>>, vector<2x8x1x16xf32>,
    %319 = vector.extract_strided_slice %309 {offsets = [0, 0, 3, 0], sizes = [2, 8, 1, 16], strides = [1, 1, 1, 1]} : vector<2x8x4x16xf32> to vector<2x8x1x16xf32>
    %c0_398 = arith.constant 0 : index
    %c0_399 = arith.constant 0 : index
    %c6 = arith.constant 6 : index
    %c0_400 = arith.constant 0 : index
    %320 = vector.load %arg35[%c0_398, %c0_399, %c6, %c0_400] : memref<2x8x8x16xf32, #tpu.memory_space<vmem>>, vector<2x8x1x16xf32>
    tpu.vector_store %arg35[%c0_398, %c0_399, %c6, %c0_400], %319 {strides = array<i32>} : memref<2x8x8x16xf32, #tpu.memory_space<vmem>>, vector<2x8x1x16xf32>,
    %c0_401 = arith.constant 0 : index
    %c0_402 = arith.constant 0 : index
    %c7 = arith.constant 7 : index
    %c0_403 = arith.constant 0 : index
    %321 = vector.load %arg35[%c0_401, %c0_402, %c7, %c0_403] : memref<2x8x8x16xf32, #tpu.memory_space<vmem>>, vector<2x8x1x16xf32>
    tpu.vector_store %arg35[%c0_401, %c0_402, %c7, %c0_403], %319 {strides = array<i32>} : memref<2x8x8x16xf32, #tpu.memory_space<vmem>>, vector<2x8x1x16xf32>,
    %c0_404 = arith.constant 0 : index
    %c0_405 = arith.constant 0 : index
    %c0_406 = arith.constant 0 : index
    %c0_407 = arith.constant 0 : index
    %322 = vector.load %arg35[%c0_404, %c0_405, %c0_406, %c0_407] : memref<2x8x8x16xf32, #tpu.memory_space<vmem>>, vector<2x8x8x16xf32>
    %323 = arith.addf %305, %322 : vector<2x8x8x16xf32>
    %cst_408 = arith.constant 0.000000e+00 : f32
    %324 = vector.broadcast %cst_408 : f32 to vector<2x10x10x16xf32>
    %c0_409 = arith.constant 0 : index
    %c0_410 = arith.constant 0 : index
    %c0_411 = arith.constant 0 : index
    %c0_412 = arith.constant 0 : index
    %325 = vector.load %arg32[%c0_409, %c0_410, %c0_411, %c0_412] : memref<2x10x10x16xf32, #tpu.memory_space<vmem>>, vector<2x10x10x16xf32>
    tpu.vector_store %arg32[%c0_409, %c0_410, %c0_411, %c0_412], %324 {strides = array<i32>} : memref<2x10x10x16xf32, #tpu.memory_space<vmem>>, vector<2x10x10x16xf32>,
    %c0_413 = arith.constant 0 : index
    %c1_414 = arith.constant 1 : index
    %c1_415 = arith.constant 1 : index
    %c0_416 = arith.constant 0 : index
    %326 = vector.load %arg32[%c0_413, %c1_414, %c1_415, %c0_416] : memref<2x10x10x16xf32, #tpu.memory_space<vmem>>, vector<2x8x8x16xf32>
    tpu.vector_store %arg32[%c0_413, %c1_414, %c1_415, %c0_416], %323 {strides = array<i32>} : memref<2x10x10x16xf32, #tpu.memory_space<vmem>>, vector<2x8x8x16xf32>,
    %c0_417 = arith.constant 0 : index
    %c0_418 = arith.constant 0 : index
    %c0_419 = arith.constant 0 : index
    %c0_420 = arith.constant 0 : index
    %327 = vector.load %arg32[%c0_417, %c0_418, %c0_419, %c0_420] : memref<2x10x10x16xf32, #tpu.memory_space<vmem>>, vector<2x8x8x16xf32>
    %328 = vector.shape_cast %327 : vector<2x8x8x16xf32> to vector<128x16xf32>
    %c0_421 = arith.constant 0 : index
    %c0_422 = arith.constant 0 : index
    %329 = vector.load %arg33[%c0_421, %c0_422] : memref<128x144xf32, #tpu.memory_space<vmem>>, vector<128x16xf32>
    tpu.vector_store %arg33[%c0_421, %c0_422], %328 {strides = array<i32>} : memref<128x144xf32, #tpu.memory_space<vmem>>, vector<128x16xf32>,
    %c0_423 = arith.constant 0 : index
    %c0_424 = arith.constant 0 : index
    %c1_425 = arith.constant 1 : index
    %c0_426 = arith.constant 0 : index
    %330 = vector.load %arg32[%c0_423, %c0_424, %c1_425, %c0_426] : memref<2x10x10x16xf32, #tpu.memory_space<vmem>>, vector<2x8x8x16xf32>
    %331 = vector.shape_cast %330 : vector<2x8x8x16xf32> to vector<128x16xf32>
    %c0_427 = arith.constant 0 : index
    %c16_428 = arith.constant 16 : index
    %332 = vector.load %arg33[%c0_427, %c16_428] : memref<128x144xf32, #tpu.memory_space<vmem>>, vector<128x16xf32>
    tpu.vector_store %arg33[%c0_427, %c16_428], %331 {strides = array<i32>} : memref<128x144xf32, #tpu.memory_space<vmem>>, vector<128x16xf32>,
    %c0_429 = arith.constant 0 : index
    %c0_430 = arith.constant 0 : index
    %c2_431 = arith.constant 2 : index
    %c0_432 = arith.constant 0 : index
    %333 = vector.load %arg32[%c0_429, %c0_430, %c2_431, %c0_432] : memref<2x10x10x16xf32, #tpu.memory_space<vmem>>, vector<2x8x8x16xf32>
    %334 = vector.shape_cast %333 : vector<2x8x8x16xf32> to vector<128x16xf32>
    %c0_433 = arith.constant 0 : index
    %c32_434 = arith.constant 32 : index
    %335 = vector.load %arg33[%c0_433, %c32_434] : memref<128x144xf32, #tpu.memory_space<vmem>>, vector<128x16xf32>
    tpu.vector_store %arg33[%c0_433, %c32_434], %334 {strides = array<i32>} : memref<128x144xf32, #tpu.memory_space<vmem>>, vector<128x16xf32>,
    %c0_435 = arith.constant 0 : index
    %c1_436 = arith.constant 1 : index
    %c0_437 = arith.constant 0 : index
    %c0_438 = arith.constant 0 : index
    %336 = vector.load %arg32[%c0_435, %c1_436, %c0_437, %c0_438] : memref<2x10x10x16xf32, #tpu.memory_space<vmem>>, vector<2x8x8x16xf32>
    %337 = vector.shape_cast %336 : vector<2x8x8x16xf32> to vector<128x16xf32>
    %c0_439 = arith.constant 0 : index
    %c48_440 = arith.constant 48 : index
    %338 = vector.load %arg33[%c0_439, %c48_440] : memref<128x144xf32, #tpu.memory_space<vmem>>, vector<128x16xf32>
    tpu.vector_store %arg33[%c0_439, %c48_440], %337 {strides = array<i32>} : memref<128x144xf32, #tpu.memory_space<vmem>>, vector<128x16xf32>,
    %c0_441 = arith.constant 0 : index
    %c1_442 = arith.constant 1 : index
    %c1_443 = arith.constant 1 : index
    %c0_444 = arith.constant 0 : index
    %339 = vector.load %arg32[%c0_441, %c1_442, %c1_443, %c0_444] : memref<2x10x10x16xf32, #tpu.memory_space<vmem>>, vector<2x8x8x16xf32>
    %340 = vector.shape_cast %339 : vector<2x8x8x16xf32> to vector<128x16xf32>
    %c0_445 = arith.constant 0 : index
    %c64_446 = arith.constant 64 : index
    %341 = vector.load %arg33[%c0_445, %c64_446] : memref<128x144xf32, #tpu.memory_space<vmem>>, vector<128x16xf32>
    tpu.vector_store %arg33[%c0_445, %c64_446], %340 {strides = array<i32>} : memref<128x144xf32, #tpu.memory_space<vmem>>, vector<128x16xf32>,
    %c0_447 = arith.constant 0 : index
    %c1_448 = arith.constant 1 : index
    %c2_449 = arith.constant 2 : index
    %c0_450 = arith.constant 0 : index
    %342 = vector.load %arg32[%c0_447, %c1_448, %c2_449, %c0_450] : memref<2x10x10x16xf32, #tpu.memory_space<vmem>>, vector<2x8x8x16xf32>
    %343 = vector.shape_cast %342 : vector<2x8x8x16xf32> to vector<128x16xf32>
    %c0_451 = arith.constant 0 : index
    %c80_452 = arith.constant 80 : index
    %344 = vector.load %arg33[%c0_451, %c80_452] : memref<128x144xf32, #tpu.memory_space<vmem>>, vector<128x16xf32>
    tpu.vector_store %arg33[%c0_451, %c80_452], %343 {strides = array<i32>} : memref<128x144xf32, #tpu.memory_space<vmem>>, vector<128x16xf32>,
    %c0_453 = arith.constant 0 : index
    %c2_454 = arith.constant 2 : index
    %c0_455 = arith.constant 0 : index
    %c0_456 = arith.constant 0 : index
    %345 = vector.load %arg32[%c0_453, %c2_454, %c0_455, %c0_456] : memref<2x10x10x16xf32, #tpu.memory_space<vmem>>, vector<2x8x8x16xf32>
    %346 = vector.shape_cast %345 : vector<2x8x8x16xf32> to vector<128x16xf32>
    %c0_457 = arith.constant 0 : index
    %c96_458 = arith.constant 96 : index
    %347 = vector.load %arg33[%c0_457, %c96_458] : memref<128x144xf32, #tpu.memory_space<vmem>>, vector<128x16xf32>
    tpu.vector_store %arg33[%c0_457, %c96_458], %346 {strides = array<i32>} : memref<128x144xf32, #tpu.memory_space<vmem>>, vector<128x16xf32>,
    %c0_459 = arith.constant 0 : index
    %c2_460 = arith.constant 2 : index
    %c1_461 = arith.constant 1 : index
    %c0_462 = arith.constant 0 : index
    %348 = vector.load %arg32[%c0_459, %c2_460, %c1_461, %c0_462] : memref<2x10x10x16xf32, #tpu.memory_space<vmem>>, vector<2x8x8x16xf32>
    %349 = vector.shape_cast %348 : vector<2x8x8x16xf32> to vector<128x16xf32>
    %c0_463 = arith.constant 0 : index
    %c112_464 = arith.constant 112 : index
    %350 = vector.load %arg33[%c0_463, %c112_464] : memref<128x144xf32, #tpu.memory_space<vmem>>, vector<128x16xf32>
    tpu.vector_store %arg33[%c0_463, %c112_464], %349 {strides = array<i32>} : memref<128x144xf32, #tpu.memory_space<vmem>>, vector<128x16xf32>,
    %c0_465 = arith.constant 0 : index
    %c2_466 = arith.constant 2 : index
    %c2_467 = arith.constant 2 : index
    %c0_468 = arith.constant 0 : index
    %351 = vector.load %arg32[%c0_465, %c2_466, %c2_467, %c0_468] : memref<2x10x10x16xf32, #tpu.memory_space<vmem>>, vector<2x8x8x16xf32>
    %352 = vector.shape_cast %351 : vector<2x8x8x16xf32> to vector<128x16xf32>
    %c0_469 = arith.constant 0 : index
    %c128_470 = arith.constant 128 : index
    %353 = vector.load %arg33[%c0_469, %c128_470] : memref<128x144xf32, #tpu.memory_space<vmem>>, vector<128x16xf32>
    tpu.vector_store %arg33[%c0_469, %c128_470], %352 {strides = array<i32>} : memref<128x144xf32, #tpu.memory_space<vmem>>, vector<128x16xf32>,
    %c0_471 = arith.constant 0 : index
    %c0_472 = arith.constant 0 : index
    %354 = vector.load %arg33[%c0_471, %c0_472] : memref<128x144xf32, #tpu.memory_space<vmem>>, vector<128x144xf32>
    %c0_473 = arith.constant 0 : index
    %c0_474 = arith.constant 0 : index
    %355 = vector.load %arg13[%c0_473, %c0_474] : memref<144x16xf32, #tpu.memory_space<vmem>>, vector<144x16xf32>
    %cst_475 = arith.constant dense<0.000000e+00> : vector<128x16xf32>
    %356 = tpu.matmul %354, %355, %cst_475 {dimension_numbers = #tpu.dot_dimension_numbers<[1], [0], [0], [1], [0, 0, 1, 1], [], []>} : vector<128x144xf32>, vector<144x16xf32>, vector<128x16xf32> -> vector<128x16xf32>
    %c0_476 = arith.constant 0 : index
    %c0_477 = arith.constant 0 : index
    %357 = vector.load %arg14[%c0_476, %c0_477] : memref<1x16xf32, #tpu.memory_space<vmem>>, vector<1x16xf32>
    %358 = vector.broadcast %357 : vector<1x16xf32> to vector<128x16xf32>
    %359 = arith.addf %356, %358 : vector<128x16xf32>
    %c0_478 = arith.constant 0 : index
    %c0_479 = arith.constant 0 : index
    %360 = vector.load %arg21[%c0_478, %c0_479] : memref<128x16xf32, #tpu.memory_space<vmem>>, vector<128x16xf32>
    tpu.vector_store %arg21[%c0_478, %c0_479], %359 {strides = array<i32>} : memref<128x16xf32, #tpu.memory_space<vmem>>, vector<128x16xf32>,
    return
  }
}

</mosaic_0001>

<llo_original>
// kernel: feature_pyramid_forward.1
$region0: #{feature_pyramid_forward.1}
  #allocation0 [shape = 'u32[]', space=smem, size = 0x4, offset = 0x4, fixed_abs, tag = 'smem constant byte address 0x4 - core index']
  #allocation1 [shape = 'u32[144,128]{1,0:T(1,128)}', space=vmem, size = 0x12000, scoped, tag = 'internal scratch']
  #allocation2 [shape = 'f32[2,18,18,4]{3,2,1,0:T(8,128)}', space=vmem, size = 0x6c000, scoped, tag = 'scratch operand']
  #allocation3 [shape = 'f32[128,36]{1,0:T(8,128)}', space=vmem, size = 0x10000, scoped, tag = 'scratch operand']
  #allocation4 [shape = 'f32[2,10,10,8]{3,2,1,0:T(8,128)}', space=vmem, size = 0x28000, scoped, tag = 'scratch operand']
  #allocation5 [shape = 'f32[32,72]{1,0:T(8,128)}', space=vmem, size = 0x4000, scoped, tag = 'scratch operand']
  #allocation6 [shape = 'f32[2,6,6,16]{3,2,1,0:T(8,128)}', space=vmem, size = 0xc000, scoped, tag = 'scratch operand']
  #allocation7 [shape = 'f32[8,144]{1,0:T(8,128)}', space=vmem, size = 0x2000, scoped, tag = 'scratch operand']
  #allocation8 [shape = 'f32[2,4,4,16]{3,2,1,0:T(4,128)}', space=vmem, size = 0x4000, scoped, tag = 'scratch operand']
  #allocation9 [shape = 'f32[8,144]{1,0:T(8,128)}', space=vmem, size = 0x2000, scoped, tag = 'scratch operand']
  #allocation10 [shape = 'f32[2,6,6,16]{3,2,1,0:T(8,128)}', space=vmem, size = 0xc000, scoped, tag = 'scratch operand']
  #allocation11 [shape = 'f32[32,144]{1,0:T(8,128)}', space=vmem, size = 0x8000, scoped, tag = 'scratch operand']
  #allocation12 [shape = 'f32[2,10,10,16]{3,2,1,0:T(8,128)}', space=vmem, size = 0x28000, scoped, tag = 'scratch operand']
  #allocation13 [shape = 'f32[128,144]{1,0:T(8,128)}', space=vmem, size = 0x20000, scoped, tag = 'scratch operand']
  #allocation14 [shape = 'f32[2,4,4,16]{3,2,1,0:T(4,128)}', space=vmem, size = 0x4000, scoped, tag = 'scratch operand']
  #allocation15 [shape = 'f32[2,8,8,16]{3,2,1,0:T(8,128)}', space=vmem, size = 0x10000, scoped, tag = 'scratch operand']
  %s0 = inlined_call_operand.vmem [shape: f32[2,16,16,4], index: 0, kind: input, shape index: {}]
  %s1 = inlined_call_operand.vmem [shape: f32[36,8], index: 1, kind: input, shape index: {}]
  %s2 = inlined_call_operand.vmem [shape: f32[1,8], index: 2, kind: input, shape index: {}]
  %s3 = inlined_call_operand.vmem [shape: f32[72,16], index: 3, kind: input, shape index: {}]
  %s4 = inlined_call_operand.vmem [shape: f32[1,16], index: 4, kind: input, shape index: {}]
  %s5 = inlined_call_operand.vmem [shape: f32[144,32], index: 5, kind: input, shape index: {}]
  %s6 = inlined_call_operand.vmem [shape: f32[1,32], index: 6, kind: input, shape index: {}]
  %s7 = inlined_call_operand.vmem [shape: f32[8,16], index: 7, kind: input, shape index: {}]
  %s8 = inlined_call_operand.vmem [shape: f32[1,16], index: 8, kind: input, shape index: {}]
  %s9 = inlined_call_operand.vmem [shape: f32[16,16], index: 9, kind: input, shape index: {}]
  %s10 = inlined_call_operand.vmem [shape: f32[1,16], index: 10, kind: input, shape index: {}]
  %s11 = inlined_call_operand.vmem [shape: f32[32,16], index: 11, kind: input, shape index: {}]
  %s12 = inlined_call_operand.vmem [shape: f32[1,16], index: 12, kind: input, shape index: {}]
  %s13 = inlined_call_operand.vmem [shape: f32[144,16], index: 13, kind: input, shape index: {}]
  %s14 = inlined_call_operand.vmem [shape: f32[1,16], index: 14, kind: input, shape index: {}]
  %s15 = inlined_call_operand.vmem [shape: f32[144,16], index: 15, kind: input, shape index: {}]
  %s16 = inlined_call_operand.vmem [shape: f32[1,16], index: 16, kind: input, shape index: {}]
  %s17 = inlined_call_operand.vmem [shape: f32[144,16], index: 17, kind: input, shape index: {}]
  %s18 = inlined_call_operand.vmem [shape: f32[1,16], index: 18, kind: input, shape index: {}]
  %s19 = inlined_call_operand.hbm [shape: f32[8,16], index: 19, kind: output, shape index: {0}]
  %s20 = inlined_call_operand.hbm [shape: f32[32,16], index: 20, kind: output, shape index: {1}]
  %s21 = inlined_call_operand.hbm [shape: f32[128,16], index: 21, kind: output, shape index: {2}]
  %22 = xla_tuple %s19, %s20, %s21
  %s23 = sld [smem:[#allocation0]]
  $region102: #{feature_pyramid_forward.1} parent=0
    _
  %s25 = ssub.s32 1, %s23
  %s26 = scalar_select 0, %s25, %s23
  $region1: #{feature_pyramid_forward.1} parent=0
    #allocation16 [shape = 'u8[4096]{0}', space=vmem, size = 0x1000, scoped, tag = 'output window, operand 0, single buffered']
    #allocation17 [shape = 's32[1]{0}', space=sflag, size = 0x4, scoped, tag = 'scoped memory for feature_pyramid_forward.1']
    #allocation18 [shape = 'u8[16384]{0}', space=vmem, size = 0x4000, scoped, tag = 'output window, operand 1, single buffered']
    #allocation19 [shape = 's32[1]{0}', space=sflag, size = 0x4, scoped, tag = 'scoped memory for feature_pyramid_forward.1']
    #allocation20 [shape = 'u8[65536]{0}', space=vmem, size = 0x10000, scoped, tag = 'output window, operand 2, single buffered']
    %27 = vsyncpa [#allocation17], 0
    %28 = vsyncpa [#allocation19], 0
    // Predicated region
    $region2: #{feature_pyramid_forward.1} parent=1 // pred_check
      _
    $region3: #{feature_pyramid_forward.1} parent=1 // pred_check_branch
      %30 = sbr.rel (0) target = $region5
    $region4: #{feature_pyramid_forward.1} parent=1 // pred_region
      _
    $region5: #{feature_pyramid_forward.1} parent=1 // pred_fallthru
      _
    // Predicated region
    $region6: #{feature_pyramid_forward.1} parent=1 // pred_check
      _
    $region7: #{feature_pyramid_forward.1} parent=1 // pred_check_branch
      %32 = sbr.rel (0) target = $region9
    $region8: #{feature_pyramid_forward.1} parent=1 // pred_region
      _
    $region9: #{feature_pyramid_forward.1} parent=1 // pred_fallthru
      _
    // Predicated region
    $region10: #{feature_pyramid_forward.1} parent=1 // pred_check
      _
    $region11: #{feature_pyramid_forward.1} parent=1 // pred_check_branch
      %34 = sbr.rel (0) target = $region13
    $region12: #{feature_pyramid_forward.1} parent=1 // pred_region
      _
    $region13: #{feature_pyramid_forward.1} parent=1 // pred_fallthru
      _
    // Predicated region
    $region14: #{feature_pyramid_forward.1} parent=1 // pred_check
      _
    $region15: #{feature_pyramid_forward.1} parent=1 // pred_check_branch
      %36 = sbr.rel (0) target = $region17
    $region16: #{feature_pyramid_forward.1} parent=1 // pred_region
      _
    $region17: #{feature_pyramid_forward.1} parent=1 // pred_fallthru
      _
    // Predicated region
    $region18: #{feature_pyramid_forward.1} parent=1 // pred_check
      _
    $region19: #{feature_pyramid_forward.1} parent=1 // pred_check_branch
      %38 = sbr.rel (0) target = $region21
    $region20: #{feature_pyramid_forward.1} parent=1 // pred_region
      _
    $region21: #{feature_pyramid_forward.1} parent=1 // pred_fallthru
      _
    // Predicated region
    $region22: #{feature_pyramid_forward.1} parent=1 // pred_check
      _
    $region23: #{feature_pyramid_forward.1} parent=1 // pred_check_branch
      %40 = sbr.rel (0) target = $region25
    $region24: #{feature_pyramid_forward.1} parent=1 // pred_region
      _
    $region25: #{feature_pyramid_forward.1} parent=1 // pred_fallthru
      _
    // Predicated region
    $region26: #{feature_pyramid_forward.1} parent=1 // pred_check
      _
    $region27: #{feature_pyramid_forward.1} parent=1 // pred_check_branch
      %42 = sbr.rel (0) target = $region29
    $region28: #{feature_pyramid_forward.1} parent=1 // pred_region
      _
    $region29: #{feature_pyramid_forward.1} parent=1 // pred_fallthru
      _
    // Predicated region
    $region30: #{feature_pyramid_forward.1} parent=1 // pred_check
      _
    $region31: #{feature_pyramid_forward.1} parent=1 // pred_check_branch
      %44 = sbr.rel (0) target = $region33
    $region32: #{feature_pyramid_forward.1} parent=1 // pred_region
      _
    $region33: #{feature_pyramid_forward.1} parent=1 // pred_fallthru
      _
    // Predicated region
    $region34: #{feature_pyramid_forward.1} parent=1 // pred_check
      _
    $region35: #{feature_pyramid_forward.1} parent=1 // pred_check_branch
      %46 = sbr.rel (0) target = $region37
    $region36: #{feature_pyramid_forward.1} parent=1 // pred_region
      _
    $region37: #{feature_pyramid_forward.1} parent=1 // pred_fallthru
      _
    // Predicated region
    $region38: #{feature_pyramid_forward.1} parent=1 // pred_check
      _
    $region39: #{feature_pyramid_forward.1} parent=1 // pred_check_branch
      %48 = sbr.rel (0) target = $region41
    $region40: #{feature_pyramid_forward.1} parent=1 // pred_region
      _
    $region41: #{feature_pyramid_forward.1} parent=1 // pred_fallthru
      _
    // Predicated region
    $region42: #{feature_pyramid_forward.1} parent=1 // pred_check
      _
    $region43: #{feature_pyramid_forward.1} parent=1 // pred_check_branch
      %50 = sbr.rel (0) target = $region45
    $region44: #{feature_pyramid_forward.1} parent=1 // pred_region
      _
    $region45: #{feature_pyramid_forward.1} parent=1 // pred_fallthru
      _
    // Predicated region
    $region46: #{feature_pyramid_forward.1} parent=1 // pred_check
      _
    $region47: #{feature_pyramid_forward.1} parent=1 // pred_check_branch
      %52 = sbr.rel (0) target = $region49
    $region48: #{feature_pyramid_forward.1} parent=1 // pred_region
      _
    $region49: #{feature_pyramid_forward.1} parent=1 // pred_fallthru
      _
    // Predicated region
    $region50: #{feature_pyramid_forward.1} parent=1 // pred_check
      _
    $region51: #{feature_pyramid_forward.1} parent=1 // pred_check_branch
      %54 = sbr.rel (0) target = $region53
    $region52: #{feature_pyramid_forward.1} parent=1 // pred_region
      _
    $region53: #{feature_pyramid_forward.1} parent=1 // pred_fallthru
      _
    // Predicated region
    $region54: #{feature_pyramid_forward.1} parent=1 // pred_check
      _
    $region55: #{feature_pyramid_forward.1} parent=1 // pred_check_branch
      %56 = sbr.rel (0) target = $region57
    $region56: #{feature_pyramid_forward.1} parent=1 // pred_region
      _
    $region57: #{feature_pyramid_forward.1} parent=1 // pred_fallthru
      _
    // Predicated region
    $region58: #{feature_pyramid_forward.1} parent=1 // pred_check
      _
    $region59: #{feature_pyramid_forward.1} parent=1 // pred_check_branch
      %58 = sbr.rel (0) target = $region61
    $region60: #{feature_pyramid_forward.1} parent=1 // pred_region
      _
    $region61: #{feature_pyramid_forward.1} parent=1 // pred_fallthru
      _
    // Predicated region
    $region62: #{feature_pyramid_forward.1} parent=1 // pred_check
      _
    $region63: #{feature_pyramid_forward.1} parent=1 // pred_check_branch
      %60 = sbr.rel (0) target = $region65
    $region64: #{feature_pyramid_forward.1} parent=1 // pred_region
      _
    $region65: #{feature_pyramid_forward.1} parent=1 // pred_fallthru
      _
    // Predicated region
    $region66: #{feature_pyramid_forward.1} parent=1 // pred_check
      _
    $region67: #{feature_pyramid_forward.1} parent=1 // pred_check_branch
      %62 = sbr.rel (0) target = $region69
    $region68: #{feature_pyramid_forward.1} parent=1 // pred_region
      _
    $region69: #{feature_pyramid_forward.1} parent=1 // pred_fallthru
      _
    // Predicated region
    $region70: #{feature_pyramid_forward.1} parent=1 // pred_check
      _
    $region71: #{feature_pyramid_forward.1} parent=1 // pred_check_branch
      %64 = sbr.rel (0) target = $region73
    $region72: #{feature_pyramid_forward.1} parent=1 // pred_region
      _
    $region73: #{feature_pyramid_forward.1} parent=1 // pred_fallthru
      _
    // Predicated region
    $region74: #{feature_pyramid_forward.1} parent=1 // pred_check
      _
    $region75: #{feature_pyramid_forward.1} parent=1 // pred_check_branch
      %66 = sbr.rel (0) target = $region77
    $region76: #{feature_pyramid_forward.1} parent=1 // pred_region
      _
    $region77: #{feature_pyramid_forward.1} parent=1 // pred_fallthru
      _
    %v67 = vld [vmem:[%s0] sm:$0xff]
    %v68 = vld [vmem:[%s0 + $0x8] sm:$0xff]
    %v69 = vld [vmem:[%s0 + $0x10] sm:$0xff]
    %v70 = vld [vmem:[%s0 + $0x18] sm:$0xff]
    %v71 = vld [vmem:[%s0 + $0x20] sm:$0xff]
    %v72 = vld [vmem:[%s0 + $0x28] sm:$0xff]
    %v73 = vld [vmem:[%s0 + $0x30] sm:$0xff]
    %v74 = vld [vmem:[%s0 + $0x38] sm:$0xff]
    %v75 = vld [vmem:[%s0 + $0x40] sm:$0xff]
    %v76 = vld [vmem:[%s0 + $0x48] sm:$0xff]
    %v77 = vld [vmem:[%s0 + $0x50] sm:$0xff]
    %v78 = vld [vmem:[%s0 + $0x58] sm:$0xff]
    %v79 = vld [vmem:[%s0 + $0x60] sm:$0xff]
    %v80 = vld [vmem:[%s0 + $0x68] sm:$0xff]
    %v81 = vld [vmem:[%s0 + $0x70] sm:$0xff]
    %v82 = vld [vmem:[%s0 + $0x78] sm:$0xff]
    %v83 = vld [vmem:[%s0 + $0x80] sm:$0xff]
    %v84 = vld [vmem:[%s0 + $0x88] sm:$0xff]
    %v85 = vld [vmem:[%s0 + $0x90] sm:$0xff]
    %v86 = vld [vmem:[%s0 + $0x98] sm:$0xff]
    %v87 = vld [vmem:[%s0 + $0xa0] sm:$0xff]
    %v88 = vld [vmem:[%s0 + $0xa8] sm:$0xff]
    %v89 = vld [vmem:[%s0 + $0xb0] sm:$0xff]
    %v90 = vld [vmem:[%s0 + $0xb8] sm:$0xff]
    %v91 = vld [vmem:[%s0 + $0xc0] sm:$0xff]
    %v92 = vld [vmem:[%s0 + $0xc8] sm:$0xff]
    %v93 = vld [vmem:[%s0 + $0xd0] sm:$0xff]
    %v94 = vld [vmem:[%s0 + $0xd8] sm:$0xff]
    %v95 = vld [vmem:[%s0 + $0xe0] sm:$0xff]
    %v96 = vld [vmem:[%s0 + $0xe8] sm:$0xff]
    %v97 = vld [vmem:[%s0 + $0xf0] sm:$0xff]
    %v98 = vld [vmem:[%s0 + $0xf8] sm:$0xff]
    %v99 = vld [vmem:[%s0 + $0x100] sm:$0xff]
    %v100 = vld [vmem:[%s0 + $0x108] sm:$0xff]
    %v101 = vld [vmem:[%s0 + $0x110] sm:$0xff]
    %v102 = vld [vmem:[%s0 + $0x118] sm:$0xff]
    %v103 = vld [vmem:[%s0 + $0x120] sm:$0xff]
    %v104 = vld [vmem:[%s0 + $0x128] sm:$0xff]
    %v105 = vld [vmem:[%s0 + $0x130] sm:$0xff]
    %v106 = vld [vmem:[%s0 + $0x138] sm:$0xff]
    %v107 = vld [vmem:[%s0 + $0x140] sm:$0xff]
    %v108 = vld [vmem:[%s0 + $0x148] sm:$0xff]
    %v109 = vld [vmem:[%s0 + $0x150] sm:$0xff]
    %v110 = vld [vmem:[%s0 + $0x158] sm:$0xff]
    %v111 = vld [vmem:[%s0 + $0x160] sm:$0xff]
    %v112 = vld [vmem:[%s0 + $0x168] sm:$0xff]
    %v113 = vld [vmem:[%s0 + $0x170] sm:$0xff]
    %v114 = vld [vmem:[%s0 + $0x178] sm:$0xff]
    %v115 = vld [vmem:[%s0 + $0x180] sm:$0xff]
    %v116 = vld [vmem:[%s0 + $0x188] sm:$0xff]
    %v117 = vld [vmem:[%s0 + $0x190] sm:$0xff]
    %v118 = vld [vmem:[%s0 + $0x198] sm:$0xff]
    %v119 = vld [vmem:[%s0 + $0x1a0] sm:$0xff]
    %v120 = vld [vmem:[%s0 + $0x1a8] sm:$0xff]
    %v121 = vld [vmem:[%s0 + $0x1b0] sm:$0xff]
    %v122 = vld [vmem:[%s0 + $0x1b8] sm:$0xff]
    %v123 = vld [vmem:[%s0 + $0x1c0] sm:$0xff]
    %v124 = vld [vmem:[%s0 + $0x1c8] sm:$0xff]
    %v125 = vld [vmem:[%s0 + $0x1d0] sm:$0xff]
    %v126 = vld [vmem:[%s0 + $0x1d8] sm:$0xff]
    %v127 = vld [vmem:[%s0 + $0x1e0] sm:$0xff]
    %v128 = vld [vmem:[%s0 + $0x1e8] sm:$0xff]
    %v129 = vld [vmem:[%s0 + $0x1f0] sm:$0xff]
    %v130 = vld [vmem:[%s0 + $0x1f8] sm:$0xff]
    %vm131 = vcmask 31744
    %132 = vst.msk [vmem:[#allocation2] sm:$0xff] %vm131, 0.0
    %133 = vst.msk [vmem:[#allocation2 + $0x8] sm:$0xff] %vm131, 0.0
    %vm134 = vcmask 25600
    %135 = vst.msk [vmem:[#allocation2 + $0x10] sm:$0x3] %vm134, 0.0
    %136 = vst.msk [vmem:[#allocation2 + $0x18] sm:$0xff] %vm131, 0.0
    %137 = vst.msk [vmem:[#allocation2 + $0x20] sm:$0xff] %vm131, 0.0
    %138 = vst.msk [vmem:[#allocation2 + $0x28] sm:$0x3] %vm134, 0.0
    %139 = vst.msk [vmem:[#allocation2 + $0x30] sm:$0xff] %vm131, 0.0
    %140 = vst.msk [vmem:[#allocation2 + $0x38] sm:$0xff] %vm131, 0.0
    %141 = vst.msk [vmem:[#allocation2 + $0x40] sm:$0x3] %vm134, 0.0
    %142 = vst.msk [vmem:[#allocation2 + $0x48] sm:$0xff] %vm131, 0.0
    %143 = vst.msk [vmem:[#allocation2 + $0x50] sm:$0xff] %vm131, 0.0
    %144 = vst.msk [vmem:[#allocation2 + $0x58] sm:$0x3] %vm134, 0.0
    %145 = vst.msk [vmem:[#allocation2 + $0x60] sm:$0xff] %vm131, 0.0
    %146 = vst.msk [vmem:[#allocation2 + $0x68] sm:$0xff] %vm131, 0.0
    %147 = vst.msk [vmem:[#allocation2 + $0x70] sm:$0x3] %vm134, 0.0
    %148 = vst.msk [vmem:[#allocation2 + $0x78] sm:$0xff] %vm131, 0.0
    %149 = vst.msk [vmem:[#allocation2 + $0x80] sm:$0xff] %vm131, 0.0
    %150 = vst.msk [vmem:[#allocation2 + $0x88] sm:$0x3] %vm134, 0.0
    %151 = vst.msk [vmem:[#allocation2 + $0x90] sm:$0xff] %vm131, 0.0
    %152 = vst.msk [vmem:[#allocation2 + $0x98] sm:$0xff] %vm131, 0.0
    %153 = vst.msk [vmem:[#allocation2 + $0xa0] sm:$0x3] %vm134, 0.0
    %154 = vst.msk [vmem:[#allocation2 + $0xa8] sm:$0xff] %vm131, 0.0
    %155 = vst.msk [vmem:[#allocation2 + $0xb0] sm:$0xff] %vm131, 0.0
    %156 = vst.msk [vmem:[#allocation2 + $0xb8] sm:$0x3] %vm134, 0.0
    %157 = vst.msk [vmem:[#allocation2 + $0xc0] sm:$0xff] %vm131, 0.0
    %158 = vst.msk [vmem:[#allocation2 + $0xc8] sm:$0xff] %vm131, 0.0
    %159 = vst.msk [vmem:[#allocation2 + $0xd0] sm:$0x3] %vm134, 0.0
    %160 = vst.msk [vmem:[#allocation2 + $0xd8] sm:$0xff] %vm131, 0.0
    %161 = vst.msk [vmem:[#allocation2 + $0xe0] sm:$0xff] %vm131, 0.0
    %162 = vst.msk [vmem:[#allocation2 + $0xe8] sm:$0x3] %vm134, 0.0
    %163 = vst.msk [vmem:[#allocation2 + $0xf0] sm:$0xff] %vm131, 0.0
    %164 = vst.msk [vmem:[#allocation2 + $0xf8] sm:$0xff] %vm131, 0.0
    %165 = vst.msk [vmem:[#allocation2 + $0x100] sm:$0x3] %vm134, 0.0
    %166 = vst.msk [vmem:[#allocation2 + $0x108] sm:$0xff] %vm131, 0.0
    %167 = vst.msk [vmem:[#allocation2 + $0x110] sm:$0xff] %vm131, 0.0
    %168 = vst.msk [vmem:[#allocation2 + $0x118] sm:$0x3] %vm134, 0.0
    %169 = vst.msk [vmem:[#allocation2 + $0x120] sm:$0xff] %vm131, 0.0
    %170 = vst.msk [vmem:[#allocation2 + $0x128] sm:$0xff] %vm131, 0.0
    %171 = vst.msk [vmem:[#allocation2 + $0x130] sm:$0x3] %vm134, 0.0
    %172 = vst.msk [vmem:[#allocation2 + $0x138] sm:$0xff] %vm131, 0.0
    %173 = vst.msk [vmem:[#allocation2 + $0x140] sm:$0xff] %vm131, 0.0
    %174 = vst.msk [vmem:[#allocation2 + $0x148] sm:$0x3] %vm134, 0.0
    %175 = vst.msk [vmem:[#allocation2 + $0x150] sm:$0xff] %vm131, 0.0
    %176 = vst.msk [vmem:[#allocation2 + $0x158] sm:$0xff] %vm131, 0.0
    %177 = vst.msk [vmem:[#allocation2 + $0x160] sm:$0x3] %vm134, 0.0
    %178 = vst.msk [vmem:[#allocation2 + $0x168] sm:$0xff] %vm131, 0.0
    %179 = vst.msk [vmem:[#allocation2 + $0x170] sm:$0xff] %vm131, 0.0
    %180 = vst.msk [vmem:[#allocation2 + $0x178] sm:$0x3] %vm134, 0.0
    %181 = vst.msk [vmem:[#allocation2 + $0x180] sm:$0xff] %vm131, 0.0
    %182 = vst.msk [vmem:[#allocation2 + $0x188] sm:$0xff] %vm131, 0.0
    %183 = vst.msk [vmem:[#allocation2 + $0x190] sm:$0x3] %vm134, 0.0
    %184 = vst.msk [vmem:[#allocation2 + $0x198] sm:$0xff] %vm131, 0.0
    %185 = vst.msk [vmem:[#allocation2 + $0x1a0] sm:$0xff] %vm131, 0.0
    %186 = vst.msk [vmem:[#allocation2 + $0x1a8] sm:$0x3] %vm134, 0.0
    %187 = vst.msk [vmem:[#allocation2 + $0x1b0] sm:$0xff] %vm131, 0.0
    %188 = vst.msk [vmem:[#allocation2 + $0x1b8] sm:$0xff] %vm131, 0.0
    %189 = vst.msk [vmem:[#allocation2 + $0x1c0] sm:$0x3] %vm134, 0.0
    %190 = vst.msk [vmem:[#allocation2 + $0x1c8] sm:$0xff] %vm131, 0.0
    %191 = vst.msk [vmem:[#allocation2 + $0x1d0] sm:$0xff] %vm131, 0.0
    %192 = vst.msk [vmem:[#allocation2 + $0x1d8] sm:$0x3] %vm134, 0.0
    %193 = vst.msk [vmem:[#allocation2 + $0x1e0] sm:$0xff] %vm131, 0.0
    %194 = vst.msk [vmem:[#allocation2 + $0x1e8] sm:$0xff] %vm131, 0.0
    %195 = vst.msk [vmem:[#allocation2 + $0x1f0] sm:$0x3] %vm134, 0.0
    %196 = vst.msk [vmem:[#allocation2 + $0x1f8] sm:$0xff] %vm131, 0.0
    %197 = vst.msk [vmem:[#allocation2 + $0x200] sm:$0xff] %vm131, 0.0
    %198 = vst.msk [vmem:[#allocation2 + $0x208] sm:$0x3] %vm134, 0.0
    %199 = vst.msk [vmem:[#allocation2 + $0x210] sm:$0xff] %vm131, 0.0
    %200 = vst.msk [vmem:[#allocation2 + $0x218] sm:$0xff] %vm131, 0.0
    %201 = vst.msk [vmem:[#allocation2 + $0x220] sm:$0x3] %vm134, 0.0
    %202 = vst.msk [vmem:[#allocation2 + $0x228] sm:$0xff] %vm131, 0.0
    %203 = vst.msk [vmem:[#allocation2 + $0x230] sm:$0xff] %vm131, 0.0
    %204 = vst.msk [vmem:[#allocation2 + $0x238] sm:$0x3] %vm134, 0.0
    %205 = vst.msk [vmem:[#allocation2 + $0x240] sm:$0xff] %vm131, 0.0
    %206 = vst.msk [vmem:[#allocation2 + $0x248] sm:$0xff] %vm131, 0.0
    %207 = vst.msk [vmem:[#allocation2 + $0x250] sm:$0x3] %vm134, 0.0
    %208 = vst.msk [vmem:[#allocation2 + $0x258] sm:$0xff] %vm131, 0.0
    %209 = vst.msk [vmem:[#allocation2 + $0x260] sm:$0xff] %vm131, 0.0
    %210 = vst.msk [vmem:[#allocation2 + $0x268] sm:$0x3] %vm134, 0.0
    %211 = vst.msk [vmem:[#allocation2 + $0x270] sm:$0xff] %vm131, 0.0
    %212 = vst.msk [vmem:[#allocation2 + $0x278] sm:$0xff] %vm131, 0.0
    %213 = vst.msk [vmem:[#allocation2 + $0x280] sm:$0x3] %vm134, 0.0
    %214 = vst.msk [vmem:[#allocation2 + $0x288] sm:$0xff] %vm131, 0.0
    %215 = vst.msk [vmem:[#allocation2 + $0x290] sm:$0xff] %vm131, 0.0
    %216 = vst.msk [vmem:[#allocation2 + $0x298] sm:$0x3] %vm134, 0.0
    %217 = vst.msk [vmem:[#allocation2 + $0x2a0] sm:$0xff] %vm131, 0.0
    %218 = vst.msk [vmem:[#allocation2 + $0x2a8] sm:$0xff] %vm131, 0.0
    %219 = vst.msk [vmem:[#allocation2 + $0x2b0] sm:$0x3] %vm134, 0.0
    %220 = vst.msk [vmem:[#allocation2 + $0x2b8] sm:$0xff] %vm131, 0.0
    %221 = vst.msk [vmem:[#allocation2 + $0x2c0] sm:$0xff] %vm131, 0.0
    %222 = vst.msk [vmem:[#allocation2 + $0x2c8] sm:$0x3] %vm134, 0.0
    %223 = vst.msk [vmem:[#allocation2 + $0x2d0] sm:$0xff] %vm131, 0.0
    %224 = vst.msk [vmem:[#allocation2 + $0x2d8] sm:$0xff] %vm131, 0.0
    %225 = vst.msk [vmem:[#allocation2 + $0x2e0] sm:$0x3] %vm134, 0.0
    %226 = vst.msk [vmem:[#allocation2 + $0x2e8] sm:$0xff] %vm131, 0.0
    %227 = vst.msk [vmem:[#allocation2 + $0x2f0] sm:$0xff] %vm131, 0.0
    %228 = vst.msk [vmem:[#allocation2 + $0x2f8] sm:$0x3] %vm134, 0.0
    %229 = vst.msk [vmem:[#allocation2 + $0x300] sm:$0xff] %vm131, 0.0
    %230 = vst.msk [vmem:[#allocation2 + $0x308] sm:$0xff] %vm131, 0.0
    %231 = vst.msk [vmem:[#allocation2 + $0x310] sm:$0x3] %vm134, 0.0
    %232 = vst.msk [vmem:[#allocation2 + $0x318] sm:$0xff] %vm131, 0.0
    %233 = vst.msk [vmem:[#allocation2 + $0x320] sm:$0xff] %vm131, 0.0
    %234 = vst.msk [vmem:[#allocation2 + $0x328] sm:$0x3] %vm134, 0.0
    %235 = vst.msk [vmem:[#allocation2 + $0x330] sm:$0xff] %vm131, 0.0
    %236 = vst.msk [vmem:[#allocation2 + $0x338] sm:$0xff] %vm131, 0.0
    %237 = vst.msk [vmem:[#allocation2 + $0x340] sm:$0x3] %vm134, 0.0
    %238 = vst.msk [vmem:[#allocation2 + $0x348] sm:$0xff] %vm131, 0.0
    %239 = vst.msk [vmem:[#allocation2 + $0x350] sm:$0xff] %vm131, 0.0
    %240 = vst.msk [vmem:[#allocation2 + $0x358] sm:$0x3] %vm134, 0.0
    %s241 = scalar_lea.vmem [#allocation2], 24
    %242 = vst.msk [vmem:[%s241 + $0x1] sm:$0xff] %vm131, %v67
    %243 = vst.msk [vmem:[%s241 + $0x9] sm:$0xff] %vm131, %v68
    %244 = vst.msk [vmem:[%s241 + $0x19] sm:$0xff] %vm131, %v69
    %245 = vst.msk [vmem:[%s241 + $0x21] sm:$0xff] %vm131, %v70
    %246 = vst.msk [vmem:[%s241 + $0x31] sm:$0xff] %vm131, %v71
    %247 = vst.msk [vmem:[%s241 + $0x39] sm:$0xff] %vm131, %v72
    %248 = vst.msk [vmem:[%s241 + $0x49] sm:$0xff] %vm131, %v73
    %249 = vst.msk [vmem:[%s241 + $0x51] sm:$0xff] %vm131, %v74
    %250 = vst.msk [vmem:[%s241 + $0x61] sm:$0xff] %vm131, %v75
    %251 = vst.msk [vmem:[%s241 + $0x69] sm:$0xff] %vm131, %v76
    %252 = vst.msk [vmem:[%s241 + $0x79] sm:$0xff] %vm131, %v77
    %253 = vst.msk [vmem:[%s241 + $0x81] sm:$0xff] %vm131, %v78
    %254 = vst.msk [vmem:[%s241 + $0x91] sm:$0xff] %vm131, %v79
    %255 = vst.msk [vmem:[%s241 + $0x99] sm:$0xff] %vm131, %v80
    %256 = vst.msk [vmem:[%s241 + $0xa9] sm:$0xff] %vm131, %v81
    %257 = vst.msk [vmem:[%s241 + $0xb1] sm:$0xff] %vm131, %v82
    %258 = vst.msk [vmem:[%s241 + $0xc1] sm:$0xff] %vm131, %v83
    %259 = vst.msk [vmem:[%s241 + $0xc9] sm:$0xff] %vm131, %v84
    %260 = vst.msk [vmem:[%s241 + $0xd9] sm:$0xff] %vm131, %v85
    %261 = vst.msk [vmem:[%s241 + $0xe1] sm:$0xff] %vm131, %v86
    %262 = vst.msk [vmem:[%s241 + $0xf1] sm:$0xff] %vm131, %v87
    %263 = vst.msk [vmem:[%s241 + $0xf9] sm:$0xff] %vm131, %v88
    %264 = vst.msk [vmem:[%s241 + $0x109] sm:$0xff] %vm131, %v89
    %265 = vst.msk [vmem:[%s241 + $0x111] sm:$0xff] %vm131, %v90
    %266 = vst.msk [vmem:[%s241 + $0x121] sm:$0xff] %vm131, %v91
    %267 = vst.msk [vmem:[%s241 + $0x129] sm:$0xff] %vm131, %v92
    %268 = vst.msk [vmem:[%s241 + $0x139] sm:$0xff] %vm131, %v93
    %269 = vst.msk [vmem:[%s241 + $0x141] sm:$0xff] %vm131, %v94
    %270 = vst.msk [vmem:[%s241 + $0x151] sm:$0xff] %vm131, %v95
    %271 = vst.msk [vmem:[%s241 + $0x159] sm:$0xff] %vm131, %v96
    %272 = vst.msk [vmem:[%s241 + $0x169] sm:$0xff] %vm131, %v97
    %273 = vst.msk [vmem:[%s241 + $0x171] sm:$0xff] %vm131, %v98
    %274 = vst.msk [vmem:[%s241 + $0x1b1] sm:$0xff] %vm131, %v99
    %275 = vst.msk [vmem:[%s241 + $0x1b9] sm:$0xff] %vm131, %v100
    %276 = vst.msk [vmem:[%s241 + $0x1c9] sm:$0xff] %vm131, %v101
    %277 = vst.msk [vmem:[%s241 + $0x1d1] sm:$0xff] %vm131, %v102
    %278 = vst.msk [vmem:[%s241 + $0x1e1] sm:$0xff] %vm131, %v103
    %279 = vst.msk [vmem:[%s241 + $0x1e9] sm:$0xff] %vm131, %v104
    %280 = vst.msk [vmem:[%s241 + $0x1f9] sm:$0xff] %vm131, %v105
    %281 = vst.msk [vmem:[%s241 + $0x201] sm:$0xff] %vm131, %v106
    %282 = vst.msk [vmem:[%s241 + $0x211] sm:$0xff] %vm131, %v107
    %283 = vst.msk [vmem:[%s241 + $0x219] sm:$0xff] %vm131, %v108
    %284 = vst.msk [vmem:[%s241 + $0x229] sm:$0xff] %vm131, %v109
    %285 = vst.msk [vmem:[%s241 + $0x231] sm:$0xff] %vm131, %v110
    %286 = vst.msk [vmem:[%s241 + $0x241] sm:$0xff] %vm131, %v111
    %287 = vst.msk [vmem:[%s241 + $0x249] sm:$0xff] %vm131, %v112
    %288 = vst.msk [vmem:[%s241 + $0x259] sm:$0xff] %vm131, %v113
    %289 = vst.msk [vmem:[%s241 + $0x261] sm:$0xff] %vm131, %v114
    %290 = vst.msk [vmem:[%s241 + $0x271] sm:$0xff] %vm131, %v115
    %291 = vst.msk [vmem:[%s241 + $0x279] sm:$0xff] %vm131, %v116
    %292 = vst.msk [vmem:[%s241 + $0x289] sm:$0xff] %vm131, %v117
    %293 = vst.msk [vmem:[%s241 + $0x291] sm:$0xff] %vm131, %v118
    %294 = vst.msk [vmem:[%s241 + $0x2a1] sm:$0xff] %vm131, %v119
    %295 = vst.msk [vmem:[%s241 + $0x2a9] sm:$0xff] %vm131, %v120
    %296 = vst.msk [vmem:[%s241 + $0x2b9] sm:$0xff] %vm131, %v121
    %297 = vst.msk [vmem:[%s241 + $0x2c1] sm:$0xff] %vm131, %v122
    %298 = vst.msk [vmem:[%s241 + $0x2d1] sm:$0xff] %vm131, %v123
    %299 = vst.msk [vmem:[%s241 + $0x2d9] sm:$0xff] %vm131, %v124
    %300 = vst.msk [vmem:[%s241 + $0x2e9] sm:$0xff] %vm131, %v125
    %301 = vst.msk [vmem:[%s241 + $0x2f1] sm:$0xff] %vm131, %v126
    %302 = vst.msk [vmem:[%s241 + $0x301] sm:$0xff] %vm131, %v127
    %303 = vst.msk [vmem:[%s241 + $0x309] sm:$0xff] %vm131, %v128
    %304 = vst.msk [vmem:[%s241 + $0x319] sm:$0xff] %vm131, %v129
    %305 = vst.msk [vmem:[%s241 + $0x321] sm:$0xff] %vm131, %v130
    %v306 = vld [vmem:[#allocation2] ss:$2 sm:$0xff]
    %s307 = scalar_lea.vmem [#allocation2], 48
    %v308 = vld [vmem:[%s307] ss:$2 sm:$0xff]
    %s309 = scalar_lea.vmem [#allocation2], 96
    %v310 = vld [vmem:[%s309] ss:$2 sm:$0xff]
    %s311 = scalar_lea.vmem [#allocation2], 144
    %v312 = vld [vmem:[%s311] ss:$2 sm:$0xff]
    %s313 = scalar_lea.vmem [#allocation2], 192
    %v314 = vld [vmem:[%s313] ss:$2 sm:$0xff]
    %s315 = scalar_lea.vmem [#allocation2], 240
    %v316 = vld [vmem:[%s315] ss:$2 sm:$0xff]
    %s317 = scalar_lea.vmem [#allocation2], 288
    %v318 = vld [vmem:[%s317] ss:$2 sm:$0xff]
    %s319 = scalar_lea.vmem [#allocation2], 336
    %v320 = vld [vmem:[%s319] ss:$2 sm:$0xff]
    %s321 = scalar_lea.vmem [#allocation2], 432
    %v322 = vld [vmem:[%s321] ss:$2 sm:$0xff]
    %s323 = scalar_lea.vmem [#allocation2], 480
    %v324 = vld [vmem:[%s323] ss:$2 sm:$0xff]
    %s325 = scalar_lea.vmem [#allocation2], 528
    %v326 = vld [vmem:[%s325] ss:$2 sm:$0xff]
    %s327 = scalar_lea.vmem [#allocation2], 576
    %v328 = vld [vmem:[%s327] ss:$2 sm:$0xff]
    %s329 = scalar_lea.vmem [#allocation2], 624
    %v330 = vld [vmem:[%s329] ss:$2 sm:$0xff]
    %s331 = scalar_lea.vmem [#allocation2], 672
    %v332 = vld [vmem:[%s331] ss:$2 sm:$0xff]
    %s333 = scalar_lea.vmem [#allocation2], 720
    %v334 = vld [vmem:[%s333] ss:$2 sm:$0xff]
    %s335 = scalar_lea.vmem [#allocation2], 768
    %v336 = vld [vmem:[%s335] ss:$2 sm:$0xff]
    %337 = vst.msk [vmem:[#allocation3] sm:$0xff] %vm131, %v306
    %338 = vst.msk [vmem:[#allocation3 + $0x8] sm:$0xff] %vm131, %v308
    %339 = vst.msk [vmem:[#allocation3 + $0x10] sm:$0xff] %vm131, %v310
    %340 = vst.msk [vmem:[#allocation3 + $0x18] sm:$0xff] %vm131, %v312
    %341 = vst.msk [vmem:[#allocation3 + $0x20] sm:$0xff] %vm131, %v314
    %342 = vst.msk [vmem:[#allocation3 + $0x28] sm:$0xff] %vm131, %v316
    %343 = vst.msk [vmem:[#allocation3 + $0x30] sm:$0xff] %vm131, %v318
    %344 = vst.msk [vmem:[#allocation3 + $0x38] sm:$0xff] %vm131, %v320
    %345 = vst.msk [vmem:[#allocation3 + $0x40] sm:$0xff] %vm131, %v322
    %346 = vst.msk [vmem:[#allocation3 + $0x48] sm:$0xff] %vm131, %v324
    %347 = vst.msk [vmem:[#allocation3 + $0x50] sm:$0xff] %vm131, %v326
    %348 = vst.msk [vmem:[#allocation3 + $0x58] sm:$0xff] %vm131, %v328
    %349 = vst.msk [vmem:[#allocation3 + $0x60] sm:$0xff] %vm131, %v330
    %350 = vst.msk [vmem:[#allocation3 + $0x68] sm:$0xff] %vm131, %v332
    %351 = vst.msk [vmem:[#allocation3 + $0x70] sm:$0xff] %vm131, %v334
    %352 = vst.msk [vmem:[#allocation3 + $0x78] sm:$0xff] %vm131, %v336
    %s353 = scalar_lea.vmem [#allocation2], 1
    %v354 = vld [vmem:[%s353] ss:$2 sm:$0xff]
    %s355 = scalar_lea.vmem [#allocation2], 49
    %v356 = vld [vmem:[%s355] ss:$2 sm:$0xff]
    %s357 = scalar_lea.vmem [#allocation2], 97
    %v358 = vld [vmem:[%s357] ss:$2 sm:$0xff]
    %s359 = scalar_lea.vmem [#allocation2], 145
    %v360 = vld [vmem:[%s359] ss:$2 sm:$0xff]
    %s361 = scalar_lea.vmem [#allocation2], 193
    %v362 = vld [vmem:[%s361] ss:$2 sm:$0xff]
    %s363 = scalar_lea.vmem [#allocation2], 241
    %v364 = vld [vmem:[%s363] ss:$2 sm:$0xff]
    %s365 = scalar_lea.vmem [#allocation2], 289
    %v366 = vld [vmem:[%s365] ss:$2 sm:$0xff]
    %s367 = scalar_lea.vmem [#allocation2], 337
    %v368 = vld [vmem:[%s367] ss:$2 sm:$0xff]
    %s369 = scalar_lea.vmem [#allocation2], 433
    %v370 = vld [vmem:[%s369] ss:$2 sm:$0xff]
    %s371 = scalar_lea.vmem [#allocation2], 481
    %v372 = vld [vmem:[%s371] ss:$2 sm:$0xff]
    %s373 = scalar_lea.vmem [#allocation2], 529
    %v374 = vld [vmem:[%s373] ss:$2 sm:$0xff]
    %s375 = scalar_lea.vmem [#allocation2], 577
    %v376 = vld [vmem:[%s375] ss:$2 sm:$0xff]
    %s377 = scalar_lea.vmem [#allocation2], 625
    %v378 = vld [vmem:[%s377] ss:$2 sm:$0xff]
    %s379 = scalar_lea.vmem [#allocation2], 673
    %v380 = vld [vmem:[%s379] ss:$2 sm:$0xff]
    %s381 = scalar_lea.vmem [#allocation2], 721
    %v382 = vld [vmem:[%s381] ss:$2 sm:$0xff]
    %s383 = scalar_lea.vmem [#allocation2], 769
    %v384 = vld [vmem:[%s383] ss:$2 sm:$0xff]
    %401 = vrot.lane.b32.xlu0 %v354, 4
    %v402 = vpop.permute.xlu0 %401
    %403 = vrot.lane.b32.xlu0 %v356, 4
    %v404 = vpop.permute.xlu0 %403
    %405 = vrot.lane.b32.xlu0 %v358, 4
    %v406 = vpop.permute.xlu0 %405
    %407 = vrot.lane.b32.xlu0 %v360, 4
    %v408 = vpop.permute.xlu0 %407
    %409 = vrot.lane.b32.xlu0 %v362, 4
    %v410 = vpop.permute.xlu0 %409
    %411 = vrot.lane.b32.xlu0 %v364, 4
    %v412 = vpop.permute.xlu0 %411
    %413 = vrot.lane.b32.xlu0 %v366, 4
    %v414 = vpop.permute.xlu0 %413
    %415 = vrot.lane.b32.xlu0 %v368, 4
    %v416 = vpop.permute.xlu0 %415
    %417 = vrot.lane.b32.xlu0 %v370, 4
    %v418 = vpop.permute.xlu0 %417
    %419 = vrot.lane.b32.xlu0 %v372, 4
    %v420 = vpop.permute.xlu0 %419
    %421 = vrot.lane.b32.xlu0 %v374, 4
    %v422 = vpop.permute.xlu0 %421
    %423 = vrot.lane.b32.xlu0 %v376, 4
    %v424 = vpop.permute.xlu0 %423
    %425 = vrot.lane.b32.xlu0 %v378, 4
    %v426 = vpop.permute.xlu0 %425
    %427 = vrot.lane.b32.xlu0 %v380, 4
    %v428 = vpop.permute.xlu0 %427
    %429 = vrot.lane.b32.xlu0 %v382, 4
    %v430 = vpop.permute.xlu0 %429
    %431 = vrot.lane.b32.xlu0 %v384, 4
    %v432 = vpop.permute.xlu0 %431
    %vm449 = vcmask 64544
    %450 = vst.msk [vmem:[#allocation3] sm:$0xff] %vm449, %v402
    %451 = vst.msk [vmem:[#allocation3 + $0x8] sm:$0xff] %vm449, %v404
    %452 = vst.msk [vmem:[#allocation3 + $0x10] sm:$0xff] %vm449, %v406
    %453 = vst.msk [vmem:[#allocation3 + $0x18] sm:$0xff] %vm449, %v408
    %454 = vst.msk [vmem:[#allocation3 + $0x20] sm:$0xff] %vm449, %v410
    %455 = vst.msk [vmem:[#allocation3 + $0x28] sm:$0xff] %vm449, %v412
    %456 = vst.msk [vmem:[#allocation3 + $0x30] sm:$0xff] %vm449, %v414
    %457 = vst.msk [vmem:[#allocation3 + $0x38] sm:$0xff] %vm449, %v416
    %458 = vst.msk [vmem:[#allocation3 + $0x40] sm:$0xff] %vm449, %v418
    %459 = vst.msk [vmem:[#allocation3 + $0x48] sm:$0xff] %vm449, %v420
    %460 = vst.msk [vmem:[#allocation3 + $0x50] sm:$0xff] %vm449, %v422
    %461 = vst.msk [vmem:[#allocation3 + $0x58] sm:$0xff] %vm449, %v424
    %462 = vst.msk [vmem:[#allocation3 + $0x60] sm:$0xff] %vm449, %v426
    %463 = vst.msk [vmem:[#allocation3 + $0x68] sm:$0xff] %vm449, %v428
    %464 = vst.msk [vmem:[#allocation3 + $0x70] sm:$0xff] %vm449, %v430
    %465 = vst.msk [vmem:[#allocation3 + $0x78] sm:$0xff] %vm449, %v432
    %s466 = scalar_lea.vmem [#allocation2], 2
    %v467 = vld [vmem:[%s466] ss:$2 sm:$0xff]
    %s468 = scalar_lea.vmem [#allocation2], 50
    %v469 = vld [vmem:[%s468] ss:$2 sm:$0xff]
    %s470 = scalar_lea.vmem [#allocation2], 98
    %v471 = vld [vmem:[%s470] ss:$2 sm:$0xff]
    %s472 = scalar_lea.vmem [#allocation2], 146
    %v473 = vld [vmem:[%s472] ss:$2 sm:$0xff]
    %s474 = scalar_lea.vmem [#allocation2], 194
    %v475 = vld [vmem:[%s474] ss:$2 sm:$0xff]
    %s476 = scalar_lea.vmem [#allocation2], 242
    %v477 = vld [vmem:[%s476] ss:$2 sm:$0xff]
    %s478 = scalar_lea.vmem [#allocation2], 290
    %v479 = vld [vmem:[%s478] ss:$2 sm:$0xff]
    %s480 = scalar_lea.vmem [#allocation2], 338
    %v481 = vld [vmem:[%s480] ss:$2 sm:$0xff]
    %s482 = scalar_lea.vmem [#allocation2], 434
    %v483 = vld [vmem:[%s482] ss:$2 sm:$0xff]
    %s484 = scalar_lea.vmem [#allocation2], 482
    %v485 = vld [vmem:[%s484] ss:$2 sm:$0xff]
    %s486 = scalar_lea.vmem [#allocation2], 530
    %v487 = vld [vmem:[%s486] ss:$2 sm:$0xff]
    %s488 = scalar_lea.vmem [#allocation2], 578
    %v489 = vld [vmem:[%s488] ss:$2 sm:$0xff]
    %s490 = scalar_lea.vmem [#allocation2], 626
    %v491 = vld [vmem:[%s490] ss:$2 sm:$0xff]
    %s492 = scalar_lea.vmem [#allocation2], 674
    %v493 = vld [vmem:[%s492] ss:$2 sm:$0xff]
    %s494 = scalar_lea.vmem [#allocation2], 722
    %v495 = vld [vmem:[%s494] ss:$2 sm:$0xff]
    %s496 = scalar_lea.vmem [#allocation2], 770
    %v497 = vld [vmem:[%s496] ss:$2 sm:$0xff]
    %514 = vrot.lane.b32.xlu0 %v467, 8
    %v515 = vpop.permute.xlu0 %514
    %516 = vrot.lane.b32.xlu0 %v469, 8
    %v517 = vpop.permute.xlu0 %516
    %518 = vrot.lane.b32.xlu0 %v471, 8
    %v519 = vpop.permute.xlu0 %518
    %520 = vrot.lane.b32.xlu0 %v473, 8
    %v521 = vpop.permute.xlu0 %520
    %522 = vrot.lane.b32.xlu0 %v475, 8
    %v523 = vpop.permute.xlu0 %522
    %524 = vrot.lane.b32.xlu0 %v477, 8
    %v525 = vpop.permute.xlu0 %524
    %526 = vrot.lane.b32.xlu0 %v479, 8
    %v527 = vpop.permute.xlu0 %526
    %528 = vrot.lane.b32.xlu0 %v481, 8
    %v529 = vpop.permute.xlu0 %528
    %530 = vrot.lane.b32.xlu0 %v483, 8
    %v531 = vpop.permute.xlu0 %530
    %532 = vrot.lane.b32.xlu0 %v485, 8
    %v533 = vpop.permute.xlu0 %532
    %534 = vrot.lane.b32.xlu0 %v487, 8
    %v535 = vpop.permute.xlu0 %534
    %536 = vrot.lane.b32.xlu0 %v489, 8
    %v537 = vpop.permute.xlu0 %536
    %538 = vrot.lane.b32.xlu0 %v491, 8
    %v539 = vpop.permute.xlu0 %538
    %540 = vrot.lane.b32.xlu0 %v493, 8
    %v541 = vpop.permute.xlu0 %540
    %542 = vrot.lane.b32.xlu0 %v495, 8
    %v543 = vpop.permute.xlu0 %542
    %544 = vrot.lane.b32.xlu0 %v497, 8
    %v545 = vpop.permute.xlu0 %544
    %vm562 = vcmask 97344
    %563 = vst.msk [vmem:[#allocation3] sm:$0xff] %vm562, %v515
    %564 = vst.msk [vmem:[#allocation3 + $0x8] sm:$0xff] %vm562, %v517
    %565 = vst.msk [vmem:[#allocation3 + $0x10] sm:$0xff] %vm562, %v519
    %566 = vst.msk [vmem:[#allocation3 + $0x18] sm:$0xff] %vm562, %v521
    %567 = vst.msk [vmem:[#allocation3 + $0x20] sm:$0xff] %vm562, %v523
    %568 = vst.msk [vmem:[#allocation3 + $0x28] sm:$0xff] %vm562, %v525
    %569 = vst.msk [vmem:[#allocation3 + $0x30] sm:$0xff] %vm562, %v527
    %570 = vst.msk [vmem:[#allocation3 + $0x38] sm:$0xff] %vm562, %v529
    %571 = vst.msk [vmem:[#allocation3 + $0x40] sm:$0xff] %vm562, %v531
    %572 = vst.msk [vmem:[#allocation3 + $0x48] sm:$0xff] %vm562, %v533
    %573 = vst.msk [vmem:[#allocation3 + $0x50] sm:$0xff] %vm562, %v535
    %574 = vst.msk [vmem:[#allocation3 + $0x58] sm:$0xff] %vm562, %v537
    %575 = vst.msk [vmem:[#allocation3 + $0x60] sm:$0xff] %vm562, %v539
    %576 = vst.msk [vmem:[#allocation3 + $0x68] sm:$0xff] %vm562, %v541
    %577 = vst.msk [vmem:[#allocation3 + $0x70] sm:$0xff] %vm562, %v543
    %578 = vst.msk [vmem:[#allocation3 + $0x78] sm:$0xff] %vm562, %v545
    %v579 = vld [vmem:[%s241] ss:$2 sm:$0xff]
    %s580 = scalar_lea.vmem %s241, 48 [#allocation2]
    %v581 = vld [vmem:[%s580] ss:$2 sm:$0xff]
    %s582 = scalar_lea.vmem %s241, 96 [#allocation2]
    %v583 = vld [vmem:[%s582] ss:$2 sm:$0xff]
    %s584 = scalar_lea.vmem %s241, 144 [#allocation2]
    %v585 = vld [vmem:[%s584] ss:$2 sm:$0xff]
    %s586 = scalar_lea.vmem %s241, 192 [#allocation2]
    %v587 = vld [vmem:[%s586] ss:$2 sm:$0xff]
    %s588 = scalar_lea.vmem %s241, 240 [#allocation2]
    %v589 = vld [vmem:[%s588] ss:$2 sm:$0xff]
    %s590 = scalar_lea.vmem %s241, 288 [#allocation2]
    %v591 = vld [vmem:[%s590] ss:$2 sm:$0xff]
    %s592 = scalar_lea.vmem %s241, 336 [#allocation2]
    %v593 = vld [vmem:[%s592] ss:$2 sm:$0xff]
    %s594 = scalar_lea.vmem %s241, 432 [#allocation2]
    %v595 = vld [vmem:[%s594] ss:$2 sm:$0xff]
    %s596 = scalar_lea.vmem %s241, 480 [#allocation2]
    %v597 = vld [vmem:[%s596] ss:$2 sm:$0xff]
    %s598 = scalar_lea.vmem %s241, 528 [#allocation2]
    %v599 = vld [vmem:[%s598] ss:$2 sm:$0xff]
    %s600 = scalar_lea.vmem %s241, 576 [#allocation2]
    %v601 = vld [vmem:[%s600] ss:$2 sm:$0xff]
    %s602 = scalar_lea.vmem %s241, 624 [#allocation2]
    %v603 = vld [vmem:[%s602] ss:$2 sm:$0xff]
    %s604 = scalar_lea.vmem %s241, 672 [#allocation2]
    %v605 = vld [vmem:[%s604] ss:$2 sm:$0xff]
    %s606 = scalar_lea.vmem %s241, 720 [#allocation2]
    %v607 = vld [vmem:[%s606] ss:$2 sm:$0xff]
    %s608 = scalar_lea.vmem %s241, 768 [#allocation2]
    %v609 = vld [vmem:[%s608] ss:$2 sm:$0xff]
    %626 = vrot.lane.b32.xlu0 %v579, 12
    %v627 = vpop.permute.xlu0 %626
    %628 = vrot.lane.b32.xlu0 %v581, 12
    %v629 = vpop.permute.xlu0 %628
    %630 = vrot.lane.b32.xlu0 %v583, 12
    %v631 = vpop.permute.xlu0 %630
    %632 = vrot.lane.b32.xlu0 %v585, 12
    %v633 = vpop.permute.xlu0 %632
    %634 = vrot.lane.b32.xlu0 %v587, 12
    %v635 = vpop.permute.xlu0 %634
    %636 = vrot.lane.b32.xlu0 %v589, 12
    %v637 = vpop.permute.xlu0 %636
    %638 = vrot.lane.b32.xlu0 %v591, 12
    %v639 = vpop.permute.xlu0 %638
    %640 = vrot.lane.b32.xlu0 %v593, 12
    %v641 = vpop.permute.xlu0 %640
    %642 = vrot.lane.b32.xlu0 %v595, 12
    %v643 = vpop.permute.xlu0 %642
    %644 = vrot.lane.b32.xlu0 %v597, 12
    %v645 = vpop.permute.xlu0 %644
    %646 = vrot.lane.b32.xlu0 %v599, 12
    %v647 = vpop.permute.xlu0 %646
    %648 = vrot.lane.b32.xlu0 %v601, 12
    %v649 = vpop.permute.xlu0 %648
    %650 = vrot.lane.b32.xlu0 %v603, 12
    %v651 = vpop.permute.xlu0 %650
    %652 = vrot.lane.b32.xlu0 %v605, 12
    %v653 = vpop.permute.xlu0 %652
    %654 = vrot.lane.b32.xlu0 %v607, 12
    %v655 = vpop.permute.xlu0 %654
    %656 = vrot.lane.b32.xlu0 %v609, 12
    %v657 = vpop.permute.xlu0 %656
    %vm674 = vcmask 130144
    %675 = vst.msk [vmem:[#allocation3] sm:$0xff] %vm674, %v627
    %676 = vst.msk [vmem:[#allocation3 + $0x8] sm:$0xff] %vm674, %v629
    %677 = vst.msk [vmem:[#allocation3 + $0x10] sm:$0xff] %vm674, %v631
    %678 = vst.msk [vmem:[#allocation3 + $0x18] sm:$0xff] %vm674, %v633
    %679 = vst.msk [vmem:[#allocation3 + $0x20] sm:$0xff] %vm674, %v635
    %680 = vst.msk [vmem:[#allocation3 + $0x28] sm:$0xff] %vm674, %v637
    %681 = vst.msk [vmem:[#allocation3 + $0x30] sm:$0xff] %vm674, %v639
    %682 = vst.msk [vmem:[#allocation3 + $0x38] sm:$0xff] %vm674, %v641
    %683 = vst.msk [vmem:[#allocation3 + $0x40] sm:$0xff] %vm674, %v643
    %684 = vst.msk [vmem:[#allocation3 + $0x48] sm:$0xff] %vm674, %v645
    %685 = vst.msk [vmem:[#allocation3 + $0x50] sm:$0xff] %vm674, %v647
    %686 = vst.msk [vmem:[#allocation3 + $0x58] sm:$0xff] %vm674, %v649
    %687 = vst.msk [vmem:[#allocation3 + $0x60] sm:$0xff] %vm674, %v651
    %688 = vst.msk [vmem:[#allocation3 + $0x68] sm:$0xff] %vm674, %v653
    %689 = vst.msk [vmem:[#allocation3 + $0x70] sm:$0xff] %vm674, %v655
    %690 = vst.msk [vmem:[#allocation3 + $0x78] sm:$0xff] %vm674, %v657
    %s691 = scalar_lea.vmem %s241, 1 [#allocation2]
    %v692 = vld [vmem:[%s691] ss:$2 sm:$0xff]
    %s693 = scalar_lea.vmem %s241, 49 [#allocation2]
    %v694 = vld [vmem:[%s693] ss:$2 sm:$0xff]
    %s695 = scalar_lea.vmem %s241, 97 [#allocation2]
    %v696 = vld [vmem:[%s695] ss:$2 sm:$0xff]
    %s697 = scalar_lea.vmem %s241, 145 [#allocation2]
    %v698 = vld [vmem:[%s697] ss:$2 sm:$0xff]
    %s699 = scalar_lea.vmem %s241, 193 [#allocation2]
    %v700 = vld [vmem:[%s699] ss:$2 sm:$0xff]
    %s701 = scalar_lea.vmem %s241, 241 [#allocation2]
    %v702 = vld [vmem:[%s701] ss:$2 sm:$0xff]
    %s703 = scalar_lea.vmem %s241, 289 [#allocation2]
    %v704 = vld [vmem:[%s703] ss:$2 sm:$0xff]
    %s705 = scalar_lea.vmem %s241, 337 [#allocation2]
    %v706 = vld [vmem:[%s705] ss:$2 sm:$0xff]
    %s707 = scalar_lea.vmem %s241, 433 [#allocation2]
    %v708 = vld [vmem:[%s707] ss:$2 sm:$0xff]
    %s709 = scalar_lea.vmem %s241, 481 [#allocation2]
    %v710 = vld [vmem:[%s709] ss:$2 sm:$0xff]
    %s711 = scalar_lea.vmem %s241, 529 [#allocation2]
    %v712 = vld [vmem:[%s711] ss:$2 sm:$0xff]
    %s713 = scalar_lea.vmem %s241, 577 [#allocation2]
    %v714 = vld [vmem:[%s713] ss:$2 sm:$0xff]
    %s715 = scalar_lea.vmem %s241, 625 [#allocation2]
    %v716 = vld [vmem:[%s715] ss:$2 sm:$0xff]
    %s717 = scalar_lea.vmem %s241, 673 [#allocation2]
    %v718 = vld [vmem:[%s717] ss:$2 sm:$0xff]
    %s719 = scalar_lea.vmem %s241, 721 [#allocation2]
    %v720 = vld [vmem:[%s719] ss:$2 sm:$0xff]
    %s721 = scalar_lea.vmem %s241, 769 [#allocation2]
    %v722 = vld [vmem:[%s721] ss:$2 sm:$0xff]
    %739 = vrot.lane.b32.xlu0 %v692, 16
    %v740 = vpop.permute.xlu0 %739
    %741 = vrot.lane.b32.xlu0 %v694, 16
    %v742 = vpop.permute.xlu0 %741
    %743 = vrot.lane.b32.xlu0 %v696, 16
    %v744 = vpop.permute.xlu0 %743
    %745 = vrot.lane.b32.xlu0 %v698, 16
    %v746 = vpop.permute.xlu0 %745
    %747 = vrot.lane.b32.xlu0 %v700, 16
    %v748 = vpop.permute.xlu0 %747
    %749 = vrot.lane.b32.xlu0 %v702, 16
    %v750 = vpop.permute.xlu0 %749
    %751 = vrot.lane.b32.xlu0 %v704, 16
    %v752 = vpop.permute.xlu0 %751
    %753 = vrot.lane.b32.xlu0 %v706, 16
    %v754 = vpop.permute.xlu0 %753
    %755 = vrot.lane.b32.xlu0 %v708, 16
    %v756 = vpop.permute.xlu0 %755
    %757 = vrot.lane.b32.xlu0 %v710, 16
    %v758 = vpop.permute.xlu0 %757
    %759 = vrot.lane.b32.xlu0 %v712, 16
    %v760 = vpop.permute.xlu0 %759
    %761 = vrot.lane.b32.xlu0 %v714, 16
    %v762 = vpop.permute.xlu0 %761
    %763 = vrot.lane.b32.xlu0 %v716, 16
    %v764 = vpop.permute.xlu0 %763
    %765 = vrot.lane.b32.xlu0 %v718, 16
    %v766 = vpop.permute.xlu0 %765
    %767 = vrot.lane.b32.xlu0 %v720, 16
    %v768 = vpop.permute.xlu0 %767
    %769 = vrot.lane.b32.xlu0 %v722, 16
    %v770 = vpop.permute.xlu0 %769
    %vm787 = vcmask 162944
    %788 = vst.msk [vmem:[#allocation3] sm:$0xff] %vm787, %v740
    %789 = vst.msk [vmem:[#allocation3 + $0x8] sm:$0xff] %vm787, %v742
    %790 = vst.msk [vmem:[#allocation3 + $0x10] sm:$0xff] %vm787, %v744
    %791 = vst.msk [vmem:[#allocation3 + $0x18] sm:$0xff] %vm787, %v746
    %792 = vst.msk [vmem:[#allocation3 + $0x20] sm:$0xff] %vm787, %v748
    %793 = vst.msk [vmem:[#allocation3 + $0x28] sm:$0xff] %vm787, %v750
    %794 = vst.msk [vmem:[#allocation3 + $0x30] sm:$0xff] %vm787, %v752
    %795 = vst.msk [vmem:[#allocation3 + $0x38] sm:$0xff] %vm787, %v754
    %796 = vst.msk [vmem:[#allocation3 + $0x40] sm:$0xff] %vm787, %v756
    %797 = vst.msk [vmem:[#allocation3 + $0x48] sm:$0xff] %vm787, %v758
    %798 = vst.msk [vmem:[#allocation3 + $0x50] sm:$0xff] %vm787, %v760
    %799 = vst.msk [vmem:[#allocation3 + $0x58] sm:$0xff] %vm787, %v762
    %800 = vst.msk [vmem:[#allocation3 + $0x60] sm:$0xff] %vm787, %v764
    %801 = vst.msk [vmem:[#allocation3 + $0x68] sm:$0xff] %vm787, %v766
    %802 = vst.msk [vmem:[#allocation3 + $0x70] sm:$0xff] %vm787, %v768
    %803 = vst.msk [vmem:[#allocation3 + $0x78] sm:$0xff] %vm787, %v770
    %s804 = scalar_lea.vmem %s241, 2 [#allocation2]
    %v805 = vld [vmem:[%s804] ss:$2 sm:$0xff]
    %s806 = scalar_lea.vmem %s241, 50 [#allocation2]
    %v807 = vld [vmem:[%s806] ss:$2 sm:$0xff]
    %s808 = scalar_lea.vmem %s241, 98 [#allocation2]
    %v809 = vld [vmem:[%s808] ss:$2 sm:$0xff]
    %s810 = scalar_lea.vmem %s241, 146 [#allocation2]
    %v811 = vld [vmem:[%s810] ss:$2 sm:$0xff]
    %s812 = scalar_lea.vmem %s241, 194 [#allocation2]
    %v813 = vld [vmem:[%s812] ss:$2 sm:$0xff]
    %s814 = scalar_lea.vmem %s241, 242 [#allocation2]
    %v815 = vld [vmem:[%s814] ss:$2 sm:$0xff]
    %s816 = scalar_lea.vmem %s241, 290 [#allocation2]
    %v817 = vld [vmem:[%s816] ss:$2 sm:$0xff]
    %s818 = scalar_lea.vmem %s241, 338 [#allocation2]
    %v819 = vld [vmem:[%s818] ss:$2 sm:$0xff]
    %s820 = scalar_lea.vmem %s241, 434 [#allocation2]
    %v821 = vld [vmem:[%s820] ss:$2 sm:$0xff]
    %s822 = scalar_lea.vmem %s241, 482 [#allocation2]
    %v823 = vld [vmem:[%s822] ss:$2 sm:$0xff]
    %s824 = scalar_lea.vmem %s241, 530 [#allocation2]
    %v825 = vld [vmem:[%s824] ss:$2 sm:$0xff]
    %s826 = scalar_lea.vmem %s241, 578 [#allocation2]
    %v827 = vld [vmem:[%s826] ss:$2 sm:$0xff]
    %s828 = scalar_lea.vmem %s241, 626 [#allocation2]
    %v829 = vld [vmem:[%s828] ss:$2 sm:$0xff]
    %s830 = scalar_lea.vmem %s241, 674 [#allocation2]
    %v831 = vld [vmem:[%s830] ss:$2 sm:$0xff]
    %s832 = scalar_lea.vmem %s241, 722 [#allocation2]
    %v833 = vld [vmem:[%s832] ss:$2 sm:$0xff]
    %s834 = scalar_lea.vmem %s241, 770 [#allocation2]
    %v835 = vld [vmem:[%s834] ss:$2 sm:$0xff]
    %852 = vrot.lane.b32.xlu0 %v805, 20
    %v853 = vpop.permute.xlu0 %852
    %854 = vrot.lane.b32.xlu0 %v807, 20
    %v855 = vpop.permute.xlu0 %854
    %856 = vrot.lane.b32.xlu0 %v809, 20
    %v857 = vpop.permute.xlu0 %856
    %858 = vrot.lane.b32.xlu0 %v811, 20
    %v859 = vpop.permute.xlu0 %858
    %860 = vrot.lane.b32.xlu0 %v813, 20
    %v861 = vpop.permute.xlu0 %860
    %862 = vrot.lane.b32.xlu0 %v815, 20
    %v863 = vpop.permute.xlu0 %862
    %864 = vrot.lane.b32.xlu0 %v817, 20
    %v865 = vpop.permute.xlu0 %864
    %866 = vrot.lane.b32.xlu0 %v819, 20
    %v867 = vpop.permute.xlu0 %866
    %868 = vrot.lane.b32.xlu0 %v821, 20
    %v869 = vpop.permute.xlu0 %868
    %870 = vrot.lane.b32.xlu0 %v823, 20
    %v871 = vpop.permute.xlu0 %870
    %872 = vrot.lane.b32.xlu0 %v825, 20
    %v873 = vpop.permute.xlu0 %872
    %874 = vrot.lane.b32.xlu0 %v827, 20
    %v875 = vpop.permute.xlu0 %874
    %876 = vrot.lane.b32.xlu0 %v829, 20
    %v877 = vpop.permute.xlu0 %876
    %878 = vrot.lane.b32.xlu0 %v831, 20
    %v879 = vpop.permute.xlu0 %878
    %880 = vrot.lane.b32.xlu0 %v833, 20
    %v881 = vpop.permute.xlu0 %880
    %882 = vrot.lane.b32.xlu0 %v835, 20
    %v883 = vpop.permute.xlu0 %882
    %vm900 = vcmask 195744
    %901 = vst.msk [vmem:[#allocation3] sm:$0xff] %vm900, %v853
    %902 = vst.msk [vmem:[#allocation3 + $0x8] sm:$0xff] %vm900, %v855
    %903 = vst.msk [vmem:[#allocation3 + $0x10] sm:$0xff] %vm900, %v857
    %904 = vst.msk [vmem:[#allocation3 + $0x18] sm:$0xff] %vm900, %v859
    %905 = vst.msk [vmem:[#allocation3 + $0x20] sm:$0xff] %vm900, %v861
    %906 = vst.msk [vmem:[#allocation3 + $0x28] sm:$0xff] %vm900, %v863
    %907 = vst.msk [vmem:[#allocation3 + $0x30] sm:$0xff] %vm900, %v865
    %908 = vst.msk [vmem:[#allocation3 + $0x38] sm:$0xff] %vm900, %v867
    %909 = vst.msk [vmem:[#allocation3 + $0x40] sm:$0xff] %vm900, %v869
    %910 = vst.msk [vmem:[#allocation3 + $0x48] sm:$0xff] %vm900, %v871
    %911 = vst.msk [vmem:[#allocation3 + $0x50] sm:$0xff] %vm900, %v873
    %912 = vst.msk [vmem:[#allocation3 + $0x58] sm:$0xff] %vm900, %v875
    %913 = vst.msk [vmem:[#allocation3 + $0x60] sm:$0xff] %vm900, %v877
    %914 = vst.msk [vmem:[#allocation3 + $0x68] sm:$0xff] %vm900, %v879
    %915 = vst.msk [vmem:[#allocation3 + $0x70] sm:$0xff] %vm900, %v881
    %916 = vst.msk [vmem:[#allocation3 + $0x78] sm:$0xff] %vm900, %v883
    %s917 = scalar_lea.vmem [#allocation2], 48
    %v918 = vld [vmem:[%s917] ss:$2 sm:$0xff]
    %s919 = scalar_lea.vmem %s917, 48 [#allocation2]
    %v920 = vld [vmem:[%s919] ss:$2 sm:$0xff]
    %s921 = scalar_lea.vmem %s917, 96 [#allocation2]
    %v922 = vld [vmem:[%s921] ss:$2 sm:$0xff]
    %s923 = scalar_lea.vmem %s917, 144 [#allocation2]
    %v924 = vld [vmem:[%s923] ss:$2 sm:$0xff]
    %s925 = scalar_lea.vmem %s917, 192 [#allocation2]
    %v926 = vld [vmem:[%s925] ss:$2 sm:$0xff]
    %s927 = scalar_lea.vmem %s917, 240 [#allocation2]
    %v928 = vld [vmem:[%s927] ss:$2 sm:$0xff]
    %s929 = scalar_lea.vmem %s917, 288 [#allocation2]
    %v930 = vld [vmem:[%s929] ss:$2 sm:$0xff]
    %s931 = scalar_lea.vmem %s917, 336 [#allocation2]
    %v932 = vld [vmem:[%s931] ss:$2 sm:$0xff]
    %s933 = scalar_lea.vmem %s917, 432 [#allocation2]
    %v934 = vld [vmem:[%s933] ss:$2 sm:$0xff]
    %s935 = scalar_lea.vmem %s917, 480 [#allocation2]
    %v936 = vld [vmem:[%s935] ss:$2 sm:$0xff]
    %s937 = scalar_lea.vmem %s917, 528 [#allocation2]
    %v938 = vld [vmem:[%s937] ss:$2 sm:$0xff]
    %s939 = scalar_lea.vmem %s917, 576 [#allocation2]
    %v940 = vld [vmem:[%s939] ss:$2 sm:$0xff]
    %s941 = scalar_lea.vmem %s917, 624 [#allocation2]
    %v942 = vld [vmem:[%s941] ss:$2 sm:$0xff]
    %s943 = scalar_lea.vmem %s917, 672 [#allocation2]
    %v944 = vld [vmem:[%s943] ss:$2 sm:$0xff]
    %s945 = scalar_lea.vmem %s917, 720 [#allocation2]
    %v946 = vld [vmem:[%s945] ss:$2 sm:$0xff]
    %s947 = scalar_lea.vmem %s917, 768 [#allocation2]
    %v948 = vld [vmem:[%s947] ss:$2 sm:$0xff]
    %965 = vrot.lane.b32.xlu0 %v918, 24
    %v966 = vpop.permute.xlu0 %965
    %967 = vrot.lane.b32.xlu0 %v920, 24
    %v968 = vpop.permute.xlu0 %967
    %969 = vrot.lane.b32.xlu0 %v922, 24
    %v970 = vpop.permute.xlu0 %969
    %971 = vrot.lane.b32.xlu0 %v924, 24
    %v972 = vpop.permute.xlu0 %971
    %973 = vrot.lane.b32.xlu0 %v926, 24
    %v974 = vpop.permute.xlu0 %973
    %975 = vrot.lane.b32.xlu0 %v928, 24
    %v976 = vpop.permute.xlu0 %975
    %977 = vrot.lane.b32.xlu0 %v930, 24
    %v978 = vpop.permute.xlu0 %977
    %979 = vrot.lane.b32.xlu0 %v932, 24
    %v980 = vpop.permute.xlu0 %979
    %981 = vrot.lane.b32.xlu0 %v934, 24
    %v982 = vpop.permute.xlu0 %981
    %983 = vrot.lane.b32.xlu0 %v936, 24
    %v984 = vpop.permute.xlu0 %983
    %985 = vrot.lane.b32.xlu0 %v938, 24
    %v986 = vpop.permute.xlu0 %985
    %987 = vrot.lane.b32.xlu0 %v940, 24
    %v988 = vpop.permute.xlu0 %987
    %989 = vrot.lane.b32.xlu0 %v942, 24
    %v990 = vpop.permute.xlu0 %989
    %991 = vrot.lane.b32.xlu0 %v944, 24
    %v992 = vpop.permute.xlu0 %991
    %993 = vrot.lane.b32.xlu0 %v946, 24
    %v994 = vpop.permute.xlu0 %993
    %995 = vrot.lane.b32.xlu0 %v948, 24
    %v996 = vpop.permute.xlu0 %995
    %vm1013 = vcmask 228544
    %1014 = vst.msk [vmem:[#allocation3] sm:$0xff] %vm1013, %v966
    %1015 = vst.msk [vmem:[#allocation3 + $0x8] sm:$0xff] %vm1013, %v968
    %1016 = vst.msk [vmem:[#allocation3 + $0x10] sm:$0xff] %vm1013, %v970
    %1017 = vst.msk [vmem:[#allocation3 + $0x18] sm:$0xff] %vm1013, %v972
    %1018 = vst.msk [vmem:[#allocation3 + $0x20] sm:$0xff] %vm1013, %v974
    %1019 = vst.msk [vmem:[#allocation3 + $0x28] sm:$0xff] %vm1013, %v976
    %1020 = vst.msk [vmem:[#allocation3 + $0x30] sm:$0xff] %vm1013, %v978
    %1021 = vst.msk [vmem:[#allocation3 + $0x38] sm:$0xff] %vm1013, %v980
    %1022 = vst.msk [vmem:[#allocation3 + $0x40] sm:$0xff] %vm1013, %v982
    %1023 = vst.msk [vmem:[#allocation3 + $0x48] sm:$0xff] %vm1013, %v984
    %1024 = vst.msk [vmem:[#allocation3 + $0x50] sm:$0xff] %vm1013, %v986
    %1025 = vst.msk [vmem:[#allocation3 + $0x58] sm:$0xff] %vm1013, %v988
    %1026 = vst.msk [vmem:[#allocation3 + $0x60] sm:$0xff] %vm1013, %v990
    %1027 = vst.msk [vmem:[#allocation3 + $0x68] sm:$0xff] %vm1013, %v992
    %1028 = vst.msk [vmem:[#allocation3 + $0x70] sm:$0xff] %vm1013, %v994
    %1029 = vst.msk [vmem:[#allocation3 + $0x78] sm:$0xff] %vm1013, %v996
    %s1030 = scalar_lea.vmem %s917, 1 [#allocation2]
    %v1031 = vld [vmem:[%s1030] ss:$2 sm:$0xff]
    %s1032 = scalar_lea.vmem %s917, 49 [#allocation2]
    %v1033 = vld [vmem:[%s1032] ss:$2 sm:$0xff]
    %s1034 = scalar_lea.vmem %s917, 97 [#allocation2]
    %v1035 = vld [vmem:[%s1034] ss:$2 sm:$0xff]
    %s1036 = scalar_lea.vmem %s917, 145 [#allocation2]
    %v1037 = vld [vmem:[%s1036] ss:$2 sm:$0xff]
    %s1038 = scalar_lea.vmem %s917, 193 [#allocation2]
    %v1039 = vld [vmem:[%s1038] ss:$2 sm:$0xff]
    %s1040 = scalar_lea.vmem %s917, 241 [#allocation2]
    %v1041 = vld [vmem:[%s1040] ss:$2 sm:$0xff]
    %s1042 = scalar_lea.vmem %s917, 289 [#allocation2]
    %v1043 = vld [vmem:[%s1042] ss:$2 sm:$0xff]
    %s1044 = scalar_lea.vmem %s917, 337 [#allocation2]
    %v1045 = vld [vmem:[%s1044] ss:$2 sm:$0xff]
    %s1046 = scalar_lea.vmem %s917, 433 [#allocation2]
    %v1047 = vld [vmem:[%s1046] ss:$2 sm:$0xff]
    %s1048 = scalar_lea.vmem %s917, 481 [#allocation2]
    %v1049 = vld [vmem:[%s1048] ss:$2 sm:$0xff]
    %s1050 = scalar_lea.vmem %s917, 529 [#allocation2]
    %v1051 = vld [vmem:[%s1050] ss:$2 sm:$0xff]
    %s1052 = scalar_lea.vmem %s917, 577 [#allocation2]
    %v1053 = vld [vmem:[%s1052] ss:$2 sm:$0xff]
    %s1054 = scalar_lea.vmem %s917, 625 [#allocation2]
    %v1055 = vld [vmem:[%s1054] ss:$2 sm:$0xff]
    %s1056 = scalar_lea.vmem %s917, 673 [#allocation2]
    %v1057 = vld [vmem:[%s1056] ss:$2 sm:$0xff]
    %s1058 = scalar_lea.vmem %s917, 721 [#allocation2]
    %v1059 = vld [vmem:[%s1058] ss:$2 sm:$0xff]
    %s1060 = scalar_lea.vmem %s917, 769 [#allocation2]
    %v1061 = vld [vmem:[%s1060] ss:$2 sm:$0xff]
    %1078 = vrot.lane.b32.xlu0 %v1031, 28
    %v1079 = vpop.permute.xlu0 %1078
    %1080 = vrot.lane.b32.xlu0 %v1033, 28
    %v1081 = vpop.permute.xlu0 %1080
    %1082 = vrot.lane.b32.xlu0 %v1035, 28
    %v1083 = vpop.permute.xlu0 %1082
    %1084 = vrot.lane.b32.xlu0 %v1037, 28
    %v1085 = vpop.permute.xlu0 %1084
    %1086 = vrot.lane.b32.xlu0 %v1039, 28
    %v1087 = vpop.permute.xlu0 %1086
    %1088 = vrot.lane.b32.xlu0 %v1041, 28
    %v1089 = vpop.permute.xlu0 %1088
    %1090 = vrot.lane.b32.xlu0 %v1043, 28
    %v1091 = vpop.permute.xlu0 %1090
    %1092 = vrot.lane.b32.xlu0 %v1045, 28
    %v1093 = vpop.permute.xlu0 %1092
    %1094 = vrot.lane.b32.xlu0 %v1047, 28
    %v1095 = vpop.permute.xlu0 %1094
    %1096 = vrot.lane.b32.xlu0 %v1049, 28
    %v1097 = vpop.permute.xlu0 %1096
    %1098 = vrot.lane.b32.xlu0 %v1051, 28
    %v1099 = vpop.permute.xlu0 %1098
    %1100 = vrot.lane.b32.xlu0 %v1053, 28
    %v1101 = vpop.permute.xlu0 %1100
    %1102 = vrot.lane.b32.xlu0 %v1055, 28
    %v1103 = vpop.permute.xlu0 %1102
    %1104 = vrot.lane.b32.xlu0 %v1057, 28
    %v1105 = vpop.permute.xlu0 %1104
    %1106 = vrot.lane.b32.xlu0 %v1059, 28
    %v1107 = vpop.permute.xlu0 %1106
    %1108 = vrot.lane.b32.xlu0 %v1061, 28
    %v1109 = vpop.permute.xlu0 %1108
    %vm1126 = vcmask 261344
    %1127 = vst.msk [vmem:[#allocation3] sm:$0xff] %vm1126, %v1079
    %1128 = vst.msk [vmem:[#allocation3 + $0x8] sm:$0xff] %vm1126, %v1081
    %1129 = vst.msk [vmem:[#allocation3 + $0x10] sm:$0xff] %vm1126, %v1083
    %1130 = vst.msk [vmem:[#allocation3 + $0x18] sm:$0xff] %vm1126, %v1085
    %1131 = vst.msk [vmem:[#allocation3 + $0x20] sm:$0xff] %vm1126, %v1087
    %1132 = vst.msk [vmem:[#allocation3 + $0x28] sm:$0xff] %vm1126, %v1089
    %1133 = vst.msk [vmem:[#allocation3 + $0x30] sm:$0xff] %vm1126, %v1091
    %1134 = vst.msk [vmem:[#allocation3 + $0x38] sm:$0xff] %vm1126, %v1093
    %1135 = vst.msk [vmem:[#allocation3 + $0x40] sm:$0xff] %vm1126, %v1095
    %1136 = vst.msk [vmem:[#allocation3 + $0x48] sm:$0xff] %vm1126, %v1097
    %1137 = vst.msk [vmem:[#allocation3 + $0x50] sm:$0xff] %vm1126, %v1099
    %1138 = vst.msk [vmem:[#allocation3 + $0x58] sm:$0xff] %vm1126, %v1101
    %1139 = vst.msk [vmem:[#allocation3 + $0x60] sm:$0xff] %vm1126, %v1103
    %1140 = vst.msk [vmem:[#allocation3 + $0x68] sm:$0xff] %vm1126, %v1105
    %1141 = vst.msk [vmem:[#allocation3 + $0x70] sm:$0xff] %vm1126, %v1107
    %1142 = vst.msk [vmem:[#allocation3 + $0x78] sm:$0xff] %vm1126, %v1109
    %s1143 = scalar_lea.vmem %s917, 2 [#allocation2]
    %v1144 = vld [vmem:[%s1143] ss:$2 sm:$0xff]
    %s1145 = scalar_lea.vmem %s917, 50 [#allocation2]
    %v1146 = vld [vmem:[%s1145] ss:$2 sm:$0xff]
    %s1147 = scalar_lea.vmem %s917, 98 [#allocation2]
    %v1148 = vld [vmem:[%s1147] ss:$2 sm:$0xff]
    %s1149 = scalar_lea.vmem %s917, 146 [#allocation2]
    %v1150 = vld [vmem:[%s1149] ss:$2 sm:$0xff]
    %s1151 = scalar_lea.vmem %s917, 194 [#allocation2]
    %v1152 = vld [vmem:[%s1151] ss:$2 sm:$0xff]
    %s1153 = scalar_lea.vmem %s917, 242 [#allocation2]
    %v1154 = vld [vmem:[%s1153] ss:$2 sm:$0xff]
    %s1155 = scalar_lea.vmem %s917, 290 [#allocation2]
    %v1156 = vld [vmem:[%s1155] ss:$2 sm:$0xff]
    %s1157 = scalar_lea.vmem %s917, 338 [#allocation2]
    %v1158 = vld [vmem:[%s1157] ss:$2 sm:$0xff]
    %s1159 = scalar_lea.vmem %s917, 434 [#allocation2]
    %v1160 = vld [vmem:[%s1159] ss:$2 sm:$0xff]
    %s1161 = scalar_lea.vmem %s917, 482 [#allocation2]
    %v1162 = vld [vmem:[%s1161] ss:$2 sm:$0xff]
    %s1163 = scalar_lea.vmem %s917, 530 [#allocation2]
    %v1164 = vld [vmem:[%s1163] ss:$2 sm:$0xff]
    %s1165 = scalar_lea.vmem %s917, 578 [#allocation2]
    %v1166 = vld [vmem:[%s1165] ss:$2 sm:$0xff]
    %s1167 = scalar_lea.vmem %s917, 626 [#allocation2]
    %v1168 = vld [vmem:[%s1167] ss:$2 sm:$0xff]
    %s1169 = scalar_lea.vmem %s917, 674 [#allocation2]
    %v1170 = vld [vmem:[%s1169] ss:$2 sm:$0xff]
    %s1171 = scalar_lea.vmem %s917, 722 [#allocation2]
    %v1172 = vld [vmem:[%s1171] ss:$2 sm:$0xff]
    %s1173 = scalar_lea.vmem %s917, 770 [#allocation2]
    %v1174 = vld [vmem:[%s1173] ss:$2 sm:$0xff]
    %1191 = vrot.lane.b32.xlu0 %v1144, 32
    %v1192 = vpop.permute.xlu0 %1191
    %1193 = vrot.lane.b32.xlu0 %v1146, 32
    %v1194 = vpop.permute.xlu0 %1193
    %1195 = vrot.lane.b32.xlu0 %v1148, 32
    %v1196 = vpop.permute.xlu0 %1195
    %1197 = vrot.lane.b32.xlu0 %v1150, 32
    %v1198 = vpop.permute.xlu0 %1197
    %1199 = vrot.lane.b32.xlu0 %v1152, 32
    %v1200 = vpop.permute.xlu0 %1199
    %1201 = vrot.lane.b32.xlu0 %v1154, 32
    %v1202 = vpop.permute.xlu0 %1201
    %1203 = vrot.lane.b32.xlu0 %v1156, 32
    %v1204 = vpop.permute.xlu0 %1203
    %1205 = vrot.lane.b32.xlu0 %v1158, 32
    %v1206 = vpop.permute.xlu0 %1205
    %1207 = vrot.lane.b32.xlu0 %v1160, 32
    %v1208 = vpop.permute.xlu0 %1207
    %1209 = vrot.lane.b32.xlu0 %v1162, 32
    %v1210 = vpop.permute.xlu0 %1209
    %1211 = vrot.lane.b32.xlu0 %v1164, 32
    %v1212 = vpop.permute.xlu0 %1211
    %1213 = vrot.lane.b32.xlu0 %v1166, 32
    %v1214 = vpop.permute.xlu0 %1213
    %1215 = vrot.lane.b32.xlu0 %v1168, 32
    %v1216 = vpop.permute.xlu0 %1215
    %1217 = vrot.lane.b32.xlu0 %v1170, 32
    %v1218 = vpop.permute.xlu0 %1217
    %1219 = vrot.lane.b32.xlu0 %v1172, 32
    %v1220 = vpop.permute.xlu0 %1219
    %1221 = vrot.lane.b32.xlu0 %v1174, 32
    %v1222 = vpop.permute.xlu0 %1221
    %vm1239 = vcmask 294144
    %1240 = vst.msk [vmem:[#allocation3] sm:$0xff] %vm1239, %v1192
    %1241 = vst.msk [vmem:[#allocation3 + $0x8] sm:$0xff] %vm1239, %v1194
    %1242 = vst.msk [vmem:[#allocation3 + $0x10] sm:$0xff] %vm1239, %v1196
    %1243 = vst.msk [vmem:[#allocation3 + $0x18] sm:$0xff] %vm1239, %v1198
    %1244 = vst.msk [vmem:[#allocation3 + $0x20] sm:$0xff] %vm1239, %v1200
    %1245 = vst.msk [vmem:[#allocation3 + $0x28] sm:$0xff] %vm1239, %v1202
    %1246 = vst.msk [vmem:[#allocation3 + $0x30] sm:$0xff] %vm1239, %v1204
    %1247 = vst.msk [vmem:[#allocation3 + $0x38] sm:$0xff] %vm1239, %v1206
    %1248 = vst.msk [vmem:[#allocation3 + $0x40] sm:$0xff] %vm1239, %v1208
    %1249 = vst.msk [vmem:[#allocation3 + $0x48] sm:$0xff] %vm1239, %v1210
    %1250 = vst.msk [vmem:[#allocation3 + $0x50] sm:$0xff] %vm1239, %v1212
    %1251 = vst.msk [vmem:[#allocation3 + $0x58] sm:$0xff] %vm1239, %v1214
    %1252 = vst.msk [vmem:[#allocation3 + $0x60] sm:$0xff] %vm1239, %v1216
    %1253 = vst.msk [vmem:[#allocation3 + $0x68] sm:$0xff] %vm1239, %v1218
    %1254 = vst.msk [vmem:[#allocation3 + $0x70] sm:$0xff] %vm1239, %v1220
    %1255 = vst.msk [vmem:[#allocation3 + $0x78] sm:$0xff] %vm1239, %v1222
    %v1256 = vld [vmem:[#allocation3] sm:$0xff]
    %v1257 = vld [vmem:[#allocation3 + $0x8] sm:$0xff]
    %v1258 = vld [vmem:[#allocation3 + $0x10] sm:$0xff]
    %v1259 = vld [vmem:[#allocation3 + $0x18] sm:$0xff]
    %v1260 = vld [vmem:[#allocation3 + $0x20] sm:$0xff]
    %v1261 = vld [vmem:[#allocation3 + $0x28] sm:$0xff]
    %v1262 = vld [vmem:[#allocation3 + $0x30] sm:$0xff]
    %v1263 = vld [vmem:[#allocation3 + $0x38] sm:$0xff]
    %v1264 = vld [vmem:[#allocation3 + $0x40] sm:$0xff]
    %v1265 = vld [vmem:[#allocation3 + $0x48] sm:$0xff]
    %v1266 = vld [vmem:[#allocation3 + $0x50] sm:$0xff]
    %v1267 = vld [vmem:[#allocation3 + $0x58] sm:$0xff]
    %v1268 = vld [vmem:[#allocation3 + $0x60] sm:$0xff]
    %v1269 = vld [vmem:[#allocation3 + $0x68] sm:$0xff]
    %v1270 = vld [vmem:[#allocation3 + $0x70] sm:$0xff]
    %v1271 = vld [vmem:[#allocation3 + $0x78] sm:$0xff]
    %v1272 = vld [vmem:[%s1] sm:$0xff]
    %v1273 = vld [vmem:[%s1 + $0x8] sm:$0xff]
    %v1274 = vld [vmem:[%s1 + $0x10] sm:$0xff]
    %v1275 = vld [vmem:[%s1 + $0x18] sm:$0xff]
    %v1276 = vld [vmem:[%s1 + $0x20] sm:$0xf]
    %v1277 = vld [vmem:[%s2] sm:$0x1]
    %v1279 = vlaneseq
    %v1280 = vshrl.u32 %v1279, 7
    %v1281 = vsub.s32 0, %v1280
    %v1282 = vrot.slane %v1277, %v1281
    %vm1284 = vcmask 293888
    %v1286 = vsel %vm1284, %v1256, 0
    %v1289 = vsel %vm1284, %v1257, 0
    %v1292 = vsel %vm1284, %v1258, 0
    %v1295 = vsel %vm1284, %v1259, 0
    %v1298 = vsel %vm1284, %v1260, 0
    %v1301 = vsel %vm1284, %v1261, 0
    %v1304 = vsel %vm1284, %v1262, 0
    %v1307 = vsel %vm1284, %v1263, 0
    %v1310 = vsel %vm1284, %v1264, 0
    %v1313 = vsel %vm1284, %v1265, 0
    %v1316 = vsel %vm1284, %v1266, 0
    %v1319 = vsel %vm1284, %v1267, 0
    %v1322 = vsel %vm1284, %v1268, 0
    %v1325 = vsel %vm1284, %v1269, 0
    %v1328 = vsel %vm1284, %v1270, 0
    %v1331 = vsel %vm1284, %v1271, 0
    %vm1333 = vcmask 1043456
    %v1335 = vsel %vm1333, %v1276, 0
    %1337 = vmatprep.subr.mxu0 0.0
    %1338 = vmatpush1.msra.mxu0 %v1272
    %1339 = vmatprep.subr.mxu0 0.0
    %1340 = vmatpush1.msra.mxu0 %v1273
    %1341 = vmatprep.subr.mxu0 0.0
    %1342 = vmatpush1.msra.mxu0 %v1274
    %1343 = vmatprep.subr.mxu0 0.0
    %1344 = vmatpush1.msra.mxu0 %v1275
    %1345 = vmatprep.subr.mxu0 0.0
    %1346 = vmatpush1.msra.mxu0 %v1335
    %1347 = vmatprep.subr.mxu0 0.0
    %1348 = vmatpush1.msra.mxu0 0.0
    %1349 = vmatprep.subr.mxu0 0.0
    %1350 = vmatpush1.msra.mxu0 0.0
    %1351 = vmatprep.subr.mxu0 0.0
    %1352 = vmatpush1.msra.mxu0 0.0
    %1353 = vmatprep.subr.mxu0 0.0
    %1354 = vmatpush1.msra.mxu0 0.0
    %1355 = vmatprep.subr.mxu0 0.0
    %1356 = vmatpush1.msra.mxu0 0.0
    %1357 = vmatprep.subr.mxu0 0.0
    %1358 = vmatpush1.msra.mxu0 0.0
    %1359 = vmatprep.subr.mxu0 0.0
    %1360 = vmatpush1.msra.mxu0 0.0
    %1361 = vmatprep.subr.mxu0 0.0
    %1362 = vmatpush1.msra.mxu0 0.0
    %1363 = vmatprep.subr.mxu0 0.0
    %1364 = vmatpush1.msra.mxu0 0.0
    %1365 = vmatprep.subr.mxu0 0.0
    %1366 = vmatpush1.msra.mxu0 0.0
    %1367 = vmatprep.subr.mxu0 0.0
    %1368 = vmatpush1.msra.mxu0 0.0
    %1369 = vmatprep.subr.mxu0 0.0
    %1370 = vmatpush1.msra.mxu0 0.0
    %1371 = vmatprep.subr.mxu0 0.0
    %1372 = vmatpush1.msra.mxu0 0.0
    %1373 = vmatprep.subr.mxu0 0.0
    %1374 = vmatpush1.msra.mxu0 0.0
    %1375 = vmatprep.subr.mxu0 0.0
    %1376 = vmatpush1.msra.mxu0 0.0
    %1377 = vmatprep.subr.mxu0 0.0
    %1378 = vmatpush1.msra.mxu0 0.0
    %1379 = vmatprep.subr.mxu0 0.0
    %1380 = vmatpush1.msra.mxu0 0.0
    %1381 = vmatprep.subr.mxu0 0.0
    %1382 = vmatpush1.msra.mxu0 0.0
    %1383 = vmatprep.subr.mxu0 0.0
    %1384 = vmatpush1.msra.mxu0 0.0
    %1385 = vmatprep.subr.mxu0 0.0
    %1386 = vmatpush1.msra.mxu0 0.0
    %1387 = vmatprep.subr.mxu0 0.0
    %1388 = vmatpush1.msra.mxu0 0.0
    %1389 = vmatprep.subr.mxu0 0.0
    %1390 = vmatpush1.msra.mxu0 0.0
    %1391 = vmatprep.subr.mxu0 0.0
    %1392 = vmatpush1.msra.mxu0 0.0
    %1393 = vmatprep.subr.mxu0 0.0
    %1394 = vmatpush1.msra.mxu0 0.0
    %1395 = vmatprep.subr.mxu0 0.0
    %1396 = vmatpush1.msra.mxu0 0.0
    %1397 = vmatprep.subr.mxu0 0.0
    %1398 = vmatpush1.msra.mxu0 0.0
    %1399 = vmatprep.subr.mxu0 0.0
    %1400 = vmatpush1.msra.mxu0 0.0
    %1401 = vmatprep.mubr.f32.mxu0 0.0
    %1402 = vmatmul.mubr.f32.gmra.mrb[0].mxu0 %v1286
    %v1403 = vpop.f32.mrb[0].mxu0
    %v1404 = vadd.f32 %v1282, %v1403
    %v1405 = vpop.f32.mrb[0].mxu0
    %1406 = vmatprep.mubr.f32.mxu0 0.0
    %1407 = vmatmul.mubr.f32.gmra.mrb[0].mxu0 %v1289
    %v1408 = vpop.f32.mrb[0].mxu0
    %v1409 = vadd.f32 %v1282, %v1408
    %v1410 = vpop.f32.mrb[0].mxu0
    %1411 = vmatprep.mubr.f32.mxu0 0.0
    %1412 = vmatmul.mubr.f32.gmra.mrb[0].mxu0 %v1292
    %v1413 = vpop.f32.mrb[0].mxu0
    %v1414 = vadd.f32 %v1282, %v1413
    %v1415 = vpop.f32.mrb[0].mxu0
    %1416 = vmatprep.mubr.f32.mxu0 0.0
    %1417 = vmatmul.mubr.f32.gmra.mrb[0].mxu0 %v1295
    %v1418 = vpop.f32.mrb[0].mxu0
    %v1419 = vadd.f32 %v1282, %v1418
    %v1420 = vpop.f32.mrb[0].mxu0
    %1421 = vmatprep.mubr.f32.mxu0 0.0
    %1422 = vmatmul.mubr.f32.gmra.mrb[0].mxu0 %v1298
    %v1423 = vpop.f32.mrb[0].mxu0
    %v1424 = vadd.f32 %v1282, %v1423
    %v1425 = vpop.f32.mrb[0].mxu0
    %1426 = vmatprep.mubr.f32.mxu0 0.0
    %1427 = vmatmul.mubr.f32.gmra.mrb[0].mxu0 %v1301
    %v1428 = vpop.f32.mrb[0].mxu0
    %v1429 = vadd.f32 %v1282, %v1428
    %v1430 = vpop.f32.mrb[0].mxu0
    %1431 = vmatprep.mubr.f32.mxu0 0.0
    %1432 = vmatmul.mubr.f32.gmra.mrb[0].mxu0 %v1304
    %v1433 = vpop.f32.mrb[0].mxu0
    %v1434 = vadd.f32 %v1282, %v1433
    %v1435 = vpop.f32.mrb[0].mxu0
    %1436 = vmatprep.mubr.f32.mxu0 0.0
    %1437 = vmatmul.mubr.f32.gmra.mrb[0].mxu0 %v1307
    %v1438 = vpop.f32.mrb[0].mxu0
    %v1439 = vadd.f32 %v1282, %v1438
    %v1440 = vpop.f32.mrb[0].mxu0
    %1441 = vmatprep.mubr.f32.mxu0 0.0
    %1442 = vmatmul.mubr.f32.gmra.mrb[0].mxu0 %v1310
    %v1443 = vpop.f32.mrb[0].mxu0
    %v1444 = vadd.f32 %v1282, %v1443
    %v1445 = vpop.f32.mrb[0].mxu0
    %1446 = vmatprep.mubr.f32.mxu0 0.0
    %1447 = vmatmul.mubr.f32.gmra.mrb[0].mxu0 %v1313
    %v1448 = vpop.f32.mrb[0].mxu0
    %v1449 = vadd.f32 %v1282, %v1448
    %v1450 = vpop.f32.mrb[0].mxu0
    %1451 = vmatprep.mubr.f32.mxu0 0.0
    %1452 = vmatmul.mubr.f32.gmra.mrb[0].mxu0 %v1316
    %v1453 = vpop.f32.mrb[0].mxu0
    %v1454 = vadd.f32 %v1282, %v1453
    %v1455 = vpop.f32.mrb[0].mxu0
    %1456 = vmatprep.mubr.f32.mxu0 0.0
    %1457 = vmatmul.mubr.f32.gmra.mrb[0].mxu0 %v1319
    %v1458 = vpop.f32.mrb[0].mxu0
    %v1459 = vadd.f32 %v1282, %v1458
    %v1460 = vpop.f32.mrb[0].mxu0
    %1461 = vmatprep.mubr.f32.mxu0 0.0
    %1462 = vmatmul.mubr.f32.gmra.mrb[0].mxu0 %v1322
    %v1463 = vpop.f32.mrb[0].mxu0
    %v1464 = vadd.f32 %v1282, %v1463
    %v1465 = vpop.f32.mrb[0].mxu0
    %1466 = vmatprep.mubr.f32.mxu0 0.0
    %1467 = vmatmul.mubr.f32.gmra.mrb[0].mxu0 %v1325
    %v1468 = vpop.f32.mrb[0].mxu0
    %v1469 = vadd.f32 %v1282, %v1468
    %v1470 = vpop.f32.mrb[0].mxu0
    %1471 = vmatprep.mubr.f32.mxu0 0.0
    %1472 = vmatmul.mubr.f32.gmra.mrb[0].mxu0 %v1328
    %v1473 = vpop.f32.mrb[0].mxu0
    %v1474 = vadd.f32 %v1282, %v1473
    %v1475 = vpop.f32.mrb[0].mxu0
    %1476 = vmatprep.mubr.f32.mxu0 0.0
    %1477 = vmatmul.mubr.f32.gmra.mrb[0].mxu0 %v1331
    %v1478 = vpop.f32.mrb[0].mxu0
    %v1479 = vadd.f32 %v1282, %v1478
    %v1480 = vpop.f32.mrb[0].mxu0
    %1481 = vdwg.mxu0
    %v1482 = vmax.f32 %v1404, 0.0
    %v1483 = vmax.f32 %v1409, 0.0
    %v1484 = vmax.f32 %v1414, 0.0
    %v1485 = vmax.f32 %v1419, 0.0
    %v1486 = vmax.f32 %v1424, 0.0
    %v1487 = vmax.f32 %v1429, 0.0
    %v1488 = vmax.f32 %v1434, 0.0
    %v1489 = vmax.f32 %v1439, 0.0
    %v1490 = vmax.f32 %v1444, 0.0
    %v1491 = vmax.f32 %v1449, 0.0
    %v1492 = vmax.f32 %v1454, 0.0
    %v1493 = vmax.f32 %v1459, 0.0
    %v1494 = vmax.f32 %v1464, 0.0
    %v1495 = vmax.f32 %v1469, 0.0
    %v1496 = vmax.f32 %v1474, 0.0
    %v1497 = vmax.f32 %v1479, 0.0
    %vm1498 = vcmask 64512
    %1499 = vst.msk [vmem:[#allocation4] sm:$0xff] %vm1498, 0.0
    %vm1500 = vcmask 58368
    %1501 = vst.msk [vmem:[#allocation4 + $0x8] sm:$0x3] %vm1500, 0.0
    %1502 = vst.msk [vmem:[#allocation4 + $0x10] sm:$0xff] %vm1498, 0.0
    %1503 = vst.msk [vmem:[#allocation4 + $0x18] sm:$0x3] %vm1500, 0.0
    %1504 = vst.msk [vmem:[#allocation4 + $0x20] sm:$0xff] %vm1498, 0.0
    %1505 = vst.msk [vmem:[#allocation4 + $0x28] sm:$0x3] %vm1500, 0.0
    %1506 = vst.msk [vmem:[#allocation4 + $0x30] sm:$0xff] %vm1498, 0.0
    %1507 = vst.msk [vmem:[#allocation4 + $0x38] sm:$0x3] %vm1500, 0.0
    %1508 = vst.msk [vmem:[#allocation4 + $0x40] sm:$0xff] %vm1498, 0.0
    %1509 = vst.msk [vmem:[#allocation4 + $0x48] sm:$0x3] %vm1500, 0.0
    %1510 = vst.msk [vmem:[#allocation4 + $0x50] sm:$0xff] %vm1498, 0.0
    %1511 = vst.msk [vmem:[#allocation4 + $0x58] sm:$0x3] %vm1500, 0.0
    %1512 = vst.msk [vmem:[#allocation4 + $0x60] sm:$0xff] %vm1498, 0.0
    %1513 = vst.msk [vmem:[#allocation4 + $0x68] sm:$0x3] %vm1500, 0.0
    %1514 = vst.msk [vmem:[#allocation4 + $0x70] sm:$0xff] %vm1498, 0.0
    %1515 = vst.msk [vmem:[#allocation4 + $0x78] sm:$0x3] %vm1500, 0.0
    %1516 = vst.msk [vmem:[#allocation4 + $0x80] sm:$0xff] %vm1498, 0.0
    %1517 = vst.msk [vmem:[#allocation4 + $0x88] sm:$0x3] %vm1500, 0.0
    %1518 = vst.msk [vmem:[#allocation4 + $0x90] sm:$0xff] %vm1498, 0.0
    %1519 = vst.msk [vmem:[#allocation4 + $0x98] sm:$0x3] %vm1500, 0.0
    %1520 = vst.msk [vmem:[#allocation4 + $0xa0] sm:$0xff] %vm1498, 0.0
    %1521 = vst.msk [vmem:[#allocation4 + $0xa8] sm:$0x3] %vm1500, 0.0
    %1522 = vst.msk [vmem:[#allocation4 + $0xb0] sm:$0xff] %vm1498, 0.0
    %1523 = vst.msk [vmem:[#allocation4 + $0xb8] sm:$0x3] %vm1500, 0.0
    %1524 = vst.msk [vmem:[#allocation4 + $0xc0] sm:$0xff] %vm1498, 0.0
    %1525 = vst.msk [vmem:[#allocation4 + $0xc8] sm:$0x3] %vm1500, 0.0
    %1526 = vst.msk [vmem:[#allocation4 + $0xd0] sm:$0xff] %vm1498, 0.0
    %1527 = vst.msk [vmem:[#allocation4 + $0xd8] sm:$0x3] %vm1500, 0.0
    %1528 = vst.msk [vmem:[#allocation4 + $0xe0] sm:$0xff] %vm1498, 0.0
    %1529 = vst.msk [vmem:[#allocation4 + $0xe8] sm:$0x3] %vm1500, 0.0
    %1530 = vst.msk [vmem:[#allocation4 + $0xf0] sm:$0xff] %vm1498, 0.0
    %1531 = vst.msk [vmem:[#allocation4 + $0xf8] sm:$0x3] %vm1500, 0.0
    %1532 = vst.msk [vmem:[#allocation4 + $0x100] sm:$0xff] %vm1498, 0.0
    %1533 = vst.msk [vmem:[#allocation4 + $0x108] sm:$0x3] %vm1500, 0.0
    %1534 = vst.msk [vmem:[#allocation4 + $0x110] sm:$0xff] %vm1498, 0.0
    %1535 = vst.msk [vmem:[#allocation4 + $0x118] sm:$0x3] %vm1500, 0.0
    %1536 = vst.msk [vmem:[#allocation4 + $0x120] sm:$0xff] %vm1498, 0.0
    %1537 = vst.msk [vmem:[#allocation4 + $0x128] sm:$0x3] %vm1500, 0.0
    %1538 = vst.msk [vmem:[#allocation4 + $0x130] sm:$0xff] %vm1498, 0.0
    %1539 = vst.msk [vmem:[#allocation4 + $0x138] sm:$0x3] %vm1500, 0.0
    %s1540 = scalar_lea.vmem [#allocation4], 16
    %1541 = vst.msk [vmem:[%s1540 + $0x1] sm:$0xff] %vm1498, %v1482
    %1542 = vst.msk [vmem:[%s1540 + $0x11] sm:$0xff] %vm1498, %v1483
    %1543 = vst.msk [vmem:[%s1540 + $0x21] sm:$0xff] %vm1498, %v1484
    %1544 = vst.msk [vmem:[%s1540 + $0x31] sm:$0xff] %vm1498, %v1485
    %1545 = vst.msk [vmem:[%s1540 + $0x41] sm:$0xff] %vm1498, %v1486
    %1546 = vst.msk [vmem:[%s1540 + $0x51] sm:$0xff] %vm1498, %v1487
    %1547 = vst.msk [vmem:[%s1540 + $0x61] sm:$0xff] %vm1498, %v1488
    %1548 = vst.msk [vmem:[%s1540 + $0x71] sm:$0xff] %vm1498, %v1489
    %1549 = vst.msk [vmem:[%s1540 + $0xa1] sm:$0xff] %vm1498, %v1490
    %1550 = vst.msk [vmem:[%s1540 + $0xb1] sm:$0xff] %vm1498, %v1491
    %1551 = vst.msk [vmem:[%s1540 + $0xc1] sm:$0xff] %vm1498, %v1492
    %1552 = vst.msk [vmem:[%s1540 + $0xd1] sm:$0xff] %vm1498, %v1493
    %1553 = vst.msk [vmem:[%s1540 + $0xe1] sm:$0xff] %vm1498, %v1494
    %1554 = vst.msk [vmem:[%s1540 + $0xf1] sm:$0xff] %vm1498, %v1495
    %1555 = vst.msk [vmem:[%s1540 + $0x101] sm:$0xff] %vm1498, %v1496
    %1556 = vst.msk [vmem:[%s1540 + $0x111] sm:$0xff] %vm1498, %v1497
    %v1557 = vld [vmem:[#allocation4] ss:$2 sm:$0xf]
    %s1558 = scalar_lea.vmem [#allocation4], 32
    %v1559 = vld [vmem:[%s1558] ss:$2 sm:$0xf]
    %s1560 = scalar_lea.vmem [#allocation4], 64
    %v1561 = vld [vmem:[%s1560] ss:$2 sm:$0xf]
    %s1562 = scalar_lea.vmem [#allocation4], 96
    %v1563 = vld [vmem:[%s1562] ss:$2 sm:$0xf]
    %s1564 = scalar_lea.vmem [#allocation4], 160
    %v1565 = vld [vmem:[%s1564] ss:$2 sm:$0xf]
    %s1566 = scalar_lea.vmem [#allocation4], 192
    %v1567 = vld [vmem:[%s1566] ss:$2 sm:$0xf]
    %s1568 = scalar_lea.vmem [#allocation4], 224
    %v1569 = vld [vmem:[%s1568] ss:$2 sm:$0xf]
    %s1570 = scalar_lea.vmem [#allocation4], 256
    %v1571 = vld [vmem:[%s1570] ss:$2 sm:$0xf]
    %v1580 = vcombine.low %v1557, %v1559
    %v1581 = vcombine.low %v1561, %v1563
    %v1582 = vcombine.low %v1565, %v1567
    %v1583 = vcombine.low %v1569, %v1571
    %1588 = vst.msk [vmem:[#allocation5] sm:$0xff] %vm1498, %v1580
    %1589 = vst.msk [vmem:[#allocation5 + $0x8] sm:$0xff] %vm1498, %v1581
    %1590 = vst.msk [vmem:[#allocation5 + $0x10] sm:$0xff] %vm1498, %v1582
    %1591 = vst.msk [vmem:[#allocation5 + $0x18] sm:$0xff] %vm1498, %v1583
    %s1592 = scalar_lea.vmem [#allocation4], 1
    %v1593 = vld [vmem:[%s1592] ss:$2 sm:$0xf]
    %s1594 = scalar_lea.vmem [#allocation4], 33
    %v1595 = vld [vmem:[%s1594] ss:$2 sm:$0xf]
    %s1596 = scalar_lea.vmem [#allocation4], 65
    %v1597 = vld [vmem:[%s1596] ss:$2 sm:$0xf]
    %s1598 = scalar_lea.vmem [#allocation4], 97
    %v1599 = vld [vmem:[%s1598] ss:$2 sm:$0xf]
    %s1600 = scalar_lea.vmem [#allocation4], 161
    %v1601 = vld [vmem:[%s1600] ss:$2 sm:$0xf]
    %s1602 = scalar_lea.vmem [#allocation4], 193
    %v1603 = vld [vmem:[%s1602] ss:$2 sm:$0xf]
    %s1604 = scalar_lea.vmem [#allocation4], 225
    %v1605 = vld [vmem:[%s1604] ss:$2 sm:$0xf]
    %s1606 = scalar_lea.vmem [#allocation4], 257
    %v1607 = vld [vmem:[%s1606] ss:$2 sm:$0xf]
    %v1616 = vcombine.low %v1593, %v1595
    %v1617 = vcombine.low %v1597, %v1599
    %v1618 = vcombine.low %v1601, %v1603
    %v1619 = vcombine.low %v1605, %v1607
    %1620 = vrot.lane.b32.xlu0 %v1616, 8
    %v1621 = vpop.permute.xlu0 %1620
    %1622 = vrot.lane.b32.xlu0 %v1617, 8
    %v1623 = vpop.permute.xlu0 %1622
    %1624 = vrot.lane.b32.xlu0 %v1618, 8
    %v1625 = vpop.permute.xlu0 %1624
    %1626 = vrot.lane.b32.xlu0 %v1619, 8
    %v1627 = vpop.permute.xlu0 %1626
    %vm1632 = vcmask 130112
    %1633 = vst.msk [vmem:[#allocation5] sm:$0xff] %vm1632, %v1621
    %1634 = vst.msk [vmem:[#allocation5 + $0x8] sm:$0xff] %vm1632, %v1623
    %1635 = vst.msk [vmem:[#allocation5 + $0x10] sm:$0xff] %vm1632, %v1625
    %1636 = vst.msk [vmem:[#allocation5 + $0x18] sm:$0xff] %vm1632, %v1627
    %s1637 = scalar_lea.vmem [#allocation4], 2
    %v1638 = vld [vmem:[%s1637] ss:$2 sm:$0xf]
    %s1639 = scalar_lea.vmem [#allocation4], 34
    %v1640 = vld [vmem:[%s1639] ss:$2 sm:$0xf]
    %s1641 = scalar_lea.vmem [#allocation4], 66
    %v1642 = vld [vmem:[%s1641] ss:$2 sm:$0xf]
    %s1643 = scalar_lea.vmem [#allocation4], 98
    %v1644 = vld [vmem:[%s1643] ss:$2 sm:$0xf]
    %s1645 = scalar_lea.vmem [#allocation4], 162
    %v1646 = vld [vmem:[%s1645] ss:$2 sm:$0xf]
    %s1647 = scalar_lea.vmem [#allocation4], 194
    %v1648 = vld [vmem:[%s1647] ss:$2 sm:$0xf]
    %s1649 = scalar_lea.vmem [#allocation4], 226
    %v1650 = vld [vmem:[%s1649] ss:$2 sm:$0xf]
    %s1651 = scalar_lea.vmem [#allocation4], 258
    %v1652 = vld [vmem:[%s1651] ss:$2 sm:$0xf]
    %v1661 = vcombine.low %v1638, %v1640
    %v1662 = vcombine.low %v1642, %v1644
    %v1663 = vcombine.low %v1646, %v1648
    %v1664 = vcombine.low %v1650, %v1652
    %1665 = vrot.lane.b32.xlu0 %v1661, 16
    %v1666 = vpop.permute.xlu0 %1665
    %1667 = vrot.lane.b32.xlu0 %v1662, 16
    %v1668 = vpop.permute.xlu0 %1667
    %1669 = vrot.lane.b32.xlu0 %v1663, 16
    %v1670 = vpop.permute.xlu0 %1669
    %1671 = vrot.lane.b32.xlu0 %v1664, 16
    %v1672 = vpop.permute.xlu0 %1671
    %vm1677 = vcmask 195712
    %1678 = vst.msk [vmem:[#allocation5] sm:$0xff] %vm1677, %v1666
    %1679 = vst.msk [vmem:[#allocation5 + $0x8] sm:$0xff] %vm1677, %v1668
    %1680 = vst.msk [vmem:[#allocation5 + $0x10] sm:$0xff] %vm1677, %v1670
    %1681 = vst.msk [vmem:[#allocation5 + $0x18] sm:$0xff] %vm1677, %v1672
    %v1682 = vld [vmem:[%s1540] ss:$2 sm:$0xf]
    %s1683 = scalar_lea.vmem %s1540, 32 [#allocation4]
    %v1684 = vld [vmem:[%s1683] ss:$2 sm:$0xf]
    %s1685 = scalar_lea.vmem %s1540, 64 [#allocation4]
    %v1686 = vld [vmem:[%s1685] ss:$2 sm:$0xf]
    %s1687 = scalar_lea.vmem %s1540, 96 [#allocation4]
    %v1688 = vld [vmem:[%s1687] ss:$2 sm:$0xf]
    %s1689 = scalar_lea.vmem %s1540, 160 [#allocation4]
    %v1690 = vld [vmem:[%s1689] ss:$2 sm:$0xf]
    %s1691 = scalar_lea.vmem %s1540, 192 [#allocation4]
    %v1692 = vld [vmem:[%s1691] ss:$2 sm:$0xf]
    %s1693 = scalar_lea.vmem %s1540, 224 [#allocation4]
    %v1694 = vld [vmem:[%s1693] ss:$2 sm:$0xf]
    %s1695 = scalar_lea.vmem %s1540, 256 [#allocation4]
    %v1696 = vld [vmem:[%s1695] ss:$2 sm:$0xf]
    %v1705 = vcombine.low %v1682, %v1684
    %v1706 = vcombine.low %v1686, %v1688
    %v1707 = vcombine.low %v1690, %v1692
    %v1708 = vcombine.low %v1694, %v1696
    %1709 = vrot.lane.b32.xlu0 %v1705, 24
    %v1710 = vpop.permute.xlu0 %1709
    %1711 = vrot.lane.b32.xlu0 %v1706, 24
    %v1712 = vpop.permute.xlu0 %1711
    %1713 = vrot.lane.b32.xlu0 %v1707, 24
    %v1714 = vpop.permute.xlu0 %1713
    %1715 = vrot.lane.b32.xlu0 %v1708, 24
    %v1716 = vpop.permute.xlu0 %1715
    %vm1721 = vcmask 261312
    %1722 = vst.msk [vmem:[#allocation5] sm:$0xff] %vm1721, %v1710
    %1723 = vst.msk [vmem:[#allocation5 + $0x8] sm:$0xff] %vm1721, %v1712
    %1724 = vst.msk [vmem:[#allocation5 + $0x10] sm:$0xff] %vm1721, %v1714
    %1725 = vst.msk [vmem:[#allocation5 + $0x18] sm:$0xff] %vm1721, %v1716
    %s1726 = scalar_lea.vmem %s1540, 1 [#allocation4]
    %v1727 = vld [vmem:[%s1726] ss:$2 sm:$0xf]
    %s1728 = scalar_lea.vmem %s1540, 33 [#allocation4]
    %v1729 = vld [vmem:[%s1728] ss:$2 sm:$0xf]
    %s1730 = scalar_lea.vmem %s1540, 65 [#allocation4]
    %v1731 = vld [vmem:[%s1730] ss:$2 sm:$0xf]
    %s1732 = scalar_lea.vmem %s1540, 97 [#allocation4]
    %v1733 = vld [vmem:[%s1732] ss:$2 sm:$0xf]
    %s1734 = scalar_lea.vmem %s1540, 161 [#allocation4]
    %v1735 = vld [vmem:[%s1734] ss:$2 sm:$0xf]
    %s1736 = scalar_lea.vmem %s1540, 193 [#allocation4]
    %v1737 = vld [vmem:[%s1736] ss:$2 sm:$0xf]
    %s1738 = scalar_lea.vmem %s1540, 225 [#allocation4]
    %v1739 = vld [vmem:[%s1738] ss:$2 sm:$0xf]
    %s1740 = scalar_lea.vmem %s1540, 257 [#allocation4]
    %v1741 = vld [vmem:[%s1740] ss:$2 sm:$0xf]
    %v1750 = vcombine.low %v1727, %v1729
    %v1751 = vcombine.low %v1731, %v1733
    %v1752 = vcombine.low %v1735, %v1737
    %v1753 = vcombine.low %v1739, %v1741
    %1754 = vrot.lane.b32.xlu0 %v1750, 32
    %v1755 = vpop.permute.xlu0 %1754
    %1756 = vrot.lane.b32.xlu0 %v1751, 32
    %v1757 = vpop.permute.xlu0 %1756
    %1758 = vrot.lane.b32.xlu0 %v1752, 32
    %v1759 = vpop.permute.xlu0 %1758
    %1760 = vrot.lane.b32.xlu0 %v1753, 32
    %v1761 = vpop.permute.xlu0 %1760
    %vm1766 = vcmask 326912
    %1767 = vst.msk [vmem:[#allocation5] sm:$0xff] %vm1766, %v1755
    %1768 = vst.msk [vmem:[#allocation5 + $0x8] sm:$0xff] %vm1766, %v1757
    %1769 = vst.msk [vmem:[#allocation5 + $0x10] sm:$0xff] %vm1766, %v1759
    %1770 = vst.msk [vmem:[#allocation5 + $0x18] sm:$0xff] %vm1766, %v1761
    %s1771 = scalar_lea.vmem %s1540, 2 [#allocation4]
    %v1772 = vld [vmem:[%s1771] ss:$2 sm:$0xf]
    %s1773 = scalar_lea.vmem %s1540, 34 [#allocation4]
    %v1774 = vld [vmem:[%s1773] ss:$2 sm:$0xf]
    %s1775 = scalar_lea.vmem %s1540, 66 [#allocation4]
    %v1776 = vld [vmem:[%s1775] ss:$2 sm:$0xf]
    %s1777 = scalar_lea.vmem %s1540, 98 [#allocation4]
    %v1778 = vld [vmem:[%s1777] ss:$2 sm:$0xf]
    %s1779 = scalar_lea.vmem %s1540, 162 [#allocation4]
    %v1780 = vld [vmem:[%s1779] ss:$2 sm:$0xf]
    %s1781 = scalar_lea.vmem %s1540, 194 [#allocation4]
    %v1782 = vld [vmem:[%s1781] ss:$2 sm:$0xf]
    %s1783 = scalar_lea.vmem %s1540, 226 [#allocation4]
    %v1784 = vld [vmem:[%s1783] ss:$2 sm:$0xf]
    %s1785 = scalar_lea.vmem %s1540, 258 [#allocation4]
    %v1786 = vld [vmem:[%s1785] ss:$2 sm:$0xf]
    %v1795 = vcombine.low %v1772, %v1774
    %v1796 = vcombine.low %v1776, %v1778
    %v1797 = vcombine.low %v1780, %v1782
    %v1798 = vcombine.low %v1784, %v1786
    %1799 = vrot.lane.b32.xlu0 %v1795, 40
    %v1800 = vpop.permute.xlu0 %1799
    %1801 = vrot.lane.b32.xlu0 %v1796, 40
    %v1802 = vpop.permute.xlu0 %1801
    %1803 = vrot.lane.b32.xlu0 %v1797, 40
    %v1804 = vpop.permute.xlu0 %1803
    %1805 = vrot.lane.b32.xlu0 %v1798, 40
    %v1806 = vpop.permute.xlu0 %1805
    %vm1811 = vcmask 392512
    %1812 = vst.msk [vmem:[#allocation5] sm:$0xff] %vm1811, %v1800
    %1813 = vst.msk [vmem:[#allocation5 + $0x8] sm:$0xff] %vm1811, %v1802
    %1814 = vst.msk [vmem:[#allocation5 + $0x10] sm:$0xff] %vm1811, %v1804
    %1815 = vst.msk [vmem:[#allocation5 + $0x18] sm:$0xff] %vm1811, %v1806
    %s1816 = scalar_lea.vmem [#allocation4], 32
    %v1817 = vld [vmem:[%s1816] ss:$2 sm:$0xf]
    %s1818 = scalar_lea.vmem %s1816, 32 [#allocation4]
    %v1819 = vld [vmem:[%s1818] ss:$2 sm:$0xf]
    %s1820 = scalar_lea.vmem %s1816, 64 [#allocation4]
    %v1821 = vld [vmem:[%s1820] ss:$2 sm:$0xf]
    %s1822 = scalar_lea.vmem %s1816, 96 [#allocation4]
    %v1823 = vld [vmem:[%s1822] ss:$2 sm:$0xf]
    %s1824 = scalar_lea.vmem %s1816, 160 [#allocation4]
    %v1825 = vld [vmem:[%s1824] ss:$2 sm:$0xf]
    %s1826 = scalar_lea.vmem %s1816, 192 [#allocation4]
    %v1827 = vld [vmem:[%s1826] ss:$2 sm:$0xf]
    %s1828 = scalar_lea.vmem %s1816, 224 [#allocation4]
    %v1829 = vld [vmem:[%s1828] ss:$2 sm:$0xf]
    %s1830 = scalar_lea.vmem %s1816, 256 [#allocation4]
    %v1831 = vld [vmem:[%s1830] ss:$2 sm:$0xf]
    %v1840 = vcombine.low %v1817, %v1819
    %v1841 = vcombine.low %v1821, %v1823
    %v1842 = vcombine.low %v1825, %v1827
    %v1843 = vcombine.low %v1829, %v1831
    %1844 = vrot.lane.b32.xlu0 %v1840, 48
    %v1845 = vpop.permute.xlu0 %1844
    %1846 = vrot.lane.b32.xlu0 %v1841, 48
    %v1847 = vpop.permute.xlu0 %1846
    %1848 = vrot.lane.b32.xlu0 %v1842, 48
    %v1849 = vpop.permute.xlu0 %1848
    %1850 = vrot.lane.b32.xlu0 %v1843, 48
    %v1851 = vpop.permute.xlu0 %1850
    %vm1856 = vcmask 458112
    %1857 = vst.msk [vmem:[#allocation5] sm:$0xff] %vm1856, %v1845
    %1858 = vst.msk [vmem:[#allocation5 + $0x8] sm:$0xff] %vm1856, %v1847
    %1859 = vst.msk [vmem:[#allocation5 + $0x10] sm:$0xff] %vm1856, %v1849
    %1860 = vst.msk [vmem:[#allocation5 + $0x18] sm:$0xff] %vm1856, %v1851
    %s1861 = scalar_lea.vmem %s1816, 1 [#allocation4]
    %v1862 = vld [vmem:[%s1861] ss:$2 sm:$0xf]
    %s1863 = scalar_lea.vmem %s1816, 33 [#allocation4]
    %v1864 = vld [vmem:[%s1863] ss:$2 sm:$0xf]
    %s1865 = scalar_lea.vmem %s1816, 65 [#allocation4]
    %v1866 = vld [vmem:[%s1865] ss:$2 sm:$0xf]
    %s1867 = scalar_lea.vmem %s1816, 97 [#allocation4]
    %v1868 = vld [vmem:[%s1867] ss:$2 sm:$0xf]
    %s1869 = scalar_lea.vmem %s1816, 161 [#allocation4]
    %v1870 = vld [vmem:[%s1869] ss:$2 sm:$0xf]
    %s1871 = scalar_lea.vmem %s1816, 193 [#allocation4]
    %v1872 = vld [vmem:[%s1871] ss:$2 sm:$0xf]
    %s1873 = scalar_lea.vmem %s1816, 225 [#allocation4]
    %v1874 = vld [vmem:[%s1873] ss:$2 sm:$0xf]
    %s1875 = scalar_lea.vmem %s1816, 257 [#allocation4]
    %v1876 = vld [vmem:[%s1875] ss:$2 sm:$0xf]
    %v1885 = vcombine.low %v1862, %v1864
    %v1886 = vcombine.low %v1866, %v1868
    %v1887 = vcombine.low %v1870, %v1872
    %v1888 = vcombine.low %v1874, %v1876
    %1889 = vrot.lane.b32.xlu0 %v1885, 56
    %v1890 = vpop.permute.xlu0 %1889
    %1891 = vrot.lane.b32.xlu0 %v1886, 56
    %v1892 = vpop.permute.xlu0 %1891
    %1893 = vrot.lane.b32.xlu0 %v1887, 56
    %v1894 = vpop.permute.xlu0 %1893
    %1895 = vrot.lane.b32.xlu0 %v1888, 56
    %v1896 = vpop.permute.xlu0 %1895
    %vm1901 = vcmask 523712
    %1902 = vst.msk [vmem:[#allocation5] sm:$0xff] %vm1901, %v1890
    %1903 = vst.msk [vmem:[#allocation5 + $0x8] sm:$0xff] %vm1901, %v1892
    %1904 = vst.msk [vmem:[#allocation5 + $0x10] sm:$0xff] %vm1901, %v1894
    %1905 = vst.msk [vmem:[#allocation5 + $0x18] sm:$0xff] %vm1901, %v1896
    %s1906 = scalar_lea.vmem %s1816, 2 [#allocation4]
    %v1907 = vld [vmem:[%s1906] ss:$2 sm:$0xf]
    %s1908 = scalar_lea.vmem %s1816, 34 [#allocation4]
    %v1909 = vld [vmem:[%s1908] ss:$2 sm:$0xf]
    %s1910 = scalar_lea.vmem %s1816, 66 [#allocation4]
    %v1911 = vld [vmem:[%s1910] ss:$2 sm:$0xf]
    %s1912 = scalar_lea.vmem %s1816, 98 [#allocation4]
    %v1913 = vld [vmem:[%s1912] ss:$2 sm:$0xf]
    %s1914 = scalar_lea.vmem %s1816, 162 [#allocation4]
    %v1915 = vld [vmem:[%s1914] ss:$2 sm:$0xf]
    %s1916 = scalar_lea.vmem %s1816, 194 [#allocation4]
    %v1917 = vld [vmem:[%s1916] ss:$2 sm:$0xf]
    %s1918 = scalar_lea.vmem %s1816, 226 [#allocation4]
    %v1919 = vld [vmem:[%s1918] ss:$2 sm:$0xf]
    %s1920 = scalar_lea.vmem %s1816, 258 [#allocation4]
    %v1921 = vld [vmem:[%s1920] ss:$2 sm:$0xf]
    %v1930 = vcombine.low %v1907, %v1909
    %v1931 = vcombine.low %v1911, %v1913
    %v1932 = vcombine.low %v1915, %v1917
    %v1933 = vcombine.low %v1919, %v1921
    %1934 = vrot.lane.b32.xlu0 %v1930, 64
    %v1935 = vpop.permute.xlu0 %1934
    %1936 = vrot.lane.b32.xlu0 %v1931, 64
    %v1937 = vpop.permute.xlu0 %1936
    %1938 = vrot.lane.b32.xlu0 %v1932, 64
    %v1939 = vpop.permute.xlu0 %1938
    %1940 = vrot.lane.b32.xlu0 %v1933, 64
    %v1941 = vpop.permute.xlu0 %1940
    %vm1946 = vcmask 589312
    %1947 = vst.msk [vmem:[#allocation5] sm:$0xff] %vm1946, %v1935
    %1948 = vst.msk [vmem:[#allocation5 + $0x8] sm:$0xff] %vm1946, %v1937
    %1949 = vst.msk [vmem:[#allocation5 + $0x10] sm:$0xff] %vm1946, %v1939
    %1950 = vst.msk [vmem:[#allocation5 + $0x18] sm:$0xff] %vm1946, %v1941
    %v1951 = vld [vmem:[#allocation5] sm:$0xff]
    %v1952 = vld [vmem:[#allocation5 + $0x8] sm:$0xff]
    %v1953 = vld [vmem:[#allocation5 + $0x10] sm:$0xff]
    %v1954 = vld [vmem:[#allocation5 + $0x18] sm:$0xff]
    %v1955 = vld [vmem:[%s3] sm:$0xff]
    %v1956 = vld [vmem:[%s3 + $0x8] sm:$0xff]
    %v1957 = vld [vmem:[%s3 + $0x10] sm:$0xff]
    %v1958 = vld [vmem:[%s3 + $0x18] sm:$0xff]
    %v1959 = vld [vmem:[%s3 + $0x20] sm:$0xff]
    %v1960 = vld [vmem:[%s3 + $0x28] sm:$0xff]
    %v1961 = vld [vmem:[%s3 + $0x30] sm:$0xff]
    %v1962 = vld [vmem:[%s3 + $0x38] sm:$0xff]
    %v1963 = vld [vmem:[%s3 + $0x40] sm:$0xff]
    %v1964 = vld [vmem:[%s4] sm:$0x1]
    %v1966 = vlaneseq
    %v1967 = vshrl.u32 %v1966, 7
    %v1968 = vsub.s32 0, %v1967
    %v1969 = vrot.slane %v1964, %v1968
    %vm1971 = vcmask 588800
    %v1973 = vsel %vm1971, %v1951, 0
    %v1976 = vsel %vm1971, %v1952, 0
    %v1979 = vsel %vm1971, %v1953, 0
    %v1982 = vsel %vm1971, %v1954, 0
    %1984 = vmatprep.subr.mxu0 0.0
    %1985 = vmatpush1.msra.mxu0 %v1955
    %1986 = vmatprep.subr.mxu0 0.0
    %1987 = vmatpush1.msra.mxu0 %v1956
    %1988 = vmatprep.subr.mxu0 0.0
    %1989 = vmatpush1.msra.mxu0 %v1957
    %1990 = vmatprep.subr.mxu0 0.0
    %1991 = vmatpush1.msra.mxu0 %v1958
    %1992 = vmatprep.subr.mxu0 0.0
    %1993 = vmatpush1.msra.mxu0 %v1959
    %1994 = vmatprep.subr.mxu0 0.0
    %1995 = vmatpush1.msra.mxu0 %v1960
    %1996 = vmatprep.subr.mxu0 0.0
    %1997 = vmatpush1.msra.mxu0 %v1961
    %1998 = vmatprep.subr.mxu0 0.0
    %1999 = vmatpush1.msra.mxu0 %v1962
    %2000 = vmatprep.subr.mxu0 0.0
    %2001 = vmatpush1.msra.mxu0 %v1963
    %2002 = vmatprep.subr.mxu0 0.0
    %2003 = vmatpush1.msra.mxu0 0.0
    %2004 = vmatprep.subr.mxu0 0.0
    %2005 = vmatpush1.msra.mxu0 0.0
    %2006 = vmatprep.subr.mxu0 0.0
    %2007 = vmatpush1.msra.mxu0 0.0
    %2008 = vmatprep.subr.mxu0 0.0
    %2009 = vmatpush1.msra.mxu0 0.0
    %2010 = vmatprep.subr.mxu0 0.0
    %2011 = vmatpush1.msra.mxu0 0.0
    %2012 = vmatprep.subr.mxu0 0.0
    %2013 = vmatpush1.msra.mxu0 0.0
    %2014 = vmatprep.subr.mxu0 0.0
    %2015 = vmatpush1.msra.mxu0 0.0
    %2016 = vmatprep.subr.mxu0 0.0
    %2017 = vmatpush1.msra.mxu0 0.0
    %2018 = vmatprep.subr.mxu0 0.0
    %2019 = vmatpush1.msra.mxu0 0.0
    %2020 = vmatprep.subr.mxu0 0.0
    %2021 = vmatpush1.msra.mxu0 0.0
    %2022 = vmatprep.subr.mxu0 0.0
    %2023 = vmatpush1.msra.mxu0 0.0
    %2024 = vmatprep.subr.mxu0 0.0
    %2025 = vmatpush1.msra.mxu0 0.0
    %2026 = vmatprep.subr.mxu0 0.0
    %2027 = vmatpush1.msra.mxu0 0.0
    %2028 = vmatprep.subr.mxu0 0.0
    %2029 = vmatpush1.msra.mxu0 0.0
    %2030 = vmatprep.subr.mxu0 0.0
    %2031 = vmatpush1.msra.mxu0 0.0
    %2032 = vmatprep.subr.mxu0 0.0
    %2033 = vmatpush1.msra.mxu0 0.0
    %2034 = vmatprep.subr.mxu0 0.0
    %2035 = vmatpush1.msra.mxu0 0.0
    %2036 = vmatprep.subr.mxu0 0.0
    %2037 = vmatpush1.msra.mxu0 0.0
    %2038 = vmatprep.subr.mxu0 0.0
    %2039 = vmatpush1.msra.mxu0 0.0
    %2040 = vmatprep.subr.mxu0 0.0
    %2041 = vmatpush1.msra.mxu0 0.0
    %2042 = vmatprep.subr.mxu0 0.0
    %2043 = vmatpush1.msra.mxu0 0.0
    %2044 = vmatprep.subr.mxu0 0.0
    %2045 = vmatpush1.msra.mxu0 0.0
    %2046 = vmatprep.subr.mxu0 0.0
    %2047 = vmatpush1.msra.mxu0 0.0
    %2048 = vmatprep.mubr.f32.mxu0 0.0
    %2049 = vmatmul.mubr.f32.gmra.mrb[0].mxu0 %v1973
    %v2050 = vpop.f32.mrb[0].mxu0
    %v2051 = vadd.f32 %v1969, %v2050
    %v2052 = vpop.f32.mrb[0].mxu0
    %2053 = vmatprep.mubr.f32.mxu0 0.0
    %2054 = vmatmul.mubr.f32.gmra.mrb[0].mxu0 %v1976
    %v2055 = vpop.f32.mrb[0].mxu0
    %v2056 = vadd.f32 %v1969, %v2055
    %v2057 = vpop.f32.mrb[0].mxu0
    %2058 = vmatprep.mubr.f32.mxu0 0.0
    %2059 = vmatmul.mubr.f32.gmra.mrb[0].mxu0 %v1979
    %v2060 = vpop.f32.mrb[0].mxu0
    %v2061 = vadd.f32 %v1969, %v2060
    %v2062 = vpop.f32.mrb[0].mxu0
    %2063 = vmatprep.mubr.f32.mxu0 0.0
    %2064 = vmatmul.mubr.f32.gmra.mrb[0].mxu0 %v1982
    %v2065 = vpop.f32.mrb[0].mxu0
    %v2066 = vadd.f32 %v1969, %v2065
    %v2067 = vpop.f32.mrb[0].mxu0
    %2068 = vdwg.mxu0
    %v2069 = vmax.f32 %v2051, 0.0
    %v2070 = vmax.f32 %v2056, 0.0
    %v2071 = vmax.f32 %v2061, 0.0
    %v2072 = vmax.f32 %v2066, 0.0
    %v2077 = vcombine.high %v2069, %v2069
    %v2078 = vcombine.high %v2070, %v2070
    %v2079 = vcombine.high %v2071, %v2071
    %v2080 = vcombine.high %v2072, %v2072
    %vm2085 = vcmask 128000
    %2086 = vst.msk [vmem:[#allocation6] sm:$0x3f] %vm2085, 0.0
    %2087 = vst.msk [vmem:[#allocation6 + $0x8] sm:$0x3f] %vm2085, 0.0
    %2088 = vst.msk [vmem:[#allocation6 + $0x10] sm:$0x3f] %vm2085, 0.0
    %2089 = vst.msk [vmem:[#allocation6 + $0x18] sm:$0x3f] %vm2085, 0.0
    %2090 = vst.msk [vmem:[#allocation6 + $0x20] sm:$0x3f] %vm2085, 0.0
    %2091 = vst.msk [vmem:[#allocation6 + $0x28] sm:$0x3f] %vm2085, 0.0
    %2092 = vst.msk [vmem:[#allocation6 + $0x30] sm:$0x3f] %vm2085, 0.0
    %2093 = vst.msk [vmem:[#allocation6 + $0x38] sm:$0x3f] %vm2085, 0.0
    %2094 = vst.msk [vmem:[#allocation6 + $0x40] sm:$0x3f] %vm2085, 0.0
    %2095 = vst.msk [vmem:[#allocation6 + $0x48] sm:$0x3f] %vm2085, 0.0
    %2096 = vst.msk [vmem:[#allocation6 + $0x50] sm:$0x3f] %vm2085, 0.0
    %2097 = vst.msk [vmem:[#allocation6 + $0x58] sm:$0x3f] %vm2085, 0.0
    %s2098 = scalar_lea.vmem [#allocation6], 8
    %vm2099 = vcmask 125952
    %2100 = vst.msk [vmem:[%s2098 + $0x1] sm:$0xf] %vm2099, %v2069
    %2101 = vst.msk [vmem:[%s2098 + $0x9] sm:$0xf] %vm2099, %v2077
    %2102 = vst.msk [vmem:[%s2098 + $0x11] sm:$0xf] %vm2099, %v2070
    %2103 = vst.msk [vmem:[%s2098 + $0x19] sm:$0xf] %vm2099, %v2078
    %2104 = vst.msk [vmem:[%s2098 + $0x31] sm:$0xf] %vm2099, %v2071
    %2105 = vst.msk [vmem:[%s2098 + $0x39] sm:$0xf] %vm2099, %v2079
    %2106 = vst.msk [vmem:[%s2098 + $0x41] sm:$0xf] %vm2099, %v2072
    %2107 = vst.msk [vmem:[%s2098 + $0x49] sm:$0xf] %vm2099, %v2080
    %v2108 = vld [vmem:[#allocation6] ss:$2 sm:$0x3]
    %s2109 = scalar_lea.vmem [#allocation6], 16
    %v2110 = vld [vmem:[%s2109] ss:$2 sm:$0x3]
    %s2111 = scalar_lea.vmem [#allocation6], 48
    %v2112 = vld [vmem:[%s2111] ss:$2 sm:$0x3]
    %s2113 = scalar_lea.vmem [#allocation6], 64
    %v2114 = vld [vmem:[%s2113] ss:$2 sm:$0x3]
    %v2119 = vcombine.low %v2108, %v2110
    %v2120 = vcombine.low %v2112, %v2114
    %v2122 = vunpack.c.l.s4 1983009808
    %v2123 = vunpack.c.0.s8 %v2122
    %v2124 = vlaneseq
    %v2125 = vshrl.u32 %v2124, 7
    %v2126 = vsub.s32 %v2123, %v2125
    %v2127 = vrot.slane %v2119, %v2126
    %v2129 = vunpack.c.l.s4 1983009808
    %v2130 = vunpack.c.0.s8 %v2129
    %v2131 = vlaneseq
    %v2132 = vshrl.u32 %v2131, 7
    %v2133 = vsub.s32 %v2130, %v2132
    %v2134 = vrot.slane %v2120, %v2133
    %v2135 = vcombine.low %v2127, %v2134
    %vm2137 = vcmask 130048
    %2138 = vst.msk [vmem:[#allocation7] sm:$0xff] %vm2137, %v2135
    %s2139 = scalar_lea.vmem [#allocation6], 1
    %v2140 = vld [vmem:[%s2139] ss:$2 sm:$0x3]
    %s2141 = scalar_lea.vmem [#allocation6], 17
    %v2142 = vld [vmem:[%s2141] ss:$2 sm:$0x3]
    %s2143 = scalar_lea.vmem [#allocation6], 49
    %v2144 = vld [vmem:[%s2143] ss:$2 sm:$0x3]
    %s2145 = scalar_lea.vmem [#allocation6], 65
    %v2146 = vld [vmem:[%s2145] ss:$2 sm:$0x3]
    %v2151 = vcombine.low %v2140, %v2142
    %v2152 = vcombine.low %v2144, %v2146
    %v2154 = vunpack.c.l.s4 1983009808
    %v2155 = vunpack.c.0.s8 %v2154
    %v2156 = vlaneseq
    %v2157 = vshrl.u32 %v2156, 7
    %v2158 = vsub.s32 %v2155, %v2157
    %v2159 = vrot.slane %v2151, %v2158
    %v2161 = vunpack.c.l.s4 1983009808
    %v2162 = vunpack.c.0.s8 %v2161
    %v2163 = vlaneseq
    %v2164 = vshrl.u32 %v2163, 7
    %v2165 = vsub.s32 %v2162, %v2164
    %v2166 = vrot.slane %v2152, %v2165
    %v2167 = vcombine.low %v2159, %v2166
    %2168 = vrot.lane.b32.xlu0 %v2167, 16
    %v2169 = vpop.permute.xlu0 %2168
    %vm2171 = vcmask 261248
    %2172 = vst.msk [vmem:[#allocation7] sm:$0xff] %vm2171, %v2169
    %s2173 = scalar_lea.vmem [#allocation6], 2
    %v2174 = vld [vmem:[%s2173] ss:$2 sm:$0x3]
    %s2175 = scalar_lea.vmem [#allocation6], 18
    %v2176 = vld [vmem:[%s2175] ss:$2 sm:$0x3]
    %s2177 = scalar_lea.vmem [#allocation6], 50
    %v2178 = vld [vmem:[%s2177] ss:$2 sm:$0x3]
    %s2179 = scalar_lea.vmem [#allocation6], 66
    %v2180 = vld [vmem:[%s2179] ss:$2 sm:$0x3]
    %v2185 = vcombine.low %v2174, %v2176
    %v2186 = vcombine.low %v2178, %v2180
    %v2188 = vunpack.c.l.s4 1983009808
    %v2189 = vunpack.c.0.s8 %v2188
    %v2190 = vlaneseq
    %v2191 = vshrl.u32 %v2190, 7
    %v2192 = vsub.s32 %v2189, %v2191
    %v2193 = vrot.slane %v2185, %v2192
    %v2195 = vunpack.c.l.s4 1983009808
    %v2196 = vunpack.c.0.s8 %v2195
    %v2197 = vlaneseq
    %v2198 = vshrl.u32 %v2197, 7
    %v2199 = vsub.s32 %v2196, %v2198
    %v2200 = vrot.slane %v2186, %v2199
    %v2201 = vcombine.low %v2193, %v2200
    %2202 = vrot.lane.b32.xlu0 %v2201, 32
    %v2203 = vpop.permute.xlu0 %2202
    %vm2205 = vcmask 392448
    %2206 = vst.msk [vmem:[#allocation7] sm:$0xff] %vm2205, %v2203
    %v2207 = vld [vmem:[%s2098] ss:$2 sm:$0x3]
    %s2208 = scalar_lea.vmem %s2098, 16 [#allocation6]
    %v2209 = vld [vmem:[%s2208] ss:$2 sm:$0x3]
    %s2210 = scalar_lea.vmem %s2098, 48 [#allocation6]
    %v2211 = vld [vmem:[%s2210] ss:$2 sm:$0x3]
    %s2212 = scalar_lea.vmem %s2098, 64 [#allocation6]
    %v2213 = vld [vmem:[%s2212] ss:$2 sm:$0x3]
    %v2218 = vcombine.low %v2207, %v2209
    %v2219 = vcombine.low %v2211, %v2213
    %v2221 = vunpack.c.l.s4 1983009808
    %v2222 = vunpack.c.0.s8 %v2221
    %v2223 = vlaneseq
    %v2224 = vshrl.u32 %v2223, 7
    %v2225 = vsub.s32 %v2222, %v2224
    %v2226 = vrot.slane %v2218, %v2225
    %v2228 = vunpack.c.l.s4 1983009808
    %v2229 = vunpack.c.0.s8 %v2228
    %v2230 = vlaneseq
    %v2231 = vshrl.u32 %v2230, 7
    %v2232 = vsub.s32 %v2229, %v2231
    %v2233 = vrot.slane %v2219, %v2232
    %v2234 = vcombine.low %v2226, %v2233
    %2235 = vrot.lane.b32.xlu0 %v2234, 48
    %v2236 = vpop.permute.xlu0 %2235
    %vm2238 = vcmask 523648
    %2239 = vst.msk [vmem:[#allocation7] sm:$0xff] %vm2238, %v2236
    %s2240 = scalar_lea.vmem %s2098, 1 [#allocation6]
    %v2241 = vld [vmem:[%s2240] ss:$2 sm:$0x3]
    %s2242 = scalar_lea.vmem %s2098, 17 [#allocation6]
    %v2243 = vld [vmem:[%s2242] ss:$2 sm:$0x3]
    %s2244 = scalar_lea.vmem %s2098, 49 [#allocation6]
    %v2245 = vld [vmem:[%s2244] ss:$2 sm:$0x3]
    %s2246 = scalar_lea.vmem %s2098, 65 [#allocation6]
    %v2247 = vld [vmem:[%s2246] ss:$2 sm:$0x3]
    %v2252 = vcombine.low %v2241, %v2243
    %v2253 = vcombine.low %v2245, %v2247
    %v2255 = vunpack.c.l.s4 1983009808
    %v2256 = vunpack.c.0.s8 %v2255
    %v2257 = vlaneseq
    %v2258 = vshrl.u32 %v2257, 7
    %v2259 = vsub.s32 %v2256, %v2258
    %v2260 = vrot.slane %v2252, %v2259
    %v2262 = vunpack.c.l.s4 1983009808
    %v2263 = vunpack.c.0.s8 %v2262
    %v2264 = vlaneseq
    %v2265 = vshrl.u32 %v2264, 7
    %v2266 = vsub.s32 %v2263, %v2265
    %v2267 = vrot.slane %v2253, %v2266
    %v2268 = vcombine.low %v2260, %v2267
    %2269 = vrot.lane.b32.xlu0 %v2268, 64
    %v2270 = vpop.permute.xlu0 %2269
    %vm2272 = vcmask 654848
    %2273 = vst.msk [vmem:[#allocation7] sm:$0xff] %vm2272, %v2270
    %s2274 = scalar_lea.vmem %s2098, 2 [#allocation6]
    %v2275 = vld [vmem:[%s2274] ss:$2 sm:$0x3]
    %s2276 = scalar_lea.vmem %s2098, 18 [#allocation6]
    %v2277 = vld [vmem:[%s2276] ss:$2 sm:$0x3]
    %s2278 = scalar_lea.vmem %s2098, 50 [#allocation6]
    %v2279 = vld [vmem:[%s2278] ss:$2 sm:$0x3]
    %s2280 = scalar_lea.vmem %s2098, 66 [#allocation6]
    %v2281 = vld [vmem:[%s2280] ss:$2 sm:$0x3]
    %v2286 = vcombine.low %v2275, %v2277
    %v2287 = vcombine.low %v2279, %v2281
    %v2289 = vunpack.c.l.s4 1983009808
    %v2290 = vunpack.c.0.s8 %v2289
    %v2291 = vlaneseq
    %v2292 = vshrl.u32 %v2291, 7
    %v2293 = vsub.s32 %v2290, %v2292
    %v2294 = vrot.slane %v2286, %v2293
    %v2296 = vunpack.c.l.s4 1983009808
    %v2297 = vunpack.c.0.s8 %v2296
    %v2298 = vlaneseq
    %v2299 = vshrl.u32 %v2298, 7
    %v2300 = vsub.s32 %v2297, %v2299
    %v2301 = vrot.slane %v2287, %v2300
    %v2302 = vcombine.low %v2294, %v2301
    %2303 = vrot.lane.b32.xlu0 %v2302, 80
    %v2304 = vpop.permute.xlu0 %2303
    %vm2306 = vcmask 786048
    %2307 = vst.msk [vmem:[#allocation7] sm:$0xff] %vm2306, %v2304
    %s2308 = scalar_lea.vmem [#allocation6], 16
    %v2309 = vld [vmem:[%s2308] ss:$2 sm:$0x3]
    %s2310 = scalar_lea.vmem %s2308, 16 [#allocation6]
    %v2311 = vld [vmem:[%s2310] ss:$2 sm:$0x3]
    %s2312 = scalar_lea.vmem %s2308, 48 [#allocation6]
    %v2313 = vld [vmem:[%s2312] ss:$2 sm:$0x3]
    %s2314 = scalar_lea.vmem %s2308, 64 [#allocation6]
    %v2315 = vld [vmem:[%s2314] ss:$2 sm:$0x3]
    %v2320 = vcombine.low %v2309, %v2311
    %v2321 = vcombine.low %v2313, %v2315
    %v2323 = vunpack.c.l.s4 1983009808
    %v2324 = vunpack.c.0.s8 %v2323
    %v2325 = vlaneseq
    %v2326 = vshrl.u32 %v2325, 7
    %v2327 = vsub.s32 %v2324, %v2326
    %v2328 = vrot.slane %v2320, %v2327
    %v2330 = vunpack.c.l.s4 1983009808
    %v2331 = vunpack.c.0.s8 %v2330
    %v2332 = vlaneseq
    %v2333 = vshrl.u32 %v2332, 7
    %v2334 = vsub.s32 %v2331, %v2333
    %v2335 = vrot.slane %v2321, %v2334
    %v2336 = vcombine.low %v2328, %v2335
    %2337 = vrot.lane.b32.xlu0 %v2336, 96
    %v2338 = vpop.permute.xlu0 %2337
    %vm2340 = vcmask 917248
    %2341 = vst.msk [vmem:[#allocation7] sm:$0xff] %vm2340, %v2338
    %s2342 = scalar_lea.vmem %s2308, 1 [#allocation6]
    %v2343 = vld [vmem:[%s2342] ss:$2 sm:$0x3]
    %s2344 = scalar_lea.vmem %s2308, 17 [#allocation6]
    %v2345 = vld [vmem:[%s2344] ss:$2 sm:$0x3]
    %s2346 = scalar_lea.vmem %s2308, 49 [#allocation6]
    %v2347 = vld [vmem:[%s2346] ss:$2 sm:$0x3]
    %s2348 = scalar_lea.vmem %s2308, 65 [#allocation6]
    %v2349 = vld [vmem:[%s2348] ss:$2 sm:$0x3]
    %v2354 = vcombine.low %v2343, %v2345
    %v2355 = vcombine.low %v2347, %v2349
    %v2357 = vunpack.c.l.s4 1983009808
    %v2358 = vunpack.c.0.s8 %v2357
    %v2359 = vlaneseq
    %v2360 = vshrl.u32 %v2359, 7
    %v2361 = vsub.s32 %v2358, %v2360
    %v2362 = vrot.slane %v2354, %v2361
    %v2364 = vunpack.c.l.s4 1983009808
    %v2365 = vunpack.c.0.s8 %v2364
    %v2366 = vlaneseq
    %v2367 = vshrl.u32 %v2366, 7
    %v2368 = vsub.s32 %v2365, %v2367
    %v2369 = vrot.slane %v2355, %v2368
    %v2370 = vcombine.low %v2362, %v2369
    %2371 = vrot.lane.b32.xlu0 %v2370, 112
    %v2372 = vpop.permute.xlu0 %2371
    %vm2374 = vcmask 1048448
    %2375 = vst.msk [vmem:[#allocation7] sm:$0xff] %vm2374, %v2372
    %s2376 = scalar_lea.vmem %s2308, 2 [#allocation6]
    %v2377 = vld [vmem:[%s2376] ss:$2 sm:$0x3]
    %s2378 = scalar_lea.vmem %s2308, 18 [#allocation6]
    %v2379 = vld [vmem:[%s2378] ss:$2 sm:$0x3]
    %s2380 = scalar_lea.vmem %s2308, 50 [#allocation6]
    %v2381 = vld [vmem:[%s2380] ss:$2 sm:$0x3]
    %s2382 = scalar_lea.vmem %s2308, 66 [#allocation6]
    %v2383 = vld [vmem:[%s2382] ss:$2 sm:$0x3]
    %v2388 = vcombine.low %v2377, %v2379
    %v2389 = vcombine.low %v2381, %v2383
    %v2391 = vunpack.c.l.s4 1983009808
    %v2392 = vunpack.c.0.s8 %v2391
    %v2393 = vlaneseq
    %v2394 = vshrl.u32 %v2393, 7
    %v2395 = vsub.s32 %v2392, %v2394
    %v2396 = vrot.slane %v2388, %v2395
    %v2398 = vunpack.c.l.s4 1983009808
    %v2399 = vunpack.c.0.s8 %v2398
    %v2400 = vlaneseq
    %v2401 = vshrl.u32 %v2400, 7
    %v2402 = vsub.s32 %v2399, %v2401
    %v2403 = vrot.slane %v2389, %v2402
    %v2404 = vcombine.low %v2396, %v2403
    %2406 = vst.msk [vmem:[#allocation7 + $0x8] sm:$0xff] %vm2137, %v2404
    %v2407 = vld [vmem:[#allocation7] sm:$0xff]
    %v2408 = vld [vmem:[#allocation7 + $0x8] sm:$0xff]
    %v2409 = vld [vmem:[%s5] sm:$0xff]
    %v2410 = vld [vmem:[%s5 + $0x8] sm:$0xff]
    %v2411 = vld [vmem:[%s5 + $0x10] sm:$0xff]
    %v2412 = vld [vmem:[%s5 + $0x18] sm:$0xff]
    %v2413 = vld [vmem:[%s5 + $0x20] sm:$0xff]
    %v2414 = vld [vmem:[%s5 + $0x28] sm:$0xff]
    %v2415 = vld [vmem:[%s5 + $0x30] sm:$0xff]
    %v2416 = vld [vmem:[%s5 + $0x38] sm:$0xff]
    %v2417 = vld [vmem:[%s5 + $0x40] sm:$0xff]
    %v2418 = vld [vmem:[%s5 + $0x48] sm:$0xff]
    %v2419 = vld [vmem:[%s5 + $0x50] sm:$0xff]
    %v2420 = vld [vmem:[%s5 + $0x58] sm:$0xff]
    %v2421 = vld [vmem:[%s5 + $0x60] sm:$0xff]
    %v2422 = vld [vmem:[%s5 + $0x68] sm:$0xff]
    %v2423 = vld [vmem:[%s5 + $0x70] sm:$0xff]
    %v2424 = vld [vmem:[%s5 + $0x78] sm:$0xff]
    %v2425 = vld [vmem:[%s5 + $0x80] sm:$0xff]
    %v2426 = vld [vmem:[%s5 + $0x88] sm:$0xff]
    %v2427 = vld [vmem:[%s6] sm:$0x1]
    %v2429 = vlaneseq
    %v2430 = vshrl.u32 %v2429, 7
    %v2431 = vsub.s32 0, %v2430
    %v2432 = vrot.slane %v2427, %v2431
    %v2435 = vsel %vm2137, %v2408, 0
    %2437 = vmatprep.subr.mxu0 0.0
    %2438 = vmatpush1.msra.mxu0 %v2409
    %2439 = vmatprep.subr.mxu0 0.0
    %2440 = vmatpush1.msra.mxu0 %v2410
    %2441 = vmatprep.subr.mxu0 0.0
    %2442 = vmatpush1.msra.mxu0 %v2411
    %2443 = vmatprep.subr.mxu0 0.0
    %2444 = vmatpush1.msra.mxu0 %v2412
    %2445 = vmatprep.subr.mxu0 0.0
    %2446 = vmatpush1.msra.mxu0 %v2413
    %2447 = vmatprep.subr.mxu0 0.0
    %2448 = vmatpush1.msra.mxu0 %v2414
    %2449 = vmatprep.subr.mxu0 0.0
    %2450 = vmatpush1.msra.mxu0 %v2415
    %2451 = vmatprep.subr.mxu0 0.0
    %2452 = vmatpush1.msra.mxu0 %v2416
    %2453 = vmatprep.subr.mxu0 0.0
    %2454 = vmatpush1.msra.mxu0 %v2417
    %2455 = vmatprep.subr.mxu0 0.0
    %2456 = vmatpush1.msra.mxu0 %v2418
    %2457 = vmatprep.subr.mxu0 0.0
    %2458 = vmatpush1.msra.mxu0 %v2419
    %2459 = vmatprep.subr.mxu0 0.0
    %2460 = vmatpush1.msra.mxu0 %v2420
    %2461 = vmatprep.subr.mxu0 0.0
    %2462 = vmatpush1.msra.mxu0 %v2421
    %2463 = vmatprep.subr.mxu0 0.0
    %2464 = vmatpush1.msra.mxu0 %v2422
    %2465 = vmatprep.subr.mxu0 0.0
    %2466 = vmatpush1.msra.mxu0 %v2423
    %2467 = vmatprep.subr.mxu0 0.0
    %2468 = vmatpush1.msra.mxu0 %v2424
    %2469 = vmatprep.subr.mxu0 0.0
    %2470 = vmatpush1.msra.mxu0 %v2425
    %2471 = vmatprep.subr.mxu0 0.0
    %2472 = vmatpush1.msra.mxu0 %v2426
    %2473 = vmatprep.subr.mxu0 0.0
    %2474 = vmatpush1.msra.mxu0 0.0
    %2475 = vmatprep.subr.mxu0 0.0
    %2476 = vmatpush1.msra.mxu0 0.0
    %2477 = vmatprep.subr.mxu0 0.0
    %2478 = vmatpush1.msra.mxu0 0.0
    %2479 = vmatprep.subr.mxu0 0.0
    %2480 = vmatpush1.msra.mxu0 0.0
    %2481 = vmatprep.subr.mxu0 0.0
    %2482 = vmatpush1.msra.mxu0 0.0
    %2483 = vmatprep.subr.mxu0 0.0
    %2484 = vmatpush1.msra.mxu0 0.0
    %2485 = vmatprep.subr.mxu0 0.0
    %2486 = vmatpush1.msra.mxu0 0.0
    %2487 = vmatprep.subr.mxu0 0.0
    %2488 = vmatpush1.msra.mxu0 0.0
    %2489 = vmatprep.subr.mxu0 0.0
    %2490 = vmatpush1.msra.mxu0 0.0
    %2491 = vmatprep.subr.mxu0 0.0
    %2492 = vmatpush1.msra.mxu0 0.0
    %2493 = vmatprep.subr.mxu0 0.0
    %2494 = vmatpush1.msra.mxu0 0.0
    %2495 = vmatprep.subr.mxu0 0.0
    %2496 = vmatpush1.msra.mxu0 0.0
    %2497 = vmatprep.subr.mxu0 0.0
    %2498 = vmatpush1.msra.mxu0 0.0
    %2499 = vmatprep.subr.mxu0 0.0
    %2500 = vmatpush1.msra.mxu0 0.0
    %2501 = vmatprep.mubr.f32.mxu0 %v2435
    %2502 = vmatmul.mubr.f32.gmra.mrb[0].mxu0 %v2407
    %v2503 = vpop.f32.mrb[0].mxu0
    %v2504 = vadd.f32 %v2432, %v2503
    %v2505 = vpop.f32.mrb[0].mxu0
    %2506 = vdwg.mxu0
    %v2507 = vmax.f32 %v2504, 0.0
    %v2508 = vld [vmem:[%s11] sm:$0xff]
    %v2509 = vld [vmem:[%s11 + $0x8] sm:$0xff]
    %v2510 = vld [vmem:[%s11 + $0x10] sm:$0xff]
    %v2511 = vld [vmem:[%s11 + $0x18] sm:$0xff]
    %v2512 = vld [vmem:[%s12] sm:$0x1]
    %v2514 = vlaneseq
    %v2515 = vshrl.u32 %v2514, 7
    %v2516 = vsub.s32 0, %v2515
    %v2517 = vrot.slane %v2512, %v2516
    %vm2519 = vcmask 261120
    %v2521 = vsel %vm2519, %v2507, 0
    %2523 = vmatprep.subr.mxu0 0.0
    %2524 = vmatpush1.msra.mxu0 %v2508
    %2525 = vmatprep.subr.mxu0 0.0
    %2526 = vmatpush1.msra.mxu0 %v2509
    %2527 = vmatprep.subr.mxu0 0.0
    %2528 = vmatpush1.msra.mxu0 %v2510
    %2529 = vmatprep.subr.mxu0 0.0
    %2530 = vmatpush1.msra.mxu0 %v2511
    %2531 = vmatprep.subr.mxu0 0.0
    %2532 = vmatpush1.msra.mxu0 0.0
    %2533 = vmatprep.subr.mxu0 0.0
    %2534 = vmatpush1.msra.mxu0 0.0
    %2535 = vmatprep.subr.mxu0 0.0
    %2536 = vmatpush1.msra.mxu0 0.0
    %2537 = vmatprep.subr.mxu0 0.0
    %2538 = vmatpush1.msra.mxu0 0.0
    %2539 = vmatprep.subr.mxu0 0.0
    %2540 = vmatpush1.msra.mxu0 0.0
    %2541 = vmatprep.subr.mxu0 0.0
    %2542 = vmatpush1.msra.mxu0 0.0
    %2543 = vmatprep.subr.mxu0 0.0
    %2544 = vmatpush1.msra.mxu0 0.0
    %2545 = vmatprep.subr.mxu0 0.0
    %2546 = vmatpush1.msra.mxu0 0.0
    %2547 = vmatprep.subr.mxu0 0.0
    %2548 = vmatpush1.msra.mxu0 0.0
    %2549 = vmatprep.subr.mxu0 0.0
    %2550 = vmatpush1.msra.mxu0 0.0
    %2551 = vmatprep.subr.mxu0 0.0
    %2552 = vmatpush1.msra.mxu0 0.0
    %2553 = vmatprep.subr.mxu0 0.0
    %2554 = vmatpush1.msra.mxu0 0.0
    %2555 = vmatprep.subr.mxu0 0.0
    %2556 = vmatpush1.msra.mxu0 0.0
    %2557 = vmatprep.subr.mxu0 0.0
    %2558 = vmatpush1.msra.mxu0 0.0
    %2559 = vmatprep.subr.mxu0 0.0
    %2560 = vmatpush1.msra.mxu0 0.0
    %2561 = vmatprep.subr.mxu0 0.0
    %2562 = vmatpush1.msra.mxu0 0.0
    %2563 = vmatprep.subr.mxu0 0.0
    %2564 = vmatpush1.msra.mxu0 0.0
    %2565 = vmatprep.subr.mxu0 0.0
    %2566 = vmatpush1.msra.mxu0 0.0
    %2567 = vmatprep.subr.mxu0 0.0
    %2568 = vmatpush1.msra.mxu0 0.0
    %2569 = vmatprep.subr.mxu0 0.0
    %2570 = vmatpush1.msra.mxu0 0.0
    %2571 = vmatprep.subr.mxu0 0.0
    %2572 = vmatpush1.msra.mxu0 0.0
    %2573 = vmatprep.subr.mxu0 0.0
    %2574 = vmatpush1.msra.mxu0 0.0
    %2575 = vmatprep.subr.mxu0 0.0
    %2576 = vmatpush1.msra.mxu0 0.0
    %2577 = vmatprep.subr.mxu0 0.0
    %2578 = vmatpush1.msra.mxu0 0.0
    %2579 = vmatprep.subr.mxu0 0.0
    %2580 = vmatpush1.msra.mxu0 0.0
    %2581 = vmatprep.subr.mxu0 0.0
    %2582 = vmatpush1.msra.mxu0 0.0
    %2583 = vmatprep.subr.mxu0 0.0
    %2584 = vmatpush1.msra.mxu0 0.0
    %2585 = vmatprep.subr.mxu0 0.0
    %2586 = vmatpush1.msra.mxu0 0.0
    %2587 = vmatprep.mubr.f32.mxu0 0.0
    %2588 = vmatmul.mubr.f32.gmra.mrb[0].mxu0 %v2521
    %v2589 = vpop.f32.mrb[0].mxu0
    %v2590 = vadd.f32 %v2517, %v2589
    %v2591 = vpop.f32.mrb[0].mxu0
    %2592 = vdwg.mxu0
    %v2594 = vcombine.high %v2590, %v2590
    %v2596 = vunpack.c.l.s4 1983009808
    %v2597 = vunpack.c.0.s8 %v2596
    %v2598 = vlaneseq
    %v2599 = vshrl.u32 %v2598, 7
    %v2600 = vsub.s32 %v2597, %v2599
    %v2601 = vrot.slane %v2590, %v2600
    %v2603 = vunpack.c.l.s4 1983009808
    %v2604 = vunpack.c.0.s8 %v2603
    %v2605 = vlaneseq
    %v2606 = vshrl.u32 %v2605, 7
    %v2607 = vsub.s32 %v2604, %v2606
    %v2608 = vrot.slane %v2594, %v2607
    %v2609 = vcombine.high %v2601, %v2601
    %v2610 = vcombine.high %v2608, %v2608
    %2615 = vst.msk [vmem:[#allocation8] sm:$0xf] %vm2099, 0.0
    %2616 = vst.msk [vmem:[#allocation8 + $0x4] sm:$0xf] %vm2099, 0.0
    %2617 = vst.msk [vmem:[#allocation8 + $0x8] sm:$0xf] %vm2099, 0.0
    %2618 = vst.msk [vmem:[#allocation8 + $0xc] sm:$0xf] %vm2099, 0.0
    %2619 = vst.msk [vmem:[#allocation8 + $0x10] sm:$0xf] %vm2099, 0.0
    %2620 = vst.msk [vmem:[#allocation8 + $0x14] sm:$0xf] %vm2099, 0.0
    %2621 = vst.msk [vmem:[#allocation8 + $0x18] sm:$0xf] %vm2099, 0.0
    %2622 = vst.msk [vmem:[#allocation8 + $0x1c] sm:$0xf] %vm2099, 0.0
    %s2623 = scalar_lea.vmem [#allocation8], 4
    %vm2624 = vcmask 123904
    %2625 = vst.msk [vmem:[%s2623 + $0x1] sm:$0x3] %vm2624, %v2601
    %2626 = vst.msk [vmem:[%s2623 + $0x5] sm:$0x3] %vm2624, %v2609
    %2627 = vst.msk [vmem:[%s2623 + $0x11] sm:$0x3] %vm2624, %v2608
    %2628 = vst.msk [vmem:[%s2623 + $0x15] sm:$0x3] %vm2624, %v2610
    %v2629 = vld [vmem:[#allocation8] sm:$0x3]
    %v2630 = vld [vmem:[#allocation8 + $0x4] sm:$0x3]
    %v2631 = vld [vmem:[#allocation8 + $0x10] sm:$0x3]
    %v2632 = vld [vmem:[#allocation8 + $0x14] sm:$0x3]
    %v2637 = vcombine.low %v2629, %v2630
    %v2638 = vcombine.low %v2631, %v2632
    %v2640 = vunpack.c.l.s4 1983009808
    %v2641 = vunpack.c.0.s8 %v2640
    %v2642 = vlaneseq
    %v2643 = vshrl.u32 %v2642, 7
    %v2644 = vsub.s32 %v2641, %v2643
    %v2645 = vrot.slane %v2637, %v2644
    %v2647 = vunpack.c.l.s4 1983009808
    %v2648 = vunpack.c.0.s8 %v2647
    %v2649 = vlaneseq
    %v2650 = vshrl.u32 %v2649, 7
    %v2651 = vsub.s32 %v2648, %v2650
    %v2652 = vrot.slane %v2638, %v2651
    %v2653 = vcombine.low %v2645, %v2652
    %2655 = vst.msk [vmem:[#allocation9] sm:$0xff] %vm2137, %v2653
    %v2656 = vld [vmem:[#allocation8 + $0x1] sm:$0x3]
    %v2657 = vld [vmem:[#allocation8 + $0x5] sm:$0x3]
    %v2658 = vld [vmem:[#allocation8 + $0x11] sm:$0x3]
    %v2659 = vld [vmem:[#allocation8 + $0x15] sm:$0x3]
    %v2664 = vcombine.low %v2656, %v2657
    %v2665 = vcombine.low %v2658, %v2659
    %v2667 = vunpack.c.l.s4 1983009808
    %v2668 = vunpack.c.0.s8 %v2667
    %v2669 = vlaneseq
    %v2670 = vshrl.u32 %v2669, 7
    %v2671 = vsub.s32 %v2668, %v2670
    %v2672 = vrot.slane %v2664, %v2671
    %v2674 = vunpack.c.l.s4 1983009808
    %v2675 = vunpack.c.0.s8 %v2674
    %v2676 = vlaneseq
    %v2677 = vshrl.u32 %v2676, 7
    %v2678 = vsub.s32 %v2675, %v2677
    %v2679 = vrot.slane %v2665, %v2678
    %v2680 = vcombine.low %v2672, %v2679
    %2681 = vrot.lane.b32.xlu0 %v2680, 16
    %v2682 = vpop.permute.xlu0 %2681
    %2684 = vst.msk [vmem:[#allocation9] sm:$0xff] %vm2171, %v2682
    %v2685 = vld [vmem:[#allocation8 + $0x2] sm:$0x3]
    %v2686 = vld [vmem:[#allocation8 + $0x6] sm:$0x3]
    %v2687 = vld [vmem:[#allocation8 + $0x12] sm:$0x3]
    %v2688 = vld [vmem:[#allocation8 + $0x16] sm:$0x3]
    %v2693 = vcombine.low %v2685, %v2686
    %v2694 = vcombine.low %v2687, %v2688
    %v2696 = vunpack.c.l.s4 1983009808
    %v2697 = vunpack.c.0.s8 %v2696
    %v2698 = vlaneseq
    %v2699 = vshrl.u32 %v2698, 7
    %v2700 = vsub.s32 %v2697, %v2699
    %v2701 = vrot.slane %v2693, %v2700
    %v2703 = vunpack.c.l.s4 1983009808
    %v2704 = vunpack.c.0.s8 %v2703
    %v2705 = vlaneseq
    %v2706 = vshrl.u32 %v2705, 7
    %v2707 = vsub.s32 %v2704, %v2706
    %v2708 = vrot.slane %v2694, %v2707
    %v2709 = vcombine.low %v2701, %v2708
    %2710 = vrot.lane.b32.xlu0 %v2709, 32
    %v2711 = vpop.permute.xlu0 %2710
    %2713 = vst.msk [vmem:[#allocation9] sm:$0xff] %vm2205, %v2711
    %v2714 = vld [vmem:[%s2623] sm:$0x3]
    %v2715 = vld [vmem:[%s2623 + $0x4] sm:$0x3]
    %v2716 = vld [vmem:[%s2623 + $0x10] sm:$0x3]
    %v2717 = vld [vmem:[%s2623 + $0x14] sm:$0x3]
    %v2722 = vcombine.low %v2714, %v2715
    %v2723 = vcombine.low %v2716, %v2717
    %v2725 = vunpack.c.l.s4 1983009808
    %v2726 = vunpack.c.0.s8 %v2725
    %v2727 = vlaneseq
    %v2728 = vshrl.u32 %v2727, 7
    %v2729 = vsub.s32 %v2726, %v2728
    %v2730 = vrot.slane %v2722, %v2729
    %v2732 = vunpack.c.l.s4 1983009808
    %v2733 = vunpack.c.0.s8 %v2732
    %v2734 = vlaneseq
    %v2735 = vshrl.u32 %v2734, 7
    %v2736 = vsub.s32 %v2733, %v2735
    %v2737 = vrot.slane %v2723, %v2736
    %v2738 = vcombine.low %v2730, %v2737
    %2739 = vrot.lane.b32.xlu0 %v2738, 48
    %v2740 = vpop.permute.xlu0 %2739
    %2742 = vst.msk [vmem:[#allocation9] sm:$0xff] %vm2238, %v2740
    %v2743 = vld [vmem:[%s2623 + $0x1] sm:$0x3]
    %v2744 = vld [vmem:[%s2623 + $0x5] sm:$0x3]
    %v2745 = vld [vmem:[%s2623 + $0x11] sm:$0x3]
    %v2746 = vld [vmem:[%s2623 + $0x15] sm:$0x3]
    %v2751 = vcombine.low %v2743, %v2744
    %v2752 = vcombine.low %v2745, %v2746
    %v2754 = vunpack.c.l.s4 1983009808
    %v2755 = vunpack.c.0.s8 %v2754
    %v2756 = vlaneseq
    %v2757 = vshrl.u32 %v2756, 7
    %v2758 = vsub.s32 %v2755, %v2757
    %v2759 = vrot.slane %v2751, %v2758
    %v2761 = vunpack.c.l.s4 1983009808
    %v2762 = vunpack.c.0.s8 %v2761
    %v2763 = vlaneseq
    %v2764 = vshrl.u32 %v2763, 7
    %v2765 = vsub.s32 %v2762, %v2764
    %v2766 = vrot.slane %v2752, %v2765
    %v2767 = vcombine.low %v2759, %v2766
    %2768 = vrot.lane.b32.xlu0 %v2767, 64
    %v2769 = vpop.permute.xlu0 %2768
    %2771 = vst.msk [vmem:[#allocation9] sm:$0xff] %vm2272, %v2769
    %v2772 = vld [vmem:[%s2623 + $0x2] sm:$0x3]
    %v2773 = vld [vmem:[%s2623 + $0x6] sm:$0x3]
    %v2774 = vld [vmem:[%s2623 + $0x12] sm:$0x3]
    %v2775 = vld [vmem:[%s2623 + $0x16] sm:$0x3]
    %v2780 = vcombine.low %v2772, %v2773
    %v2781 = vcombine.low %v2774, %v2775
    %v2783 = vunpack.c.l.s4 1983009808
    %v2784 = vunpack.c.0.s8 %v2783
    %v2785 = vlaneseq
    %v2786 = vshrl.u32 %v2785, 7
    %v2787 = vsub.s32 %v2784, %v2786
    %v2788 = vrot.slane %v2780, %v2787
    %v2790 = vunpack.c.l.s4 1983009808
    %v2791 = vunpack.c.0.s8 %v2790
    %v2792 = vlaneseq
    %v2793 = vshrl.u32 %v2792, 7
    %v2794 = vsub.s32 %v2791, %v2793
    %v2795 = vrot.slane %v2781, %v2794
    %v2796 = vcombine.low %v2788, %v2795
    %2797 = vrot.lane.b32.xlu0 %v2796, 80
    %v2798 = vpop.permute.xlu0 %2797
    %2800 = vst.msk [vmem:[#allocation9] sm:$0xff] %vm2306, %v2798
    %s2801 = scalar_lea.vmem [#allocation8], 8
    %v2802 = vld [vmem:[%s2801] sm:$0x3]
    %v2803 = vld [vmem:[%s2801 + $0x4] sm:$0x3]
    %v2804 = vld [vmem:[%s2801 + $0x10] sm:$0x3]
    %v2805 = vld [vmem:[%s2801 + $0x14] sm:$0x3]
    %v2810 = vcombine.low %v2802, %v2803
    %v2811 = vcombine.low %v2804, %v2805
    %v2813 = vunpack.c.l.s4 1983009808
    %v2814 = vunpack.c.0.s8 %v2813
    %v2815 = vlaneseq
    %v2816 = vshrl.u32 %v2815, 7
    %v2817 = vsub.s32 %v2814, %v2816
    %v2818 = vrot.slane %v2810, %v2817
    %v2820 = vunpack.c.l.s4 1983009808
    %v2821 = vunpack.c.0.s8 %v2820
    %v2822 = vlaneseq
    %v2823 = vshrl.u32 %v2822, 7
    %v2824 = vsub.s32 %v2821, %v2823
    %v2825 = vrot.slane %v2811, %v2824
    %v2826 = vcombine.low %v2818, %v2825
    %2827 = vrot.lane.b32.xlu0 %v2826, 96
    %v2828 = vpop.permute.xlu0 %2827
    %2830 = vst.msk [vmem:[#allocation9] sm:$0xff] %vm2340, %v2828
    %v2831 = vld [vmem:[%s2801 + $0x1] sm:$0x3]
    %v2832 = vld [vmem:[%s2801 + $0x5] sm:$0x3]
    %v2833 = vld [vmem:[%s2801 + $0x11] sm:$0x3]
    %v2834 = vld [vmem:[%s2801 + $0x15] sm:$0x3]
    %v2839 = vcombine.low %v2831, %v2832
    %v2840 = vcombine.low %v2833, %v2834
    %v2842 = vunpack.c.l.s4 1983009808
    %v2843 = vunpack.c.0.s8 %v2842
    %v2844 = vlaneseq
    %v2845 = vshrl.u32 %v2844, 7
    %v2846 = vsub.s32 %v2843, %v2845
    %v2847 = vrot.slane %v2839, %v2846
    %v2849 = vunpack.c.l.s4 1983009808
    %v2850 = vunpack.c.0.s8 %v2849
    %v2851 = vlaneseq
    %v2852 = vshrl.u32 %v2851, 7
    %v2853 = vsub.s32 %v2850, %v2852
    %v2854 = vrot.slane %v2840, %v2853
    %v2855 = vcombine.low %v2847, %v2854
    %2856 = vrot.lane.b32.xlu0 %v2855, 112
    %v2857 = vpop.permute.xlu0 %2856
    %2859 = vst.msk [vmem:[#allocation9] sm:$0xff] %vm2374, %v2857
    %v2860 = vld [vmem:[%s2801 + $0x2] sm:$0x3]
    %v2861 = vld [vmem:[%s2801 + $0x6] sm:$0x3]
    %v2862 = vld [vmem:[%s2801 + $0x12] sm:$0x3]
    %v2863 = vld [vmem:[%s2801 + $0x16] sm:$0x3]
    %v2868 = vcombine.low %v2860, %v2861
    %v2869 = vcombine.low %v2862, %v2863
    %v2871 = vunpack.c.l.s4 1983009808
    %v2872 = vunpack.c.0.s8 %v2871
    %v2873 = vlaneseq
    %v2874 = vshrl.u32 %v2873, 7
    %v2875 = vsub.s32 %v2872, %v2874
    %v2876 = vrot.slane %v2868, %v2875
    %v2878 = vunpack.c.l.s4 1983009808
    %v2879 = vunpack.c.0.s8 %v2878
    %v2880 = vlaneseq
    %v2881 = vshrl.u32 %v2880, 7
    %v2882 = vsub.s32 %v2879, %v2881
    %v2883 = vrot.slane %v2869, %v2882
    %v2884 = vcombine.low %v2876, %v2883
    %2886 = vst.msk [vmem:[#allocation9 + $0x8] sm:$0xff] %vm2137, %v2884
    %v2887 = vld [vmem:[#allocation9] sm:$0xff]
    %v2888 = vld [vmem:[#allocation9 + $0x8] sm:$0xff]
    %v2889 = vld [vmem:[%s17] sm:$0xff]
    %v2890 = vld [vmem:[%s17 + $0x8] sm:$0xff]
    %v2891 = vld [vmem:[%s17 + $0x10] sm:$0xff]
    %v2892 = vld [vmem:[%s17 + $0x18] sm:$0xff]
    %v2893 = vld [vmem:[%s17 + $0x20] sm:$0xff]
    %v2894 = vld [vmem:[%s17 + $0x28] sm:$0xff]
    %v2895 = vld [vmem:[%s17 + $0x30] sm:$0xff]
    %v2896 = vld [vmem:[%s17 + $0x38] sm:$0xff]
    %v2897 = vld [vmem:[%s17 + $0x40] sm:$0xff]
    %v2898 = vld [vmem:[%s17 + $0x48] sm:$0xff]
    %v2899 = vld [vmem:[%s17 + $0x50] sm:$0xff]
    %v2900 = vld [vmem:[%s17 + $0x58] sm:$0xff]
    %v2901 = vld [vmem:[%s17 + $0x60] sm:$0xff]
    %v2902 = vld [vmem:[%s17 + $0x68] sm:$0xff]
    %v2903 = vld [vmem:[%s17 + $0x70] sm:$0xff]
    %v2904 = vld [vmem:[%s17 + $0x78] sm:$0xff]
    %v2905 = vld [vmem:[%s17 + $0x80] sm:$0xff]
    %v2906 = vld [vmem:[%s17 + $0x88] sm:$0xff]
    %v2907 = vld [vmem:[%s18] sm:$0x1]
    %v2909 = vlaneseq
    %v2910 = vshrl.u32 %v2909, 7
    %v2911 = vsub.s32 0, %v2910
    %v2912 = vrot.slane %v2907, %v2911
    %v2915 = vsel %vm2137, %v2888, 0
    %2917 = vmatprep.subr.mxu0 0.0
    %2918 = vmatpush1.msra.mxu0 %v2889
    %2919 = vmatprep.subr.mxu0 0.0
    %2920 = vmatpush1.msra.mxu0 %v2890
    %2921 = vmatprep.subr.mxu0 0.0
    %2922 = vmatpush1.msra.mxu0 %v2891
    %2923 = vmatprep.subr.mxu0 0.0
    %2924 = vmatpush1.msra.mxu0 %v2892
    %2925 = vmatprep.subr.mxu0 0.0
    %2926 = vmatpush1.msra.mxu0 %v2893
    %2927 = vmatprep.subr.mxu0 0.0
    %2928 = vmatpush1.msra.mxu0 %v2894
    %2929 = vmatprep.subr.mxu0 0.0
    %2930 = vmatpush1.msra.mxu0 %v2895
    %2931 = vmatprep.subr.mxu0 0.0
    %2932 = vmatpush1.msra.mxu0 %v2896
    %2933 = vmatprep.subr.mxu0 0.0
    %2934 = vmatpush1.msra.mxu0 %v2897
    %2935 = vmatprep.subr.mxu0 0.0
    %2936 = vmatpush1.msra.mxu0 %v2898
    %2937 = vmatprep.subr.mxu0 0.0
    %2938 = vmatpush1.msra.mxu0 %v2899
    %2939 = vmatprep.subr.mxu0 0.0
    %2940 = vmatpush1.msra.mxu0 %v2900
    %2941 = vmatprep.subr.mxu0 0.0
    %2942 = vmatpush1.msra.mxu0 %v2901
    %2943 = vmatprep.subr.mxu0 0.0
    %2944 = vmatpush1.msra.mxu0 %v2902
    %2945 = vmatprep.subr.mxu0 0.0
    %2946 = vmatpush1.msra.mxu0 %v2903
    %2947 = vmatprep.subr.mxu0 0.0
    %2948 = vmatpush1.msra.mxu0 %v2904
    %2949 = vmatprep.subr.mxu0 0.0
    %2950 = vmatpush1.msra.mxu0 %v2905
    %2951 = vmatprep.subr.mxu0 0.0
    %2952 = vmatpush1.msra.mxu0 %v2906
    %2953 = vmatprep.subr.mxu0 0.0
    %2954 = vmatpush1.msra.mxu0 0.0
    %2955 = vmatprep.subr.mxu0 0.0
    %2956 = vmatpush1.msra.mxu0 0.0
    %2957 = vmatprep.subr.mxu0 0.0
    %2958 = vmatpush1.msra.mxu0 0.0
    %2959 = vmatprep.subr.mxu0 0.0
    %2960 = vmatpush1.msra.mxu0 0.0
    %2961 = vmatprep.subr.mxu0 0.0
    %2962 = vmatpush1.msra.mxu0 0.0
    %2963 = vmatprep.subr.mxu0 0.0
    %2964 = vmatpush1.msra.mxu0 0.0
    %2965 = vmatprep.subr.mxu0 0.0
    %2966 = vmatpush1.msra.mxu0 0.0
    %2967 = vmatprep.subr.mxu0 0.0
    %2968 = vmatpush1.msra.mxu0 0.0
    %2969 = vmatprep.subr.mxu0 0.0
    %2970 = vmatpush1.msra.mxu0 0.0
    %2971 = vmatprep.subr.mxu0 0.0
    %2972 = vmatpush1.msra.mxu0 0.0
    %2973 = vmatprep.subr.mxu0 0.0
    %2974 = vmatpush1.msra.mxu0 0.0
    %2975 = vmatprep.subr.mxu0 0.0
    %2976 = vmatpush1.msra.mxu0 0.0
    %2977 = vmatprep.subr.mxu0 0.0
    %2978 = vmatpush1.msra.mxu0 0.0
    %2979 = vmatprep.subr.mxu0 0.0
    %2980 = vmatpush1.msra.mxu0 0.0
    %2981 = vmatprep.mubr.f32.mxu0 %v2915
    %2982 = vmatmul.mubr.f32.gmra.mrb[0].mxu0 %v2887
    %v2983 = vpop.f32.mrb[0].mxu0
    %v2984 = vadd.f32 %v2912, %v2983
    %v2985 = vpop.f32.mrb[0].mxu0
    %2986 = vdwg.mxu0
    %2987 = vst.msk [vmem:[#allocation16] sm:$0xff] %vm2137, %v2984
    %v2988 = vld [vmem:[%s9] sm:$0xff]
    %v2989 = vld [vmem:[%s9 + $0x8] sm:$0xff]
    %v2990 = vld [vmem:[%s10] sm:$0x1]
    %v2992 = vlaneseq
    %v2993 = vshrl.u32 %v2992, 7
    %v2994 = vsub.s32 0, %v2993
    %v2995 = vrot.slane %v2990, %v2994
    %v2997 = vsel %vm2137, %v2069, 0
    %v2999 = vsel %vm2137, %v2070, 0
    %v3001 = vsel %vm2137, %v2071, 0
    %v3003 = vsel %vm2137, %v2072, 0
    %3005 = vmatprep.subr.mxu0 0.0
    %3006 = vmatpush1.msra.mxu0 %v2988
    %3007 = vmatprep.subr.mxu0 0.0
    %3008 = vmatpush1.msra.mxu0 %v2989
    %3009 = vmatprep.subr.mxu0 0.0
    %3010 = vmatpush1.msra.mxu0 0.0
    %3011 = vmatprep.subr.mxu0 0.0
    %3012 = vmatpush1.msra.mxu0 0.0
    %3013 = vmatprep.subr.mxu0 0.0
    %3014 = vmatpush1.msra.mxu0 0.0
    %3015 = vmatprep.subr.mxu0 0.0
    %3016 = vmatpush1.msra.mxu0 0.0
    %3017 = vmatprep.subr.mxu0 0.0
    %3018 = vmatpush1.msra.mxu0 0.0
    %3019 = vmatprep.subr.mxu0 0.0
    %3020 = vmatpush1.msra.mxu0 0.0
    %3021 = vmatprep.subr.mxu0 0.0
    %3022 = vmatpush1.msra.mxu0 0.0
    %3023 = vmatprep.subr.mxu0 0.0
    %3024 = vmatpush1.msra.mxu0 0.0
    %3025 = vmatprep.subr.mxu0 0.0
    %3026 = vmatpush1.msra.mxu0 0.0
    %3027 = vmatprep.subr.mxu0 0.0
    %3028 = vmatpush1.msra.mxu0 0.0
    %3029 = vmatprep.subr.mxu0 0.0
    %3030 = vmatpush1.msra.mxu0 0.0
    %3031 = vmatprep.subr.mxu0 0.0
    %3032 = vmatpush1.msra.mxu0 0.0
    %3033 = vmatprep.subr.mxu0 0.0
    %3034 = vmatpush1.msra.mxu0 0.0
    %3035 = vmatprep.subr.mxu0 0.0
    %3036 = vmatpush1.msra.mxu0 0.0
    %3037 = vmatprep.subr.mxu0 0.0
    %3038 = vmatpush1.msra.mxu0 0.0
    %3039 = vmatprep.subr.mxu0 0.0
    %3040 = vmatpush1.msra.mxu0 0.0
    %3041 = vmatprep.subr.mxu0 0.0
    %3042 = vmatpush1.msra.mxu0 0.0
    %3043 = vmatprep.subr.mxu0 0.0
    %3044 = vmatpush1.msra.mxu0 0.0
    %3045 = vmatprep.subr.mxu0 0.0
    %3046 = vmatpush1.msra.mxu0 0.0
    %3047 = vmatprep.subr.mxu0 0.0
    %3048 = vmatpush1.msra.mxu0 0.0
    %3049 = vmatprep.subr.mxu0 0.0
    %3050 = vmatpush1.msra.mxu0 0.0
    %3051 = vmatprep.subr.mxu0 0.0
    %3052 = vmatpush1.msra.mxu0 0.0
    %3053 = vmatprep.subr.mxu0 0.0
    %3054 = vmatpush1.msra.mxu0 0.0
    %3055 = vmatprep.subr.mxu0 0.0
    %3056 = vmatpush1.msra.mxu0 0.0
    %3057 = vmatprep.subr.mxu0 0.0
    %3058 = vmatpush1.msra.mxu0 0.0
    %3059 = vmatprep.subr.mxu0 0.0
    %3060 = vmatpush1.msra.mxu0 0.0
    %3061 = vmatprep.subr.mxu0 0.0
    %3062 = vmatpush1.msra.mxu0 0.0
    %3063 = vmatprep.subr.mxu0 0.0
    %3064 = vmatpush1.msra.mxu0 0.0
    %3065 = vmatprep.subr.mxu0 0.0
    %3066 = vmatpush1.msra.mxu0 0.0
    %3067 = vmatprep.subr.mxu0 0.0
    %3068 = vmatpush1.msra.mxu0 0.0
    %3069 = vmatprep.mubr.f32.mxu0 0.0
    %3070 = vmatmul.mubr.f32.gmra.mrb[0].mxu0 %v2997
    %v3071 = vpop.f32.mrb[0].mxu0
    %v3072 = vadd.f32 %v2995, %v3071
    %v3073 = vpop.f32.mrb[0].mxu0
    %3074 = vmatprep.mubr.f32.mxu0 0.0
    %3075 = vmatmul.mubr.f32.gmra.mrb[0].mxu0 %v2999
    %v3076 = vpop.f32.mrb[0].mxu0
    %v3077 = vadd.f32 %v2995, %v3076
    %v3078 = vpop.f32.mrb[0].mxu0
    %3079 = vmatprep.mubr.f32.mxu0 0.0
    %3080 = vmatmul.mubr.f32.gmra.mrb[0].mxu0 %v3001
    %v3081 = vpop.f32.mrb[0].mxu0
    %v3082 = vadd.f32 %v2995, %v3081
    %v3083 = vpop.f32.mrb[0].mxu0
    %3084 = vmatprep.mubr.f32.mxu0 0.0
    %3085 = vmatmul.mubr.f32.gmra.mrb[0].mxu0 %v3003
    %v3086 = vpop.f32.mrb[0].mxu0
    %v3087 = vadd.f32 %v2995, %v3086
    %v3088 = vpop.f32.mrb[0].mxu0
    %3089 = vdwg.mxu0
    %v3094 = vcombine.high %v3072, %v3072
    %v3095 = vcombine.high %v3077, %v3077
    %v3096 = vcombine.high %v3082, %v3082
    %v3097 = vcombine.high %v3087, %v3087
    %vm3102 = vcmask 122880
    %3103 = vst.msk [vmem:[#allocation14] sm:$0x1] %vm3102, %v2601
    %3104 = vst.msk [vmem:[#allocation14 + $0x4] sm:$0x1] %vm3102, %v2601
    %3105 = vst.msk [vmem:[#allocation14 + $0x8] sm:$0x1] %vm3102, %v2609
    %3106 = vst.msk [vmem:[#allocation14 + $0xc] sm:$0x1] %vm3102, %v2609
    %3107 = vst.msk [vmem:[#allocation14 + $0x10] sm:$0x1] %vm3102, %v2608
    %3108 = vst.msk [vmem:[#allocation14 + $0x14] sm:$0x1] %vm3102, %v2608
    %3109 = vst.msk [vmem:[#allocation14 + $0x18] sm:$0x1] %vm3102, %v2610
    %3110 = vst.msk [vmem:[#allocation14 + $0x1c] sm:$0x1] %vm3102, %v2610
    %3111 = vst.msk [vmem:[#allocation14 + $0x1] sm:$0x1] %vm3102, %v2601
    %3112 = vst.msk [vmem:[#allocation14 + $0x5] sm:$0x1] %vm3102, %v2601
    %3113 = vst.msk [vmem:[#allocation14 + $0x9] sm:$0x1] %vm3102, %v2609
    %3114 = vst.msk [vmem:[#allocation14 + $0xd] sm:$0x1] %vm3102, %v2609
    %3115 = vst.msk [vmem:[#allocation14 + $0x11] sm:$0x1] %vm3102, %v2608
    %3116 = vst.msk [vmem:[#allocation14 + $0x15] sm:$0x1] %vm3102, %v2608
    %3117 = vst.msk [vmem:[#allocation14 + $0x19] sm:$0x1] %vm3102, %v2610
    %3118 = vst.msk [vmem:[#allocation14 + $0x1d] sm:$0x1] %vm3102, %v2610
    %vm3119 = vcmask 123905
    %3120 = vst.msk [vmem:[#allocation14 + $0x1] sm:$0x2] %vm3119, %v2601
    %3121 = vst.msk [vmem:[#allocation14 + $0x5] sm:$0x2] %vm3119, %v2601
    %3122 = vst.msk [vmem:[#allocation14 + $0x9] sm:$0x2] %vm3119, %v2609
    %3123 = vst.msk [vmem:[#allocation14 + $0xd] sm:$0x2] %vm3119, %v2609
    %3124 = vst.msk [vmem:[#allocation14 + $0x11] sm:$0x2] %vm3119, %v2608
    %3125 = vst.msk [vmem:[#allocation14 + $0x15] sm:$0x2] %vm3119, %v2608
    %3126 = vst.msk [vmem:[#allocation14 + $0x19] sm:$0x2] %vm3119, %v2610
    %3127 = vst.msk [vmem:[#allocation14 + $0x1d] sm:$0x2] %vm3119, %v2610
    %3128 = vst.msk [vmem:[#allocation14 + $0x2] sm:$0x2] %vm3119, %v2601
    %3129 = vst.msk [vmem:[#allocation14 + $0x6] sm:$0x2] %vm3119, %v2601
    %3130 = vst.msk [vmem:[#allocation14 + $0xa] sm:$0x2] %vm3119, %v2609
    %3131 = vst.msk [vmem:[#allocation14 + $0xe] sm:$0x2] %vm3119, %v2609
    %3132 = vst.msk [vmem:[#allocation14 + $0x12] sm:$0x2] %vm3119, %v2608
    %3133 = vst.msk [vmem:[#allocation14 + $0x16] sm:$0x2] %vm3119, %v2608
    %3134 = vst.msk [vmem:[#allocation14 + $0x1a] sm:$0x2] %vm3119, %v2610
    %3135 = vst.msk [vmem:[#allocation14 + $0x1e] sm:$0x2] %vm3119, %v2610
    %v3136 = vld [vmem:[#allocation14] sm:$0xf]
    %v3137 = vld [vmem:[#allocation14 + $0x4] sm:$0xf]
    %v3138 = vld [vmem:[#allocation14 + $0x8] sm:$0xf]
    %v3139 = vld [vmem:[#allocation14 + $0xc] sm:$0xf]
    %v3140 = vld [vmem:[#allocation14 + $0x10] sm:$0xf]
    %v3141 = vld [vmem:[#allocation14 + $0x14] sm:$0xf]
    %v3142 = vld [vmem:[#allocation14 + $0x18] sm:$0xf]
    %v3143 = vld [vmem:[#allocation14 + $0x1c] sm:$0xf]
    %v3144 = vadd.f32 %v3072, %v3136
    %v3145 = vadd.f32 %v3094, %v3137
    %v3146 = vadd.f32 %v3077, %v3138
    %v3147 = vadd.f32 %v3095, %v3139
    %v3148 = vadd.f32 %v3082, %v3140
    %v3149 = vadd.f32 %v3096, %v3141
    %v3150 = vadd.f32 %v3087, %v3142
    %v3151 = vadd.f32 %v3097, %v3143
    %3152 = vst.msk [vmem:[#allocation10] sm:$0x3f] %vm2085, 0.0
    %3153 = vst.msk [vmem:[#allocation10 + $0x8] sm:$0x3f] %vm2085, 0.0
    %3154 = vst.msk [vmem:[#allocation10 + $0x10] sm:$0x3f] %vm2085, 0.0
    %3155 = vst.msk [vmem:[#allocation10 + $0x18] sm:$0x3f] %vm2085, 0.0
    %3156 = vst.msk [vmem:[#allocation10 + $0x20] sm:$0x3f] %vm2085, 0.0
    %3157 = vst.msk [vmem:[#allocation10 + $0x28] sm:$0x3f] %vm2085, 0.0
    %3158 = vst.msk [vmem:[#allocation10 + $0x30] sm:$0x3f] %vm2085, 0.0
    %3159 = vst.msk [vmem:[#allocation10 + $0x38] sm:$0x3f] %vm2085, 0.0
    %3160 = vst.msk [vmem:[#allocation10 + $0x40] sm:$0x3f] %vm2085, 0.0
    %3161 = vst.msk [vmem:[#allocation10 + $0x48] sm:$0x3f] %vm2085, 0.0
    %3162 = vst.msk [vmem:[#allocation10 + $0x50] sm:$0x3f] %vm2085, 0.0
    %3163 = vst.msk [vmem:[#allocation10 + $0x58] sm:$0x3f] %vm2085, 0.0
    %s3164 = scalar_lea.vmem [#allocation10], 8
    %3165 = vst.msk [vmem:[%s3164 + $0x1] sm:$0xf] %vm2099, %v3144
    %3166 = vst.msk [vmem:[%s3164 + $0x9] sm:$0xf] %vm2099, %v3145
    %3167 = vst.msk [vmem:[%s3164 + $0x11] sm:$0xf] %vm2099, %v3146
    %3168 = vst.msk [vmem:[%s3164 + $0x19] sm:$0xf] %vm2099, %v3147
    %3169 = vst.msk [vmem:[%s3164 + $0x31] sm:$0xf] %vm2099, %v3148
    %3170 = vst.msk [vmem:[%s3164 + $0x39] sm:$0xf] %vm2099, %v3149
    %3171 = vst.msk [vmem:[%s3164 + $0x41] sm:$0xf] %vm2099, %v3150
    %3172 = vst.msk [vmem:[%s3164 + $0x49] sm:$0xf] %vm2099, %v3151
    %v3173 = vld [vmem:[#allocation10] sm:$0xf]
    %v3174 = vld [vmem:[#allocation10 + $0x8] sm:$0xf]
    %v3175 = vld [vmem:[#allocation10 + $0x10] sm:$0xf]
    %v3176 = vld [vmem:[#allocation10 + $0x18] sm:$0xf]
    %v3177 = vld [vmem:[#allocation10 + $0x30] sm:$0xf]
    %v3178 = vld [vmem:[#allocation10 + $0x38] sm:$0xf]
    %v3179 = vld [vmem:[#allocation10 + $0x40] sm:$0xf]
    %v3180 = vld [vmem:[#allocation10 + $0x48] sm:$0xf]
    %v3189 = vcombine.low %v3173, %v3174
    %v3190 = vcombine.low %v3175, %v3176
    %v3191 = vcombine.low %v3177, %v3178
    %v3192 = vcombine.low %v3179, %v3180
    %3197 = vst.msk [vmem:[#allocation11] sm:$0xff] %vm2137, %v3189
    %3198 = vst.msk [vmem:[#allocation11 + $0x10] sm:$0xff] %vm2137, %v3190
    %3199 = vst.msk [vmem:[#allocation11 + $0x20] sm:$0xff] %vm2137, %v3191
    %3200 = vst.msk [vmem:[#allocation11 + $0x30] sm:$0xff] %vm2137, %v3192
    %v3201 = vld [vmem:[#allocation10 + $0x1] sm:$0xf]
    %v3202 = vld [vmem:[#allocation10 + $0x9] sm:$0xf]
    %v3203 = vld [vmem:[#allocation10 + $0x11] sm:$0xf]
    %v3204 = vld [vmem:[#allocation10 + $0x19] sm:$0xf]
    %v3205 = vld [vmem:[#allocation10 + $0x31] sm:$0xf]
    %v3206 = vld [vmem:[#allocation10 + $0x39] sm:$0xf]
    %v3207 = vld [vmem:[#allocation10 + $0x41] sm:$0xf]
    %v3208 = vld [vmem:[#allocation10 + $0x49] sm:$0xf]
    %v3217 = vcombine.low %v3201, %v3202
    %v3218 = vcombine.low %v3203, %v3204
    %v3219 = vcombine.low %v3205, %v3206
    %v3220 = vcombine.low %v3207, %v3208
    %3221 = vrot.lane.b32.xlu0 %v3217, 16
    %v3222 = vpop.permute.xlu0 %3221
    %3223 = vrot.lane.b32.xlu0 %v3218, 16
    %v3224 = vpop.permute.xlu0 %3223
    %3225 = vrot.lane.b32.xlu0 %v3219, 16
    %v3226 = vpop.permute.xlu0 %3225
    %3227 = vrot.lane.b32.xlu0 %v3220, 16
    %v3228 = vpop.permute.xlu0 %3227
    %3233 = vst.msk [vmem:[#allocation11] sm:$0xff] %vm2171, %v3222
    %3234 = vst.msk [vmem:[#allocation11 + $0x10] sm:$0xff] %vm2171, %v3224
    %3235 = vst.msk [vmem:[#allocation11 + $0x20] sm:$0xff] %vm2171, %v3226
    %3236 = vst.msk [vmem:[#allocation11 + $0x30] sm:$0xff] %vm2171, %v3228
    %v3237 = vld [vmem:[#allocation10 + $0x2] sm:$0xf]
    %v3238 = vld [vmem:[#allocation10 + $0xa] sm:$0xf]
    %v3239 = vld [vmem:[#allocation10 + $0x12] sm:$0xf]
    %v3240 = vld [vmem:[#allocation10 + $0x1a] sm:$0xf]
    %v3241 = vld [vmem:[#allocation10 + $0x32] sm:$0xf]
    %v3242 = vld [vmem:[#allocation10 + $0x3a] sm:$0xf]
    %v3243 = vld [vmem:[#allocation10 + $0x42] sm:$0xf]
    %v3244 = vld [vmem:[#allocation10 + $0x4a] sm:$0xf]
    %v3253 = vcombine.low %v3237, %v3238
    %v3254 = vcombine.low %v3239, %v3240
    %v3255 = vcombine.low %v3241, %v3242
    %v3256 = vcombine.low %v3243, %v3244
    %3257 = vrot.lane.b32.xlu0 %v3253, 32
    %v3258 = vpop.permute.xlu0 %3257
    %3259 = vrot.lane.b32.xlu0 %v3254, 32
    %v3260 = vpop.permute.xlu0 %3259
    %3261 = vrot.lane.b32.xlu0 %v3255, 32
    %v3262 = vpop.permute.xlu0 %3261
    %3263 = vrot.lane.b32.xlu0 %v3256, 32
    %v3264 = vpop.permute.xlu0 %3263
    %3269 = vst.msk [vmem:[#allocation11] sm:$0xff] %vm2205, %v3258
    %3270 = vst.msk [vmem:[#allocation11 + $0x10] sm:$0xff] %vm2205, %v3260
    %3271 = vst.msk [vmem:[#allocation11 + $0x20] sm:$0xff] %vm2205, %v3262
    %3272 = vst.msk [vmem:[#allocation11 + $0x30] sm:$0xff] %vm2205, %v3264
    %v3273 = vld [vmem:[%s3164] sm:$0xf]
    %v3274 = vld [vmem:[%s3164 + $0x8] sm:$0xf]
    %v3275 = vld [vmem:[%s3164 + $0x10] sm:$0xf]
    %v3276 = vld [vmem:[%s3164 + $0x18] sm:$0xf]
    %v3277 = vld [vmem:[%s3164 + $0x30] sm:$0xf]
    %v3278 = vld [vmem:[%s3164 + $0x38] sm:$0xf]
    %v3279 = vld [vmem:[%s3164 + $0x40] sm:$0xf]
    %v3280 = vld [vmem:[%s3164 + $0x48] sm:$0xf]
    %v3289 = vcombine.low %v3273, %v3274
    %v3290 = vcombine.low %v3275, %v3276
    %v3291 = vcombine.low %v3277, %v3278
    %v3292 = vcombine.low %v3279, %v3280
    %3293 = vrot.lane.b32.xlu0 %v3289, 48
    %v3294 = vpop.permute.xlu0 %3293
    %3295 = vrot.lane.b32.xlu0 %v3290, 48
    %v3296 = vpop.permute.xlu0 %3295
    %3297 = vrot.lane.b32.xlu0 %v3291, 48
    %v3298 = vpop.permute.xlu0 %3297
    %3299 = vrot.lane.b32.xlu0 %v3292, 48
    %v3300 = vpop.permute.xlu0 %3299
    %3305 = vst.msk [vmem:[#allocation11] sm:$0xff] %vm2238, %v3294
    %3306 = vst.msk [vmem:[#allocation11 + $0x10] sm:$0xff] %vm2238, %v3296
    %3307 = vst.msk [vmem:[#allocation11 + $0x20] sm:$0xff] %vm2238, %v3298
    %3308 = vst.msk [vmem:[#allocation11 + $0x30] sm:$0xff] %vm2238, %v3300
    %v3309 = vld [vmem:[%s3164 + $0x1] sm:$0xf]
    %v3310 = vld [vmem:[%s3164 + $0x9] sm:$0xf]
    %v3311 = vld [vmem:[%s3164 + $0x11] sm:$0xf]
    %v3312 = vld [vmem:[%s3164 + $0x19] sm:$0xf]
    %v3313 = vld [vmem:[%s3164 + $0x31] sm:$0xf]
    %v3314 = vld [vmem:[%s3164 + $0x39] sm:$0xf]
    %v3315 = vld [vmem:[%s3164 + $0x41] sm:$0xf]
    %v3316 = vld [vmem:[%s3164 + $0x49] sm:$0xf]
    %v3325 = vcombine.low %v3309, %v3310
    %v3326 = vcombine.low %v3311, %v3312
    %v3327 = vcombine.low %v3313, %v3314
    %v3328 = vcombine.low %v3315, %v3316
    %3329 = vrot.lane.b32.xlu0 %v3325, 64
    %v3330 = vpop.permute.xlu0 %3329
    %3331 = vrot.lane.b32.xlu0 %v3326, 64
    %v3332 = vpop.permute.xlu0 %3331
    %3333 = vrot.lane.b32.xlu0 %v3327, 64
    %v3334 = vpop.permute.xlu0 %3333
    %3335 = vrot.lane.b32.xlu0 %v3328, 64
    %v3336 = vpop.permute.xlu0 %3335
    %3341 = vst.msk [vmem:[#allocation11] sm:$0xff] %vm2272, %v3330
    %3342 = vst.msk [vmem:[#allocation11 + $0x10] sm:$0xff] %vm2272, %v3332
    %3343 = vst.msk [vmem:[#allocation11 + $0x20] sm:$0xff] %vm2272, %v3334
    %3344 = vst.msk [vmem:[#allocation11 + $0x30] sm:$0xff] %vm2272, %v3336
    %v3345 = vld [vmem:[%s3164 + $0x2] sm:$0xf]
    %v3346 = vld [vmem:[%s3164 + $0xa] sm:$0xf]
    %v3347 = vld [vmem:[%s3164 + $0x12] sm:$0xf]
    %v3348 = vld [vmem:[%s3164 + $0x1a] sm:$0xf]
    %v3349 = vld [vmem:[%s3164 + $0x32] sm:$0xf]
    %v3350 = vld [vmem:[%s3164 + $0x3a] sm:$0xf]
    %v3351 = vld [vmem:[%s3164 + $0x42] sm:$0xf]
    %v3352 = vld [vmem:[%s3164 + $0x4a] sm:$0xf]
    %v3361 = vcombine.low %v3345, %v3346
    %v3362 = vcombine.low %v3347, %v3348
    %v3363 = vcombine.low %v3349, %v3350
    %v3364 = vcombine.low %v3351, %v3352
    %3365 = vrot.lane.b32.xlu0 %v3361, 80
    %v3366 = vpop.permute.xlu0 %3365
    %3367 = vrot.lane.b32.xlu0 %v3362, 80
    %v3368 = vpop.permute.xlu0 %3367
    %3369 = vrot.lane.b32.xlu0 %v3363, 80
    %v3370 = vpop.permute.xlu0 %3369
    %3371 = vrot.lane.b32.xlu0 %v3364, 80
    %v3372 = vpop.permute.xlu0 %3371
    %3377 = vst.msk [vmem:[#allocation11] sm:$0xff] %vm2306, %v3366
    %3378 = vst.msk [vmem:[#allocation11 + $0x10] sm:$0xff] %vm2306, %v3368
    %3379 = vst.msk [vmem:[#allocation11 + $0x20] sm:$0xff] %vm2306, %v3370
    %3380 = vst.msk [vmem:[#allocation11 + $0x30] sm:$0xff] %vm2306, %v3372
    %s3381 = scalar_lea.vmem [#allocation10], 16
    %v3382 = vld [vmem:[%s3381] sm:$0xf]
    %v3383 = vld [vmem:[%s3381 + $0x8] sm:$0xf]
    %v3384 = vld [vmem:[%s3381 + $0x10] sm:$0xf]
    %v3385 = vld [vmem:[%s3381 + $0x18] sm:$0xf]
    %v3386 = vld [vmem:[%s3381 + $0x30] sm:$0xf]
    %v3387 = vld [vmem:[%s3381 + $0x38] sm:$0xf]
    %v3388 = vld [vmem:[%s3381 + $0x40] sm:$0xf]
    %v3389 = vld [vmem:[%s3381 + $0x48] sm:$0xf]
    %v3398 = vcombine.low %v3382, %v3383
    %v3399 = vcombine.low %v3384, %v3385
    %v3400 = vcombine.low %v3386, %v3387
    %v3401 = vcombine.low %v3388, %v3389
    %3402 = vrot.lane.b32.xlu0 %v3398, 96
    %v3403 = vpop.permute.xlu0 %3402
    %3404 = vrot.lane.b32.xlu0 %v3399, 96
    %v3405 = vpop.permute.xlu0 %3404
    %3406 = vrot.lane.b32.xlu0 %v3400, 96
    %v3407 = vpop.permute.xlu0 %3406
    %3408 = vrot.lane.b32.xlu0 %v3401, 96
    %v3409 = vpop.permute.xlu0 %3408
    %3414 = vst.msk [vmem:[#allocation11] sm:$0xff] %vm2340, %v3403
    %3415 = vst.msk [vmem:[#allocation11 + $0x10] sm:$0xff] %vm2340, %v3405
    %3416 = vst.msk [vmem:[#allocation11 + $0x20] sm:$0xff] %vm2340, %v3407
    %3417 = vst.msk [vmem:[#allocation11 + $0x30] sm:$0xff] %vm2340, %v3409
    %v3418 = vld [vmem:[%s3381 + $0x1] sm:$0xf]
    %v3419 = vld [vmem:[%s3381 + $0x9] sm:$0xf]
    %v3420 = vld [vmem:[%s3381 + $0x11] sm:$0xf]
    %v3421 = vld [vmem:[%s3381 + $0x19] sm:$0xf]
    %v3422 = vld [vmem:[%s3381 + $0x31] sm:$0xf]
    %v3423 = vld [vmem:[%s3381 + $0x39] sm:$0xf]
    %v3424 = vld [vmem:[%s3381 + $0x41] sm:$0xf]
    %v3425 = vld [vmem:[%s3381 + $0x49] sm:$0xf]
    %v3434 = vcombine.low %v3418, %v3419
    %v3435 = vcombine.low %v3420, %v3421
    %v3436 = vcombine.low %v3422, %v3423
    %v3437 = vcombine.low %v3424, %v3425
    %3438 = vrot.lane.b32.xlu0 %v3434, 112
    %v3439 = vpop.permute.xlu0 %3438
    %3440 = vrot.lane.b32.xlu0 %v3435, 112
    %v3441 = vpop.permute.xlu0 %3440
    %3442 = vrot.lane.b32.xlu0 %v3436, 112
    %v3443 = vpop.permute.xlu0 %3442
    %3444 = vrot.lane.b32.xlu0 %v3437, 112
    %v3445 = vpop.permute.xlu0 %3444
    %3450 = vst.msk [vmem:[#allocation11] sm:$0xff] %vm2374, %v3439
    %3451 = vst.msk [vmem:[#allocation11 + $0x10] sm:$0xff] %vm2374, %v3441
    %3452 = vst.msk [vmem:[#allocation11 + $0x20] sm:$0xff] %vm2374, %v3443
    %3453 = vst.msk [vmem:[#allocation11 + $0x30] sm:$0xff] %vm2374, %v3445
    %v3454 = vld [vmem:[%s3381 + $0x2] sm:$0xf]
    %v3455 = vld [vmem:[%s3381 + $0xa] sm:$0xf]
    %v3456 = vld [vmem:[%s3381 + $0x12] sm:$0xf]
    %v3457 = vld [vmem:[%s3381 + $0x1a] sm:$0xf]
    %v3458 = vld [vmem:[%s3381 + $0x32] sm:$0xf]
    %v3459 = vld [vmem:[%s3381 + $0x3a] sm:$0xf]
    %v3460 = vld [vmem:[%s3381 + $0x42] sm:$0xf]
    %v3461 = vld [vmem:[%s3381 + $0x4a] sm:$0xf]
    %v3470 = vcombine.low %v3454, %v3455
    %v3471 = vcombine.low %v3456, %v3457
    %v3472 = vcombine.low %v3458, %v3459
    %v3473 = vcombine.low %v3460, %v3461
    %3478 = vst.msk [vmem:[#allocation11 + $0x8] sm:$0xff] %vm2137, %v3470
    %3479 = vst.msk [vmem:[#allocation11 + $0x18] sm:$0xff] %vm2137, %v3471
    %3480 = vst.msk [vmem:[#allocation11 + $0x28] sm:$0xff] %vm2137, %v3472
    %3481 = vst.msk [vmem:[#allocation11 + $0x38] sm:$0xff] %vm2137, %v3473
    %v3482 = vld [vmem:[#allocation11] sm:$0xff]
    %v3483 = vld [vmem:[#allocation11 + $0x8] sm:$0xff]
    %v3484 = vld [vmem:[#allocation11 + $0x10] sm:$0xff]
    %v3485 = vld [vmem:[#allocation11 + $0x18] sm:$0xff]
    %v3486 = vld [vmem:[#allocation11 + $0x20] sm:$0xff]
    %v3487 = vld [vmem:[#allocation11 + $0x28] sm:$0xff]
    %v3488 = vld [vmem:[#allocation11 + $0x30] sm:$0xff]
    %v3489 = vld [vmem:[#allocation11 + $0x38] sm:$0xff]
    %v3490 = vld [vmem:[%s15] sm:$0xff]
    %v3491 = vld [vmem:[%s15 + $0x8] sm:$0xff]
    %v3492 = vld [vmem:[%s15 + $0x10] sm:$0xff]
    %v3493 = vld [vmem:[%s15 + $0x18] sm:$0xff]
    %v3494 = vld [vmem:[%s15 + $0x20] sm:$0xff]
    %v3495 = vld [vmem:[%s15 + $0x28] sm:$0xff]
    %v3496 = vld [vmem:[%s15 + $0x30] sm:$0xff]
    %v3497 = vld [vmem:[%s15 + $0x38] sm:$0xff]
    %v3498 = vld [vmem:[%s15 + $0x40] sm:$0xff]
    %v3499 = vld [vmem:[%s15 + $0x48] sm:$0xff]
    %v3500 = vld [vmem:[%s15 + $0x50] sm:$0xff]
    %v3501 = vld [vmem:[%s15 + $0x58] sm:$0xff]
    %v3502 = vld [vmem:[%s15 + $0x60] sm:$0xff]
    %v3503 = vld [vmem:[%s15 + $0x68] sm:$0xff]
    %v3504 = vld [vmem:[%s15 + $0x70] sm:$0xff]
    %v3505 = vld [vmem:[%s15 + $0x78] sm:$0xff]
    %v3506 = vld [vmem:[%s15 + $0x80] sm:$0xff]
    %v3507 = vld [vmem:[%s15 + $0x88] sm:$0xff]
    %v3508 = vld [vmem:[%s16] sm:$0x1]
    %v3510 = vlaneseq
    %v3511 = vshrl.u32 %v3510, 7
    %v3512 = vsub.s32 0, %v3511
    %v3513 = vrot.slane %v3508, %v3512
    %v3516 = vsel %vm2137, %v3483, 0
    %v3519 = vsel %vm2137, %v3485, 0
    %v3522 = vsel %vm2137, %v3487, 0
    %v3525 = vsel %vm2137, %v3489, 0
    %3527 = vmatprep.subr.mxu0 0.0
    %3528 = vmatpush1.msra.mxu0 %v3490
    %3529 = vmatprep.subr.mxu0 0.0
    %3530 = vmatpush1.msra.mxu0 %v3491
    %3531 = vmatprep.subr.mxu0 0.0
    %3532 = vmatpush1.msra.mxu0 %v3492
    %3533 = vmatprep.subr.mxu0 0.0
    %3534 = vmatpush1.msra.mxu0 %v3493
    %3535 = vmatprep.subr.mxu0 0.0
    %3536 = vmatpush1.msra.mxu0 %v3494
    %3537 = vmatprep.subr.mxu0 0.0
    %3538 = vmatpush1.msra.mxu0 %v3495
    %3539 = vmatprep.subr.mxu0 0.0
    %3540 = vmatpush1.msra.mxu0 %v3496
    %3541 = vmatprep.subr.mxu0 0.0
    %3542 = vmatpush1.msra.mxu0 %v3497
    %3543 = vmatprep.subr.mxu0 0.0
    %3544 = vmatpush1.msra.mxu0 %v3498
    %3545 = vmatprep.subr.mxu0 0.0
    %3546 = vmatpush1.msra.mxu0 %v3499
    %3547 = vmatprep.subr.mxu0 0.0
    %3548 = vmatpush1.msra.mxu0 %v3500
    %3549 = vmatprep.subr.mxu0 0.0
    %3550 = vmatpush1.msra.mxu0 %v3501
    %3551 = vmatprep.subr.mxu0 0.0
    %3552 = vmatpush1.msra.mxu0 %v3502
    %3553 = vmatprep.subr.mxu0 0.0
    %3554 = vmatpush1.msra.mxu0 %v3503
    %3555 = vmatprep.subr.mxu0 0.0
    %3556 = vmatpush1.msra.mxu0 %v3504
    %3557 = vmatprep.subr.mxu0 0.0
    %3558 = vmatpush1.msra.mxu0 %v3505
    %3559 = vmatprep.subr.mxu0 0.0
    %3560 = vmatpush1.msra.mxu0 %v3506
    %3561 = vmatprep.subr.mxu0 0.0
    %3562 = vmatpush1.msra.mxu0 %v3507
    %3563 = vmatprep.subr.mxu0 0.0
    %3564 = vmatpush1.msra.mxu0 0.0
    %3565 = vmatprep.subr.mxu0 0.0
    %3566 = vmatpush1.msra.mxu0 0.0
    %3567 = vmatprep.subr.mxu0 0.0
    %3568 = vmatpush1.msra.mxu0 0.0
    %3569 = vmatprep.subr.mxu0 0.0
    %3570 = vmatpush1.msra.mxu0 0.0
    %3571 = vmatprep.subr.mxu0 0.0
    %3572 = vmatpush1.msra.mxu0 0.0
    %3573 = vmatprep.subr.mxu0 0.0
    %3574 = vmatpush1.msra.mxu0 0.0
    %3575 = vmatprep.subr.mxu0 0.0
    %3576 = vmatpush1.msra.mxu0 0.0
    %3577 = vmatprep.subr.mxu0 0.0
    %3578 = vmatpush1.msra.mxu0 0.0
    %3579 = vmatprep.subr.mxu0 0.0
    %3580 = vmatpush1.msra.mxu0 0.0
    %3581 = vmatprep.subr.mxu0 0.0
    %3582 = vmatpush1.msra.mxu0 0.0
    %3583 = vmatprep.subr.mxu0 0.0
    %3584 = vmatpush1.msra.mxu0 0.0
    %3585 = vmatprep.subr.mxu0 0.0
    %3586 = vmatpush1.msra.mxu0 0.0
    %3587 = vmatprep.subr.mxu0 0.0
    %3588 = vmatpush1.msra.mxu0 0.0
    %3589 = vmatprep.subr.mxu0 0.0
    %3590 = vmatpush1.msra.mxu0 0.0
    %3591 = vmatprep.mubr.f32.mxu0 %v3516
    %3592 = vmatmul.mubr.f32.gmra.mrb[0].mxu0 %v3482
    %v3593 = vpop.f32.mrb[0].mxu0
    %v3594 = vadd.f32 %v3513, %v3593
    %v3595 = vpop.f32.mrb[0].mxu0
    %3596 = vmatprep.mubr.f32.mxu0 %v3519
    %3597 = vmatmul.mubr.f32.gmra.mrb[0].mxu0 %v3484
    %v3598 = vpop.f32.mrb[0].mxu0
    %v3599 = vadd.f32 %v3513, %v3598
    %v3600 = vpop.f32.mrb[0].mxu0
    %3601 = vmatprep.mubr.f32.mxu0 %v3522
    %3602 = vmatmul.mubr.f32.gmra.mrb[0].mxu0 %v3486
    %v3603 = vpop.f32.mrb[0].mxu0
    %v3604 = vadd.f32 %v3513, %v3603
    %v3605 = vpop.f32.mrb[0].mxu0
    %3606 = vmatprep.mubr.f32.mxu0 %v3525
    %3607 = vmatmul.mubr.f32.gmra.mrb[0].mxu0 %v3488
    %v3608 = vpop.f32.mrb[0].mxu0
    %v3609 = vadd.f32 %v3513, %v3608
    %v3610 = vpop.f32.mrb[0].mxu0
    %3611 = vdwg.mxu0
    %3612 = vst.msk [vmem:[#allocation18] sm:$0xff] %vm2137, %v3594
    %3613 = vst.msk [vmem:[#allocation18 + $0x8] sm:$0xff] %vm2137, %v3599
    %3614 = vst.msk [vmem:[#allocation18 + $0x10] sm:$0xff] %vm2137, %v3604
    %3615 = vst.msk [vmem:[#allocation18 + $0x18] sm:$0xff] %vm2137, %v3609
    %v3616 = vld [vmem:[%s7] sm:$0xff]
    %v3617 = vld [vmem:[%s8] sm:$0x1]
    %v3619 = vlaneseq
    %v3620 = vshrl.u32 %v3619, 7
    %v3621 = vsub.s32 0, %v3620
    %v3622 = vrot.slane %v3617, %v3621
    %v3625 = vsel %vm1498, %v1482, 0
    %v3628 = vsel %vm1498, %v1483, 0
    %v3631 = vsel %vm1498, %v1484, 0
    %v3634 = vsel %vm1498, %v1485, 0
    %v3637 = vsel %vm1498, %v1486, 0
    %v3640 = vsel %vm1498, %v1487, 0
    %v3643 = vsel %vm1498, %v1488, 0
    %v3646 = vsel %vm1498, %v1489, 0
    %v3649 = vsel %vm1498, %v1490, 0
    %v3652 = vsel %vm1498, %v1491, 0
    %v3655 = vsel %vm1498, %v1492, 0
    %v3658 = vsel %vm1498, %v1493, 0
    %v3661 = vsel %vm1498, %v1494, 0
    %v3664 = vsel %vm1498, %v1495, 0
    %v3667 = vsel %vm1498, %v1496, 0
    %v3670 = vsel %vm1498, %v1497, 0
    %3672 = vmatprep.subr.mxu0 0.0
    %3673 = vmatpush1.msra.mxu0 %v3616
    %3674 = vmatprep.subr.mxu0 0.0
    %3675 = vmatpush1.msra.mxu0 0.0
    %3676 = vmatprep.subr.mxu0 0.0
    %3677 = vmatpush1.msra.mxu0 0.0
    %3678 = vmatprep.subr.mxu0 0.0
    %3679 = vmatpush1.msra.mxu0 0.0
    %3680 = vmatprep.subr.mxu0 0.0
    %3681 = vmatpush1.msra.mxu0 0.0
    %3682 = vmatprep.subr.mxu0 0.0
    %3683 = vmatpush1.msra.mxu0 0.0
    %3684 = vmatprep.subr.mxu0 0.0
    %3685 = vmatpush1.msra.mxu0 0.0
    %3686 = vmatprep.subr.mxu0 0.0
    %3687 = vmatpush1.msra.mxu0 0.0
    %3688 = vmatprep.subr.mxu0 0.0
    %3689 = vmatpush1.msra.mxu0 0.0
    %3690 = vmatprep.subr.mxu0 0.0
    %3691 = vmatpush1.msra.mxu0 0.0
    %3692 = vmatprep.subr.mxu0 0.0
    %3693 = vmatpush1.msra.mxu0 0.0
    %3694 = vmatprep.subr.mxu0 0.0
    %3695 = vmatpush1.msra.mxu0 0.0
    %3696 = vmatprep.subr.mxu0 0.0
    %3697 = vmatpush1.msra.mxu0 0.0
    %3698 = vmatprep.subr.mxu0 0.0
    %3699 = vmatpush1.msra.mxu0 0.0
    %3700 = vmatprep.subr.mxu0 0.0
    %3701 = vmatpush1.msra.mxu0 0.0
    %3702 = vmatprep.subr.mxu0 0.0
    %3703 = vmatpush1.msra.mxu0 0.0
    %3704 = vmatprep.subr.mxu0 0.0
    %3705 = vmatpush1.msra.mxu0 0.0
    %3706 = vmatprep.subr.mxu0 0.0
    %3707 = vmatpush1.msra.mxu0 0.0
    %3708 = vmatprep.subr.mxu0 0.0
    %3709 = vmatpush1.msra.mxu0 0.0
    %3710 = vmatprep.subr.mxu0 0.0
    %3711 = vmatpush1.msra.mxu0 0.0
    %3712 = vmatprep.subr.mxu0 0.0
    %3713 = vmatpush1.msra.mxu0 0.0
    %3714 = vmatprep.subr.mxu0 0.0
    %3715 = vmatpush1.msra.mxu0 0.0
    %3716 = vmatprep.subr.mxu0 0.0
    %3717 = vmatpush1.msra.mxu0 0.0
    %3718 = vmatprep.subr.mxu0 0.0
    %3719 = vmatpush1.msra.mxu0 0.0
    %3720 = vmatprep.subr.mxu0 0.0
    %3721 = vmatpush1.msra.mxu0 0.0
    %3722 = vmatprep.subr.mxu0 0.0
    %3723 = vmatpush1.msra.mxu0 0.0
    %3724 = vmatprep.subr.mxu0 0.0
    %3725 = vmatpush1.msra.mxu0 0.0
    %3726 = vmatprep.subr.mxu0 0.0
    %3727 = vmatpush1.msra.mxu0 0.0
    %3728 = vmatprep.subr.mxu0 0.0
    %3729 = vmatpush1.msra.mxu0 0.0
    %3730 = vmatprep.subr.mxu0 0.0
    %3731 = vmatpush1.msra.mxu0 0.0
    %3732 = vmatprep.subr.mxu0 0.0
    %3733 = vmatpush1.msra.mxu0 0.0
    %3734 = vmatprep.subr.mxu0 0.0
    %3735 = vmatpush1.msra.mxu0 0.0
    %3736 = vmatprep.mubr.f32.mxu0 0.0
    %3737 = vmatmul.mubr.f32.gmra.mrb[0].mxu0 %v3625
    %v3738 = vpop.f32.mrb[0].mxu0
    %v3739 = vadd.f32 %v3622, %v3738
    %v3740 = vpop.f32.mrb[0].mxu0
    %3741 = vmatprep.mubr.f32.mxu0 0.0
    %3742 = vmatmul.mubr.f32.gmra.mrb[0].mxu0 %v3628
    %v3743 = vpop.f32.mrb[0].mxu0
    %v3744 = vadd.f32 %v3622, %v3743
    %v3745 = vpop.f32.mrb[0].mxu0
    %3746 = vmatprep.mubr.f32.mxu0 0.0
    %3747 = vmatmul.mubr.f32.gmra.mrb[0].mxu0 %v3631
    %v3748 = vpop.f32.mrb[0].mxu0
    %v3749 = vadd.f32 %v3622, %v3748
    %v3750 = vpop.f32.mrb[0].mxu0
    %3751 = vmatprep.mubr.f32.mxu0 0.0
    %3752 = vmatmul.mubr.f32.gmra.mrb[0].mxu0 %v3634
    %v3753 = vpop.f32.mrb[0].mxu0
    %v3754 = vadd.f32 %v3622, %v3753
    %v3755 = vpop.f32.mrb[0].mxu0
    %3756 = vmatprep.mubr.f32.mxu0 0.0
    %3757 = vmatmul.mubr.f32.gmra.mrb[0].mxu0 %v3637
    %v3758 = vpop.f32.mrb[0].mxu0
    %v3759 = vadd.f32 %v3622, %v3758
    %v3760 = vpop.f32.mrb[0].mxu0
    %3761 = vmatprep.mubr.f32.mxu0 0.0
    %3762 = vmatmul.mubr.f32.gmra.mrb[0].mxu0 %v3640
    %v3763 = vpop.f32.mrb[0].mxu0
    %v3764 = vadd.f32 %v3622, %v3763
    %v3765 = vpop.f32.mrb[0].mxu0
    %3766 = vmatprep.mubr.f32.mxu0 0.0
    %3767 = vmatmul.mubr.f32.gmra.mrb[0].mxu0 %v3643
    %v3768 = vpop.f32.mrb[0].mxu0
    %v3769 = vadd.f32 %v3622, %v3768
    %v3770 = vpop.f32.mrb[0].mxu0
    %3771 = vmatprep.mubr.f32.mxu0 0.0
    %3772 = vmatmul.mubr.f32.gmra.mrb[0].mxu0 %v3646
    %v3773 = vpop.f32.mrb[0].mxu0
    %v3774 = vadd.f32 %v3622, %v3773
    %v3775 = vpop.f32.mrb[0].mxu0
    %3776 = vmatprep.mubr.f32.mxu0 0.0
    %3777 = vmatmul.mubr.f32.gmra.mrb[0].mxu0 %v3649
    %v3778 = vpop.f32.mrb[0].mxu0
    %v3779 = vadd.f32 %v3622, %v3778
    %v3780 = vpop.f32.mrb[0].mxu0
    %3781 = vmatprep.mubr.f32.mxu0 0.0
    %3782 = vmatmul.mubr.f32.gmra.mrb[0].mxu0 %v3652
    %v3783 = vpop.f32.mrb[0].mxu0
    %v3784 = vadd.f32 %v3622, %v3783
    %v3785 = vpop.f32.mrb[0].mxu0
    %3786 = vmatprep.mubr.f32.mxu0 0.0
    %3787 = vmatmul.mubr.f32.gmra.mrb[0].mxu0 %v3655
    %v3788 = vpop.f32.mrb[0].mxu0
    %v3789 = vadd.f32 %v3622, %v3788
    %v3790 = vpop.f32.mrb[0].mxu0
    %3791 = vmatprep.mubr.f32.mxu0 0.0
    %3792 = vmatmul.mubr.f32.gmra.mrb[0].mxu0 %v3658
    %v3793 = vpop.f32.mrb[0].mxu0
    %v3794 = vadd.f32 %v3622, %v3793
    %v3795 = vpop.f32.mrb[0].mxu0
    %3796 = vmatprep.mubr.f32.mxu0 0.0
    %3797 = vmatmul.mubr.f32.gmra.mrb[0].mxu0 %v3661
    %v3798 = vpop.f32.mrb[0].mxu0
    %v3799 = vadd.f32 %v3622, %v3798
    %v3800 = vpop.f32.mrb[0].mxu0
    %3801 = vmatprep.mubr.f32.mxu0 0.0
    %3802 = vmatmul.mubr.f32.gmra.mrb[0].mxu0 %v3664
    %v3803 = vpop.f32.mrb[0].mxu0
    %v3804 = vadd.f32 %v3622, %v3803
    %v3805 = vpop.f32.mrb[0].mxu0
    %3806 = vmatprep.mubr.f32.mxu0 0.0
    %3807 = vmatmul.mubr.f32.gmra.mrb[0].mxu0 %v3667
    %v3808 = vpop.f32.mrb[0].mxu0
    %v3809 = vadd.f32 %v3622, %v3808
    %v3810 = vpop.f32.mrb[0].mxu0
    %3811 = vmatprep.mubr.f32.mxu0 0.0
    %3812 = vmatmul.mubr.f32.gmra.mrb[0].mxu0 %v3670
    %v3813 = vpop.f32.mrb[0].mxu0
    %v3814 = vadd.f32 %v3622, %v3813
    %v3815 = vpop.f32.mrb[0].mxu0
    %3816 = vdwg.mxu0
    %3817 = vst.msk [vmem:[#allocation15] sm:$0x1] %vm3102, %v3144
    %3818 = vst.msk [vmem:[#allocation15 + $0x8] sm:$0x1] %vm3102, %v3144
    %3819 = vst.msk [vmem:[#allocation15 + $0x10] sm:$0x1] %vm3102, %v3145
    %3820 = vst.msk [vmem:[#allocation15 + $0x18] sm:$0x1] %vm3102, %v3145
    %3821 = vst.msk [vmem:[#allocation15 + $0x20] sm:$0x1] %vm3102, %v3146
    %3822 = vst.msk [vmem:[#allocation15 + $0x28] sm:$0x1] %vm3102, %v3146
    %3823 = vst.msk [vmem:[#allocation15 + $0x30] sm:$0x1] %vm3102, %v3147
    %3824 = vst.msk [vmem:[#allocation15 + $0x38] sm:$0x1] %vm3102, %v3147
    %3825 = vst.msk [vmem:[#allocation15 + $0x40] sm:$0x1] %vm3102, %v3148
    %3826 = vst.msk [vmem:[#allocation15 + $0x48] sm:$0x1] %vm3102, %v3148
    %3827 = vst.msk [vmem:[#allocation15 + $0x50] sm:$0x1] %vm3102, %v3149
    %3828 = vst.msk [vmem:[#allocation15 + $0x58] sm:$0x1] %vm3102, %v3149
    %3829 = vst.msk [vmem:[#allocation15 + $0x60] sm:$0x1] %vm3102, %v3150
    %3830 = vst.msk [vmem:[#allocation15 + $0x68] sm:$0x1] %vm3102, %v3150
    %3831 = vst.msk [vmem:[#allocation15 + $0x70] sm:$0x1] %vm3102, %v3151
    %3832 = vst.msk [vmem:[#allocation15 + $0x78] sm:$0x1] %vm3102, %v3151
    %3833 = vst.msk [vmem:[#allocation15 + $0x1] sm:$0x1] %vm3102, %v3144
    %3834 = vst.msk [vmem:[#allocation15 + $0x9] sm:$0x1] %vm3102, %v3144
    %3835 = vst.msk [vmem:[#allocation15 + $0x11] sm:$0x1] %vm3102, %v3145
    %3836 = vst.msk [vmem:[#allocation15 + $0x19] sm:$0x1] %vm3102, %v3145
    %3837 = vst.msk [vmem:[#allocation15 + $0x21] sm:$0x1] %vm3102, %v3146
    %3838 = vst.msk [vmem:[#allocation15 + $0x29] sm:$0x1] %vm3102, %v3146
    %3839 = vst.msk [vmem:[#allocation15 + $0x31] sm:$0x1] %vm3102, %v3147
    %3840 = vst.msk [vmem:[#allocation15 + $0x39] sm:$0x1] %vm3102, %v3147
    %3841 = vst.msk [vmem:[#allocation15 + $0x41] sm:$0x1] %vm3102, %v3148
    %3842 = vst.msk [vmem:[#allocation15 + $0x49] sm:$0x1] %vm3102, %v3148
    %3843 = vst.msk [vmem:[#allocation15 + $0x51] sm:$0x1] %vm3102, %v3149
    %3844 = vst.msk [vmem:[#allocation15 + $0x59] sm:$0x1] %vm3102, %v3149
    %3845 = vst.msk [vmem:[#allocation15 + $0x61] sm:$0x1] %vm3102, %v3150
    %3846 = vst.msk [vmem:[#allocation15 + $0x69] sm:$0x1] %vm3102, %v3150
    %3847 = vst.msk [vmem:[#allocation15 + $0x71] sm:$0x1] %vm3102, %v3151
    %3848 = vst.msk [vmem:[#allocation15 + $0x79] sm:$0x1] %vm3102, %v3151
    %3849 = vst.msk [vmem:[#allocation15 + $0x1] sm:$0x2] %vm3119, %v3144
    %3850 = vst.msk [vmem:[#allocation15 + $0x9] sm:$0x2] %vm3119, %v3144
    %3851 = vst.msk [vmem:[#allocation15 + $0x11] sm:$0x2] %vm3119, %v3145
    %3852 = vst.msk [vmem:[#allocation15 + $0x19] sm:$0x2] %vm3119, %v3145
    %3853 = vst.msk [vmem:[#allocation15 + $0x21] sm:$0x2] %vm3119, %v3146
    %3854 = vst.msk [vmem:[#allocation15 + $0x29] sm:$0x2] %vm3119, %v3146
    %3855 = vst.msk [vmem:[#allocation15 + $0x31] sm:$0x2] %vm3119, %v3147
    %3856 = vst.msk [vmem:[#allocation15 + $0x39] sm:$0x2] %vm3119, %v3147
    %3857 = vst.msk [vmem:[#allocation15 + $0x41] sm:$0x2] %vm3119, %v3148
    %3858 = vst.msk [vmem:[#allocation15 + $0x49] sm:$0x2] %vm3119, %v3148
    %3859 = vst.msk [vmem:[#allocation15 + $0x51] sm:$0x2] %vm3119, %v3149
    %3860 = vst.msk [vmem:[#allocation15 + $0x59] sm:$0x2] %vm3119, %v3149
    %3861 = vst.msk [vmem:[#allocation15 + $0x61] sm:$0x2] %vm3119, %v3150
    %3862 = vst.msk [vmem:[#allocation15 + $0x69] sm:$0x2] %vm3119, %v3150
    %3863 = vst.msk [vmem:[#allocation15 + $0x71] sm:$0x2] %vm3119, %v3151
    %3864 = vst.msk [vmem:[#allocation15 + $0x79] sm:$0x2] %vm3119, %v3151
    %3865 = vst.msk [vmem:[#allocation15 + $0x2] sm:$0x2] %vm3119, %v3144
    %3866 = vst.msk [vmem:[#allocation15 + $0xa] sm:$0x2] %vm3119, %v3144
    %3867 = vst.msk [vmem:[#allocation15 + $0x12] sm:$0x2] %vm3119, %v3145
    %3868 = vst.msk [vmem:[#allocation15 + $0x1a] sm:$0x2] %vm3119, %v3145
    %3869 = vst.msk [vmem:[#allocation15 + $0x22] sm:$0x2] %vm3119, %v3146
    %3870 = vst.msk [vmem:[#allocation15 + $0x2a] sm:$0x2] %vm3119, %v3146
    %3871 = vst.msk [vmem:[#allocation15 + $0x32] sm:$0x2] %vm3119, %v3147
    %3872 = vst.msk [vmem:[#allocation15 + $0x3a] sm:$0x2] %vm3119, %v3147
    %3873 = vst.msk [vmem:[#allocation15 + $0x42] sm:$0x2] %vm3119, %v3148
    %3874 = vst.msk [vmem:[#allocation15 + $0x4a] sm:$0x2] %vm3119, %v3148
    %3875 = vst.msk [vmem:[#allocation15 + $0x52] sm:$0x2] %vm3119, %v3149
    %3876 = vst.msk [vmem:[#allocation15 + $0x5a] sm:$0x2] %vm3119, %v3149
    %3877 = vst.msk [vmem:[#allocation15 + $0x62] sm:$0x2] %vm3119, %v3150
    %3878 = vst.msk [vmem:[#allocation15 + $0x6a] sm:$0x2] %vm3119, %v3150
    %3879 = vst.msk [vmem:[#allocation15 + $0x72] sm:$0x2] %vm3119, %v3151
    %3880 = vst.msk [vmem:[#allocation15 + $0x7a] sm:$0x2] %vm3119, %v3151
    %vm3881 = vcmask 124930
    %3882 = vst.msk [vmem:[#allocation15 + $0x2] sm:$0x4] %vm3881, %v3144
    %3883 = vst.msk [vmem:[#allocation15 + $0xa] sm:$0x4] %vm3881, %v3144
    %3884 = vst.msk [vmem:[#allocation15 + $0x12] sm:$0x4] %vm3881, %v3145
    %3885 = vst.msk [vmem:[#allocation15 + $0x1a] sm:$0x4] %vm3881, %v3145
    %3886 = vst.msk [vmem:[#allocation15 + $0x22] sm:$0x4] %vm3881, %v3146
    %3887 = vst.msk [vmem:[#allocation15 + $0x2a] sm:$0x4] %vm3881, %v3146
    %3888 = vst.msk [vmem:[#allocation15 + $0x32] sm:$0x4] %vm3881, %v3147
    %3889 = vst.msk [vmem:[#allocation15 + $0x3a] sm:$0x4] %vm3881, %v3147
    %3890 = vst.msk [vmem:[#allocation15 + $0x42] sm:$0x4] %vm3881, %v3148
    %3891 = vst.msk [vmem:[#allocation15 + $0x4a] sm:$0x4] %vm3881, %v3148
    %3892 = vst.msk [vmem:[#allocation15 + $0x52] sm:$0x4] %vm3881, %v3149
    %3893 = vst.msk [vmem:[#allocation15 + $0x5a] sm:$0x4] %vm3881, %v3149
    %3894 = vst.msk [vmem:[#allocation15 + $0x62] sm:$0x4] %vm3881, %v3150
    %3895 = vst.msk [vmem:[#allocation15 + $0x6a] sm:$0x4] %vm3881, %v3150
    %3896 = vst.msk [vmem:[#allocation15 + $0x72] sm:$0x4] %vm3881, %v3151
    %3897 = vst.msk [vmem:[#allocation15 + $0x7a] sm:$0x4] %vm3881, %v3151
    %3898 = vst.msk [vmem:[#allocation15 + $0x3] sm:$0x4] %vm3881, %v3144
    %3899 = vst.msk [vmem:[#allocation15 + $0xb] sm:$0x4] %vm3881, %v3144
    %3900 = vst.msk [vmem:[#allocation15 + $0x13] sm:$0x4] %vm3881, %v3145
    %3901 = vst.msk [vmem:[#allocation15 + $0x1b] sm:$0x4] %vm3881, %v3145
    %3902 = vst.msk [vmem:[#allocation15 + $0x23] sm:$0x4] %vm3881, %v3146
    %3903 = vst.msk [vmem:[#allocation15 + $0x2b] sm:$0x4] %vm3881, %v3146
    %3904 = vst.msk [vmem:[#allocation15 + $0x33] sm:$0x4] %vm3881, %v3147
    %3905 = vst.msk [vmem:[#allocation15 + $0x3b] sm:$0x4] %vm3881, %v3147
    %3906 = vst.msk [vmem:[#allocation15 + $0x43] sm:$0x4] %vm3881, %v3148
    %3907 = vst.msk [vmem:[#allocation15 + $0x4b] sm:$0x4] %vm3881, %v3148
    %3908 = vst.msk [vmem:[#allocation15 + $0x53] sm:$0x4] %vm3881, %v3149
    %3909 = vst.msk [vmem:[#allocation15 + $0x5b] sm:$0x4] %vm3881, %v3149
    %3910 = vst.msk [vmem:[#allocation15 + $0x63] sm:$0x4] %vm3881, %v3150
    %3911 = vst.msk [vmem:[#allocation15 + $0x6b] sm:$0x4] %vm3881, %v3150
    %3912 = vst.msk [vmem:[#allocation15 + $0x73] sm:$0x4] %vm3881, %v3151
    %3913 = vst.msk [vmem:[#allocation15 + $0x7b] sm:$0x4] %vm3881, %v3151
    %vm3914 = vcmask 125955
    %3915 = vst.msk [vmem:[#allocation15 + $0x3] sm:$0x8] %vm3914, %v3144
    %3916 = vst.msk [vmem:[#allocation15 + $0xb] sm:$0x8] %vm3914, %v3144
    %3917 = vst.msk [vmem:[#allocation15 + $0x13] sm:$0x8] %vm3914, %v3145
    %3918 = vst.msk [vmem:[#allocation15 + $0x1b] sm:$0x8] %vm3914, %v3145
    %3919 = vst.msk [vmem:[#allocation15 + $0x23] sm:$0x8] %vm3914, %v3146
    %3920 = vst.msk [vmem:[#allocation15 + $0x2b] sm:$0x8] %vm3914, %v3146
    %3921 = vst.msk [vmem:[#allocation15 + $0x33] sm:$0x8] %vm3914, %v3147
    %3922 = vst.msk [vmem:[#allocation15 + $0x3b] sm:$0x8] %vm3914, %v3147
    %3923 = vst.msk [vmem:[#allocation15 + $0x43] sm:$0x8] %vm3914, %v3148
    %3924 = vst.msk [vmem:[#allocation15 + $0x4b] sm:$0x8] %vm3914, %v3148
    %3925 = vst.msk [vmem:[#allocation15 + $0x53] sm:$0x8] %vm3914, %v3149
    %3926 = vst.msk [vmem:[#allocation15 + $0x5b] sm:$0x8] %vm3914, %v3149
    %3927 = vst.msk [vmem:[#allocation15 + $0x63] sm:$0x8] %vm3914, %v3150
    %3928 = vst.msk [vmem:[#allocation15 + $0x6b] sm:$0x8] %vm3914, %v3150
    %3929 = vst.msk [vmem:[#allocation15 + $0x73] sm:$0x8] %vm3914, %v3151
    %3930 = vst.msk [vmem:[#allocation15 + $0x7b] sm:$0x8] %vm3914, %v3151
    %3931 = vst.msk [vmem:[#allocation15 + $0x4] sm:$0x8] %vm3914, %v3144
    %3932 = vst.msk [vmem:[#allocation15 + $0xc] sm:$0x8] %vm3914, %v3144
    %3933 = vst.msk [vmem:[#allocation15 + $0x14] sm:$0x8] %vm3914, %v3145
    %3934 = vst.msk [vmem:[#allocation15 + $0x1c] sm:$0x8] %vm3914, %v3145
    %3935 = vst.msk [vmem:[#allocation15 + $0x24] sm:$0x8] %vm3914, %v3146
    %3936 = vst.msk [vmem:[#allocation15 + $0x2c] sm:$0x8] %vm3914, %v3146
    %3937 = vst.msk [vmem:[#allocation15 + $0x34] sm:$0x8] %vm3914, %v3147
    %3938 = vst.msk [vmem:[#allocation15 + $0x3c] sm:$0x8] %vm3914, %v3147
    %3939 = vst.msk [vmem:[#allocation15 + $0x44] sm:$0x8] %vm3914, %v3148
    %3940 = vst.msk [vmem:[#allocation15 + $0x4c] sm:$0x8] %vm3914, %v3148
    %3941 = vst.msk [vmem:[#allocation15 + $0x54] sm:$0x8] %vm3914, %v3149
    %3942 = vst.msk [vmem:[#allocation15 + $0x5c] sm:$0x8] %vm3914, %v3149
    %3943 = vst.msk [vmem:[#allocation15 + $0x64] sm:$0x8] %vm3914, %v3150
    %3944 = vst.msk [vmem:[#allocation15 + $0x6c] sm:$0x8] %vm3914, %v3150
    %3945 = vst.msk [vmem:[#allocation15 + $0x74] sm:$0x8] %vm3914, %v3151
    %3946 = vst.msk [vmem:[#allocation15 + $0x7c] sm:$0x8] %vm3914, %v3151
    %v3947 = vld [vmem:[#allocation15] sm:$0xff]
    %v3948 = vld [vmem:[#allocation15 + $0x8] sm:$0xff]
    %v3949 = vld [vmem:[#allocation15 + $0x10] sm:$0xff]
    %v3950 = vld [vmem:[#allocation15 + $0x18] sm:$0xff]
    %v3951 = vld [vmem:[#allocation15 + $0x20] sm:$0xff]
    %v3952 = vld [vmem:[#allocation15 + $0x28] sm:$0xff]
    %v3953 = vld [vmem:[#allocation15 + $0x30] sm:$0xff]
    %v3954 = vld [vmem:[#allocation15 + $0x38] sm:$0xff]
    %v3955 = vld [vmem:[#allocation15 + $0x40] sm:$0xff]
    %v3956 = vld [vmem:[#allocation15 + $0x48] sm:$0xff]
    %v3957 = vld [vmem:[#allocation15 + $0x50] sm:$0xff]
    %v3958 = vld [vmem:[#allocation15 + $0x58] sm:$0xff]
    %v3959 = vld [vmem:[#allocation15 + $0x60] sm:$0xff]
    %v3960 = vld [vmem:[#allocation15 + $0x68] sm:$0xff]
    %v3961 = vld [vmem:[#allocation15 + $0x70] sm:$0xff]
    %v3962 = vld [vmem:[#allocation15 + $0x78] sm:$0xff]
    %v3963 = vadd.f32 %v3739, %v3947
    %v3964 = vadd.f32 %v3744, %v3948
    %v3965 = vadd.f32 %v3749, %v3949
    %v3966 = vadd.f32 %v3754, %v3950
    %v3967 = vadd.f32 %v3759, %v3951
    %v3968 = vadd.f32 %v3764, %v3952
    %v3969 = vadd.f32 %v3769, %v3953
    %v3970 = vadd.f32 %v3774, %v3954
    %v3971 = vadd.f32 %v3779, %v3955
    %v3972 = vadd.f32 %v3784, %v3956
    %v3973 = vadd.f32 %v3789, %v3957
    %v3974 = vadd.f32 %v3794, %v3958
    %v3975 = vadd.f32 %v3799, %v3959
    %v3976 = vadd.f32 %v3804, %v3960
    %v3977 = vadd.f32 %v3809, %v3961
    %v3978 = vadd.f32 %v3814, %v3962
    %3979 = vst.msk [vmem:[#allocation12] sm:$0xff] %vm2137, 0.0
    %3980 = vst.msk [vmem:[#allocation12 + $0x8] sm:$0x3] %vm2624, 0.0
    %3981 = vst.msk [vmem:[#allocation12 + $0x10] sm:$0xff] %vm2137, 0.0
    %3982 = vst.msk [vmem:[#allocation12 + $0x18] sm:$0x3] %vm2624, 0.0
    %3983 = vst.msk [vmem:[#allocation12 + $0x20] sm:$0xff] %vm2137, 0.0
    %3984 = vst.msk [vmem:[#allocation12 + $0x28] sm:$0x3] %vm2624, 0.0
    %3985 = vst.msk [vmem:[#allocation12 + $0x30] sm:$0xff] %vm2137, 0.0
    %3986 = vst.msk [vmem:[#allocation12 + $0x38] sm:$0x3] %vm2624, 0.0
    %3987 = vst.msk [vmem:[#allocation12 + $0x40] sm:$0xff] %vm2137, 0.0
    %3988 = vst.msk [vmem:[#allocation12 + $0x48] sm:$0x3] %vm2624, 0.0
    %3989 = vst.msk [vmem:[#allocation12 + $0x50] sm:$0xff] %vm2137, 0.0
    %3990 = vst.msk [vmem:[#allocation12 + $0x58] sm:$0x3] %vm2624, 0.0
    %3991 = vst.msk [vmem:[#allocation12 + $0x60] sm:$0xff] %vm2137, 0.0
    %3992 = vst.msk [vmem:[#allocation12 + $0x68] sm:$0x3] %vm2624, 0.0
    %3993 = vst.msk [vmem:[#allocation12 + $0x70] sm:$0xff] %vm2137, 0.0
    %3994 = vst.msk [vmem:[#allocation12 + $0x78] sm:$0x3] %vm2624, 0.0
    %3995 = vst.msk [vmem:[#allocation12 + $0x80] sm:$0xff] %vm2137, 0.0
    %3996 = vst.msk [vmem:[#allocation12 + $0x88] sm:$0x3] %vm2624, 0.0
    %3997 = vst.msk [vmem:[#allocation12 + $0x90] sm:$0xff] %vm2137, 0.0
    %3998 = vst.msk [vmem:[#allocation12 + $0x98] sm:$0x3] %vm2624, 0.0
    %3999 = vst.msk [vmem:[#allocation12 + $0xa0] sm:$0xff] %vm2137, 0.0
    %4000 = vst.msk [vmem:[#allocation12 + $0xa8] sm:$0x3] %vm2624, 0.0
    %4001 = vst.msk [vmem:[#allocation12 + $0xb0] sm:$0xff] %vm2137, 0.0
    %4002 = vst.msk [vmem:[#allocation12 + $0xb8] sm:$0x3] %vm2624, 0.0
    %4003 = vst.msk [vmem:[#allocation12 + $0xc0] sm:$0xff] %vm2137, 0.0
    %4004 = vst.msk [vmem:[#allocation12 + $0xc8] sm:$0x3] %vm2624, 0.0
    %4005 = vst.msk [vmem:[#allocation12 + $0xd0] sm:$0xff] %vm2137, 0.0
    %4006 = vst.msk [vmem:[#allocation12 + $0xd8] sm:$0x3] %vm2624, 0.0
    %4007 = vst.msk [vmem:[#allocation12 + $0xe0] sm:$0xff] %vm2137, 0.0
    %4008 = vst.msk [vmem:[#allocation12 + $0xe8] sm:$0x3] %vm2624, 0.0
    %4009 = vst.msk [vmem:[#allocation12 + $0xf0] sm:$0xff] %vm2137, 0.0
    %4010 = vst.msk [vmem:[#allocation12 + $0xf8] sm:$0x3] %vm2624, 0.0
    %4011 = vst.msk [vmem:[#allocation12 + $0x100] sm:$0xff] %vm2137, 0.0
    %4012 = vst.msk [vmem:[#allocation12 + $0x108] sm:$0x3] %vm2624, 0.0
    %4013 = vst.msk [vmem:[#allocation12 + $0x110] sm:$0xff] %vm2137, 0.0
    %4014 = vst.msk [vmem:[#allocation12 + $0x118] sm:$0x3] %vm2624, 0.0
    %4015 = vst.msk [vmem:[#allocation12 + $0x120] sm:$0xff] %vm2137, 0.0
    %4016 = vst.msk [vmem:[#allocation12 + $0x128] sm:$0x3] %vm2624, 0.0
    %4017 = vst.msk [vmem:[#allocation12 + $0x130] sm:$0xff] %vm2137, 0.0
    %4018 = vst.msk [vmem:[#allocation12 + $0x138] sm:$0x3] %vm2624, 0.0
    %s4019 = scalar_lea.vmem [#allocation12], 16
    %4020 = vst.msk [vmem:[%s4019 + $0x1] sm:$0xff] %vm2137, %v3963
    %4021 = vst.msk [vmem:[%s4019 + $0x11] sm:$0xff] %vm2137, %v3964
    %4022 = vst.msk [vmem:[%s4019 + $0x21] sm:$0xff] %vm2137, %v3965
    %4023 = vst.msk [vmem:[%s4019 + $0x31] sm:$0xff] %vm2137, %v3966
    %4024 = vst.msk [vmem:[%s4019 + $0x41] sm:$0xff] %vm2137, %v3967
    %4025 = vst.msk [vmem:[%s4019 + $0x51] sm:$0xff] %vm2137, %v3968
    %4026 = vst.msk [vmem:[%s4019 + $0x61] sm:$0xff] %vm2137, %v3969
    %4027 = vst.msk [vmem:[%s4019 + $0x71] sm:$0xff] %vm2137, %v3970
    %4028 = vst.msk [vmem:[%s4019 + $0xa1] sm:$0xff] %vm2137, %v3971
    %4029 = vst.msk [vmem:[%s4019 + $0xb1] sm:$0xff] %vm2137, %v3972
    %4030 = vst.msk [vmem:[%s4019 + $0xc1] sm:$0xff] %vm2137, %v3973
    %4031 = vst.msk [vmem:[%s4019 + $0xd1] sm:$0xff] %vm2137, %v3974
    %4032 = vst.msk [vmem:[%s4019 + $0xe1] sm:$0xff] %vm2137, %v3975
    %4033 = vst.msk [vmem:[%s4019 + $0xf1] sm:$0xff] %vm2137, %v3976
    %4034 = vst.msk [vmem:[%s4019 + $0x101] sm:$0xff] %vm2137, %v3977
    %4035 = vst.msk [vmem:[%s4019 + $0x111] sm:$0xff] %vm2137, %v3978
    %v4036 = vld [vmem:[#allocation12] sm:$0xff]
    %v4037 = vld [vmem:[#allocation12 + $0x10] sm:$0xff]
    %v4038 = vld [vmem:[#allocation12 + $0x20] sm:$0xff]
    %v4039 = vld [vmem:[#allocation12 + $0x30] sm:$0xff]
    %v4040 = vld [vmem:[#allocation12 + $0x40] sm:$0xff]
    %v4041 = vld [vmem:[#allocation12 + $0x50] sm:$0xff]
    %v4042 = vld [vmem:[#allocation12 + $0x60] sm:$0xff]
    %v4043 = vld [vmem:[#allocation12 + $0x70] sm:$0xff]
    %v4044 = vld [vmem:[#allocation12 + $0xa0] sm:$0xff]
    %v4045 = vld [vmem:[#allocation12 + $0xb0] sm:$0xff]
    %v4046 = vld [vmem:[#allocation12 + $0xc0] sm:$0xff]
    %v4047 = vld [vmem:[#allocation12 + $0xd0] sm:$0xff]
    %v4048 = vld [vmem:[#allocation12 + $0xe0] sm:$0xff]
    %v4049 = vld [vmem:[#allocation12 + $0xf0] sm:$0xff]
    %v4050 = vld [vmem:[#allocation12 + $0x100] sm:$0xff]
    %v4051 = vld [vmem:[#allocation12 + $0x110] sm:$0xff]
    %4052 = vst.msk [vmem:[#allocation13] sm:$0xff] %vm2137, %v4036
    %4053 = vst.msk [vmem:[#allocation13 + $0x10] sm:$0xff] %vm2137, %v4037
    %4054 = vst.msk [vmem:[#allocation13 + $0x20] sm:$0xff] %vm2137, %v4038
    %4055 = vst.msk [vmem:[#allocation13 + $0x30] sm:$0xff] %vm2137, %v4039
    %4056 = vst.msk [vmem:[#allocation13 + $0x40] sm:$0xff] %vm2137, %v4040
    %4057 = vst.msk [vmem:[#allocation13 + $0x50] sm:$0xff] %vm2137, %v4041
    %4058 = vst.msk [vmem:[#allocation13 + $0x60] sm:$0xff] %vm2137, %v4042
    %4059 = vst.msk [vmem:[#allocation13 + $0x70] sm:$0xff] %vm2137, %v4043
    %4060 = vst.msk [vmem:[#allocation13 + $0x80] sm:$0xff] %vm2137, %v4044
    %4061 = vst.msk [vmem:[#allocation13 + $0x90] sm:$0xff] %vm2137, %v4045
    %4062 = vst.msk [vmem:[#allocation13 + $0xa0] sm:$0xff] %vm2137, %v4046
    %4063 = vst.msk [vmem:[#allocation13 + $0xb0] sm:$0xff] %vm2137, %v4047
    %4064 = vst.msk [vmem:[#allocation13 + $0xc0] sm:$0xff] %vm2137, %v4048
    %4065 = vst.msk [vmem:[#allocation13 + $0xd0] sm:$0xff] %vm2137, %v4049
    %4066 = vst.msk [vmem:[#allocation13 + $0xe0] sm:$0xff] %vm2137, %v4050
    %4067 = vst.msk [vmem:[#allocation13 + $0xf0] sm:$0xff] %vm2137, %v4051
    %v4068 = vld [vmem:[#allocation12 + $0x1] sm:$0xff]
    %v4069 = vld [vmem:[#allocation12 + $0x11] sm:$0xff]
    %v4070 = vld [vmem:[#allocation12 + $0x21] sm:$0xff]
    %v4071 = vld [vmem:[#allocation12 + $0x31] sm:$0xff]
    %v4072 = vld [vmem:[#allocation12 + $0x41] sm:$0xff]
    %v4073 = vld [vmem:[#allocation12 + $0x51] sm:$0xff]
    %v4074 = vld [vmem:[#allocation12 + $0x61] sm:$0xff]
    %v4075 = vld [vmem:[#allocation12 + $0x71] sm:$0xff]
    %v4076 = vld [vmem:[#allocation12 + $0xa1] sm:$0xff]
    %v4077 = vld [vmem:[#allocation12 + $0xb1] sm:$0xff]
    %v4078 = vld [vmem:[#allocation12 + $0xc1] sm:$0xff]
    %v4079 = vld [vmem:[#allocation12 + $0xd1] sm:$0xff]
    %v4080 = vld [vmem:[#allocation12 + $0xe1] sm:$0xff]
    %v4081 = vld [vmem:[#allocation12 + $0xf1] sm:$0xff]
    %v4082 = vld [vmem:[#allocation12 + $0x101] sm:$0xff]
    %v4083 = vld [vmem:[#allocation12 + $0x111] sm:$0xff]
    %4100 = vrot.lane.b32.xlu0 %v4068, 16
    %v4101 = vpop.permute.xlu0 %4100
    %4102 = vrot.lane.b32.xlu0 %v4069, 16
    %v4103 = vpop.permute.xlu0 %4102
    %4104 = vrot.lane.b32.xlu0 %v4070, 16
    %v4105 = vpop.permute.xlu0 %4104
    %4106 = vrot.lane.b32.xlu0 %v4071, 16
    %v4107 = vpop.permute.xlu0 %4106
    %4108 = vrot.lane.b32.xlu0 %v4072, 16
    %v4109 = vpop.permute.xlu0 %4108
    %4110 = vrot.lane.b32.xlu0 %v4073, 16
    %v4111 = vpop.permute.xlu0 %4110
    %4112 = vrot.lane.b32.xlu0 %v4074, 16
    %v4113 = vpop.permute.xlu0 %4112
    %4114 = vrot.lane.b32.xlu0 %v4075, 16
    %v4115 = vpop.permute.xlu0 %4114
    %4116 = vrot.lane.b32.xlu0 %v4076, 16
    %v4117 = vpop.permute.xlu0 %4116
    %4118 = vrot.lane.b32.xlu0 %v4077, 16
    %v4119 = vpop.permute.xlu0 %4118
    %4120 = vrot.lane.b32.xlu0 %v4078, 16
    %v4121 = vpop.permute.xlu0 %4120
    %4122 = vrot.lane.b32.xlu0 %v4079, 16
    %v4123 = vpop.permute.xlu0 %4122
    %4124 = vrot.lane.b32.xlu0 %v4080, 16
    %v4125 = vpop.permute.xlu0 %4124
    %4126 = vrot.lane.b32.xlu0 %v4081, 16
    %v4127 = vpop.permute.xlu0 %4126
    %4128 = vrot.lane.b32.xlu0 %v4082, 16
    %v4129 = vpop.permute.xlu0 %4128
    %4130 = vrot.lane.b32.xlu0 %v4083, 16
    %v4131 = vpop.permute.xlu0 %4130
    %4148 = vst.msk [vmem:[#allocation13] sm:$0xff] %vm2171, %v4101
    %4149 = vst.msk [vmem:[#allocation13 + $0x10] sm:$0xff] %vm2171, %v4103
    %4150 = vst.msk [vmem:[#allocation13 + $0x20] sm:$0xff] %vm2171, %v4105
    %4151 = vst.msk [vmem:[#allocation13 + $0x30] sm:$0xff] %vm2171, %v4107
    %4152 = vst.msk [vmem:[#allocation13 + $0x40] sm:$0xff] %vm2171, %v4109
    %4153 = vst.msk [vmem:[#allocation13 + $0x50] sm:$0xff] %vm2171, %v4111
    %4154 = vst.msk [vmem:[#allocation13 + $0x60] sm:$0xff] %vm2171, %v4113
    %4155 = vst.msk [vmem:[#allocation13 + $0x70] sm:$0xff] %vm2171, %v4115
    %4156 = vst.msk [vmem:[#allocation13 + $0x80] sm:$0xff] %vm2171, %v4117
    %4157 = vst.msk [vmem:[#allocation13 + $0x90] sm:$0xff] %vm2171, %v4119
    %4158 = vst.msk [vmem:[#allocation13 + $0xa0] sm:$0xff] %vm2171, %v4121
    %4159 = vst.msk [vmem:[#allocation13 + $0xb0] sm:$0xff] %vm2171, %v4123
    %4160 = vst.msk [vmem:[#allocation13 + $0xc0] sm:$0xff] %vm2171, %v4125
    %4161 = vst.msk [vmem:[#allocation13 + $0xd0] sm:$0xff] %vm2171, %v4127
    %4162 = vst.msk [vmem:[#allocation13 + $0xe0] sm:$0xff] %vm2171, %v4129
    %4163 = vst.msk [vmem:[#allocation13 + $0xf0] sm:$0xff] %vm2171, %v4131
    %v4164 = vld [vmem:[#allocation12 + $0x2] sm:$0xff]
    %v4165 = vld [vmem:[#allocation12 + $0x12] sm:$0xff]
    %v4166 = vld [vmem:[#allocation12 + $0x22] sm:$0xff]
    %v4167 = vld [vmem:[#allocation12 + $0x32] sm:$0xff]
    %v4168 = vld [vmem:[#allocation12 + $0x42] sm:$0xff]
    %v4169 = vld [vmem:[#allocation12 + $0x52] sm:$0xff]
    %v4170 = vld [vmem:[#allocation12 + $0x62] sm:$0xff]
    %v4171 = vld [vmem:[#allocation12 + $0x72] sm:$0xff]
    %v4172 = vld [vmem:[#allocation12 + $0xa2] sm:$0xff]
    %v4173 = vld [vmem:[#allocation12 + $0xb2] sm:$0xff]
    %v4174 = vld [vmem:[#allocation12 + $0xc2] sm:$0xff]
    %v4175 = vld [vmem:[#allocation12 + $0xd2] sm:$0xff]
    %v4176 = vld [vmem:[#allocation12 + $0xe2] sm:$0xff]
    %v4177 = vld [vmem:[#allocation12 + $0xf2] sm:$0xff]
    %v4178 = vld [vmem:[#allocation12 + $0x102] sm:$0xff]
    %v4179 = vld [vmem:[#allocation12 + $0x112] sm:$0xff]
    %4196 = vrot.lane.b32.xlu0 %v4164, 32
    %v4197 = vpop.permute.xlu0 %4196
    %4198 = vrot.lane.b32.xlu0 %v4165, 32
    %v4199 = vpop.permute.xlu0 %4198
    %4200 = vrot.lane.b32.xlu0 %v4166, 32
    %v4201 = vpop.permute.xlu0 %4200
    %4202 = vrot.lane.b32.xlu0 %v4167, 32
    %v4203 = vpop.permute.xlu0 %4202
    %4204 = vrot.lane.b32.xlu0 %v4168, 32
    %v4205 = vpop.permute.xlu0 %4204
    %4206 = vrot.lane.b32.xlu0 %v4169, 32
    %v4207 = vpop.permute.xlu0 %4206
    %4208 = vrot.lane.b32.xlu0 %v4170, 32
    %v4209 = vpop.permute.xlu0 %4208
    %4210 = vrot.lane.b32.xlu0 %v4171, 32
    %v4211 = vpop.permute.xlu0 %4210
    %4212 = vrot.lane.b32.xlu0 %v4172, 32
    %v4213 = vpop.permute.xlu0 %4212
    %4214 = vrot.lane.b32.xlu0 %v4173, 32
    %v4215 = vpop.permute.xlu0 %4214
    %4216 = vrot.lane.b32.xlu0 %v4174, 32
    %v4217 = vpop.permute.xlu0 %4216
    %4218 = vrot.lane.b32.xlu0 %v4175, 32
    %v4219 = vpop.permute.xlu0 %4218
    %4220 = vrot.lane.b32.xlu0 %v4176, 32
    %v4221 = vpop.permute.xlu0 %4220
    %4222 = vrot.lane.b32.xlu0 %v4177, 32
    %v4223 = vpop.permute.xlu0 %4222
    %4224 = vrot.lane.b32.xlu0 %v4178, 32
    %v4225 = vpop.permute.xlu0 %4224
    %4226 = vrot.lane.b32.xlu0 %v4179, 32
    %v4227 = vpop.permute.xlu0 %4226
    %4244 = vst.msk [vmem:[#allocation13] sm:$0xff] %vm2205, %v4197
    %4245 = vst.msk [vmem:[#allocation13 + $0x10] sm:$0xff] %vm2205, %v4199
    %4246 = vst.msk [vmem:[#allocation13 + $0x20] sm:$0xff] %vm2205, %v4201
    %4247 = vst.msk [vmem:[#allocation13 + $0x30] sm:$0xff] %vm2205, %v4203
    %4248 = vst.msk [vmem:[#allocation13 + $0x40] sm:$0xff] %vm2205, %v4205
    %4249 = vst.msk [vmem:[#allocation13 + $0x50] sm:$0xff] %vm2205, %v4207
    %4250 = vst.msk [vmem:[#allocation13 + $0x60] sm:$0xff] %vm2205, %v4209
    %4251 = vst.msk [vmem:[#allocation13 + $0x70] sm:$0xff] %vm2205, %v4211
    %4252 = vst.msk [vmem:[#allocation13 + $0x80] sm:$0xff] %vm2205, %v4213
    %4253 = vst.msk [vmem:[#allocation13 + $0x90] sm:$0xff] %vm2205, %v4215
    %4254 = vst.msk [vmem:[#allocation13 + $0xa0] sm:$0xff] %vm2205, %v4217
    %4255 = vst.msk [vmem:[#allocation13 + $0xb0] sm:$0xff] %vm2205, %v4219
    %4256 = vst.msk [vmem:[#allocation13 + $0xc0] sm:$0xff] %vm2205, %v4221
    %4257 = vst.msk [vmem:[#allocation13 + $0xd0] sm:$0xff] %vm2205, %v4223
    %4258 = vst.msk [vmem:[#allocation13 + $0xe0] sm:$0xff] %vm2205, %v4225
    %4259 = vst.msk [vmem:[#allocation13 + $0xf0] sm:$0xff] %vm2205, %v4227
    %v4260 = vld [vmem:[%s4019] sm:$0xff]
    %v4261 = vld [vmem:[%s4019 + $0x10] sm:$0xff]
    %v4262 = vld [vmem:[%s4019 + $0x20] sm:$0xff]
    %v4263 = vld [vmem:[%s4019 + $0x30] sm:$0xff]
    %v4264 = vld [vmem:[%s4019 + $0x40] sm:$0xff]
    %v4265 = vld [vmem:[%s4019 + $0x50] sm:$0xff]
    %v4266 = vld [vmem:[%s4019 + $0x60] sm:$0xff]
    %v4267 = vld [vmem:[%s4019 + $0x70] sm:$0xff]
    %v4268 = vld [vmem:[%s4019 + $0xa0] sm:$0xff]
    %v4269 = vld [vmem:[%s4019 + $0xb0] sm:$0xff]
    %v4270 = vld [vmem:[%s4019 + $0xc0] sm:$0xff]
    %v4271 = vld [vmem:[%s4019 + $0xd0] sm:$0xff]
    %v4272 = vld [vmem:[%s4019 + $0xe0] sm:$0xff]
    %v4273 = vld [vmem:[%s4019 + $0xf0] sm:$0xff]
    %v4274 = vld [vmem:[%s4019 + $0x100] sm:$0xff]
    %v4275 = vld [vmem:[%s4019 + $0x110] sm:$0xff]
    %4292 = vrot.lane.b32.xlu0 %v4260, 48
    %v4293 = vpop.permute.xlu0 %4292
    %4294 = vrot.lane.b32.xlu0 %v4261, 48
    %v4295 = vpop.permute.xlu0 %4294
    %4296 = vrot.lane.b32.xlu0 %v4262, 48
    %v4297 = vpop.permute.xlu0 %4296
    %4298 = vrot.lane.b32.xlu0 %v4263, 48
    %v4299 = vpop.permute.xlu0 %4298
    %4300 = vrot.lane.b32.xlu0 %v4264, 48
    %v4301 = vpop.permute.xlu0 %4300
    %4302 = vrot.lane.b32.xlu0 %v4265, 48
    %v4303 = vpop.permute.xlu0 %4302
    %4304 = vrot.lane.b32.xlu0 %v4266, 48
    %v4305 = vpop.permute.xlu0 %4304
    %4306 = vrot.lane.b32.xlu0 %v4267, 48
    %v4307 = vpop.permute.xlu0 %4306
    %4308 = vrot.lane.b32.xlu0 %v4268, 48
    %v4309 = vpop.permute.xlu0 %4308
    %4310 = vrot.lane.b32.xlu0 %v4269, 48
    %v4311 = vpop.permute.xlu0 %4310
    %4312 = vrot.lane.b32.xlu0 %v4270, 48
    %v4313 = vpop.permute.xlu0 %4312
    %4314 = vrot.lane.b32.xlu0 %v4271, 48
    %v4315 = vpop.permute.xlu0 %4314
    %4316 = vrot.lane.b32.xlu0 %v4272, 48
    %v4317 = vpop.permute.xlu0 %4316
    %4318 = vrot.lane.b32.xlu0 %v4273, 48
    %v4319 = vpop.permute.xlu0 %4318
    %4320 = vrot.lane.b32.xlu0 %v4274, 48
    %v4321 = vpop.permute.xlu0 %4320
    %4322 = vrot.lane.b32.xlu0 %v4275, 48
    %v4323 = vpop.permute.xlu0 %4322
    %4340 = vst.msk [vmem:[#allocation13] sm:$0xff] %vm2238, %v4293
    %4341 = vst.msk [vmem:[#allocation13 + $0x10] sm:$0xff] %vm2238, %v4295
    %4342 = vst.msk [vmem:[#allocation13 + $0x20] sm:$0xff] %vm2238, %v4297
    %4343 = vst.msk [vmem:[#allocation13 + $0x30] sm:$0xff] %vm2238, %v4299
    %4344 = vst.msk [vmem:[#allocation13 + $0x40] sm:$0xff] %vm2238, %v4301
    %4345 = vst.msk [vmem:[#allocation13 + $0x50] sm:$0xff] %vm2238, %v4303
    %4346 = vst.msk [vmem:[#allocation13 + $0x60] sm:$0xff] %vm2238, %v4305
    %4347 = vst.msk [vmem:[#allocation13 + $0x70] sm:$0xff] %vm2238, %v4307
    %4348 = vst.msk [vmem:[#allocation13 + $0x80] sm:$0xff] %vm2238, %v4309
    %4349 = vst.msk [vmem:[#allocation13 + $0x90] sm:$0xff] %vm2238, %v4311
    %4350 = vst.msk [vmem:[#allocation13 + $0xa0] sm:$0xff] %vm2238, %v4313
    %4351 = vst.msk [vmem:[#allocation13 + $0xb0] sm:$0xff] %vm2238, %v4315
    %4352 = vst.msk [vmem:[#allocation13 + $0xc0] sm:$0xff] %vm2238, %v4317
    %4353 = vst.msk [vmem:[#allocation13 + $0xd0] sm:$0xff] %vm2238, %v4319
    %4354 = vst.msk [vmem:[#allocation13 + $0xe0] sm:$0xff] %vm2238, %v4321
    %4355 = vst.msk [vmem:[#allocation13 + $0xf0] sm:$0xff] %vm2238, %v4323
    %v4356 = vld [vmem:[%s4019 + $0x1] sm:$0xff]
    %v4357 = vld [vmem:[%s4019 + $0x11] sm:$0xff]
    %v4358 = vld [vmem:[%s4019 + $0x21] sm:$0xff]
    %v4359 = vld [vmem:[%s4019 + $0x31] sm:$0xff]
    %v4360 = vld [vmem:[%s4019 + $0x41] sm:$0xff]
    %v4361 = vld [vmem:[%s4019 + $0x51] sm:$0xff]
    %v4362 = vld [vmem:[%s4019 + $0x61] sm:$0xff]
    %v4363 = vld [vmem:[%s4019 + $0x71] sm:$0xff]
    %v4364 = vld [vmem:[%s4019 + $0xa1] sm:$0xff]
    %v4365 = vld [vmem:[%s4019 + $0xb1] sm:$0xff]
    %v4366 = vld [vmem:[%s4019 + $0xc1] sm:$0xff]
    %v4367 = vld [vmem:[%s4019 + $0xd1] sm:$0xff]
    %v4368 = vld [vmem:[%s4019 + $0xe1] sm:$0xff]
    %v4369 = vld [vmem:[%s4019 + $0xf1] sm:$0xff]
    %v4370 = vld [vmem:[%s4019 + $0x101] sm:$0xff]
    %v4371 = vld [vmem:[%s4019 + $0x111] sm:$0xff]
    %4388 = vrot.lane.b32.xlu0 %v4356, 64
    %v4389 = vpop.permute.xlu0 %4388
    %4390 = vrot.lane.b32.xlu0 %v4357, 64
    %v4391 = vpop.permute.xlu0 %4390
    %4392 = vrot.lane.b32.xlu0 %v4358, 64
    %v4393 = vpop.permute.xlu0 %4392
    %4394 = vrot.lane.b32.xlu0 %v4359, 64
    %v4395 = vpop.permute.xlu0 %4394
    %4396 = vrot.lane.b32.xlu0 %v4360, 64
    %v4397 = vpop.permute.xlu0 %4396
    %4398 = vrot.lane.b32.xlu0 %v4361, 64
    %v4399 = vpop.permute.xlu0 %4398
    %4400 = vrot.lane.b32.xlu0 %v4362, 64
    %v4401 = vpop.permute.xlu0 %4400
    %4402 = vrot.lane.b32.xlu0 %v4363, 64
    %v4403 = vpop.permute.xlu0 %4402
    %4404 = vrot.lane.b32.xlu0 %v4364, 64
    %v4405 = vpop.permute.xlu0 %4404
    %4406 = vrot.lane.b32.xlu0 %v4365, 64
    %v4407 = vpop.permute.xlu0 %4406
    %4408 = vrot.lane.b32.xlu0 %v4366, 64
    %v4409 = vpop.permute.xlu0 %4408
    %4410 = vrot.lane.b32.xlu0 %v4367, 64
    %v4411 = vpop.permute.xlu0 %4410
    %4412 = vrot.lane.b32.xlu0 %v4368, 64
    %v4413 = vpop.permute.xlu0 %4412
    %4414 = vrot.lane.b32.xlu0 %v4369, 64
    %v4415 = vpop.permute.xlu0 %4414
    %4416 = vrot.lane.b32.xlu0 %v4370, 64
    %v4417 = vpop.permute.xlu0 %4416
    %4418 = vrot.lane.b32.xlu0 %v4371, 64
    %v4419 = vpop.permute.xlu0 %4418
    %4436 = vst.msk [vmem:[#allocation13] sm:$0xff] %vm2272, %v4389
    %4437 = vst.msk [vmem:[#allocation13 + $0x10] sm:$0xff] %vm2272, %v4391
    %4438 = vst.msk [vmem:[#allocation13 + $0x20] sm:$0xff] %vm2272, %v4393
    %4439 = vst.msk [vmem:[#allocation13 + $0x30] sm:$0xff] %vm2272, %v4395
    %4440 = vst.msk [vmem:[#allocation13 + $0x40] sm:$0xff] %vm2272, %v4397
    %4441 = vst.msk [vmem:[#allocation13 + $0x50] sm:$0xff] %vm2272, %v4399
    %4442 = vst.msk [vmem:[#allocation13 + $0x60] sm:$0xff] %vm2272, %v4401
    %4443 = vst.msk [vmem:[#allocation13 + $0x70] sm:$0xff] %vm2272, %v4403
    %4444 = vst.msk [vmem:[#allocation13 + $0x80] sm:$0xff] %vm2272, %v4405
    %4445 = vst.msk [vmem:[#allocation13 + $0x90] sm:$0xff] %vm2272, %v4407
    %4446 = vst.msk [vmem:[#allocation13 + $0xa0] sm:$0xff] %vm2272, %v4409
    %4447 = vst.msk [vmem:[#allocation13 + $0xb0] sm:$0xff] %vm2272, %v4411
    %4448 = vst.msk [vmem:[#allocation13 + $0xc0] sm:$0xff] %vm2272, %v4413
    %4449 = vst.msk [vmem:[#allocation13 + $0xd0] sm:$0xff] %vm2272, %v4415
    %4450 = vst.msk [vmem:[#allocation13 + $0xe0] sm:$0xff] %vm2272, %v4417
    %4451 = vst.msk [vmem:[#allocation13 + $0xf0] sm:$0xff] %vm2272, %v4419
    %v4452 = vld [vmem:[%s4019 + $0x2] sm:$0xff]
    %v4453 = vld [vmem:[%s4019 + $0x12] sm:$0xff]
    %v4454 = vld [vmem:[%s4019 + $0x22] sm:$0xff]
    %v4455 = vld [vmem:[%s4019 + $0x32] sm:$0xff]
    %v4456 = vld [vmem:[%s4019 + $0x42] sm:$0xff]
    %v4457 = vld [vmem:[%s4019 + $0x52] sm:$0xff]
    %v4458 = vld [vmem:[%s4019 + $0x62] sm:$0xff]
    %v4459 = vld [vmem:[%s4019 + $0x72] sm:$0xff]
    %v4460 = vld [vmem:[%s4019 + $0xa2] sm:$0xff]
    %v4461 = vld [vmem:[%s4019 + $0xb2] sm:$0xff]
    %v4462 = vld [vmem:[%s4019 + $0xc2] sm:$0xff]
    %v4463 = vld [vmem:[%s4019 + $0xd2] sm:$0xff]
    %v4464 = vld [vmem:[%s4019 + $0xe2] sm:$0xff]
    %v4465 = vld [vmem:[%s4019 + $0xf2] sm:$0xff]
    %v4466 = vld [vmem:[%s4019 + $0x102] sm:$0xff]
    %v4467 = vld [vmem:[%s4019 + $0x112] sm:$0xff]
    %4484 = vrot.lane.b32.xlu0 %v4452, 80
    %v4485 = vpop.permute.xlu0 %4484
    %4486 = vrot.lane.b32.xlu0 %v4453, 80
    %v4487 = vpop.permute.xlu0 %4486
    %4488 = vrot.lane.b32.xlu0 %v4454, 80
    %v4489 = vpop.permute.xlu0 %4488
    %4490 = vrot.lane.b32.xlu0 %v4455, 80
    %v4491 = vpop.permute.xlu0 %4490
    %4492 = vrot.lane.b32.xlu0 %v4456, 80
    %v4493 = vpop.permute.xlu0 %4492
    %4494 = vrot.lane.b32.xlu0 %v4457, 80
    %v4495 = vpop.permute.xlu0 %4494
    %4496 = vrot.lane.b32.xlu0 %v4458, 80
    %v4497 = vpop.permute.xlu0 %4496
    %4498 = vrot.lane.b32.xlu0 %v4459, 80
    %v4499 = vpop.permute.xlu0 %4498
    %4500 = vrot.lane.b32.xlu0 %v4460, 80
    %v4501 = vpop.permute.xlu0 %4500
    %4502 = vrot.lane.b32.xlu0 %v4461, 80
    %v4503 = vpop.permute.xlu0 %4502
    %4504 = vrot.lane.b32.xlu0 %v4462, 80
    %v4505 = vpop.permute.xlu0 %4504
    %4506 = vrot.lane.b32.xlu0 %v4463, 80
    %v4507 = vpop.permute.xlu0 %4506
    %4508 = vrot.lane.b32.xlu0 %v4464, 80
    %v4509 = vpop.permute.xlu0 %4508
    %4510 = vrot.lane.b32.xlu0 %v4465, 80
    %v4511 = vpop.permute.xlu0 %4510
    %4512 = vrot.lane.b32.xlu0 %v4466, 80
    %v4513 = vpop.permute.xlu0 %4512
    %4514 = vrot.lane.b32.xlu0 %v4467, 80
    %v4515 = vpop.permute.xlu0 %4514
    %4532 = vst.msk [vmem:[#allocation13] sm:$0xff] %vm2306, %v4485
    %4533 = vst.msk [vmem:[#allocation13 + $0x10] sm:$0xff] %vm2306, %v4487
    %4534 = vst.msk [vmem:[#allocation13 + $0x20] sm:$0xff] %vm2306, %v4489
    %4535 = vst.msk [vmem:[#allocation13 + $0x30] sm:$0xff] %vm2306, %v4491
    %4536 = vst.msk [vmem:[#allocation13 + $0x40] sm:$0xff] %vm2306, %v4493
    %4537 = vst.msk [vmem:[#allocation13 + $0x50] sm:$0xff] %vm2306, %v4495
    %4538 = vst.msk [vmem:[#allocation13 + $0x60] sm:$0xff] %vm2306, %v4497
    %4539 = vst.msk [vmem:[#allocation13 + $0x70] sm:$0xff] %vm2306, %v4499
    %4540 = vst.msk [vmem:[#allocation13 + $0x80] sm:$0xff] %vm2306, %v4501
    %4541 = vst.msk [vmem:[#allocation13 + $0x90] sm:$0xff] %vm2306, %v4503
    %4542 = vst.msk [vmem:[#allocation13 + $0xa0] sm:$0xff] %vm2306, %v4505
    %4543 = vst.msk [vmem:[#allocation13 + $0xb0] sm:$0xff] %vm2306, %v4507
    %4544 = vst.msk [vmem:[#allocation13 + $0xc0] sm:$0xff] %vm2306, %v4509
    %4545 = vst.msk [vmem:[#allocation13 + $0xd0] sm:$0xff] %vm2306, %v4511
    %4546 = vst.msk [vmem:[#allocation13 + $0xe0] sm:$0xff] %vm2306, %v4513
    %4547 = vst.msk [vmem:[#allocation13 + $0xf0] sm:$0xff] %vm2306, %v4515
    %s4548 = scalar_lea.vmem [#allocation12], 32
    %v4549 = vld [vmem:[%s4548] sm:$0xff]
    %v4550 = vld [vmem:[%s4548 + $0x10] sm:$0xff]
    %v4551 = vld [vmem:[%s4548 + $0x20] sm:$0xff]
    %v4552 = vld [vmem:[%s4548 + $0x30] sm:$0xff]
    %v4553 = vld [vmem:[%s4548 + $0x40] sm:$0xff]
    %v4554 = vld [vmem:[%s4548 + $0x50] sm:$0xff]
    %v4555 = vld [vmem:[%s4548 + $0x60] sm:$0xff]
    %v4556 = vld [vmem:[%s4548 + $0x70] sm:$0xff]
    %v4557 = vld [vmem:[%s4548 + $0xa0] sm:$0xff]
    %v4558 = vld [vmem:[%s4548 + $0xb0] sm:$0xff]
    %v4559 = vld [vmem:[%s4548 + $0xc0] sm:$0xff]
    %v4560 = vld [vmem:[%s4548 + $0xd0] sm:$0xff]
    %v4561 = vld [vmem:[%s4548 + $0xe0] sm:$0xff]
    %v4562 = vld [vmem:[%s4548 + $0xf0] sm:$0xff]
    %v4563 = vld [vmem:[%s4548 + $0x100] sm:$0xff]
    %v4564 = vld [vmem:[%s4548 + $0x110] sm:$0xff]
    %4581 = vrot.lane.b32.xlu0 %v4549, 96
    %v4582 = vpop.permute.xlu0 %4581
    %4583 = vrot.lane.b32.xlu0 %v4550, 96
    %v4584 = vpop.permute.xlu0 %4583
    %4585 = vrot.lane.b32.xlu0 %v4551, 96
    %v4586 = vpop.permute.xlu0 %4585
    %4587 = vrot.lane.b32.xlu0 %v4552, 96
    %v4588 = vpop.permute.xlu0 %4587
    %4589 = vrot.lane.b32.xlu0 %v4553, 96
    %v4590 = vpop.permute.xlu0 %4589
    %4591 = vrot.lane.b32.xlu0 %v4554, 96
    %v4592 = vpop.permute.xlu0 %4591
    %4593 = vrot.lane.b32.xlu0 %v4555, 96
    %v4594 = vpop.permute.xlu0 %4593
    %4595 = vrot.lane.b32.xlu0 %v4556, 96
    %v4596 = vpop.permute.xlu0 %4595
    %4597 = vrot.lane.b32.xlu0 %v4557, 96
    %v4598 = vpop.permute.xlu0 %4597
    %4599 = vrot.lane.b32.xlu0 %v4558, 96
    %v4600 = vpop.permute.xlu0 %4599
    %4601 = vrot.lane.b32.xlu0 %v4559, 96
    %v4602 = vpop.permute.xlu0 %4601
    %4603 = vrot.lane.b32.xlu0 %v4560, 96
    %v4604 = vpop.permute.xlu0 %4603
    %4605 = vrot.lane.b32.xlu0 %v4561, 96
    %v4606 = vpop.permute.xlu0 %4605
    %4607 = vrot.lane.b32.xlu0 %v4562, 96
    %v4608 = vpop.permute.xlu0 %4607
    %4609 = vrot.lane.b32.xlu0 %v4563, 96
    %v4610 = vpop.permute.xlu0 %4609
    %4611 = vrot.lane.b32.xlu0 %v4564, 96
    %v4612 = vpop.permute.xlu0 %4611
    %4629 = vst.msk [vmem:[#allocation13] sm:$0xff] %vm2340, %v4582
    %4630 = vst.msk [vmem:[#allocation13 + $0x10] sm:$0xff] %vm2340, %v4584
    %4631 = vst.msk [vmem:[#allocation13 + $0x20] sm:$0xff] %vm2340, %v4586
    %4632 = vst.msk [vmem:[#allocation13 + $0x30] sm:$0xff] %vm2340, %v4588
    %4633 = vst.msk [vmem:[#allocation13 + $0x40] sm:$0xff] %vm2340, %v4590
    %4634 = vst.msk [vmem:[#allocation13 + $0x50] sm:$0xff] %vm2340, %v4592
    %4635 = vst.msk [vmem:[#allocation13 + $0x60] sm:$0xff] %vm2340, %v4594
    %4636 = vst.msk [vmem:[#allocation13 + $0x70] sm:$0xff] %vm2340, %v4596
    %4637 = vst.msk [vmem:[#allocation13 + $0x80] sm:$0xff] %vm2340, %v4598
    %4638 = vst.msk [vmem:[#allocation13 + $0x90] sm:$0xff] %vm2340, %v4600
    %4639 = vst.msk [vmem:[#allocation13 + $0xa0] sm:$0xff] %vm2340, %v4602
    %4640 = vst.msk [vmem:[#allocation13 + $0xb0] sm:$0xff] %vm2340, %v4604
    %4641 = vst.msk [vmem:[#allocation13 + $0xc0] sm:$0xff] %vm2340, %v4606
    %4642 = vst.msk [vmem:[#allocation13 + $0xd0] sm:$0xff] %vm2340, %v4608
    %4643 = vst.msk [vmem:[#allocation13 + $0xe0] sm:$0xff] %vm2340, %v4610
    %4644 = vst.msk [vmem:[#allocation13 + $0xf0] sm:$0xff] %vm2340, %v4612
    %v4645 = vld [vmem:[%s4548 + $0x1] sm:$0xff]
    %v4646 = vld [vmem:[%s4548 + $0x11] sm:$0xff]
    %v4647 = vld [vmem:[%s4548 + $0x21] sm:$0xff]
    %v4648 = vld [vmem:[%s4548 + $0x31] sm:$0xff]
    %v4649 = vld [vmem:[%s4548 + $0x41] sm:$0xff]
    %v4650 = vld [vmem:[%s4548 + $0x51] sm:$0xff]
    %v4651 = vld [vmem:[%s4548 + $0x61] sm:$0xff]
    %v4652 = vld [vmem:[%s4548 + $0x71] sm:$0xff]
    %v4653 = vld [vmem:[%s4548 + $0xa1] sm:$0xff]
    %v4654 = vld [vmem:[%s4548 + $0xb1] sm:$0xff]
    %v4655 = vld [vmem:[%s4548 + $0xc1] sm:$0xff]
    %v4656 = vld [vmem:[%s4548 + $0xd1] sm:$0xff]
    %v4657 = vld [vmem:[%s4548 + $0xe1] sm:$0xff]
    %v4658 = vld [vmem:[%s4548 + $0xf1] sm:$0xff]
    %v4659 = vld [vmem:[%s4548 + $0x101] sm:$0xff]
    %v4660 = vld [vmem:[%s4548 + $0x111] sm:$0xff]
    %4677 = vrot.lane.b32.xlu0 %v4645, 112
    %v4678 = vpop.permute.xlu0 %4677
    %4679 = vrot.lane.b32.xlu0 %v4646, 112
    %v4680 = vpop.permute.xlu0 %4679
    %4681 = vrot.lane.b32.xlu0 %v4647, 112
    %v4682 = vpop.permute.xlu0 %4681
    %4683 = vrot.lane.b32.xlu0 %v4648, 112
    %v4684 = vpop.permute.xlu0 %4683
    %4685 = vrot.lane.b32.xlu0 %v4649, 112
    %v4686 = vpop.permute.xlu0 %4685
    %4687 = vrot.lane.b32.xlu0 %v4650, 112
    %v4688 = vpop.permute.xlu0 %4687
    %4689 = vrot.lane.b32.xlu0 %v4651, 112
    %v4690 = vpop.permute.xlu0 %4689
    %4691 = vrot.lane.b32.xlu0 %v4652, 112
    %v4692 = vpop.permute.xlu0 %4691
    %4693 = vrot.lane.b32.xlu0 %v4653, 112
    %v4694 = vpop.permute.xlu0 %4693
    %4695 = vrot.lane.b32.xlu0 %v4654, 112
    %v4696 = vpop.permute.xlu0 %4695
    %4697 = vrot.lane.b32.xlu0 %v4655, 112
    %v4698 = vpop.permute.xlu0 %4697
    %4699 = vrot.lane.b32.xlu0 %v4656, 112
    %v4700 = vpop.permute.xlu0 %4699
    %4701 = vrot.lane.b32.xlu0 %v4657, 112
    %v4702 = vpop.permute.xlu0 %4701
    %4703 = vrot.lane.b32.xlu0 %v4658, 112
    %v4704 = vpop.permute.xlu0 %4703
    %4705 = vrot.lane.b32.xlu0 %v4659, 112
    %v4706 = vpop.permute.xlu0 %4705
    %4707 = vrot.lane.b32.xlu0 %v4660, 112
    %v4708 = vpop.permute.xlu0 %4707
    %4725 = vst.msk [vmem:[#allocation13] sm:$0xff] %vm2374, %v4678
    %4726 = vst.msk [vmem:[#allocation13 + $0x10] sm:$0xff] %vm2374, %v4680
    %4727 = vst.msk [vmem:[#allocation13 + $0x20] sm:$0xff] %vm2374, %v4682
    %4728 = vst.msk [vmem:[#allocation13 + $0x30] sm:$0xff] %vm2374, %v4684
    %4729 = vst.msk [vmem:[#allocation13 + $0x40] sm:$0xff] %vm2374, %v4686
    %4730 = vst.msk [vmem:[#allocation13 + $0x50] sm:$0xff] %vm2374, %v4688
    %4731 = vst.msk [vmem:[#allocation13 + $0x60] sm:$0xff] %vm2374, %v4690
    %4732 = vst.msk [vmem:[#allocation13 + $0x70] sm:$0xff] %vm2374, %v4692
    %4733 = vst.msk [vmem:[#allocation13 + $0x80] sm:$0xff] %vm2374, %v4694
    %4734 = vst.msk [vmem:[#allocation13 + $0x90] sm:$0xff] %vm2374, %v4696
    %4735 = vst.msk [vmem:[#allocation13 + $0xa0] sm:$0xff] %vm2374, %v4698
    %4736 = vst.msk [vmem:[#allocation13 + $0xb0] sm:$0xff] %vm2374, %v4700
    %4737 = vst.msk [vmem:[#allocation13 + $0xc0] sm:$0xff] %vm2374, %v4702
    %4738 = vst.msk [vmem:[#allocation13 + $0xd0] sm:$0xff] %vm2374, %v4704
    %4739 = vst.msk [vmem:[#allocation13 + $0xe0] sm:$0xff] %vm2374, %v4706
    %4740 = vst.msk [vmem:[#allocation13 + $0xf0] sm:$0xff] %vm2374, %v4708
    %v4741 = vld [vmem:[%s4548 + $0x2] sm:$0xff]
    %v4742 = vld [vmem:[%s4548 + $0x12] sm:$0xff]
    %v4743 = vld [vmem:[%s4548 + $0x22] sm:$0xff]
    %v4744 = vld [vmem:[%s4548 + $0x32] sm:$0xff]
    %v4745 = vld [vmem:[%s4548 + $0x42] sm:$0xff]
    %v4746 = vld [vmem:[%s4548 + $0x52] sm:$0xff]
    %v4747 = vld [vmem:[%s4548 + $0x62] sm:$0xff]
    %v4748 = vld [vmem:[%s4548 + $0x72] sm:$0xff]
    %v4749 = vld [vmem:[%s4548 + $0xa2] sm:$0xff]
    %v4750 = vld [vmem:[%s4548 + $0xb2] sm:$0xff]
    %v4751 = vld [vmem:[%s4548 + $0xc2] sm:$0xff]
    %v4752 = vld [vmem:[%s4548 + $0xd2] sm:$0xff]
    %v4753 = vld [vmem:[%s4548 + $0xe2] sm:$0xff]
    %v4754 = vld [vmem:[%s4548 + $0xf2] sm:$0xff]
    %v4755 = vld [vmem:[%s4548 + $0x102] sm:$0xff]
    %v4756 = vld [vmem:[%s4548 + $0x112] sm:$0xff]
    %4757 = vst.msk [vmem:[#allocation13 + $0x8] sm:$0xff] %vm2137, %v4741
    %4758 = vst.msk [vmem:[#allocation13 + $0x18] sm:$0xff] %vm2137, %v4742
    %4759 = vst.msk [vmem:[#allocation13 + $0x28] sm:$0xff] %vm2137, %v4743
    %4760 = vst.msk [vmem:[#allocation13 + $0x38] sm:$0xff] %vm2137, %v4744
    %4761 = vst.msk [vmem:[#allocation13 + $0x48] sm:$0xff] %vm2137, %v4745
    %4762 = vst.msk [vmem:[#allocation13 + $0x58] sm:$0xff] %vm2137, %v4746
    %4763 = vst.msk [vmem:[#allocation13 + $0x68] sm:$0xff] %vm2137, %v4747
    %4764 = vst.msk [vmem:[#allocation13 + $0x78] sm:$0xff] %vm2137, %v4748
    %4765 = vst.msk [vmem:[#allocation13 + $0x88] sm:$0xff] %vm2137, %v4749
    %4766 = vst.msk [vmem:[#allocation13 + $0x98] sm:$0xff] %vm2137, %v4750
    %4767 = vst.msk [vmem:[#allocation13 + $0xa8] sm:$0xff] %vm2137, %v4751
    %4768 = vst.msk [vmem:[#allocation13 + $0xb8] sm:$0xff] %vm2137, %v4752
    %4769 = vst.msk [vmem:[#allocation13 + $0xc8] sm:$0xff] %vm2137, %v4753
    %4770 = vst.msk [vmem:[#allocation13 + $0xd8] sm:$0xff] %vm2137, %v4754
    %4771 = vst.msk [vmem:[#allocation13 + $0xe8] sm:$0xff] %vm2137, %v4755
    %4772 = vst.msk [vmem:[#allocation13 + $0xf8] sm:$0xff] %vm2137, %v4756
    %v4773 = vld [vmem:[#allocation13] sm:$0xff]
    %v4774 = vld [vmem:[#allocation13 + $0x8] sm:$0xff]
    %v4775 = vld [vmem:[#allocation13 + $0x10] sm:$0xff]
    %v4776 = vld [vmem:[#allocation13 + $0x18] sm:$0xff]
    %v4777 = vld [vmem:[#allocation13 + $0x20] sm:$0xff]
    %v4778 = vld [vmem:[#allocation13 + $0x28] sm:$0xff]
    %v4779 = vld [vmem:[#allocation13 + $0x30] sm:$0xff]
    %v4780 = vld [vmem:[#allocation13 + $0x38] sm:$0xff]
    %v4781 = vld [vmem:[#allocation13 + $0x40] sm:$0xff]
    %v4782 = vld [vmem:[#allocation13 + $0x48] sm:$0xff]
    %v4783 = vld [vmem:[#allocation13 + $0x50] sm:$0xff]
    %v4784 = vld [vmem:[#allocation13 + $0x58] sm:$0xff]
    %v4785 = vld [vmem:[#allocation13 + $0x60] sm:$0xff]
    %v4786 = vld [vmem:[#allocation13 + $0x68] sm:$0xff]
    %v4787 = vld [vmem:[#allocation13 + $0x70] sm:$0xff]
    %v4788 = vld [vmem:[#allocation13 + $0x78] sm:$0xff]
    %v4789 = vld [vmem:[#allocation13 + $0x80] sm:$0xff]
    %v4790 = vld [vmem:[#allocation13 + $0x88] sm:$0xff]
    %v4791 = vld [vmem:[#allocation13 + $0x90] sm:$0xff]
    %v4792 = vld [vmem:[#allocation13 + $0x98] sm:$0xff]
    %v4793 = vld [vmem:[#allocation13 + $0xa0] sm:$0xff]
    %v4794 = vld [vmem:[#allocation13 + $0xa8] sm:$0xff]
    %v4795 = vld [vmem:[#allocation13 + $0xb0] sm:$0xff]
    %v4796 = vld [vmem:[#allocation13 + $0xb8] sm:$0xff]
    %v4797 = vld [vmem:[#allocation13 + $0xc0] sm:$0xff]
    %v4798 = vld [vmem:[#allocation13 + $0xc8] sm:$0xff]
    %v4799 = vld [vmem:[#allocation13 + $0xd0] sm:$0xff]
    %v4800 = vld [vmem:[#allocation13 + $0xd8] sm:$0xff]
    %v4801 = vld [vmem:[#allocation13 + $0xe0] sm:$0xff]
    %v4802 = vld [vmem:[#allocation13 + $0xe8] sm:$0xff]
    %v4803 = vld [vmem:[#allocation13 + $0xf0] sm:$0xff]
    %v4804 = vld [vmem:[#allocation13 + $0xf8] sm:$0xff]
    %v4805 = vld [vmem:[%s13] sm:$0xff]
    %v4806 = vld [vmem:[%s13 + $0x8] sm:$0xff]
    %v4807 = vld [vmem:[%s13 + $0x10] sm:$0xff]
    %v4808 = vld [vmem:[%s13 + $0x18] sm:$0xff]
    %v4809 = vld [vmem:[%s13 + $0x20] sm:$0xff]
    %v4810 = vld [vmem:[%s13 + $0x28] sm:$0xff]
    %v4811 = vld [vmem:[%s13 + $0x30] sm:$0xff]
    %v4812 = vld [vmem:[%s13 + $0x38] sm:$0xff]
    %v4813 = vld [vmem:[%s13 + $0x40] sm:$0xff]
    %v4814 = vld [vmem:[%s13 + $0x48] sm:$0xff]
    %v4815 = vld [vmem:[%s13 + $0x50] sm:$0xff]
    %v4816 = vld [vmem:[%s13 + $0x58] sm:$0xff]
    %v4817 = vld [vmem:[%s13 + $0x60] sm:$0xff]
    %v4818 = vld [vmem:[%s13 + $0x68] sm:$0xff]
    %v4819 = vld [vmem:[%s13 + $0x70] sm:$0xff]
    %v4820 = vld [vmem:[%s13 + $0x78] sm:$0xff]
    %v4821 = vld [vmem:[%s13 + $0x80] sm:$0xff]
    %v4822 = vld [vmem:[%s13 + $0x88] sm:$0xff]
    %v4823 = vld [vmem:[%s14] sm:$0x1]
    %v4825 = vlaneseq
    %v4826 = vshrl.u32 %v4825, 7
    %v4827 = vsub.s32 0, %v4826
    %v4828 = vrot.slane %v4823, %v4827
    %v4831 = vsel %vm2137, %v4774, 0
    %v4834 = vsel %vm2137, %v4776, 0
    %v4837 = vsel %vm2137, %v4778, 0
    %v4840 = vsel %vm2137, %v4780, 0
    %v4843 = vsel %vm2137, %v4782, 0
    %v4846 = vsel %vm2137, %v4784, 0
    %v4849 = vsel %vm2137, %v4786, 0
    %v4852 = vsel %vm2137, %v4788, 0
    %v4855 = vsel %vm2137, %v4790, 0
    %v4858 = vsel %vm2137, %v4792, 0
    %v4861 = vsel %vm2137, %v4794, 0
    %v4864 = vsel %vm2137, %v4796, 0
    %v4867 = vsel %vm2137, %v4798, 0
    %v4870 = vsel %vm2137, %v4800, 0
    %v4873 = vsel %vm2137, %v4802, 0
    %v4876 = vsel %vm2137, %v4804, 0
    %4878 = vmatprep.subr.mxu0 0.0
    %4879 = vmatpush1.msra.mxu0 %v4805
    %4880 = vmatprep.subr.mxu0 0.0
    %4881 = vmatpush1.msra.mxu0 %v4806
    %4882 = vmatprep.subr.mxu0 0.0
    %4883 = vmatpush1.msra.mxu0 %v4807
    %4884 = vmatprep.subr.mxu0 0.0
    %4885 = vmatpush1.msra.mxu0 %v4808
    %4886 = vmatprep.subr.mxu0 0.0
    %4887 = vmatpush1.msra.mxu0 %v4809
    %4888 = vmatprep.subr.mxu0 0.0
    %4889 = vmatpush1.msra.mxu0 %v4810
    %4890 = vmatprep.subr.mxu0 0.0
    %4891 = vmatpush1.msra.mxu0 %v4811
    %4892 = vmatprep.subr.mxu0 0.0
    %4893 = vmatpush1.msra.mxu0 %v4812
    %4894 = vmatprep.subr.mxu0 0.0
    %4895 = vmatpush1.msra.mxu0 %v4813
    %4896 = vmatprep.subr.mxu0 0.0
    %4897 = vmatpush1.msra.mxu0 %v4814
    %4898 = vmatprep.subr.mxu0 0.0
    %4899 = vmatpush1.msra.mxu0 %v4815
    %4900 = vmatprep.subr.mxu0 0.0
    %4901 = vmatpush1.msra.mxu0 %v4816
    %4902 = vmatprep.subr.mxu0 0.0
    %4903 = vmatpush1.msra.mxu0 %v4817
    %4904 = vmatprep.subr.mxu0 0.0
    %4905 = vmatpush1.msra.mxu0 %v4818
    %4906 = vmatprep.subr.mxu0 0.0
    %4907 = vmatpush1.msra.mxu0 %v4819
    %4908 = vmatprep.subr.mxu0 0.0
    %4909 = vmatpush1.msra.mxu0 %v4820
    %4910 = vmatprep.subr.mxu0 0.0
    %4911 = vmatpush1.msra.mxu0 %v4821
    %4912 = vmatprep.subr.mxu0 0.0
    %4913 = vmatpush1.msra.mxu0 %v4822
    %4914 = vmatprep.subr.mxu0 0.0
    %4915 = vmatpush1.msra.mxu0 0.0
    %4916 = vmatprep.subr.mxu0 0.0
    %4917 = vmatpush1.msra.mxu0 0.0
    %4918 = vmatprep.subr.mxu0 0.0
    %4919 = vmatpush1.msra.mxu0 0.0
    %4920 = vmatprep.subr.mxu0 0.0
    %4921 = vmatpush1.msra.mxu0 0.0
    %4922 = vmatprep.subr.mxu0 0.0
    %4923 = vmatpush1.msra.mxu0 0.0
    %4924 = vmatprep.subr.mxu0 0.0
    %4925 = vmatpush1.msra.mxu0 0.0
    %4926 = vmatprep.subr.mxu0 0.0
    %4927 = vmatpush1.msra.mxu0 0.0
    %4928 = vmatprep.subr.mxu0 0.0
    %4929 = vmatpush1.msra.mxu0 0.0
    %4930 = vmatprep.subr.mxu0 0.0
    %4931 = vmatpush1.msra.mxu0 0.0
    %4932 = vmatprep.subr.mxu0 0.0
    %4933 = vmatpush1.msra.mxu0 0.0
    %4934 = vmatprep.subr.mxu0 0.0
    %4935 = vmatpush1.msra.mxu0 0.0
    %4936 = vmatprep.subr.mxu0 0.0
    %4937 = vmatpush1.msra.mxu0 0.0
    %4938 = vmatprep.subr.mxu0 0.0
    %4939 = vmatpush1.msra.mxu0 0.0
    %4940 = vmatprep.subr.mxu0 0.0
    %4941 = vmatpush1.msra.mxu0 0.0
    %4942 = vmatprep.mubr.f32.mxu0 %v4831
    %4943 = vmatmul.mubr.f32.gmra.mrb[0].mxu0 %v4773
    %v4944 = vpop.f32.mrb[0].mxu0
    %v4945 = vadd.f32 %v4828, %v4944
    %v4946 = vpop.f32.mrb[0].mxu0
    %4947 = vmatprep.mubr.f32.mxu0 %v4834
    %4948 = vmatmul.mubr.f32.gmra.mrb[0].mxu0 %v4775
    %v4949 = vpop.f32.mrb[0].mxu0
    %v4950 = vadd.f32 %v4828, %v4949
    %v4951 = vpop.f32.mrb[0].mxu0
    %4952 = vmatprep.mubr.f32.mxu0 %v4837
    %4953 = vmatmul.mubr.f32.gmra.mrb[0].mxu0 %v4777
    %v4954 = vpop.f32.mrb[0].mxu0
    %v4955 = vadd.f32 %v4828, %v4954
    %v4956 = vpop.f32.mrb[0].mxu0
    %4957 = vmatprep.mubr.f32.mxu0 %v4840
    %4958 = vmatmul.mubr.f32.gmra.mrb[0].mxu0 %v4779
    %v4959 = vpop.f32.mrb[0].mxu0
    %v4960 = vadd.f32 %v4828, %v4959
    %v4961 = vpop.f32.mrb[0].mxu0
    %4962 = vmatprep.mubr.f32.mxu0 %v4843
    %4963 = vmatmul.mubr.f32.gmra.mrb[0].mxu0 %v4781
    %v4964 = vpop.f32.mrb[0].mxu0
    %v4965 = vadd.f32 %v4828, %v4964
    %v4966 = vpop.f32.mrb[0].mxu0
    %4967 = vmatprep.mubr.f32.mxu0 %v4846
    %4968 = vmatmul.mubr.f32.gmra.mrb[0].mxu0 %v4783
    %v4969 = vpop.f32.mrb[0].mxu0
    %v4970 = vadd.f32 %v4828, %v4969
    %v4971 = vpop.f32.mrb[0].mxu0
    %4972 = vmatprep.mubr.f32.mxu0 %v4849
    %4973 = vmatmul.mubr.f32.gmra.mrb[0].mxu0 %v4785
    %v4974 = vpop.f32.mrb[0].mxu0
    %v4975 = vadd.f32 %v4828, %v4974
    %v4976 = vpop.f32.mrb[0].mxu0
    %4977 = vmatprep.mubr.f32.mxu0 %v4852
    %4978 = vmatmul.mubr.f32.gmra.mrb[0].mxu0 %v4787
    %v4979 = vpop.f32.mrb[0].mxu0
    %v4980 = vadd.f32 %v4828, %v4979
    %v4981 = vpop.f32.mrb[0].mxu0
    %4982 = vmatprep.mubr.f32.mxu0 %v4855
    %4983 = vmatmul.mubr.f32.gmra.mrb[0].mxu0 %v4789
    %v4984 = vpop.f32.mrb[0].mxu0
    %v4985 = vadd.f32 %v4828, %v4984
    %v4986 = vpop.f32.mrb[0].mxu0
    %4987 = vmatprep.mubr.f32.mxu0 %v4858
    %4988 = vmatmul.mubr.f32.gmra.mrb[0].mxu0 %v4791
    %v4989 = vpop.f32.mrb[0].mxu0
    %v4990 = vadd.f32 %v4828, %v4989
    %v4991 = vpop.f32.mrb[0].mxu0
    %4992 = vmatprep.mubr.f32.mxu0 %v4861
    %4993 = vmatmul.mubr.f32.gmra.mrb[0].mxu0 %v4793
    %v4994 = vpop.f32.mrb[0].mxu0
    %v4995 = vadd.f32 %v4828, %v4994
    %v4996 = vpop.f32.mrb[0].mxu0
    %4997 = vmatprep.mubr.f32.mxu0 %v4864
    %4998 = vmatmul.mubr.f32.gmra.mrb[0].mxu0 %v4795
    %v4999 = vpop.f32.mrb[0].mxu0
    %v5000 = vadd.f32 %v4828, %v4999
    %v5001 = vpop.f32.mrb[0].mxu0
    %5002 = vmatprep.mubr.f32.mxu0 %v4867
    %5003 = vmatmul.mubr.f32.gmra.mrb[0].mxu0 %v4797
    %v5004 = vpop.f32.mrb[0].mxu0
    %v5005 = vadd.f32 %v4828, %v5004
    %v5006 = vpop.f32.mrb[0].mxu0
    %5007 = vmatprep.mubr.f32.mxu0 %v4870
    %5008 = vmatmul.mubr.f32.gmra.mrb[0].mxu0 %v4799
    %v5009 = vpop.f32.mrb[0].mxu0
    %v5010 = vadd.f32 %v4828, %v5009
    %v5011 = vpop.f32.mrb[0].mxu0
    %5012 = vmatprep.mubr.f32.mxu0 %v4873
    %5013 = vmatmul.mubr.f32.gmra.mrb[0].mxu0 %v4801
    %v5014 = vpop.f32.mrb[0].mxu0
    %v5015 = vadd.f32 %v4828, %v5014
    %v5016 = vpop.f32.mrb[0].mxu0
    %5017 = vmatprep.mubr.f32.mxu0 %v4876
    %5018 = vmatmul.mubr.f32.gmra.mrb[0].mxu0 %v4803
    %v5019 = vpop.f32.mrb[0].mxu0
    %v5020 = vadd.f32 %v4828, %v5019
    %v5021 = vpop.f32.mrb[0].mxu0
    %5022 = vdwg.mxu0
    %5023 = vst.msk [vmem:[#allocation20] sm:$0xff] %vm2137, %v4945
    %5024 = vst.msk [vmem:[#allocation20 + $0x8] sm:$0xff] %vm2137, %v4950
    %5025 = vst.msk [vmem:[#allocation20 + $0x10] sm:$0xff] %vm2137, %v4955
    %5026 = vst.msk [vmem:[#allocation20 + $0x18] sm:$0xff] %vm2137, %v4960
    %5027 = vst.msk [vmem:[#allocation20 + $0x20] sm:$0xff] %vm2137, %v4965
    %5028 = vst.msk [vmem:[#allocation20 + $0x28] sm:$0xff] %vm2137, %v4970
    %5029 = vst.msk [vmem:[#allocation20 + $0x30] sm:$0xff] %vm2137, %v4975
    %5030 = vst.msk [vmem:[#allocation20 + $0x38] sm:$0xff] %vm2137, %v4980
    %5031 = vst.msk [vmem:[#allocation20 + $0x40] sm:$0xff] %vm2137, %v4985
    %5032 = vst.msk [vmem:[#allocation20 + $0x48] sm:$0xff] %vm2137, %v4990
    %5033 = vst.msk [vmem:[#allocation20 + $0x50] sm:$0xff] %vm2137, %v4995
    %5034 = vst.msk [vmem:[#allocation20 + $0x58] sm:$0xff] %vm2137, %v5000
    %5035 = vst.msk [vmem:[#allocation20 + $0x60] sm:$0xff] %vm2137, %v5005
    %5036 = vst.msk [vmem:[#allocation20 + $0x68] sm:$0xff] %vm2137, %v5010
    %5037 = vst.msk [vmem:[#allocation20 + $0x70] sm:$0xff] %vm2137, %v5015
    %5038 = vst.msk [vmem:[#allocation20 + $0x78] sm:$0xff] %vm2137, %v5020
    // Predicated region
    $region78: #{feature_pyramid_forward.1} parent=1 // pred_check
      _
    $region79: #{feature_pyramid_forward.1} parent=1 // pred_check_branch
      %5040 = sbr.rel (0) target = $region81
    $region80: #{feature_pyramid_forward.1} parent=1 // pred_region
      %s5042 = ssub.s32 128, 128
      %5043 = vsyncadd [#allocation17], %s5042
      %s5045 = sshll.u32 [#allocation16], 4
      %s5046 = int_to_ptr.vmem [resolvable:$true] %s5045
      %5048 = dma.vmem_to_hbm [thread:$0]  %s5046, 128, %s19, [#allocation17]
    $region81: #{feature_pyramid_forward.1} parent=1 // pred_fallthru
      _
    // Predicated region
    $region82: #{feature_pyramid_forward.1} parent=1 // pred_check
      _
    $region83: #{feature_pyramid_forward.1} parent=1 // pred_check_branch
      %5050 = sbr.rel (0) target = $region85
    $region84: #{feature_pyramid_forward.1} parent=1 // pred_region
      %s5052 = ssub.s32 512, 512
      %5053 = vsyncadd [#allocation19], %s5052
      %s5054 = sshll.u32 [#allocation18], 4
      %s5055 = int_to_ptr.vmem [resolvable:$true] %s5054
      %5060 = dma.vmem_to_hbm [thread:$0]  %s5055, 512, %s20, [#allocation19], 128, 128, 8
    $region85: #{feature_pyramid_forward.1} parent=1 // pred_fallthru
      _
    // Predicated region
    $region86: #{feature_pyramid_forward.1} parent=1 // pred_check
      _
    $region87: #{feature_pyramid_forward.1} parent=1 // pred_check_branch
      %5062 = sbr.rel (0) target = $region89
    $region88: #{feature_pyramid_forward.1} parent=1 // pred_region
      %s5064 = ssub.s32 2048, 2048
      %5065 = vsyncadd [#allocation19], %s5064
      %s5066 = sshll.u32 [#allocation20], 4
      %s5067 = int_to_ptr.vmem [resolvable:$true] %s5066
      %5072 = dma.vmem_to_hbm [thread:$0]  %s5067, 2048, %s21, [#allocation19], 128, 128, 8
    $region89: #{feature_pyramid_forward.1} parent=1 // pred_fallthru
      _
    // Predicated region
    $region90: #{feature_pyramid_forward.1} parent=1 // pred_check
      _
    $region91: #{feature_pyramid_forward.1} parent=1 // pred_check_branch
      %5074 = sbr.rel (0) target = $region93
    $region92: #{feature_pyramid_forward.1} parent=1 // pred_region
      %5075 = dma.done [#allocation17], 128
    $region93: #{feature_pyramid_forward.1} parent=1 // pred_fallthru
      _
    // Predicated region
    $region94: #{feature_pyramid_forward.1} parent=1 // pred_check
      _
    $region95: #{feature_pyramid_forward.1} parent=1 // pred_check_branch
      %5077 = sbr.rel (0) target = $region97
    $region96: #{feature_pyramid_forward.1} parent=1 // pred_region
      %5078 = dma.done [#allocation19], 512
    $region97: #{feature_pyramid_forward.1} parent=1 // pred_fallthru
      _
    // Predicated region
    $region98: #{feature_pyramid_forward.1} parent=1 // pred_check
      _
    $region99: #{feature_pyramid_forward.1} parent=1 // pred_check_branch
      %5080 = sbr.rel (0) target = $region101
    $region100: #{feature_pyramid_forward.1} parent=1 // pred_region
      %5081 = dma.done [#allocation19], 2048
    $region101: #{feature_pyramid_forward.1} parent=1 // pred_fallthru
      _
    %5082 = vsyncpa [#allocation17], 1
    %5083 = vsyncpa [#allocation19], 1

</llo_original>
